<compile_context>
chip_gen: v7x
topology: tpu7x:2x2x1
jax: 0.10.0
libtpu: 0.0.40
codegen_flags: <defaults>
</compile_context>

<pallas_src>
import math
from functools import partial

import jax
import jax.numpy as jnp
from jax.experimental import pallas as pl
from jax.experimental.pallas import tpu as pltpu


def _cross_attn_kernel(
    x1_ref, x2_ref,
    wq_ref, wk_ref, wv_ref, wo_ref, wfc_ref, wpr_ref,     # bf16 matmul weights
    bqkv_ref, bo_ref, lngb_ref, bfc_ref, bpr_ref,          # f32 biases / LN affine
    out_ref,
    ctx_ref,                                               # VMEM scratch (tb, L1, d) f32
    *, n_head, dh, native_layout,
):
    f32 = jnp.float32
    cdt = wq_ref.dtype                       # MXU compute dtype (bf16)

    if native_layout:
        # Blocks arrive module-native (L, tb, d); bring batch to the front
        # with an in-VMEM relayout (cheap, hidden under the MXU work).
        x1 = jnp.transpose(x1_ref[...], (1, 0, 2))        # (tb, L1, d)
        x2 = jnp.transpose(x2_ref[...], (1, 0, 2))        # (tb, L2, d)
    else:
        x1 = x1_ref[...]                                   # (tb, L1, d)
        x2 = x2_ref[...]                                   # (tb, L2, d)
    tb, L1, d = x1.shape
    L2 = x2.shape[1]

    x1f = x1.reshape(tb * L1, d).astype(f32)               # f32 residual path
    x1c = x1f.astype(cdt)
    x2c = x2.reshape(tb * L2, d).astype(cdt)

    # Hoisted bias / affine params (read once, stay f32).
    b_q = bqkv_ref[0:1, :]
    b_k = bqkv_ref[1:2, :]
    b_v = bqkv_ref[2:3, :]
    b_o = bo_ref[...]
    ln_g = lngb_ref[0:1, :]
    ln_b = lngb_ref[1:2, :]
    b_fc = bfc_ref[...]
    b_pr = bpr_ref[...]

    # Fused q/k/v projections (outer Linear folded into the MHA in_proj;
    # 1/sqrt(dh) folded into wq / b_q).  Full-width (rows, d) @ (d, d) MXU.
    q = (jnp.dot(x1c, wq_ref[...], preferred_element_type=f32) + b_q
         ).astype(cdt).reshape(tb, L1, d)
    k = (jnp.dot(x2c, wk_ref[...], preferred_element_type=f32) + b_k
         ).astype(cdt).reshape(tb, L2, d)
    v = (jnp.dot(x2c, wv_ref[...], preferred_element_type=f32) + b_v
         ).astype(cdt).reshape(tb, L2, d)

    # Per-head attention, batched over the whole batch tile.  Context goes
    # into the VMEM scratch at the head's lane offset; one full-K
    # out-projection follows after the loop.
    for h in range(n_head):                  # static unroll over heads only
        lo, hi = h * dh, (h + 1) * dh
        s = jnp.einsum('bqd,bkd->bqk', q[:, :, lo:hi], k[:, :, lo:hi],
                       preferred_element_type=f32)          # (tb, L1, L2)
        s = s - jnp.max(s, axis=-1, keepdims=True)
        p = jnp.exp(s)
        p = p / jnp.sum(p, axis=-1, keepdims=True)          # exact softmax
        ctx_ref[:, :, lo:hi] = jnp.einsum('bqk,bkd->bqd', p.astype(cdt),
                                          v[:, :, lo:hi],
                                          preferred_element_type=f32)

    # Single out-projection with full K = d contraction for the whole tile.
    attn = jnp.dot(ctx_ref[...].astype(cdt).reshape(tb * L1, d), wo_ref[...],
                   preferred_element_type=f32)

    # Residual 1 (+ out_proj bias), f32.
    x1_out = x1f + attn + b_o

    # LayerNorm in f32 (torch subclass computes in float32), eps = 1e-5.
    mu = jnp.mean(x1_out, axis=-1, keepdims=True)
    var = jnp.mean(jnp.square(x1_out - mu), axis=-1, keepdims=True)
    xn = (x1_out - mu) * jax.lax.rsqrt(var + 1e-5) * ln_g + ln_b

    # MLP: Linear(d, 4d) -> QuickGELU -> Linear(4d, d).
    h1 = jnp.dot(xn.astype(cdt), wfc_ref[...], preferred_element_type=f32) + b_fc
    t = 1.702 * h1
    h1 = h1 * jax.nn.sigmoid(t)              # one EUP pass, one VALU mul
    h2 = jnp.dot(h1.astype(cdt), wpr_ref[...], preferred_element_type=f32) + b_pr

    y = (x1_out + h2).reshape(tb, L1, d)
    if native_layout:
        out_ref[...] = jnp.transpose(y, (1, 0, 2)).astype(out_ref.dtype)
    else:
        out_ref[...] = y.astype(out_ref.dtype)


def _tpu_vmem_capacity_bytes():
    try:
        return int(pltpu.get_tpu_info().vmem_capacity_bytes)
    except Exception:
        return 64 * 1024 * 1024              # conservative default (v7x-like)


def _estimate_vmem_bytes(tb, L1, L2, d):
    """Rough per-step VMEM footprint (single-buffered resident weights)."""
    f32, bf16 = 4, 2
    r1, r2 = tb * L1, tb * L2
    weights = 12 * d * d * bf16                              # wq/wk/wv/wo/wfc/wpr
    pipeline = 2 * (2 * r1 * d * f32) + 2 * (r2 * d * f32)   # x1+out, x2 (double-buffered)
    acts = (r1 * d * (4 * f32 + 3 * bf16)                    # x1f, x1_out, attn, ctx scratch, q casts
            + r2 * d * (f32 + 3 * bf16)                      # k/v
            + r1 * 4 * d * (f32 + bf16)                      # MLP hidden
            + 2 * r1 * L2 * f32)                             # one head's scores + probs
    return weights + pipeline + acts


def _pick_batch_tile(N, L1, L2, d, vmem_limit, multi_core):
    """Batch elems per grid step.

    Single-TC chips (v5e/v6e): pick the biggest tile (target ~1024 rows) that
    fits VMEM; no multi-step constraint.  2-TC chips (v7x): target ~256 rows
    and prefer an even number of >= 2 grid steps so the megacore split over
    the 'parallel' batch axis is balanced.
    """
    divs = [t for t in range(1, N + 1)
            if N % t == 0 and (t % 8 == 0 or t == N)]        # (8,128) rule on (tb, d)
    budget = 0.8 * vmem_limit
    fit = [t for t in divs if _estimate_vmem_bytes(t, L1, L2, d) <= budget]
    if not fit:
        return min(divs)
    target_rows = 256 if multi_core else 1024
    tb_target = max(1, target_rows // max(L1, 1))
    cands = [t for t in fit if t <= tb_target] or [min(fit)]
    if multi_core:
        even = [t for t in cands if N // t >= 2 and (N // t) % 2 == 0]
        if even:
            return max(even)
        multi = [t for t in cands if N // t >= 2]
        if multi:
            return max(multi)
    return max(cands)


def cross_modality_attention(x1, x2, params, n_head, *,
                             batch_tile=None, compute_dtype=jnp.bfloat16):
    """x1: (L1, N, d), x2: (L2, N, d) -> (L1, N, d)."""
    L1, N, d = x1.shape
    L2 = x2.shape[0]
    dtype = x1.dtype
    dh = d // n_head
    scale = 1.0 / math.sqrt(dh)

    # Generation-aware memory plan: ~96 MiB scoped VMEM on 128 MiB chips
    # (v5e/v6e), ~48 MiB on v7x (64 MiB / TensorCore).
    vmem_cap = _tpu_vmem_capacity_bytes()
    vmem_limit = min(vmem_cap * 3 // 4, 100 * 1024 * 1024)
    multi_core = vmem_cap < 100 * 1024 * 1024    # v7x-style 2-TC chip heuristic

    tb = batch_tile if batch_tile is not None else _pick_batch_tile(
        N, L1, L2, d, vmem_limit, multi_core)
    assert N % tb == 0

    f32 = jnp.float32
    Wq, bq = params['wq'].astype(f32), params['bq'].astype(f32)
    Wk, bk = params['wk'].astype(f32), params['bk'].astype(f32)
    Wv, bv = params['wv'].astype(f32), params['bv'].astype(f32)
    Win = params['attn_in_proj_weight'].astype(f32)          # (3d, d)
    bin_ = params['attn_in_proj_bias'].astype(f32)           # (3d,)
    Wiq, Wik, Wiv = Win[:d], Win[d:2 * d], Win[2 * d:]
    biq, bik, biv = bin_[:d], bin_[d:2 * d], bin_[2 * d:]

    # torch Linear is y = x @ W.T + b; fold the chained projections and the
    # 1/sqrt(dh) score scale (Q only) into single (d, d) matrices + biases.
    wq_f = (Wq.T @ Wiq.T) * scale
    bq_f = (bq @ Wiq.T + biq) * scale
    wk_f = Wk.T @ Wik.T
    bk_f = bk @ Wik.T + bik
    wv_f = Wv.T @ Wiv.T
    bv_f = bv @ Wiv.T + biv

    cd = compute_dtype
    weight_args = [
        wq_f.astype(cd), wk_f.astype(cd), wv_f.astype(cd),     # fused q/k/v (d, d)
        params['attn_out_w'].T.astype(cd),                     # (d, d)
        params['mlp_fc_w'].T.astype(cd),                       # (d, 4d)
        params['mlp_proj_w'].T.astype(cd),                     # (4d, d)
        jnp.stack([bq_f, bk_f, bv_f]).astype(f32),             # (3, d)
        params['attn_out_b'].reshape(1, d).astype(f32),        # (1, d)
        jnp.stack([params['ln_g'], params['ln_b']]).astype(f32),  # (2, d)
        params['mlp_fc_b'].reshape(1, 4 * d).astype(f32),      # (1, 4d)
        params['mlp_proj_b'].reshape(1, d).astype(f32),        # (1, d)
    ]

    def run(native_layout, single_buffer_weights):
        def const_spec(a):                    # full array, same block every step
            nd = a.ndim
            kw = {}
            if single_buffer_weights:
                kw['pipeline_mode'] = pl.Buffered(1)   # no re-fetch -> 1 buffer
            return pl.BlockSpec(a.shape, lambda b, _n=nd: (0,) * _n, **kw)

        kern = partial(_cross_attn_kernel, n_head=n_head, dh=dh,
                       native_layout=native_layout)
        cparams = pltpu.CompilerParams(
            dimension_semantics=("parallel",),
            vmem_limit_bytes=int(vmem_limit),
        )
        scratch = [pltpu.VMEM((tb, L1, d), jnp.float32)]

        if native_layout:
            # Block directly on the module-native (L, N, d) layout: no
            # wrapper transposes, lane-dense output stores.
            in_specs = [
                pl.BlockSpec((L1, tb, d), lambda b: (0, b, 0)),
                pl.BlockSpec((L2, tb, d), lambda b: (0, b, 0)),
            ] + [const_spec(a) for a in weight_args]
            return pl.pallas_call(
                kern,
                out_shape=jax.ShapeDtypeStruct((L1, N, d), dtype),
                grid=(N // tb,),
                in_specs=in_specs,
                out_specs=pl.BlockSpec((L1, tb, d), lambda b: (0, b, 0)),
                scratch_shapes=scratch,
                compiler_params=cparams,
            )(x1, x2, *weight_args)
        else:
            # Fallback: proven batch-major layout (wrapper transposes).
            x1b = jnp.transpose(x1, (1, 0, 2))      # (N, L1, d)
            x2b = jnp.transpose(x2, (1, 0, 2))      # (N, L2, d)
            in_specs = [
                pl.BlockSpec((tb, L1, d), lambda b: (b, 0, 0)),
                pl.BlockSpec((tb, L2, d), lambda b: (b, 0, 0)),
            ] + [const_spec(a) for a in weight_args]
            out = pl.pallas_call(
                kern,
                out_shape=jax.ShapeDtypeStruct((N, L1, d), dtype),
                grid=(N // tb,),
                in_specs=in_specs,
                out_specs=pl.BlockSpec((tb, L1, d), lambda b: (b, 0, 0)),
                scratch_shapes=scratch,
                compiler_params=cparams,
            )(x1b, x2b, *weight_args)
            return jnp.transpose(out, (1, 0, 2))

    # Preferred: native layout + single-buffered weights.  Fall back if the
    # installed jax/Mosaic version rejects Buffered(1) or the in-kernel
    # (L, tb) <-> (tb, L) relayout.
    attempts = ((True, True), (False, True), (False, False))
    last_err = None
    for native_layout, single_buffer in attempts:
        try:
            return jax.block_until_ready(run(native_layout, single_buffer))
        except Exception as e:                      # fallback for older lowerings
            last_err = e
    raise last_err


def init_params(key, d):
    ks = jax.random.split(key, 8)

    def lin(k, out_d, in_d, scale=0.05):
        kw, kb = jax.random.split(k)
        w = jax.random.normal(kw, (out_d, in_d), jnp.float32) * scale
        b = jax.random.normal(kb, (out_d,), jnp.float32) * scale
        return w, b

    p = {}
    p['wq'], p['bq'] = lin(ks[0], d, d)
    p['wk'], p['bk'] = lin(ks[1], d, d)
    p['wv'], p['bv'] = lin(ks[2], d, d)
    p['attn_in_proj_weight'], p['attn_in_proj_bias'] = lin(ks[3], 3 * d, d)
    p['attn_out_w'], p['attn_out_b'] = lin(ks[4], d, d)
    p['ln_g'] = jnp.ones((d,), jnp.float32)
    p['ln_b'] = jnp.zeros((d,), jnp.float32)
    p['mlp_fc_w'], p['mlp_fc_b'] = lin(ks[5], 4 * d, d)
    p['mlp_proj_w'], p['mlp_proj_b'] = lin(ks[6], d, 4 * d)
    return p


def reference(x1, x2, p, n_head):
    """Pure-JAX f32 reference matching the PyTorch module."""
    L1, N, d = x1.shape
    L2 = x2.shape[0]
    dh = d // n_head
    q0 = x1 @ p['wq'].T + p['bq']
    k0 = x2 @ p['wk'].T + p['bk']
    v0 = x2 @ p['wv'].T + p['bv']
    win, bin_ = p['attn_in_proj_weight'], p['attn_in_proj_bias']
    q = q0 @ win[:d].T + bin_[:d]
    k = k0 @ win[d:2 * d].T + bin_[d:2 * d]
    v = v0 @ win[2 * d:].T + bin_[2 * d:]
    qh = q.reshape(L1, N, n_head, dh).transpose(1, 2, 0, 3)
    kh = k.reshape(L2, N, n_head, dh).transpose(1, 2, 0, 3)
    vh = v.reshape(L2, N, n_head, dh).transpose(1, 2, 0, 3)
    s = jnp.einsum('nhqd,nhkd->nhqk', qh, kh) / math.sqrt(dh)
    a = jax.nn.softmax(s, axis=-1)
    o = jnp.einsum('nhqk,nhkd->nhqd', a, vh)
    o = o.transpose(2, 0, 1, 3).reshape(L1, N, d)
    o = o @ p['attn_out_w'].T + p['attn_out_b']
    x1_out = x1 + o

    def ln(x):
        mu = x.mean(-1, keepdims=True)
        var = ((x - mu) ** 2).mean(-1, keepdims=True)
        return (x - mu) / jnp.sqrt(var + 1e-5) * p['ln_g'] + p['ln_b']

    h = ln(x1_out) @ p['mlp_fc_w'].T + p['mlp_fc_b']
    h = h * jax.nn.sigmoid(1.702 * h)
    h = h @ p['mlp_proj_w'].T + p['mlp_proj_b']
    return x1_out + h


if __name__ == "__main__":
    d_model, n_head = 32, 4
    L1, L2, N = 8, 16, 2

    key = jax.random.PRNGKey(0)
    k1, k2, kp = jax.random.split(key, 3)
    x1 = jax.random.normal(k1, (L1, N, d_model), jnp.float32)
    x2 = jax.random.normal(k2, (L2, N, d_model), jnp.float32)
    params = init_params(kp, d_model)

    out = cross_modality_attention(x1, x2, params, n_head)
    out = jax.block_until_ready(out)

    ref = reference(x1, x2, params, n_head)
    assert out.shape == (L1, N, d_model)
    err = float(jnp.max(jnp.abs(out - ref)))
    # bf16 MXU compute: allow bf16-level tolerance (softmax reciprocal is exact).
    assert jnp.allclose(out, ref, atol=2e-2, rtol=2e-2), err
    print("KERNEL_OK")
</pallas_src>

<mosaic_0001>
module attributes {stable_mosaic.version = 11 : i64} {
  func.func @_cross_attn_kernel(%arg0: i32, %arg1: memref<8x2x32xf32, #tpu.memory_space<vmem>>, %arg2: memref<16x2x32xf32, #tpu.memory_space<vmem>>, %arg3: memref<32x32xbf16, #tpu.memory_space<vmem>>, %arg4: memref<32x32xbf16, #tpu.memory_space<vmem>>, %arg5: memref<32x32xbf16, #tpu.memory_space<vmem>>, %arg6: memref<32x32xbf16, #tpu.memory_space<vmem>>, %arg7: memref<32x128xbf16, #tpu.memory_space<vmem>>, %arg8: memref<128x32xbf16, #tpu.memory_space<vmem>>, %arg9: memref<3x32xf32, #tpu.memory_space<vmem>>, %arg10: memref<1x32xf32, #tpu.memory_space<vmem>>, %arg11: memref<2x32xf32, #tpu.memory_space<vmem>>, %arg12: memref<1x128xf32, #tpu.memory_space<vmem>>, %arg13: memref<1x32xf32, #tpu.memory_space<vmem>>, %arg14: memref<8x2x32xf32, #tpu.memory_space<vmem>>, %arg15: memref<2x8x32xf32, #tpu.memory_space<vmem>>) attributes {dimension_semantics = [#tpu.dimension_semantics<parallel>], iteration_bounds = array<i64: 1>, scalar_prefetch = 0 : i64, scratch_operands = 1 : i64, tpu.core_type = #tpu.core_type<tc>, window_params = [{transform_indices = @transform_0, window_bounds = array<i64: 8, 2, 32>}, {transform_indices = @transform_1, window_bounds = array<i64: 16, 2, 32>}, {pipeline_mode = #tpu.pipeline_mode<synchronous>, transform_indices = @transform_2, window_bounds = array<i64: 32, 32>}, {pipeline_mode = #tpu.pipeline_mode<synchronous>, transform_indices = @transform_3, window_bounds = array<i64: 32, 32>}, {pipeline_mode = #tpu.pipeline_mode<synchronous>, transform_indices = @transform_4, window_bounds = array<i64: 32, 32>}, {pipeline_mode = #tpu.pipeline_mode<synchronous>, transform_indices = @transform_5, window_bounds = array<i64: 32, 32>}, {pipeline_mode = #tpu.pipeline_mode<synchronous>, transform_indices = @transform_6, window_bounds = array<i64: 32, 128>}, {pipeline_mode = #tpu.pipeline_mode<synchronous>, transform_indices = @transform_7, window_bounds = array<i64: 128, 32>}, {pipeline_mode = #tpu.pipeline_mode<synchronous>, transform_indices = @transform_8, window_bounds = array<i64: 3, 32>}, {pipeline_mode = #tpu.pipeline_mode<synchronous>, transform_indices = @transform_9, window_bounds = array<i64: 1, 32>}, {pipeline_mode = #tpu.pipeline_mode<synchronous>, transform_indices = @transform_10, window_bounds = array<i64: 2, 32>}, {pipeline_mode = #tpu.pipeline_mode<synchronous>, transform_indices = @transform_11, window_bounds = array<i64: 1, 128>}, {pipeline_mode = #tpu.pipeline_mode<synchronous>, transform_indices = @transform_12, window_bounds = array<i64: 1, 32>}, {transform_indices = @transform_13, window_bounds = array<i64: 8, 2, 32>}]} {
    %c0 = arith.constant 0 : index
    %c0_0 = arith.constant 0 : index
    %c0_1 = arith.constant 0 : index
    %0 = vector.load %arg1[%c0, %c0_0, %c0_1] : memref<8x2x32xf32, #tpu.memory_space<vmem>>, vector<8x2x32xf32>
    %1 = tpu.transpose %0, [1, 0, 2] : vector<8x2x32xf32> -> vector<2x8x32xf32>
    %c0_2 = arith.constant 0 : index
    %c0_3 = arith.constant 0 : index
    %c0_4 = arith.constant 0 : index
    %2 = vector.load %arg2[%c0_2, %c0_3, %c0_4] : memref<16x2x32xf32, #tpu.memory_space<vmem>>, vector<16x2x32xf32>
    %3 = tpu.transpose %2, [1, 0, 2] : vector<16x2x32xf32> -> vector<2x16x32xf32>
    %4 = vector.shape_cast %1 : vector<2x8x32xf32> to vector<16x32xf32>
    %5 = arith.truncf %4 : vector<16x32xf32> to vector<16x32xbf16>
    %6 = vector.shape_cast %3 : vector<2x16x32xf32> to vector<32x32xf32>
    %7 = arith.truncf %6 : vector<32x32xf32> to vector<32x32xbf16>
    %c0_5 = arith.constant 0 : index
    %c0_6 = arith.constant 0 : index
    %8 = vector.load %arg9[%c0_5, %c0_6] : memref<3x32xf32, #tpu.memory_space<vmem>>, vector<1x32xf32>
    %c1 = arith.constant 1 : index
    %c0_7 = arith.constant 0 : index
    %9 = vector.load %arg9[%c1, %c0_7] : memref<3x32xf32, #tpu.memory_space<vmem>>, vector<1x32xf32>
    %c2 = arith.constant 2 : index
    %c0_8 = arith.constant 0 : index
    %10 = vector.load %arg9[%c2, %c0_8] : memref<3x32xf32, #tpu.memory_space<vmem>>, vector<1x32xf32>
    %c0_9 = arith.constant 0 : index
    %c0_10 = arith.constant 0 : index
    %11 = vector.load %arg10[%c0_9, %c0_10] : memref<1x32xf32, #tpu.memory_space<vmem>>, vector<1x32xf32>
    %c0_11 = arith.constant 0 : index
    %c0_12 = arith.constant 0 : index
    %12 = vector.load %arg11[%c0_11, %c0_12] : memref<2x32xf32, #tpu.memory_space<vmem>>, vector<1x32xf32>
    %c1_13 = arith.constant 1 : index
    %c0_14 = arith.constant 0 : index
    %13 = vector.load %arg11[%c1_13, %c0_14] : memref<2x32xf32, #tpu.memory_space<vmem>>, vector<1x32xf32>
    %c0_15 = arith.constant 0 : index
    %c0_16 = arith.constant 0 : index
    %14 = vector.load %arg12[%c0_15, %c0_16] : memref<1x128xf32, #tpu.memory_space<vmem>>, vector<1x128xf32>
    %c0_17 = arith.constant 0 : index
    %c0_18 = arith.constant 0 : index
    %15 = vector.load %arg13[%c0_17, %c0_18] : memref<1x32xf32, #tpu.memory_space<vmem>>, vector<1x32xf32>
    %c0_19 = arith.constant 0 : index
    %c0_20 = arith.constant 0 : index
    %16 = vector.load %arg3[%c0_19, %c0_20] : memref<32x32xbf16, #tpu.memory_space<vmem>>, vector<32x32xbf16>
    %cst = arith.constant dense<0.000000e+00> : vector<16x32xf32>
    %17 = tpu.matmul %5, %16, %cst {dimension_numbers = #tpu.dot_dimension_numbers<[1], [0], [0], [1], [0, 0, 1, 1], [], []>} : vector<16x32xbf16>, vector<32x32xbf16>, vector<16x32xf32> -> vector<16x32xf32>
    %18 = vector.broadcast %8 : vector<1x32xf32> to vector<16x32xf32>
    %19 = arith.addf %17, %18 : vector<16x32xf32>
    %20 = arith.truncf %19 : vector<16x32xf32> to vector<16x32xbf16>
    %21 = vector.shape_cast %20 : vector<16x32xbf16> to vector<2x8x32xbf16>
    %c0_21 = arith.constant 0 : index
    %c0_22 = arith.constant 0 : index
    %22 = vector.load %arg4[%c0_21, %c0_22] : memref<32x32xbf16, #tpu.memory_space<vmem>>, vector<32x32xbf16>
    %cst_23 = arith.constant dense<0.000000e+00> : vector<32x32xf32>
    %23 = tpu.matmul %7, %22, %cst_23 {dimension_numbers = #tpu.dot_dimension_numbers<[1], [0], [0], [1], [0, 0, 1, 1], [], []>} : vector<32x32xbf16>, vector<32x32xbf16>, vector<32x32xf32> -> vector<32x32xf32>
    %24 = vector.broadcast %9 : vector<1x32xf32> to vector<32x32xf32>
    %25 = arith.addf %23, %24 : vector<32x32xf32>
    %26 = arith.truncf %25 : vector<32x32xf32> to vector<32x32xbf16>
    %27 = vector.shape_cast %26 : vector<32x32xbf16> to vector<2x16x32xbf16>
    %c0_24 = arith.constant 0 : index
    %c0_25 = arith.constant 0 : index
    %28 = vector.load %arg5[%c0_24, %c0_25] : memref<32x32xbf16, #tpu.memory_space<vmem>>, vector<32x32xbf16>
    %cst_26 = arith.constant dense<0.000000e+00> : vector<32x32xf32>
    %29 = tpu.matmul %7, %28, %cst_26 {dimension_numbers = #tpu.dot_dimension_numbers<[1], [0], [0], [1], [0, 0, 1, 1], [], []>} : vector<32x32xbf16>, vector<32x32xbf16>, vector<32x32xf32> -> vector<32x32xf32>
    %30 = vector.broadcast %10 : vector<1x32xf32> to vector<32x32xf32>
    %31 = arith.addf %29, %30 : vector<32x32xf32>
    %32 = arith.truncf %31 : vector<32x32xf32> to vector<32x32xbf16>
    %33 = vector.shape_cast %32 : vector<32x32xbf16> to vector<2x16x32xbf16>
    %34 = vector.extract_strided_slice %21 {offsets = [0, 0, 0], sizes = [2, 8, 8], strides = [1, 1, 1]} : vector<2x8x32xbf16> to vector<2x8x8xbf16>
    %35 = vector.extract_strided_slice %27 {offsets = [0, 0, 0], sizes = [2, 16, 8], strides = [1, 1, 1]} : vector<2x16x32xbf16> to vector<2x16x8xbf16>
    "tpu.trace_start"() <{level = 10 : i32, message = "bqd,bkd->bqk"}> : () -> ()
    %cst_27 = arith.constant dense<0.000000e+00> : vector<2x8x16xf32>
    %36 = tpu.matmul %34, %35, %cst_27 {dimension_numbers = #tpu.dot_dimension_numbers<[2], [2], [1], [1], [0, 0, 0, 1, 1, 1], [0], [0]>} : vector<2x8x8xbf16>, vector<2x16x8xbf16>, vector<2x8x16xf32> -> vector<2x8x16xf32>
    "tpu.trace_stop"() : () -> ()
    %cst_28 = arith.constant dense<0xFF800000> : vector<2x8xf32>
    %37 = vector.multi_reduction <maximumf>, %36, %cst_28 [2] : vector<2x8x16xf32> to vector<2x8xf32>
    %38 = vector.shape_cast %37 : vector<2x8xf32> to vector<2x8x1xf32>
    %39 = vector.broadcast %38 : vector<2x8x1xf32> to vector<2x8x16xf32>
    %40 = arith.subf %36, %39 : vector<2x8x16xf32>
    %41 = math.exp %40 : vector<2x8x16xf32>
    %cst_29 = arith.constant dense<0.000000e+00> : vector<2x8xf32>
    %42 = vector.multi_reduction <add>, %41, %cst_29 [2] : vector<2x8x16xf32> to vector<2x8xf32>
    %43 = vector.shape_cast %42 : vector<2x8xf32> to vector<2x8x1xf32>
    %44 = vector.broadcast %43 : vector<2x8x1xf32> to vector<2x8x16xf32>
    %45 = arith.divf %41, %44 : vector<2x8x16xf32>
    %46 = arith.truncf %45 : vector<2x8x16xf32> to vector<2x8x16xbf16>
    %47 = vector.extract_strided_slice %33 {offsets = [0, 0, 0], sizes = [2, 16, 8], strides = [1, 1, 1]} : vector<2x16x32xbf16> to vector<2x16x8xbf16>
    "tpu.trace_start"() <{level = 10 : i32, message = "bqk,bkd->bqd"}> : () -> ()
    %cst_30 = arith.constant dense<0.000000e+00> : vector<2x8x8xf32>
    %48 = tpu.matmul %46, %47, %cst_30 {dimension_numbers = #tpu.dot_dimension_numbers<[2], [1], [1], [2], [0, 0, 0, 1, 1, 2], [0], [0]>} : vector<2x8x16xbf16>, vector<2x16x8xbf16>, vector<2x8x8xf32> -> vector<2x8x8xf32>
    "tpu.trace_stop"() : () -> ()
    %c0_31 = arith.constant 0 : index
    %c0_32 = arith.constant 0 : index
    %c0_33 = arith.constant 0 : index
    %49 = vector.load %arg15[%c0_31, %c0_32, %c0_33] : memref<2x8x32xf32, #tpu.memory_space<vmem>>, vector<2x8x8xf32>
    tpu.vector_store %arg15[%c0_31, %c0_32, %c0_33], %48 {strides = array<i32>} : memref<2x8x32xf32, #tpu.memory_space<vmem>>, vector<2x8x8xf32>,
    %50 = vector.extract_strided_slice %21 {offsets = [0, 0, 8], sizes = [2, 8, 8], strides = [1, 1, 1]} : vector<2x8x32xbf16> to vector<2x8x8xbf16>
    %51 = vector.extract_strided_slice %27 {offsets = [0, 0, 8], sizes = [2, 16, 8], strides = [1, 1, 1]} : vector<2x16x32xbf16> to vector<2x16x8xbf16>
    "tpu.trace_start"() <{level = 10 : i32, message = "bqd,bkd->bqk"}> : () -> ()
    %cst_34 = arith.constant dense<0.000000e+00> : vector<2x8x16xf32>
    %52 = tpu.matmul %50, %51, %cst_34 {dimension_numbers = #tpu.dot_dimension_numbers<[2], [2], [1], [1], [0, 0, 0, 1, 1, 1], [0], [0]>} : vector<2x8x8xbf16>, vector<2x16x8xbf16>, vector<2x8x16xf32> -> vector<2x8x16xf32>
    "tpu.trace_stop"() : () -> ()
    %cst_35 = arith.constant dense<0xFF800000> : vector<2x8xf32>
    %53 = vector.multi_reduction <maximumf>, %52, %cst_35 [2] : vector<2x8x16xf32> to vector<2x8xf32>
    %54 = vector.shape_cast %53 : vector<2x8xf32> to vector<2x8x1xf32>
    %55 = vector.broadcast %54 : vector<2x8x1xf32> to vector<2x8x16xf32>
    %56 = arith.subf %52, %55 : vector<2x8x16xf32>
    %57 = math.exp %56 : vector<2x8x16xf32>
    %cst_36 = arith.constant dense<0.000000e+00> : vector<2x8xf32>
    %58 = vector.multi_reduction <add>, %57, %cst_36 [2] : vector<2x8x16xf32> to vector<2x8xf32>
    %59 = vector.shape_cast %58 : vector<2x8xf32> to vector<2x8x1xf32>
    %60 = vector.broadcast %59 : vector<2x8x1xf32> to vector<2x8x16xf32>
    %61 = arith.divf %57, %60 : vector<2x8x16xf32>
    %62 = arith.truncf %61 : vector<2x8x16xf32> to vector<2x8x16xbf16>
    %63 = vector.extract_strided_slice %33 {offsets = [0, 0, 8], sizes = [2, 16, 8], strides = [1, 1, 1]} : vector<2x16x32xbf16> to vector<2x16x8xbf16>
    "tpu.trace_start"() <{level = 10 : i32, message = "bqk,bkd->bqd"}> : () -> ()
    %cst_37 = arith.constant dense<0.000000e+00> : vector<2x8x8xf32>
    %64 = tpu.matmul %62, %63, %cst_37 {dimension_numbers = #tpu.dot_dimension_numbers<[2], [1], [1], [2], [0, 0, 0, 1, 1, 2], [0], [0]>} : vector<2x8x16xbf16>, vector<2x16x8xbf16>, vector<2x8x8xf32> -> vector<2x8x8xf32>
    "tpu.trace_stop"() : () -> ()
    %c0_38 = arith.constant 0 : index
    %c0_39 = arith.constant 0 : index
    %c8 = arith.constant 8 : index
    %65 = vector.load %arg15[%c0_38, %c0_39, %c8] : memref<2x8x32xf32, #tpu.memory_space<vmem>>, vector<2x8x8xf32>
    tpu.vector_store %arg15[%c0_38, %c0_39, %c8], %64 {strides = array<i32>} : memref<2x8x32xf32, #tpu.memory_space<vmem>>, vector<2x8x8xf32>,
    %66 = vector.extract_strided_slice %21 {offsets = [0, 0, 16], sizes = [2, 8, 8], strides = [1, 1, 1]} : vector<2x8x32xbf16> to vector<2x8x8xbf16>
    %67 = vector.extract_strided_slice %27 {offsets = [0, 0, 16], sizes = [2, 16, 8], strides = [1, 1, 1]} : vector<2x16x32xbf16> to vector<2x16x8xbf16>
    "tpu.trace_start"() <{level = 10 : i32, message = "bqd,bkd->bqk"}> : () -> ()
    %cst_40 = arith.constant dense<0.000000e+00> : vector<2x8x16xf32>
    %68 = tpu.matmul %66, %67, %cst_40 {dimension_numbers = #tpu.dot_dimension_numbers<[2], [2], [1], [1], [0, 0, 0, 1, 1, 1], [0], [0]>} : vector<2x8x8xbf16>, vector<2x16x8xbf16>, vector<2x8x16xf32> -> vector<2x8x16xf32>
    "tpu.trace_stop"() : () -> ()
    %cst_41 = arith.constant dense<0xFF800000> : vector<2x8xf32>
    %69 = vector.multi_reduction <maximumf>, %68, %cst_41 [2] : vector<2x8x16xf32> to vector<2x8xf32>
    %70 = vector.shape_cast %69 : vector<2x8xf32> to vector<2x8x1xf32>
    %71 = vector.broadcast %70 : vector<2x8x1xf32> to vector<2x8x16xf32>
    %72 = arith.subf %68, %71 : vector<2x8x16xf32>
    %73 = math.exp %72 : vector<2x8x16xf32>
    %cst_42 = arith.constant dense<0.000000e+00> : vector<2x8xf32>
    %74 = vector.multi_reduction <add>, %73, %cst_42 [2] : vector<2x8x16xf32> to vector<2x8xf32>
    %75 = vector.shape_cast %74 : vector<2x8xf32> to vector<2x8x1xf32>
    %76 = vector.broadcast %75 : vector<2x8x1xf32> to vector<2x8x16xf32>
    %77 = arith.divf %73, %76 : vector<2x8x16xf32>
    %78 = arith.truncf %77 : vector<2x8x16xf32> to vector<2x8x16xbf16>
    %79 = vector.extract_strided_slice %33 {offsets = [0, 0, 16], sizes = [2, 16, 8], strides = [1, 1, 1]} : vector<2x16x32xbf16> to vector<2x16x8xbf16>
    "tpu.trace_start"() <{level = 10 : i32, message = "bqk,bkd->bqd"}> : () -> ()
    %cst_43 = arith.constant dense<0.000000e+00> : vector<2x8x8xf32>
    %80 = tpu.matmul %78, %79, %cst_43 {dimension_numbers = #tpu.dot_dimension_numbers<[2], [1], [1], [2], [0, 0, 0, 1, 1, 2], [0], [0]>} : vector<2x8x16xbf16>, vector<2x16x8xbf16>, vector<2x8x8xf32> -> vector<2x8x8xf32>
    "tpu.trace_stop"() : () -> ()
    %c0_44 = arith.constant 0 : index
    %c0_45 = arith.constant 0 : index
    %c16 = arith.constant 16 : index
    %81 = vector.load %arg15[%c0_44, %c0_45, %c16] : memref<2x8x32xf32, #tpu.memory_space<vmem>>, vector<2x8x8xf32>
    tpu.vector_store %arg15[%c0_44, %c0_45, %c16], %80 {strides = array<i32>} : memref<2x8x32xf32, #tpu.memory_space<vmem>>, vector<2x8x8xf32>,
    %82 = vector.extract_strided_slice %21 {offsets = [0, 0, 24], sizes = [2, 8, 8], strides = [1, 1, 1]} : vector<2x8x32xbf16> to vector<2x8x8xbf16>
    %83 = vector.extract_strided_slice %27 {offsets = [0, 0, 24], sizes = [2, 16, 8], strides = [1, 1, 1]} : vector<2x16x32xbf16> to vector<2x16x8xbf16>
    "tpu.trace_start"() <{level = 10 : i32, message = "bqd,bkd->bqk"}> : () -> ()
    %cst_46 = arith.constant dense<0.000000e+00> : vector<2x8x16xf32>
    %84 = tpu.matmul %82, %83, %cst_46 {dimension_numbers = #tpu.dot_dimension_numbers<[2], [2], [1], [1], [0, 0, 0, 1, 1, 1], [0], [0]>} : vector<2x8x8xbf16>, vector<2x16x8xbf16>, vector<2x8x16xf32> -> vector<2x8x16xf32>
    "tpu.trace_stop"() : () -> ()
    %cst_47 = arith.constant dense<0xFF800000> : vector<2x8xf32>
    %85 = vector.multi_reduction <maximumf>, %84, %cst_47 [2] : vector<2x8x16xf32> to vector<2x8xf32>
    %86 = vector.shape_cast %85 : vector<2x8xf32> to vector<2x8x1xf32>
    %87 = vector.broadcast %86 : vector<2x8x1xf32> to vector<2x8x16xf32>
    %88 = arith.subf %84, %87 : vector<2x8x16xf32>
    %89 = math.exp %88 : vector<2x8x16xf32>
    %cst_48 = arith.constant dense<0.000000e+00> : vector<2x8xf32>
    %90 = vector.multi_reduction <add>, %89, %cst_48 [2] : vector<2x8x16xf32> to vector<2x8xf32>
    %91 = vector.shape_cast %90 : vector<2x8xf32> to vector<2x8x1xf32>
    %92 = vector.broadcast %91 : vector<2x8x1xf32> to vector<2x8x16xf32>
    %93 = arith.divf %89, %92 : vector<2x8x16xf32>
    %94 = arith.truncf %93 : vector<2x8x16xf32> to vector<2x8x16xbf16>
    %95 = vector.extract_strided_slice %33 {offsets = [0, 0, 24], sizes = [2, 16, 8], strides = [1, 1, 1]} : vector<2x16x32xbf16> to vector<2x16x8xbf16>
    "tpu.trace_start"() <{level = 10 : i32, message = "bqk,bkd->bqd"}> : () -> ()
    %cst_49 = arith.constant dense<0.000000e+00> : vector<2x8x8xf32>
    %96 = tpu.matmul %94, %95, %cst_49 {dimension_numbers = #tpu.dot_dimension_numbers<[2], [1], [1], [2], [0, 0, 0, 1, 1, 2], [0], [0]>} : vector<2x8x16xbf16>, vector<2x16x8xbf16>, vector<2x8x8xf32> -> vector<2x8x8xf32>
    "tpu.trace_stop"() : () -> ()
    %c0_50 = arith.constant 0 : index
    %c0_51 = arith.constant 0 : index
    %c24 = arith.constant 24 : index
    %97 = vector.load %arg15[%c0_50, %c0_51, %c24] : memref<2x8x32xf32, #tpu.memory_space<vmem>>, vector<2x8x8xf32>
    tpu.vector_store %arg15[%c0_50, %c0_51, %c24], %96 {strides = array<i32>} : memref<2x8x32xf32, #tpu.memory_space<vmem>>, vector<2x8x8xf32>,
    %c0_52 = arith.constant 0 : index
    %c0_53 = arith.constant 0 : index
    %c0_54 = arith.constant 0 : index
    %98 = vector.load %arg15[%c0_52, %c0_53, %c0_54] : memref<2x8x32xf32, #tpu.memory_space<vmem>>, vector<2x8x32xf32>
    %99 = arith.truncf %98 : vector<2x8x32xf32> to vector<2x8x32xbf16>
    %100 = vector.shape_cast %99 : vector<2x8x32xbf16> to vector<16x32xbf16>
    %c0_55 = arith.constant 0 : index
    %c0_56 = arith.constant 0 : index
    %101 = vector.load %arg6[%c0_55, %c0_56] : memref<32x32xbf16, #tpu.memory_space<vmem>>, vector<32x32xbf16>
    %cst_57 = arith.constant dense<0.000000e+00> : vector<16x32xf32>
    %102 = tpu.matmul %100, %101, %cst_57 {dimension_numbers = #tpu.dot_dimension_numbers<[1], [0], [0], [1], [0, 0, 1, 1], [], []>} : vector<16x32xbf16>, vector<32x32xbf16>, vector<16x32xf32> -> vector<16x32xf32>
    %103 = arith.addf %4, %102 : vector<16x32xf32>
    %104 = vector.broadcast %11 : vector<1x32xf32> to vector<16x32xf32>
    %105 = arith.addf %103, %104 : vector<16x32xf32>
    %cst_58 = arith.constant dense<0.000000e+00> : vector<16xf32>
    %106 = vector.multi_reduction <add>, %105, %cst_58 [1] : vector<16x32xf32> to vector<16xf32>
    %107 = vector.shape_cast %106 : vector<16xf32> to vector<16x1xf32>
    %cst_59 = arith.constant 3.200000e+01 : f32
    %108 = vector.broadcast %cst_59 : f32 to vector<16x1xf32>
    %109 = arith.divf %107, %108 : vector<16x1xf32>
    %110 = vector.broadcast %109 : vector<16x1xf32> to vector<16x32xf32>
    %111 = arith.subf %105, %110 : vector<16x32xf32>
    %112 = arith.mulf %111, %111 : vector<16x32xf32>
    %cst_60 = arith.constant dense<0.000000e+00> : vector<16xf32>
    %113 = vector.multi_reduction <add>, %112, %cst_60 [1] : vector<16x32xf32> to vector<16xf32>
    %114 = vector.shape_cast %113 : vector<16xf32> to vector<16x1xf32>
    %cst_61 = arith.constant 3.200000e+01 : f32
    %115 = vector.broadcast %cst_61 : f32 to vector<16x1xf32>
    %116 = arith.divf %114, %115 : vector<16x1xf32>
    %117 = vector.broadcast %109 : vector<16x1xf32> to vector<16x32xf32>
    %118 = arith.subf %105, %117 : vector<16x32xf32>
    %cst_62 = arith.constant 9.99999974E-6 : f32
    %119 = vector.broadcast %cst_62 : f32 to vector<16x1xf32>
    %120 = arith.addf %116, %119 : vector<16x1xf32>
    %121 = math.rsqrt %120 : vector<16x1xf32>
    %122 = vector.broadcast %121 : vector<16x1xf32> to vector<16x32xf32>
    %123 = arith.mulf %118, %122 : vector<16x32xf32>
    %124 = vector.broadcast %12 : vector<1x32xf32> to vector<16x32xf32>
    %125 = arith.mulf %123, %124 : vector<16x32xf32>
    %126 = vector.broadcast %13 : vector<1x32xf32> to vector<16x32xf32>
    %127 = arith.addf %125, %126 : vector<16x32xf32>
    %128 = arith.truncf %127 : vector<16x32xf32> to vector<16x32xbf16>
    %c0_63 = arith.constant 0 : index
    %c0_64 = arith.constant 0 : index
    %129 = vector.load %arg7[%c0_63, %c0_64] : memref<32x128xbf16, #tpu.memory_space<vmem>>, vector<32x128xbf16>
    %cst_65 = arith.constant dense<0.000000e+00> : vector<16x128xf32>
    %130 = tpu.matmul %128, %129, %cst_65 {dimension_numbers = #tpu.dot_dimension_numbers<[1], [0], [0], [1], [0, 0, 1, 1], [], []>} : vector<16x32xbf16>, vector<32x128xbf16>, vector<16x128xf32> -> vector<16x128xf32>
    %131 = vector.broadcast %14 : vector<1x128xf32> to vector<16x128xf32>
    %132 = arith.addf %130, %131 : vector<16x128xf32>
    %cst_66 = arith.constant 1.702000e+00 : f32
    %133 = vector.broadcast %cst_66 : f32 to vector<16x128xf32>
    %134 = arith.mulf %133, %132 : vector<16x128xf32>
    %135 = arith.negf %134 : vector<16x128xf32>
    %136 = math.exp %135 : vector<16x128xf32>
    %cst_67 = arith.constant 1.000000e+00 : f32
    %137 = vector.broadcast %cst_67 : f32 to vector<16x128xf32>
    %138 = arith.addf %137, %136 : vector<16x128xf32>
    %139 = arith.divf %137, %138 : vector<16x128xf32>
    %140 = arith.mulf %132, %139 : vector<16x128xf32>
    %141 = arith.truncf %140 : vector<16x128xf32> to vector<16x128xbf16>
    %c0_68 = arith.constant 0 : index
    %c0_69 = arith.constant 0 : index
    %142 = vector.load %arg8[%c0_68, %c0_69] : memref<128x32xbf16, #tpu.memory_space<vmem>>, vector<128x32xbf16>
    %cst_70 = arith.constant dense<0.000000e+00> : vector<16x32xf32>
    %143 = tpu.matmul %141, %142, %cst_70 {dimension_numbers = #tpu.dot_dimension_numbers<[1], [0], [0], [1], [0, 0, 1, 1], [], []>} : vector<16x128xbf16>, vector<128x32xbf16>, vector<16x32xf32> -> vector<16x32xf32>
    %144 = vector.broadcast %15 : vector<1x32xf32> to vector<16x32xf32>
    %145 = arith.addf %143, %144 : vector<16x32xf32>
    %146 = arith.addf %105, %145 : vector<16x32xf32>
    %147 = vector.shape_cast %146 : vector<16x32xf32> to vector<2x8x32xf32>
    %148 = tpu.transpose %147, [1, 0, 2] : vector<2x8x32xf32> -> vector<8x2x32xf32>
    %c0_71 = arith.constant 0 : index
    %c0_72 = arith.constant 0 : index
    %c0_73 = arith.constant 0 : index
    %149 = vector.load %arg14[%c0_71, %c0_72, %c0_73] : memref<8x2x32xf32, #tpu.memory_space<vmem>>, vector<8x2x32xf32>
    tpu.vector_store %arg14[%c0_71, %c0_72, %c0_73], %148 {strides = array<i32>} : memref<8x2x32xf32, #tpu.memory_space<vmem>>, vector<8x2x32xf32>,
    return
  }
  func.func @transform_0(%arg0: i32) -> (i32, i32, i32) {
    %c0_i32 = arith.constant 0 : i32
    %c0_i32_0 = arith.constant 0 : i32
    %c0_i32_1 = arith.constant 0 : i32
    return %c0_i32, %arg0, %c0_i32_0 : i32, i32, i32
  }
  func.func @transform_1(%arg0: i32) -> (i32, i32, i32) {
    %c0_i32 = arith.constant 0 : i32
    %c0_i32_0 = arith.constant 0 : i32
    %c0_i32_1 = arith.constant 0 : i32
    return %c0_i32, %arg0, %c0_i32_0 : i32, i32, i32
  }
  func.func @transform_2(%arg0: i32) -> (i32, i32) {
    %c0_i32 = arith.constant 0 : i32
    %c0_i32_0 = arith.constant 0 : i32
    %c0_i32_1 = arith.constant 0 : i32
    return %c0_i32, %c0_i32_0 : i32, i32
  }
  func.func @transform_3(%arg0: i32) -> (i32, i32) {
    %c0_i32 = arith.constant 0 : i32
    %c0_i32_0 = arith.constant 0 : i32
    %c0_i32_1 = arith.constant 0 : i32
    return %c0_i32, %c0_i32_0 : i32, i32
  }
  func.func @transform_4(%arg0: i32) -> (i32, i32) {
    %c0_i32 = arith.constant 0 : i32
    %c0_i32_0 = arith.constant 0 : i32
    %c0_i32_1 = arith.constant 0 : i32
    return %c0_i32, %c0_i32_0 : i32, i32
  }
  func.func @transform_5(%arg0: i32) -> (i32, i32) {
    %c0_i32 = arith.constant 0 : i32
    %c0_i32_0 = arith.constant 0 : i32
    %c0_i32_1 = arith.constant 0 : i32
    return %c0_i32, %c0_i32_0 : i32, i32
  }
  func.func @transform_6(%arg0: i32) -> (i32, i32) {
    %c0_i32 = arith.constant 0 : i32
    %c0_i32_0 = arith.constant 0 : i32
    %c0_i32_1 = arith.constant 0 : i32
    return %c0_i32, %c0_i32_0 : i32, i32
  }
  func.func @transform_7(%arg0: i32) -> (i32, i32) {
    %c0_i32 = arith.constant 0 : i32
    %c0_i32_0 = arith.constant 0 : i32
    %c0_i32_1 = arith.constant 0 : i32
    return %c0_i32, %c0_i32_0 : i32, i32
  }
  func.func @transform_8(%arg0: i32) -> (i32, i32) {
    %c0_i32 = arith.constant 0 : i32
    %c0_i32_0 = arith.constant 0 : i32
    %c0_i32_1 = arith.constant 0 : i32
    return %c0_i32, %c0_i32_0 : i32, i32
  }
  func.func @transform_9(%arg0: i32) -> (i32, i32) {
    %c0_i32 = arith.constant 0 : i32
    %c0_i32_0 = arith.constant 0 : i32
    %c0_i32_1 = arith.constant 0 : i32
    return %c0_i32, %c0_i32_0 : i32, i32
  }
  func.func @transform_10(%arg0: i32) -> (i32, i32) {
    %c0_i32 = arith.constant 0 : i32
    %c0_i32_0 = arith.constant 0 : i32
    %c0_i32_1 = arith.constant 0 : i32
    return %c0_i32, %c0_i32_0 : i32, i32
  }
  func.func @transform_11(%arg0: i32) -> (i32, i32) {
    %c0_i32 = arith.constant 0 : i32
    %c0_i32_0 = arith.constant 0 : i32
    %c0_i32_1 = arith.constant 0 : i32
    return %c0_i32, %c0_i32_0 : i32, i32
  }
  func.func @transform_12(%arg0: i32) -> (i32, i32) {
    %c0_i32 = arith.constant 0 : i32
    %c0_i32_0 = arith.constant 0 : i32
    %c0_i32_1 = arith.constant 0 : i32
    return %c0_i32, %c0_i32_0 : i32, i32
  }
  func.func @transform_13(%arg0: i32) -> (i32, i32, i32) {
    %c0_i32 = arith.constant 0 : i32
    %c0_i32_0 = arith.constant 0 : i32
    %c0_i32_1 = arith.constant 0 : i32
    return %c0_i32, %arg0, %c0_i32_0 : i32, i32, i32
  }
}

module attributes {stable_mosaic.version = 11 : i64} {
  func.func @_cross_attn_kernel(%arg0: i32, %arg1: memref<2x8x32xf32, #tpu.memory_space<vmem>>, %arg2: memref<2x16x32xf32, #tpu.memory_space<vmem>>, %arg3: memref<32x32xbf16, #tpu.memory_space<vmem>>, %arg4: memref<32x32xbf16, #tpu.memory_space<vmem>>, %arg5: memref<32x32xbf16, #tpu.memory_space<vmem>>, %arg6: memref<32x32xbf16, #tpu.memory_space<vmem>>, %arg7: memref<32x128xbf16, #tpu.memory_space<vmem>>, %arg8: memref<128x32xbf16, #tpu.memory_space<vmem>>, %arg9: memref<3x32xf32, #tpu.memory_space<vmem>>, %arg10: memref<1x32xf32, #tpu.memory_space<vmem>>, %arg11: memref<2x32xf32, #tpu.memory_space<vmem>>, %arg12: memref<1x128xf32, #tpu.memory_space<vmem>>, %arg13: memref<1x32xf32, #tpu.memory_space<vmem>>, %arg14: memref<2x8x32xf32, #tpu.memory_space<vmem>>, %arg15: memref<2x8x32xf32, #tpu.memory_space<vmem>>) attributes {dimension_semantics = [#tpu.dimension_semantics<parallel>], iteration_bounds = array<i64: 1>, scalar_prefetch = 0 : i64, scratch_operands = 1 : i64, tpu.core_type = #tpu.core_type<tc>, window_params = [{transform_indices = @transform_0, window_bounds = array<i64: 2, 8, 32>}, {transform_indices = @transform_1, window_bounds = array<i64: 2, 16, 32>}, {pipeline_mode = #tpu.pipeline_mode<synchronous>, transform_indices = @transform_2, window_bounds = array<i64: 32, 32>}, {pipeline_mode = #tpu.pipeline_mode<synchronous>, transform_indices = @transform_3, window_bounds = array<i64: 32, 32>}, {pipeline_mode = #tpu.pipeline_mode<synchronous>, transform_indices = @transform_4, window_bounds = array<i64: 32, 32>}, {pipeline_mode = #tpu.pipeline_mode<synchronous>, transform_indices = @transform_5, window_bounds = array<i64: 32, 32>}, {pipeline_mode = #tpu.pipeline_mode<synchronous>, transform_indices = @transform_6, window_bounds = array<i64: 32, 128>}, {pipeline_mode = #tpu.pipeline_mode<synchronous>, transform_indices = @transform_7, window_bounds = array<i64: 128, 32>}, {pipeline_mode = #tpu.pipeline_mode<synchronous>, transform_indices = @transform_8, window_bounds = array<i64: 3, 32>}, {pipeline_mode = #tpu.pipeline_mode<synchronous>, transform_indices = @transform_9, window_bounds = array<i64: 1, 32>}, {pipeline_mode = #tpu.pipeline_mode<synchronous>, transform_indices = @transform_10, window_bounds = array<i64: 2, 32>}, {pipeline_mode = #tpu.pipeline_mode<synchronous>, transform_indices = @transform_11, window_bounds = array<i64: 1, 128>}, {pipeline_mode = #tpu.pipeline_mode<synchronous>, transform_indices = @transform_12, window_bounds = array<i64: 1, 32>}, {transform_indices = @transform_13, window_bounds = array<i64: 2, 8, 32>}]} {
    %c0 = arith.constant 0 : index
    %c0_0 = arith.constant 0 : index
    %c0_1 = arith.constant 0 : index
    %0 = vector.load %arg1[%c0, %c0_0, %c0_1] : memref<2x8x32xf32, #tpu.memory_space<vmem>>, vector<2x8x32xf32>
    %c0_2 = arith.constant 0 : index
    %c0_3 = arith.constant 0 : index
    %c0_4 = arith.constant 0 : index
    %1 = vector.load %arg2[%c0_2, %c0_3, %c0_4] : memref<2x16x32xf32, #tpu.memory_space<vmem>>, vector<2x16x32xf32>
    %2 = vector.shape_cast %0 : vector<2x8x32xf32> to vector<16x32xf32>
    %3 = arith.truncf %2 : vector<16x32xf32> to vector<16x32xbf16>
    %4 = vector.shape_cast %1 : vector<2x16x32xf32> to vector<32x32xf32>
    %5 = arith.truncf %4 : vector<32x32xf32> to vector<32x32xbf16>
    %c0_5 = arith.constant 0 : index
    %c0_6 = arith.constant 0 : index
    %6 = vector.load %arg9[%c0_5, %c0_6] : memref<3x32xf32, #tpu.memory_space<vmem>>, vector<1x32xf32>
    %c1 = arith.constant 1 : index
    %c0_7 = arith.constant 0 : index
    %7 = vector.load %arg9[%c1, %c0_7] : memref<3x32xf32, #tpu.memory_space<vmem>>, vector<1x32xf32>
    %c2 = arith.constant 2 : index
    %c0_8 = arith.constant 0 : index
    %8 = vector.load %arg9[%c2, %c0_8] : memref<3x32xf32, #tpu.memory_space<vmem>>, vector<1x32xf32>
    %c0_9 = arith.constant 0 : index
    %c0_10 = arith.constant 0 : index
    %9 = vector.load %arg10[%c0_9, %c0_10] : memref<1x32xf32, #tpu.memory_space<vmem>>, vector<1x32xf32>
    %c0_11 = arith.constant 0 : index
    %c0_12 = arith.constant 0 : index
    %10 = vector.load %arg11[%c0_11, %c0_12] : memref<2x32xf32, #tpu.memory_space<vmem>>, vector<1x32xf32>
    %c1_13 = arith.constant 1 : index
    %c0_14 = arith.constant 0 : index
    %11 = vector.load %arg11[%c1_13, %c0_14] : memref<2x32xf32, #tpu.memory_space<vmem>>, vector<1x32xf32>
    %c0_15 = arith.constant 0 : index
    %c0_16 = arith.constant 0 : index
    %12 = vector.load %arg12[%c0_15, %c0_16] : memref<1x128xf32, #tpu.memory_space<vmem>>, vector<1x128xf32>
    %c0_17 = arith.constant 0 : index
    %c0_18 = arith.constant 0 : index
    %13 = vector.load %arg13[%c0_17, %c0_18] : memref<1x32xf32, #tpu.memory_space<vmem>>, vector<1x32xf32>
    %c0_19 = arith.constant 0 : index
    %c0_20 = arith.constant 0 : index
    %14 = vector.load %arg3[%c0_19, %c0_20] : memref<32x32xbf16, #tpu.memory_space<vmem>>, vector<32x32xbf16>
    %cst = arith.constant dense<0.000000e+00> : vector<16x32xf32>
    %15 = tpu.matmul %3, %14, %cst {dimension_numbers = #tpu.dot_dimension_numbers<[1], [0], [0], [1], [0, 0, 1, 1], [], []>} : vector<16x32xbf16>, vector<32x32xbf16>, vector<16x32xf32> -> vector<16x32xf32>
    %16 = vector.broadcast %6 : vector<1x32xf32> to vector<16x32xf32>
    %17 = arith.addf %15, %16 : vector<16x32xf32>
    %18 = arith.truncf %17 : vector<16x32xf32> to vector<16x32xbf16>
    %19 = vector.shape_cast %18 : vector<16x32xbf16> to vector<2x8x32xbf16>
    %c0_21 = arith.constant 0 : index
    %c0_22 = arith.constant 0 : index
    %20 = vector.load %arg4[%c0_21, %c0_22] : memref<32x32xbf16, #tpu.memory_space<vmem>>, vector<32x32xbf16>
    %cst_23 = arith.constant dense<0.000000e+00> : vector<32x32xf32>
    %21 = tpu.matmul %5, %20, %cst_23 {dimension_numbers = #tpu.dot_dimension_numbers<[1], [0], [0], [1], [0, 0, 1, 1], [], []>} : vector<32x32xbf16>, vector<32x32xbf16>, vector<32x32xf32> -> vector<32x32xf32>
    %22 = vector.broadcast %7 : vector<1x32xf32> to vector<32x32xf32>
    %23 = arith.addf %21, %22 : vector<32x32xf32>
    %24 = arith.truncf %23 : vector<32x32xf32> to vector<32x32xbf16>
    %25 = vector.shape_cast %24 : vector<32x32xbf16> to vector<2x16x32xbf16>
    %c0_24 = arith.constant 0 : index
    %c0_25 = arith.constant 0 : index
    %26 = vector.load %arg5[%c0_24, %c0_25] : memref<32x32xbf16, #tpu.memory_space<vmem>>, vector<32x32xbf16>
    %cst_26 = arith.constant dense<0.000000e+00> : vector<32x32xf32>
    %27 = tpu.matmul %5, %26, %cst_26 {dimension_numbers = #tpu.dot_dimension_numbers<[1], [0], [0], [1], [0, 0, 1, 1], [], []>} : vector<32x32xbf16>, vector<32x32xbf16>, vector<32x32xf32> -> vector<32x32xf32>
    %28 = vector.broadcast %8 : vector<1x32xf32> to vector<32x32xf32>
    %29 = arith.addf %27, %28 : vector<32x32xf32>
    %30 = arith.truncf %29 : vector<32x32xf32> to vector<32x32xbf16>
    %31 = vector.shape_cast %30 : vector<32x32xbf16> to vector<2x16x32xbf16>
    %32 = vector.extract_strided_slice %19 {offsets = [0, 0, 0], sizes = [2, 8, 8], strides = [1, 1, 1]} : vector<2x8x32xbf16> to vector<2x8x8xbf16>
    %33 = vector.extract_strided_slice %25 {offsets = [0, 0, 0], sizes = [2, 16, 8], strides = [1, 1, 1]} : vector<2x16x32xbf16> to vector<2x16x8xbf16>
    "tpu.trace_start"() <{level = 10 : i32, message = "bqd,bkd->bqk"}> : () -> ()
    %cst_27 = arith.constant dense<0.000000e+00> : vector<2x8x16xf32>
    %34 = tpu.matmul %32, %33, %cst_27 {dimension_numbers = #tpu.dot_dimension_numbers<[2], [2], [1], [1], [0, 0, 0, 1, 1, 1], [0], [0]>} : vector<2x8x8xbf16>, vector<2x16x8xbf16>, vector<2x8x16xf32> -> vector<2x8x16xf32>
    "tpu.trace_stop"() : () -> ()
    %cst_28 = arith.constant dense<0xFF800000> : vector<2x8xf32>
    %35 = vector.multi_reduction <maximumf>, %34, %cst_28 [2] : vector<2x8x16xf32> to vector<2x8xf32>
    %36 = vector.shape_cast %35 : vector<2x8xf32> to vector<2x8x1xf32>
    %37 = vector.broadcast %36 : vector<2x8x1xf32> to vector<2x8x16xf32>
    %38 = arith.subf %34, %37 : vector<2x8x16xf32>
    %39 = math.exp %38 : vector<2x8x16xf32>
    %cst_29 = arith.constant dense<0.000000e+00> : vector<2x8xf32>
    %40 = vector.multi_reduction <add>, %39, %cst_29 [2] : vector<2x8x16xf32> to vector<2x8xf32>
    %41 = vector.shape_cast %40 : vector<2x8xf32> to vector<2x8x1xf32>
    %42 = vector.broadcast %41 : vector<2x8x1xf32> to vector<2x8x16xf32>
    %43 = arith.divf %39, %42 : vector<2x8x16xf32>
    %44 = arith.truncf %43 : vector<2x8x16xf32> to vector<2x8x16xbf16>
    %45 = vector.extract_strided_slice %31 {offsets = [0, 0, 0], sizes = [2, 16, 8], strides = [1, 1, 1]} : vector<2x16x32xbf16> to vector<2x16x8xbf16>
    "tpu.trace_start"() <{level = 10 : i32, message = "bqk,bkd->bqd"}> : () -> ()
    %cst_30 = arith.constant dense<0.000000e+00> : vector<2x8x8xf32>
    %46 = tpu.matmul %44, %45, %cst_30 {dimension_numbers = #tpu.dot_dimension_numbers<[2], [1], [1], [2], [0, 0, 0, 1, 1, 2], [0], [0]>} : vector<2x8x16xbf16>, vector<2x16x8xbf16>, vector<2x8x8xf32> -> vector<2x8x8xf32>
    "tpu.trace_stop"() : () -> ()
    %c0_31 = arith.constant 0 : index
    %c0_32 = arith.constant 0 : index
    %c0_33 = arith.constant 0 : index
    %47 = vector.load %arg15[%c0_31, %c0_32, %c0_33] : memref<2x8x32xf32, #tpu.memory_space<vmem>>, vector<2x8x8xf32>
    tpu.vector_store %arg15[%c0_31, %c0_32, %c0_33], %46 {strides = array<i32>} : memref<2x8x32xf32, #tpu.memory_space<vmem>>, vector<2x8x8xf32>,
    %48 = vector.extract_strided_slice %19 {offsets = [0, 0, 8], sizes = [2, 8, 8], strides = [1, 1, 1]} : vector<2x8x32xbf16> to vector<2x8x8xbf16>
    %49 = vector.extract_strided_slice %25 {offsets = [0, 0, 8], sizes = [2, 16, 8], strides = [1, 1, 1]} : vector<2x16x32xbf16> to vector<2x16x8xbf16>
    "tpu.trace_start"() <{level = 10 : i32, message = "bqd,bkd->bqk"}> : () -> ()
    %cst_34 = arith.constant dense<0.000000e+00> : vector<2x8x16xf32>
    %50 = tpu.matmul %48, %49, %cst_34 {dimension_numbers = #tpu.dot_dimension_numbers<[2], [2], [1], [1], [0, 0, 0, 1, 1, 1], [0], [0]>} : vector<2x8x8xbf16>, vector<2x16x8xbf16>, vector<2x8x16xf32> -> vector<2x8x16xf32>
    "tpu.trace_stop"() : () -> ()
    %cst_35 = arith.constant dense<0xFF800000> : vector<2x8xf32>
    %51 = vector.multi_reduction <maximumf>, %50, %cst_35 [2] : vector<2x8x16xf32> to vector<2x8xf32>
    %52 = vector.shape_cast %51 : vector<2x8xf32> to vector<2x8x1xf32>
    %53 = vector.broadcast %52 : vector<2x8x1xf32> to vector<2x8x16xf32>
    %54 = arith.subf %50, %53 : vector<2x8x16xf32>
    %55 = math.exp %54 : vector<2x8x16xf32>
    %cst_36 = arith.constant dense<0.000000e+00> : vector<2x8xf32>
    %56 = vector.multi_reduction <add>, %55, %cst_36 [2] : vector<2x8x16xf32> to vector<2x8xf32>
    %57 = vector.shape_cast %56 : vector<2x8xf32> to vector<2x8x1xf32>
    %58 = vector.broadcast %57 : vector<2x8x1xf32> to vector<2x8x16xf32>
    %59 = arith.divf %55, %58 : vector<2x8x16xf32>
    %60 = arith.truncf %59 : vector<2x8x16xf32> to vector<2x8x16xbf16>
    %61 = vector.extract_strided_slice %31 {offsets = [0, 0, 8], sizes = [2, 16, 8], strides = [1, 1, 1]} : vector<2x16x32xbf16> to vector<2x16x8xbf16>
    "tpu.trace_start"() <{level = 10 : i32, message = "bqk,bkd->bqd"}> : () -> ()
    %cst_37 = arith.constant dense<0.000000e+00> : vector<2x8x8xf32>
    %62 = tpu.matmul %60, %61, %cst_37 {dimension_numbers = #tpu.dot_dimension_numbers<[2], [1], [1], [2], [0, 0, 0, 1, 1, 2], [0], [0]>} : vector<2x8x16xbf16>, vector<2x16x8xbf16>, vector<2x8x8xf32> -> vector<2x8x8xf32>
    "tpu.trace_stop"() : () -> ()
    %c0_38 = arith.constant 0 : index
    %c0_39 = arith.constant 0 : index
    %c8 = arith.constant 8 : index
    %63 = vector.load %arg15[%c0_38, %c0_39, %c8] : memref<2x8x32xf32, #tpu.memory_space<vmem>>, vector<2x8x8xf32>
    tpu.vector_store %arg15[%c0_38, %c0_39, %c8], %62 {strides = array<i32>} : memref<2x8x32xf32, #tpu.memory_space<vmem>>, vector<2x8x8xf32>,
    %64 = vector.extract_strided_slice %19 {offsets = [0, 0, 16], sizes = [2, 8, 8], strides = [1, 1, 1]} : vector<2x8x32xbf16> to vector<2x8x8xbf16>
    %65 = vector.extract_strided_slice %25 {offsets = [0, 0, 16], sizes = [2, 16, 8], strides = [1, 1, 1]} : vector<2x16x32xbf16> to vector<2x16x8xbf16>
    "tpu.trace_start"() <{level = 10 : i32, message = "bqd,bkd->bqk"}> : () -> ()
    %cst_40 = arith.constant dense<0.000000e+00> : vector<2x8x16xf32>
    %66 = tpu.matmul %64, %65, %cst_40 {dimension_numbers = #tpu.dot_dimension_numbers<[2], [2], [1], [1], [0, 0, 0, 1, 1, 1], [0], [0]>} : vector<2x8x8xbf16>, vector<2x16x8xbf16>, vector<2x8x16xf32> -> vector<2x8x16xf32>
    "tpu.trace_stop"() : () -> ()
    %cst_41 = arith.constant dense<0xFF800000> : vector<2x8xf32>
    %67 = vector.multi_reduction <maximumf>, %66, %cst_41 [2] : vector<2x8x16xf32> to vector<2x8xf32>
    %68 = vector.shape_cast %67 : vector<2x8xf32> to vector<2x8x1xf32>
    %69 = vector.broadcast %68 : vector<2x8x1xf32> to vector<2x8x16xf32>
    %70 = arith.subf %66, %69 : vector<2x8x16xf32>
    %71 = math.exp %70 : vector<2x8x16xf32>
    %cst_42 = arith.constant dense<0.000000e+00> : vector<2x8xf32>
    %72 = vector.multi_reduction <add>, %71, %cst_42 [2] : vector<2x8x16xf32> to vector<2x8xf32>
    %73 = vector.shape_cast %72 : vector<2x8xf32> to vector<2x8x1xf32>
    %74 = vector.broadcast %73 : vector<2x8x1xf32> to vector<2x8x16xf32>
    %75 = arith.divf %71, %74 : vector<2x8x16xf32>
    %76 = arith.truncf %75 : vector<2x8x16xf32> to vector<2x8x16xbf16>
    %77 = vector.extract_strided_slice %31 {offsets = [0, 0, 16], sizes = [2, 16, 8], strides = [1, 1, 1]} : vector<2x16x32xbf16> to vector<2x16x8xbf16>
    "tpu.trace_start"() <{level = 10 : i32, message = "bqk,bkd->bqd"}> : () -> ()
    %cst_43 = arith.constant dense<0.000000e+00> : vector<2x8x8xf32>
    %78 = tpu.matmul %76, %77, %cst_43 {dimension_numbers = #tpu.dot_dimension_numbers<[2], [1], [1], [2], [0, 0, 0, 1, 1, 2], [0], [0]>} : vector<2x8x16xbf16>, vector<2x16x8xbf16>, vector<2x8x8xf32> -> vector<2x8x8xf32>
    "tpu.trace_stop"() : () -> ()
    %c0_44 = arith.constant 0 : index
    %c0_45 = arith.constant 0 : index
    %c16 = arith.constant 16 : index
    %79 = vector.load %arg15[%c0_44, %c0_45, %c16] : memref<2x8x32xf32, #tpu.memory_space<vmem>>, vector<2x8x8xf32>
    tpu.vector_store %arg15[%c0_44, %c0_45, %c16], %78 {strides = array<i32>} : memref<2x8x32xf32, #tpu.memory_space<vmem>>, vector<2x8x8xf32>,
    %80 = vector.extract_strided_slice %19 {offsets = [0, 0, 24], sizes = [2, 8, 8], strides = [1, 1, 1]} : vector<2x8x32xbf16> to vector<2x8x8xbf16>
    %81 = vector.extract_strided_slice %25 {offsets = [0, 0, 24], sizes = [2, 16, 8], strides = [1, 1, 1]} : vector<2x16x32xbf16> to vector<2x16x8xbf16>
    "tpu.trace_start"() <{level = 10 : i32, message = "bqd,bkd->bqk"}> : () -> ()
    %cst_46 = arith.constant dense<0.000000e+00> : vector<2x8x16xf32>
    %82 = tpu.matmul %80, %81, %cst_46 {dimension_numbers = #tpu.dot_dimension_numbers<[2], [2], [1], [1], [0, 0, 0, 1, 1, 1], [0], [0]>} : vector<2x8x8xbf16>, vector<2x16x8xbf16>, vector<2x8x16xf32> -> vector<2x8x16xf32>
    "tpu.trace_stop"() : () -> ()
    %cst_47 = arith.constant dense<0xFF800000> : vector<2x8xf32>
    %83 = vector.multi_reduction <maximumf>, %82, %cst_47 [2] : vector<2x8x16xf32> to vector<2x8xf32>
    %84 = vector.shape_cast %83 : vector<2x8xf32> to vector<2x8x1xf32>
    %85 = vector.broadcast %84 : vector<2x8x1xf32> to vector<2x8x16xf32>
    %86 = arith.subf %82, %85 : vector<2x8x16xf32>
    %87 = math.exp %86 : vector<2x8x16xf32>
    %cst_48 = arith.constant dense<0.000000e+00> : vector<2x8xf32>
    %88 = vector.multi_reduction <add>, %87, %cst_48 [2] : vector<2x8x16xf32> to vector<2x8xf32>
    %89 = vector.shape_cast %88 : vector<2x8xf32> to vector<2x8x1xf32>
    %90 = vector.broadcast %89 : vector<2x8x1xf32> to vector<2x8x16xf32>
    %91 = arith.divf %87, %90 : vector<2x8x16xf32>
    %92 = arith.truncf %91 : vector<2x8x16xf32> to vector<2x8x16xbf16>
    %93 = vector.extract_strided_slice %31 {offsets = [0, 0, 24], sizes = [2, 16, 8], strides = [1, 1, 1]} : vector<2x16x32xbf16> to vector<2x16x8xbf16>
    "tpu.trace_start"() <{level = 10 : i32, message = "bqk,bkd->bqd"}> : () -> ()
    %cst_49 = arith.constant dense<0.000000e+00> : vector<2x8x8xf32>
    %94 = tpu.matmul %92, %93, %cst_49 {dimension_numbers = #tpu.dot_dimension_numbers<[2], [1], [1], [2], [0, 0, 0, 1, 1, 2], [0], [0]>} : vector<2x8x16xbf16>, vector<2x16x8xbf16>, vector<2x8x8xf32> -> vector<2x8x8xf32>
    "tpu.trace_stop"() : () -> ()
    %c0_50 = arith.constant 0 : index
    %c0_51 = arith.constant 0 : index
    %c24 = arith.constant 24 : index
    %95 = vector.load %arg15[%c0_50, %c0_51, %c24] : memref<2x8x32xf32, #tpu.memory_space<vmem>>, vector<2x8x8xf32>
    tpu.vector_store %arg15[%c0_50, %c0_51, %c24], %94 {strides = array<i32>} : memref<2x8x32xf32, #tpu.memory_space<vmem>>, vector<2x8x8xf32>,
    %c0_52 = arith.constant 0 : index
    %c0_53 = arith.constant 0 : index
    %c0_54 = arith.constant 0 : index
    %96 = vector.load %arg15[%c0_52, %c0_53, %c0_54] : memref<2x8x32xf32, #tpu.memory_space<vmem>>, vector<2x8x32xf32>
    %97 = arith.truncf %96 : vector<2x8x32xf32> to vector<2x8x32xbf16>
    %98 = vector.shape_cast %97 : vector<2x8x32xbf16> to vector<16x32xbf16>
    %c0_55 = arith.constant 0 : index
    %c0_56 = arith.constant 0 : index
    %99 = vector.load %arg6[%c0_55, %c0_56] : memref<32x32xbf16, #tpu.memory_space<vmem>>, vector<32x32xbf16>
    %cst_57 = arith.constant dense<0.000000e+00> : vector<16x32xf32>
    %100 = tpu.matmul %98, %99, %cst_57 {dimension_numbers = #tpu.dot_dimension_numbers<[1], [0], [0], [1], [0, 0, 1, 1], [], []>} : vector<16x32xbf16>, vector<32x32xbf16>, vector<16x32xf32> -> vector<16x32xf32>
    %101 = arith.addf %2, %100 : vector<16x32xf32>
    %102 = vector.broadcast %9 : vector<1x32xf32> to vector<16x32xf32>
    %103 = arith.addf %101, %102 : vector<16x32xf32>
    %cst_58 = arith.constant dense<0.000000e+00> : vector<16xf32>
    %104 = vector.multi_reduction <add>, %103, %cst_58 [1] : vector<16x32xf32> to vector<16xf32>
    %105 = vector.shape_cast %104 : vector<16xf32> to vector<16x1xf32>
    %cst_59 = arith.constant 3.200000e+01 : f32
    %106 = vector.broadcast %cst_59 : f32 to vector<16x1xf32>
    %107 = arith.divf %105, %106 : vector<16x1xf32>
    %108 = vector.broadcast %107 : vector<16x1xf32> to vector<16x32xf32>
    %109 = arith.subf %103, %108 : vector<16x32xf32>
    %110 = arith.mulf %109, %109 : vector<16x32xf32>
    %cst_60 = arith.constant dense<0.000000e+00> : vector<16xf32>
    %111 = vector.multi_reduction <add>, %110, %cst_60 [1] : vector<16x32xf32> to vector<16xf32>
    %112 = vector.shape_cast %111 : vector<16xf32> to vector<16x1xf32>
    %cst_61 = arith.constant 3.200000e+01 : f32
    %113 = vector.broadcast %cst_61 : f32 to vector<16x1xf32>
    %114 = arith.divf %112, %113 : vector<16x1xf32>
    %115 = vector.broadcast %107 : vector<16x1xf32> to vector<16x32xf32>
    %116 = arith.subf %103, %115 : vector<16x32xf32>
    %cst_62 = arith.constant 9.99999974E-6 : f32
    %117 = vector.broadcast %cst_62 : f32 to vector<16x1xf32>
    %118 = arith.addf %114, %117 : vector<16x1xf32>
    %119 = math.rsqrt %118 : vector<16x1xf32>
    %120 = vector.broadcast %119 : vector<16x1xf32> to vector<16x32xf32>
    %121 = arith.mulf %116, %120 : vector<16x32xf32>
    %122 = vector.broadcast %10 : vector<1x32xf32> to vector<16x32xf32>
    %123 = arith.mulf %121, %122 : vector<16x32xf32>
    %124 = vector.broadcast %11 : vector<1x32xf32> to vector<16x32xf32>
    %125 = arith.addf %123, %124 : vector<16x32xf32>
    %126 = arith.truncf %125 : vector<16x32xf32> to vector<16x32xbf16>
    %c0_63 = arith.constant 0 : index
    %c0_64 = arith.constant 0 : index
    %127 = vector.load %arg7[%c0_63, %c0_64] : memref<32x128xbf16, #tpu.memory_space<vmem>>, vector<32x128xbf16>
    %cst_65 = arith.constant dense<0.000000e+00> : vector<16x128xf32>
    %128 = tpu.matmul %126, %127, %cst_65 {dimension_numbers = #tpu.dot_dimension_numbers<[1], [0], [0], [1], [0, 0, 1, 1], [], []>} : vector<16x32xbf16>, vector<32x128xbf16>, vector<16x128xf32> -> vector<16x128xf32>
    %129 = vector.broadcast %12 : vector<1x128xf32> to vector<16x128xf32>
    %130 = arith.addf %128, %129 : vector<16x128xf32>
    %cst_66 = arith.constant 1.702000e+00 : f32
    %131 = vector.broadcast %cst_66 : f32 to vector<16x128xf32>
    %132 = arith.mulf %131, %130 : vector<16x128xf32>
    %133 = arith.negf %132 : vector<16x128xf32>
    %134 = math.exp %133 : vector<16x128xf32>
    %cst_67 = arith.constant 1.000000e+00 : f32
    %135 = vector.broadcast %cst_67 : f32 to vector<16x128xf32>
    %136 = arith.addf %135, %134 : vector<16x128xf32>
    %137 = arith.divf %135, %136 : vector<16x128xf32>
    %138 = arith.mulf %130, %137 : vector<16x128xf32>
    %139 = arith.truncf %138 : vector<16x128xf32> to vector<16x128xbf16>
    %c0_68 = arith.constant 0 : index
    %c0_69 = arith.constant 0 : index
    %140 = vector.load %arg8[%c0_68, %c0_69] : memref<128x32xbf16, #tpu.memory_space<vmem>>, vector<128x32xbf16>
    %cst_70 = arith.constant dense<0.000000e+00> : vector<16x32xf32>
    %141 = tpu.matmul %139, %140, %cst_70 {dimension_numbers = #tpu.dot_dimension_numbers<[1], [0], [0], [1], [0, 0, 1, 1], [], []>} : vector<16x128xbf16>, vector<128x32xbf16>, vector<16x32xf32> -> vector<16x32xf32>
    %142 = vector.broadcast %13 : vector<1x32xf32> to vector<16x32xf32>
    %143 = arith.addf %141, %142 : vector<16x32xf32>
    %144 = arith.addf %103, %143 : vector<16x32xf32>
    %145 = vector.shape_cast %144 : vector<16x32xf32> to vector<2x8x32xf32>
    %c0_71 = arith.constant 0 : index
    %c0_72 = arith.constant 0 : index
    %c0_73 = arith.constant 0 : index
    %146 = vector.load %arg14[%c0_71, %c0_72, %c0_73] : memref<2x8x32xf32, #tpu.memory_space<vmem>>, vector<2x8x32xf32>
    tpu.vector_store %arg14[%c0_71, %c0_72, %c0_73], %145 {strides = array<i32>} : memref<2x8x32xf32, #tpu.memory_space<vmem>>, vector<2x8x32xf32>,
    return
  }
  func.func @transform_0(%arg0: i32) -> (i32, i32, i32) {
    %c0_i32 = arith.constant 0 : i32
    %c0_i32_0 = arith.constant 0 : i32
    %c0_i32_1 = arith.constant 0 : i32
    return %arg0, %c0_i32, %c0_i32_0 : i32, i32, i32
  }
  func.func @transform_1(%arg0: i32) -> (i32, i32, i32) {
    %c0_i32 = arith.constant 0 : i32
    %c0_i32_0 = arith.constant 0 : i32
    %c0_i32_1 = arith.constant 0 : i32
    return %arg0, %c0_i32, %c0_i32_0 : i32, i32, i32
  }
  func.func @transform_2(%arg0: i32) -> (i32, i32) {
    %c0_i32 = arith.constant 0 : i32
    %c0_i32_0 = arith.constant 0 : i32
    %c0_i32_1 = arith.constant 0 : i32
    return %c0_i32, %c0_i32_0 : i32, i32
  }
  func.func @transform_3(%arg0: i32) -> (i32, i32) {
    %c0_i32 = arith.constant 0 : i32
    %c0_i32_0 = arith.constant 0 : i32
    %c0_i32_1 = arith.constant 0 : i32
    return %c0_i32, %c0_i32_0 : i32, i32
  }
  func.func @transform_4(%arg0: i32) -> (i32, i32) {
    %c0_i32 = arith.constant 0 : i32
    %c0_i32_0 = arith.constant 0 : i32
    %c0_i32_1 = arith.constant 0 : i32
    return %c0_i32, %c0_i32_0 : i32, i32
  }
  func.func @transform_5(%arg0: i32) -> (i32, i32) {
    %c0_i32 = arith.constant 0 : i32
    %c0_i32_0 = arith.constant 0 : i32
    %c0_i32_1 = arith.constant 0 : i32
    return %c0_i32, %c0_i32_0 : i32, i32
  }
  func.func @transform_6(%arg0: i32) -> (i32, i32) {
    %c0_i32 = arith.constant 0 : i32
    %c0_i32_0 = arith.constant 0 : i32
    %c0_i32_1 = arith.constant 0 : i32
    return %c0_i32, %c0_i32_0 : i32, i32
  }
  func.func @transform_7(%arg0: i32) -> (i32, i32) {
    %c0_i32 = arith.constant 0 : i32
    %c0_i32_0 = arith.constant 0 : i32
    %c0_i32_1 = arith.constant 0 : i32
    return %c0_i32, %c0_i32_0 : i32, i32
  }
  func.func @transform_8(%arg0: i32) -> (i32, i32) {
    %c0_i32 = arith.constant 0 : i32
    %c0_i32_0 = arith.constant 0 : i32
    %c0_i32_1 = arith.constant 0 : i32
    return %c0_i32, %c0_i32_0 : i32, i32
  }
  func.func @transform_9(%arg0: i32) -> (i32, i32) {
    %c0_i32 = arith.constant 0 : i32
    %c0_i32_0 = arith.constant 0 : i32
    %c0_i32_1 = arith.constant 0 : i32
    return %c0_i32, %c0_i32_0 : i32, i32
  }
  func.func @transform_10(%arg0: i32) -> (i32, i32) {
    %c0_i32 = arith.constant 0 : i32
    %c0_i32_0 = arith.constant 0 : i32
    %c0_i32_1 = arith.constant 0 : i32
    return %c0_i32, %c0_i32_0 : i32, i32
  }
  func.func @transform_11(%arg0: i32) -> (i32, i32) {
    %c0_i32 = arith.constant 0 : i32
    %c0_i32_0 = arith.constant 0 : i32
    %c0_i32_1 = arith.constant 0 : i32
    return %c0_i32, %c0_i32_0 : i32, i32
  }
  func.func @transform_12(%arg0: i32) -> (i32, i32) {
    %c0_i32 = arith.constant 0 : i32
    %c0_i32_0 = arith.constant 0 : i32
    %c0_i32_1 = arith.constant 0 : i32
    return %c0_i32, %c0_i32_0 : i32, i32
  }
  func.func @transform_13(%arg0: i32) -> (i32, i32, i32) {
    %c0_i32 = arith.constant 0 : i32
    %c0_i32_0 = arith.constant 0 : i32
    %c0_i32_1 = arith.constant 0 : i32
    return %arg0, %c0_i32, %c0_i32_0 : i32, i32, i32
  }
}

module attributes {stable_mosaic.version = 11 : i64} {
  func.func @_cross_attn_kernel(%arg0: i32, %arg1: memref<2x8x32xf32, #tpu.memory_space<vmem>>, %arg2: memref<2x16x32xf32, #tpu.memory_space<vmem>>, %arg3: memref<32x32xbf16, #tpu.memory_space<vmem>>, %arg4: memref<32x32xbf16, #tpu.memory_space<vmem>>, %arg5: memref<32x32xbf16, #tpu.memory_space<vmem>>, %arg6: memref<32x32xbf16, #tpu.memory_space<vmem>>, %arg7: memref<32x128xbf16, #tpu.memory_space<vmem>>, %arg8: memref<128x32xbf16, #tpu.memory_space<vmem>>, %arg9: memref<3x32xf32, #tpu.memory_space<vmem>>, %arg10: memref<1x32xf32, #tpu.memory_space<vmem>>, %arg11: memref<2x32xf32, #tpu.memory_space<vmem>>, %arg12: memref<1x128xf32, #tpu.memory_space<vmem>>, %arg13: memref<1x32xf32, #tpu.memory_space<vmem>>, %arg14: memref<2x8x32xf32, #tpu.memory_space<vmem>>, %arg15: memref<2x8x32xf32, #tpu.memory_space<vmem>>) attributes {dimension_semantics = [#tpu.dimension_semantics<parallel>], iteration_bounds = array<i64: 1>, scalar_prefetch = 0 : i64, scratch_operands = 1 : i64, tpu.core_type = #tpu.core_type<tc>, window_params = [{transform_indices = @transform_0, window_bounds = array<i64: 2, 8, 32>}, {transform_indices = @transform_1, window_bounds = array<i64: 2, 16, 32>}, {pipeline_mode = #tpu.pipeline_mode<synchronous>, transform_indices = @transform_2, window_bounds = array<i64: 32, 32>}, {pipeline_mode = #tpu.pipeline_mode<synchronous>, transform_indices = @transform_3, window_bounds = array<i64: 32, 32>}, {pipeline_mode = #tpu.pipeline_mode<synchronous>, transform_indices = @transform_4, window_bounds = array<i64: 32, 32>}, {pipeline_mode = #tpu.pipeline_mode<synchronous>, transform_indices = @transform_5, window_bounds = array<i64: 32, 32>}, {pipeline_mode = #tpu.pipeline_mode<synchronous>, transform_indices = @transform_6, window_bounds = array<i64: 32, 128>}, {pipeline_mode = #tpu.pipeline_mode<synchronous>, transform_indices = @transform_7, window_bounds = array<i64: 128, 32>}, {pipeline_mode = #tpu.pipeline_mode<synchronous>, transform_indices = @transform_8, window_bounds = array<i64: 3, 32>}, {pipeline_mode = #tpu.pipeline_mode<synchronous>, transform_indices = @transform_9, window_bounds = array<i64: 1, 32>}, {pipeline_mode = #tpu.pipeline_mode<synchronous>, transform_indices = @transform_10, window_bounds = array<i64: 2, 32>}, {pipeline_mode = #tpu.pipeline_mode<synchronous>, transform_indices = @transform_11, window_bounds = array<i64: 1, 128>}, {pipeline_mode = #tpu.pipeline_mode<synchronous>, transform_indices = @transform_12, window_bounds = array<i64: 1, 32>}, {transform_indices = @transform_13, window_bounds = array<i64: 2, 8, 32>}]} {
    %c0 = arith.constant 0 : index
    %c0_0 = arith.constant 0 : index
    %c0_1 = arith.constant 0 : index
    %0 = vector.load %arg1[%c0, %c0_0, %c0_1] : memref<2x8x32xf32, #tpu.memory_space<vmem>>, vector<2x8x32xf32>
    %c0_2 = arith.constant 0 : index
    %c0_3 = arith.constant 0 : index
    %c0_4 = arith.constant 0 : index
    %1 = vector.load %arg2[%c0_2, %c0_3, %c0_4] : memref<2x16x32xf32, #tpu.memory_space<vmem>>, vector<2x16x32xf32>
    %2 = vector.shape_cast %0 : vector<2x8x32xf32> to vector<16x32xf32>
    %3 = arith.truncf %2 : vector<16x32xf32> to vector<16x32xbf16>
    %4 = vector.shape_cast %1 : vector<2x16x32xf32> to vector<32x32xf32>
    %5 = arith.truncf %4 : vector<32x32xf32> to vector<32x32xbf16>
    %c0_5 = arith.constant 0 : index
    %c0_6 = arith.constant 0 : index
    %6 = vector.load %arg9[%c0_5, %c0_6] : memref<3x32xf32, #tpu.memory_space<vmem>>, vector<1x32xf32>
    %c1 = arith.constant 1 : index
    %c0_7 = arith.constant 0 : index
    %7 = vector.load %arg9[%c1, %c0_7] : memref<3x32xf32, #tpu.memory_space<vmem>>, vector<1x32xf32>
    %c2 = arith.constant 2 : index
    %c0_8 = arith.constant 0 : index
    %8 = vector.load %arg9[%c2, %c0_8] : memref<3x32xf32, #tpu.memory_space<vmem>>, vector<1x32xf32>
    %c0_9 = arith.constant 0 : index
    %c0_10 = arith.constant 0 : index
    %9 = vector.load %arg10[%c0_9, %c0_10] : memref<1x32xf32, #tpu.memory_space<vmem>>, vector<1x32xf32>
    %c0_11 = arith.constant 0 : index
    %c0_12 = arith.constant 0 : index
    %10 = vector.load %arg11[%c0_11, %c0_12] : memref<2x32xf32, #tpu.memory_space<vmem>>, vector<1x32xf32>
    %c1_13 = arith.constant 1 : index
    %c0_14 = arith.constant 0 : index
    %11 = vector.load %arg11[%c1_13, %c0_14] : memref<2x32xf32, #tpu.memory_space<vmem>>, vector<1x32xf32>
    %c0_15 = arith.constant 0 : index
    %c0_16 = arith.constant 0 : index
    %12 = vector.load %arg12[%c0_15, %c0_16] : memref<1x128xf32, #tpu.memory_space<vmem>>, vector<1x128xf32>
    %c0_17 = arith.constant 0 : index
    %c0_18 = arith.constant 0 : index
    %13 = vector.load %arg13[%c0_17, %c0_18] : memref<1x32xf32, #tpu.memory_space<vmem>>, vector<1x32xf32>
    %c0_19 = arith.constant 0 : index
    %c0_20 = arith.constant 0 : index
    %14 = vector.load %arg3[%c0_19, %c0_20] : memref<32x32xbf16, #tpu.memory_space<vmem>>, vector<32x32xbf16>
    %cst = arith.constant dense<0.000000e+00> : vector<16x32xf32>
    %15 = tpu.matmul %3, %14, %cst {dimension_numbers = #tpu.dot_dimension_numbers<[1], [0], [0], [1], [0, 0, 1, 1], [], []>} : vector<16x32xbf16>, vector<32x32xbf16>, vector<16x32xf32> -> vector<16x32xf32>
    %16 = vector.broadcast %6 : vector<1x32xf32> to vector<16x32xf32>
    %17 = arith.addf %15, %16 : vector<16x32xf32>
    %18 = arith.truncf %17 : vector<16x32xf32> to vector<16x32xbf16>
    %19 = vector.shape_cast %18 : vector<16x32xbf16> to vector<2x8x32xbf16>
    %c0_21 = arith.constant 0 : index
    %c0_22 = arith.constant 0 : index
    %20 = vector.load %arg4[%c0_21, %c0_22] : memref<32x32xbf16, #tpu.memory_space<vmem>>, vector<32x32xbf16>
    %cst_23 = arith.constant dense<0.000000e+00> : vector<32x32xf32>
    %21 = tpu.matmul %5, %20, %cst_23 {dimension_numbers = #tpu.dot_dimension_numbers<[1], [0], [0], [1], [0, 0, 1, 1], [], []>} : vector<32x32xbf16>, vector<32x32xbf16>, vector<32x32xf32> -> vector<32x32xf32>
    %22 = vector.broadcast %7 : vector<1x32xf32> to vector<32x32xf32>
    %23 = arith.addf %21, %22 : vector<32x32xf32>
    %24 = arith.truncf %23 : vector<32x32xf32> to vector<32x32xbf16>
    %25 = vector.shape_cast %24 : vector<32x32xbf16> to vector<2x16x32xbf16>
    %c0_24 = arith.constant 0 : index
    %c0_25 = arith.constant 0 : index
    %26 = vector.load %arg5[%c0_24, %c0_25] : memref<32x32xbf16, #tpu.memory_space<vmem>>, vector<32x32xbf16>
    %cst_26 = arith.constant dense<0.000000e+00> : vector<32x32xf32>
    %27 = tpu.matmul %5, %26, %cst_26 {dimension_numbers = #tpu.dot_dimension_numbers<[1], [0], [0], [1], [0, 0, 1, 1], [], []>} : vector<32x32xbf16>, vector<32x32xbf16>, vector<32x32xf32> -> vector<32x32xf32>
    %28 = vector.broadcast %8 : vector<1x32xf32> to vector<32x32xf32>
    %29 = arith.addf %27, %28 : vector<32x32xf32>
    %30 = arith.truncf %29 : vector<32x32xf32> to vector<32x32xbf16>
    %31 = vector.shape_cast %30 : vector<32x32xbf16> to vector<2x16x32xbf16>
    %32 = vector.extract_strided_slice %19 {offsets = [0, 0, 0], sizes = [2, 8, 8], strides = [1, 1, 1]} : vector<2x8x32xbf16> to vector<2x8x8xbf16>
    %33 = vector.extract_strided_slice %25 {offsets = [0, 0, 0], sizes = [2, 16, 8], strides = [1, 1, 1]} : vector<2x16x32xbf16> to vector<2x16x8xbf16>
    "tpu.trace_start"() <{level = 10 : i32, message = "bqd,bkd->bqk"}> : () -> ()
    %cst_27 = arith.constant dense<0.000000e+00> : vector<2x8x16xf32>
    %34 = tpu.matmul %32, %33, %cst_27 {dimension_numbers = #tpu.dot_dimension_numbers<[2], [2], [1], [1], [0, 0, 0, 1, 1, 1], [0], [0]>} : vector<2x8x8xbf16>, vector<2x16x8xbf16>, vector<2x8x16xf32> -> vector<2x8x16xf32>
    "tpu.trace_stop"() : () -> ()
    %cst_28 = arith.constant dense<0xFF800000> : vector<2x8xf32>
    %35 = vector.multi_reduction <maximumf>, %34, %cst_28 [2] : vector<2x8x16xf32> to vector<2x8xf32>
    %36 = vector.shape_cast %35 : vector<2x8xf32> to vector<2x8x1xf32>
    %37 = vector.broadcast %36 : vector<2x8x1xf32> to vector<2x8x16xf32>
    %38 = arith.subf %34, %37 : vector<2x8x16xf32>
    %39 = math.exp %38 : vector<2x8x16xf32>
    %cst_29 = arith.constant dense<0.000000e+00> : vector<2x8xf32>
    %40 = vector.multi_reduction <add>, %39, %cst_29 [2] : vector<2x8x16xf32> to vector<2x8xf32>
    %41 = vector.shape_cast %40 : vector<2x8xf32> to vector<2x8x1xf32>
    %42 = vector.broadcast %41 : vector<2x8x1xf32> to vector<2x8x16xf32>
    %43 = arith.divf %39, %42 : vector<2x8x16xf32>
    %44 = arith.truncf %43 : vector<2x8x16xf32> to vector<2x8x16xbf16>
    %45 = vector.extract_strided_slice %31 {offsets = [0, 0, 0], sizes = [2, 16, 8], strides = [1, 1, 1]} : vector<2x16x32xbf16> to vector<2x16x8xbf16>
    "tpu.trace_start"() <{level = 10 : i32, message = "bqk,bkd->bqd"}> : () -> ()
    %cst_30 = arith.constant dense<0.000000e+00> : vector<2x8x8xf32>
    %46 = tpu.matmul %44, %45, %cst_30 {dimension_numbers = #tpu.dot_dimension_numbers<[2], [1], [1], [2], [0, 0, 0, 1, 1, 2], [0], [0]>} : vector<2x8x16xbf16>, vector<2x16x8xbf16>, vector<2x8x8xf32> -> vector<2x8x8xf32>
    "tpu.trace_stop"() : () -> ()
    %c0_31 = arith.constant 0 : index
    %c0_32 = arith.constant 0 : index
    %c0_33 = arith.constant 0 : index
    %47 = vector.load %arg15[%c0_31, %c0_32, %c0_33] : memref<2x8x32xf32, #tpu.memory_space<vmem>>, vector<2x8x8xf32>
    tpu.vector_store %arg15[%c0_31, %c0_32, %c0_33], %46 {strides = array<i32>} : memref<2x8x32xf32, #tpu.memory_space<vmem>>, vector<2x8x8xf32>,
    %48 = vector.extract_strided_slice %19 {offsets = [0, 0, 8], sizes = [2, 8, 8], strides = [1, 1, 1]} : vector<2x8x32xbf16> to vector<2x8x8xbf16>
    %49 = vector.extract_strided_slice %25 {offsets = [0, 0, 8], sizes = [2, 16, 8], strides = [1, 1, 1]} : vector<2x16x32xbf16> to vector<2x16x8xbf16>
    "tpu.trace_start"() <{level = 10 : i32, message = "bqd,bkd->bqk"}> : () -> ()
    %cst_34 = arith.constant dense<0.000000e+00> : vector<2x8x16xf32>
    %50 = tpu.matmul %48, %49, %cst_34 {dimension_numbers = #tpu.dot_dimension_numbers<[2], [2], [1], [1], [0, 0, 0, 1, 1, 1], [0], [0]>} : vector<2x8x8xbf16>, vector<2x16x8xbf16>, vector<2x8x16xf32> -> vector<2x8x16xf32>
    "tpu.trace_stop"() : () -> ()
    %cst_35 = arith.constant dense<0xFF800000> : vector<2x8xf32>
    %51 = vector.multi_reduction <maximumf>, %50, %cst_35 [2] : vector<2x8x16xf32> to vector<2x8xf32>
    %52 = vector.shape_cast %51 : vector<2x8xf32> to vector<2x8x1xf32>
    %53 = vector.broadcast %52 : vector<2x8x1xf32> to vector<2x8x16xf32>
    %54 = arith.subf %50, %53 : vector<2x8x16xf32>
    %55 = math.exp %54 : vector<2x8x16xf32>
    %cst_36 = arith.constant dense<0.000000e+00> : vector<2x8xf32>
    %56 = vector.multi_reduction <add>, %55, %cst_36 [2] : vector<2x8x16xf32> to vector<2x8xf32>
    %57 = vector.shape_cast %56 : vector<2x8xf32> to vector<2x8x1xf32>
    %58 = vector.broadcast %57 : vector<2x8x1xf32> to vector<2x8x16xf32>
    %59 = arith.divf %55, %58 : vector<2x8x16xf32>
    %60 = arith.truncf %59 : vector<2x8x16xf32> to vector<2x8x16xbf16>
    %61 = vector.extract_strided_slice %31 {offsets = [0, 0, 8], sizes = [2, 16, 8], strides = [1, 1, 1]} : vector<2x16x32xbf16> to vector<2x16x8xbf16>
    "tpu.trace_start"() <{level = 10 : i32, message = "bqk,bkd->bqd"}> : () -> ()
    %cst_37 = arith.constant dense<0.000000e+00> : vector<2x8x8xf32>
    %62 = tpu.matmul %60, %61, %cst_37 {dimension_numbers = #tpu.dot_dimension_numbers<[2], [1], [1], [2], [0, 0, 0, 1, 1, 2], [0], [0]>} : vector<2x8x16xbf16>, vector<2x16x8xbf16>, vector<2x8x8xf32> -> vector<2x8x8xf32>
    "tpu.trace_stop"() : () -> ()
    %c0_38 = arith.constant 0 : index
    %c0_39 = arith.constant 0 : index
    %c8 = arith.constant 8 : index
    %63 = vector.load %arg15[%c0_38, %c0_39, %c8] : memref<2x8x32xf32, #tpu.memory_space<vmem>>, vector<2x8x8xf32>
    tpu.vector_store %arg15[%c0_38, %c0_39, %c8], %62 {strides = array<i32>} : memref<2x8x32xf32, #tpu.memory_space<vmem>>, vector<2x8x8xf32>,
    %64 = vector.extract_strided_slice %19 {offsets = [0, 0, 16], sizes = [2, 8, 8], strides = [1, 1, 1]} : vector<2x8x32xbf16> to vector<2x8x8xbf16>
    %65 = vector.extract_strided_slice %25 {offsets = [0, 0, 16], sizes = [2, 16, 8], strides = [1, 1, 1]} : vector<2x16x32xbf16> to vector<2x16x8xbf16>
    "tpu.trace_start"() <{level = 10 : i32, message = "bqd,bkd->bqk"}> : () -> ()
    %cst_40 = arith.constant dense<0.000000e+00> : vector<2x8x16xf32>
    %66 = tpu.matmul %64, %65, %cst_40 {dimension_numbers = #tpu.dot_dimension_numbers<[2], [2], [1], [1], [0, 0, 0, 1, 1, 1], [0], [0]>} : vector<2x8x8xbf16>, vector<2x16x8xbf16>, vector<2x8x16xf32> -> vector<2x8x16xf32>
    "tpu.trace_stop"() : () -> ()
    %cst_41 = arith.constant dense<0xFF800000> : vector<2x8xf32>
    %67 = vector.multi_reduction <maximumf>, %66, %cst_41 [2] : vector<2x8x16xf32> to vector<2x8xf32>
    %68 = vector.shape_cast %67 : vector<2x8xf32> to vector<2x8x1xf32>
    %69 = vector.broadcast %68 : vector<2x8x1xf32> to vector<2x8x16xf32>
    %70 = arith.subf %66, %69 : vector<2x8x16xf32>
    %71 = math.exp %70 : vector<2x8x16xf32>
    %cst_42 = arith.constant dense<0.000000e+00> : vector<2x8xf32>
    %72 = vector.multi_reduction <add>, %71, %cst_42 [2] : vector<2x8x16xf32> to vector<2x8xf32>
    %73 = vector.shape_cast %72 : vector<2x8xf32> to vector<2x8x1xf32>
    %74 = vector.broadcast %73 : vector<2x8x1xf32> to vector<2x8x16xf32>
    %75 = arith.divf %71, %74 : vector<2x8x16xf32>
    %76 = arith.truncf %75 : vector<2x8x16xf32> to vector<2x8x16xbf16>
    %77 = vector.extract_strided_slice %31 {offsets = [0, 0, 16], sizes = [2, 16, 8], strides = [1, 1, 1]} : vector<2x16x32xbf16> to vector<2x16x8xbf16>
    "tpu.trace_start"() <{level = 10 : i32, message = "bqk,bkd->bqd"}> : () -> ()
    %cst_43 = arith.constant dense<0.000000e+00> : vector<2x8x8xf32>
    %78 = tpu.matmul %76, %77, %cst_43 {dimension_numbers = #tpu.dot_dimension_numbers<[2], [1], [1], [2], [0, 0, 0, 1, 1, 2], [0], [0]>} : vector<2x8x16xbf16>, vector<2x16x8xbf16>, vector<2x8x8xf32> -> vector<2x8x8xf32>
    "tpu.trace_stop"() : () -> ()
    %c0_44 = arith.constant 0 : index
    %c0_45 = arith.constant 0 : index
    %c16 = arith.constant 16 : index
    %79 = vector.load %arg15[%c0_44, %c0_45, %c16] : memref<2x8x32xf32, #tpu.memory_space<vmem>>, vector<2x8x8xf32>
    tpu.vector_store %arg15[%c0_44, %c0_45, %c16], %78 {strides = array<i32>} : memref<2x8x32xf32, #tpu.memory_space<vmem>>, vector<2x8x8xf32>,
    %80 = vector.extract_strided_slice %19 {offsets = [0, 0, 24], sizes = [2, 8, 8], strides = [1, 1, 1]} : vector<2x8x32xbf16> to vector<2x8x8xbf16>
    %81 = vector.extract_strided_slice %25 {offsets = [0, 0, 24], sizes = [2, 16, 8], strides = [1, 1, 1]} : vector<2x16x32xbf16> to vector<2x16x8xbf16>
    "tpu.trace_start"() <{level = 10 : i32, message = "bqd,bkd->bqk"}> : () -> ()
    %cst_46 = arith.constant dense<0.000000e+00> : vector<2x8x16xf32>
    %82 = tpu.matmul %80, %81, %cst_46 {dimension_numbers = #tpu.dot_dimension_numbers<[2], [2], [1], [1], [0, 0, 0, 1, 1, 1], [0], [0]>} : vector<2x8x8xbf16>, vector<2x16x8xbf16>, vector<2x8x16xf32> -> vector<2x8x16xf32>
    "tpu.trace_stop"() : () -> ()
    %cst_47 = arith.constant dense<0xFF800000> : vector<2x8xf32>
    %83 = vector.multi_reduction <maximumf>, %82, %cst_47 [2] : vector<2x8x16xf32> to vector<2x8xf32>
    %84 = vector.shape_cast %83 : vector<2x8xf32> to vector<2x8x1xf32>
    %85 = vector.broadcast %84 : vector<2x8x1xf32> to vector<2x8x16xf32>
    %86 = arith.subf %82, %85 : vector<2x8x16xf32>
    %87 = math.exp %86 : vector<2x8x16xf32>
    %cst_48 = arith.constant dense<0.000000e+00> : vector<2x8xf32>
    %88 = vector.multi_reduction <add>, %87, %cst_48 [2] : vector<2x8x16xf32> to vector<2x8xf32>
    %89 = vector.shape_cast %88 : vector<2x8xf32> to vector<2x8x1xf32>
    %90 = vector.broadcast %89 : vector<2x8x1xf32> to vector<2x8x16xf32>
    %91 = arith.divf %87, %90 : vector<2x8x16xf32>
    %92 = arith.truncf %91 : vector<2x8x16xf32> to vector<2x8x16xbf16>
    %93 = vector.extract_strided_slice %31 {offsets = [0, 0, 24], sizes = [2, 16, 8], strides = [1, 1, 1]} : vector<2x16x32xbf16> to vector<2x16x8xbf16>
    "tpu.trace_start"() <{level = 10 : i32, message = "bqk,bkd->bqd"}> : () -> ()
    %cst_49 = arith.constant dense<0.000000e+00> : vector<2x8x8xf32>
    %94 = tpu.matmul %92, %93, %cst_49 {dimension_numbers = #tpu.dot_dimension_numbers<[2], [1], [1], [2], [0, 0, 0, 1, 1, 2], [0], [0]>} : vector<2x8x16xbf16>, vector<2x16x8xbf16>, vector<2x8x8xf32> -> vector<2x8x8xf32>
    "tpu.trace_stop"() : () -> ()
    %c0_50 = arith.constant 0 : index
    %c0_51 = arith.constant 0 : index
    %c24 = arith.constant 24 : index
    %95 = vector.load %arg15[%c0_50, %c0_51, %c24] : memref<2x8x32xf32, #tpu.memory_space<vmem>>, vector<2x8x8xf32>
    tpu.vector_store %arg15[%c0_50, %c0_51, %c24], %94 {strides = array<i32>} : memref<2x8x32xf32, #tpu.memory_space<vmem>>, vector<2x8x8xf32>,
    %c0_52 = arith.constant 0 : index
    %c0_53 = arith.constant 0 : index
    %c0_54 = arith.constant 0 : index
    %96 = vector.load %arg15[%c0_52, %c0_53, %c0_54] : memref<2x8x32xf32, #tpu.memory_space<vmem>>, vector<2x8x32xf32>
    %97 = arith.truncf %96 : vector<2x8x32xf32> to vector<2x8x32xbf16>
    %98 = vector.shape_cast %97 : vector<2x8x32xbf16> to vector<16x32xbf16>
    %c0_55 = arith.constant 0 : index
    %c0_56 = arith.constant 0 : index
    %99 = vector.load %arg6[%c0_55, %c0_56] : memref<32x32xbf16, #tpu.memory_space<vmem>>, vector<32x32xbf16>
    %cst_57 = arith.constant dense<0.000000e+00> : vector<16x32xf32>
    %100 = tpu.matmul %98, %99, %cst_57 {dimension_numbers = #tpu.dot_dimension_numbers<[1], [0], [0], [1], [0, 0, 1, 1], [], []>} : vector<16x32xbf16>, vector<32x32xbf16>, vector<16x32xf32> -> vector<16x32xf32>
    %101 = arith.addf %2, %100 : vector<16x32xf32>
    %102 = vector.broadcast %9 : vector<1x32xf32> to vector<16x32xf32>
    %103 = arith.addf %101, %102 : vector<16x32xf32>
    %cst_58 = arith.constant dense<0.000000e+00> : vector<16xf32>
    %104 = vector.multi_reduction <add>, %103, %cst_58 [1] : vector<16x32xf32> to vector<16xf32>
    %105 = vector.shape_cast %104 : vector<16xf32> to vector<16x1xf32>
    %cst_59 = arith.constant 3.200000e+01 : f32
    %106 = vector.broadcast %cst_59 : f32 to vector<16x1xf32>
    %107 = arith.divf %105, %106 : vector<16x1xf32>
    %108 = vector.broadcast %107 : vector<16x1xf32> to vector<16x32xf32>
    %109 = arith.subf %103, %108 : vector<16x32xf32>
    %110 = arith.mulf %109, %109 : vector<16x32xf32>
    %cst_60 = arith.constant dense<0.000000e+00> : vector<16xf32>
    %111 = vector.multi_reduction <add>, %110, %cst_60 [1] : vector<16x32xf32> to vector<16xf32>
    %112 = vector.shape_cast %111 : vector<16xf32> to vector<16x1xf32>
    %cst_61 = arith.constant 3.200000e+01 : f32
    %113 = vector.broadcast %cst_61 : f32 to vector<16x1xf32>
    %114 = arith.divf %112, %113 : vector<16x1xf32>
    %115 = vector.broadcast %107 : vector<16x1xf32> to vector<16x32xf32>
    %116 = arith.subf %103, %115 : vector<16x32xf32>
    %cst_62 = arith.constant 9.99999974E-6 : f32
    %117 = vector.broadcast %cst_62 : f32 to vector<16x1xf32>
    %118 = arith.addf %114, %117 : vector<16x1xf32>
    %119 = math.rsqrt %118 : vector<16x1xf32>
    %120 = vector.broadcast %119 : vector<16x1xf32> to vector<16x32xf32>
    %121 = arith.mulf %116, %120 : vector<16x32xf32>
    %122 = vector.broadcast %10 : vector<1x32xf32> to vector<16x32xf32>
    %123 = arith.mulf %121, %122 : vector<16x32xf32>
    %124 = vector.broadcast %11 : vector<1x32xf32> to vector<16x32xf32>
    %125 = arith.addf %123, %124 : vector<16x32xf32>
    %126 = arith.truncf %125 : vector<16x32xf32> to vector<16x32xbf16>
    %c0_63 = arith.constant 0 : index
    %c0_64 = arith.constant 0 : index
    %127 = vector.load %arg7[%c0_63, %c0_64] : memref<32x128xbf16, #tpu.memory_space<vmem>>, vector<32x128xbf16>
    %cst_65 = arith.constant dense<0.000000e+00> : vector<16x128xf32>
    %128 = tpu.matmul %126, %127, %cst_65 {dimension_numbers = #tpu.dot_dimension_numbers<[1], [0], [0], [1], [0, 0, 1, 1], [], []>} : vector<16x32xbf16>, vector<32x128xbf16>, vector<16x128xf32> -> vector<16x128xf32>
    %129 = vector.broadcast %12 : vector<1x128xf32> to vector<16x128xf32>
    %130 = arith.addf %128, %129 : vector<16x128xf32>
    %cst_66 = arith.constant 1.702000e+00 : f32
    %131 = vector.broadcast %cst_66 : f32 to vector<16x128xf32>
    %132 = arith.mulf %131, %130 : vector<16x128xf32>
    %133 = arith.negf %132 : vector<16x128xf32>
    %134 = math.exp %133 : vector<16x128xf32>
    %cst_67 = arith.constant 1.000000e+00 : f32
    %135 = vector.broadcast %cst_67 : f32 to vector<16x128xf32>
    %136 = arith.addf %135, %134 : vector<16x128xf32>
    %137 = arith.divf %135, %136 : vector<16x128xf32>
    %138 = arith.mulf %130, %137 : vector<16x128xf32>
    %139 = arith.truncf %138 : vector<16x128xf32> to vector<16x128xbf16>
    %c0_68 = arith.constant 0 : index
    %c0_69 = arith.constant 0 : index
    %140 = vector.load %arg8[%c0_68, %c0_69] : memref<128x32xbf16, #tpu.memory_space<vmem>>, vector<128x32xbf16>
    %cst_70 = arith.constant dense<0.000000e+00> : vector<16x32xf32>
    %141 = tpu.matmul %139, %140, %cst_70 {dimension_numbers = #tpu.dot_dimension_numbers<[1], [0], [0], [1], [0, 0, 1, 1], [], []>} : vector<16x128xbf16>, vector<128x32xbf16>, vector<16x32xf32> -> vector<16x32xf32>
    %142 = vector.broadcast %13 : vector<1x32xf32> to vector<16x32xf32>
    %143 = arith.addf %141, %142 : vector<16x32xf32>
    %144 = arith.addf %103, %143 : vector<16x32xf32>
    %145 = vector.shape_cast %144 : vector<16x32xf32> to vector<2x8x32xf32>
    %c0_71 = arith.constant 0 : index
    %c0_72 = arith.constant 0 : index
    %c0_73 = arith.constant 0 : index
    %146 = vector.load %arg14[%c0_71, %c0_72, %c0_73] : memref<2x8x32xf32, #tpu.memory_space<vmem>>, vector<2x8x32xf32>
    tpu.vector_store %arg14[%c0_71, %c0_72, %c0_73], %145 {strides = array<i32>} : memref<2x8x32xf32, #tpu.memory_space<vmem>>, vector<2x8x32xf32>,
    return
  }
  func.func @transform_0(%arg0: i32) -> (i32, i32, i32) {
    %c0_i32 = arith.constant 0 : i32
    %c0_i32_0 = arith.constant 0 : i32
    %c0_i32_1 = arith.constant 0 : i32
    return %arg0, %c0_i32, %c0_i32_0 : i32, i32, i32
  }
  func.func @transform_1(%arg0: i32) -> (i32, i32, i32) {
    %c0_i32 = arith.constant 0 : i32
    %c0_i32_0 = arith.constant 0 : i32
    %c0_i32_1 = arith.constant 0 : i32
    return %arg0, %c0_i32, %c0_i32_0 : i32, i32, i32
  }
  func.func @transform_2(%arg0: i32) -> (i32, i32) {
    %c0_i32 = arith.constant 0 : i32
    %c0_i32_0 = arith.constant 0 : i32
    %c0_i32_1 = arith.constant 0 : i32
    return %c0_i32, %c0_i32_0 : i32, i32
  }
  func.func @transform_3(%arg0: i32) -> (i32, i32) {
    %c0_i32 = arith.constant 0 : i32
    %c0_i32_0 = arith.constant 0 : i32
    %c0_i32_1 = arith.constant 0 : i32
    return %c0_i32, %c0_i32_0 : i32, i32
  }
  func.func @transform_4(%arg0: i32) -> (i32, i32) {
    %c0_i32 = arith.constant 0 : i32
    %c0_i32_0 = arith.constant 0 : i32
    %c0_i32_1 = arith.constant 0 : i32
    return %c0_i32, %c0_i32_0 : i32, i32
  }
  func.func @transform_5(%arg0: i32) -> (i32, i32) {
    %c0_i32 = arith.constant 0 : i32
    %c0_i32_0 = arith.constant 0 : i32
    %c0_i32_1 = arith.constant 0 : i32
    return %c0_i32, %c0_i32_0 : i32, i32
  }
  func.func @transform_6(%arg0: i32) -> (i32, i32) {
    %c0_i32 = arith.constant 0 : i32
    %c0_i32_0 = arith.constant 0 : i32
    %c0_i32_1 = arith.constant 0 : i32
    return %c0_i32, %c0_i32_0 : i32, i32
  }
  func.func @transform_7(%arg0: i32) -> (i32, i32) {
    %c0_i32 = arith.constant 0 : i32
    %c0_i32_0 = arith.constant 0 : i32
    %c0_i32_1 = arith.constant 0 : i32
    return %c0_i32, %c0_i32_0 : i32, i32
  }
  func.func @transform_8(%arg0: i32) -> (i32, i32) {
    %c0_i32 = arith.constant 0 : i32
    %c0_i32_0 = arith.constant 0 : i32
    %c0_i32_1 = arith.constant 0 : i32
    return %c0_i32, %c0_i32_0 : i32, i32
  }
  func.func @transform_9(%arg0: i32) -> (i32, i32) {
    %c0_i32 = arith.constant 0 : i32
    %c0_i32_0 = arith.constant 0 : i32
    %c0_i32_1 = arith.constant 0 : i32
    return %c0_i32, %c0_i32_0 : i32, i32
  }
  func.func @transform_10(%arg0: i32) -> (i32, i32) {
    %c0_i32 = arith.constant 0 : i32
    %c0_i32_0 = arith.constant 0 : i32
    %c0_i32_1 = arith.constant 0 : i32
    return %c0_i32, %c0_i32_0 : i32, i32
  }
  func.func @transform_11(%arg0: i32) -> (i32, i32) {
    %c0_i32 = arith.constant 0 : i32
    %c0_i32_0 = arith.constant 0 : i32
    %c0_i32_1 = arith.constant 0 : i32
    return %c0_i32, %c0_i32_0 : i32, i32
  }
  func.func @transform_12(%arg0: i32) -> (i32, i32) {
    %c0_i32 = arith.constant 0 : i32
    %c0_i32_0 = arith.constant 0 : i32
    %c0_i32_1 = arith.constant 0 : i32
    return %c0_i32, %c0_i32_0 : i32, i32
  }
  func.func @transform_13(%arg0: i32) -> (i32, i32, i32) {
    %c0_i32 = arith.constant 0 : i32
    %c0_i32_0 = arith.constant 0 : i32
    %c0_i32_1 = arith.constant 0 : i32
    return %arg0, %c0_i32, %c0_i32_0 : i32, i32, i32
  }
}

</mosaic_0001>

<llo_original>
// kernel: tpu_custom_call.1
$region0: #{tpu_custom_call.1}
  #allocation0 [shape = 'u32[]', space=smem, size = 0x4, offset = 0x4, fixed_abs, tag = 'smem constant byte address 0x4 - core index']
  #allocation1 [shape = 'u32[144,128]{1,0:T(1,128)}', space=vmem, size = 0x12000, scoped, tag = 'internal scratch']
  #allocation2 [shape = 'f32[2,8,32]{2,1,0:T(8,128)}', space=vmem, size = 0x2000, scoped, tag = 'scratch operand']
  %s0 = inlined_call_operand.vmem [shape: f32[8,2,32], index: 0, kind: input, shape index: {}]
  %s1 = inlined_call_operand.vmem [shape: f32[16,2,32], index: 1, kind: input, shape index: {}]
  %s2 = inlined_call_operand.vmem [shape: bf16[32,32], index: 2, kind: input, shape index: {}]
  %s3 = inlined_call_operand.vmem [shape: bf16[32,32], index: 3, kind: input, shape index: {}]
  %s4 = inlined_call_operand.hbm [shape: bf16[32,32], index: 4, kind: input, shape index: {}]
  %s5 = inlined_call_operand.hbm [shape: bf16[32,32], index: 5, kind: input, shape index: {}]
  %s6 = inlined_call_operand.hbm [shape: bf16[32,128], index: 6, kind: input, shape index: {}]
  %s7 = inlined_call_operand.vmem [shape: bf16[128,32], index: 7, kind: input, shape index: {}]
  %s8 = inlined_call_operand.vmem [shape: f32[3,32], index: 8, kind: input, shape index: {}]
  %s9 = inlined_call_operand.vmem [shape: f32[1,32], index: 9, kind: input, shape index: {}]
  %s10 = inlined_call_operand.vmem [shape: f32[2,32], index: 10, kind: input, shape index: {}]
  %s11 = inlined_call_operand.vmem [shape: f32[1,128], index: 11, kind: input, shape index: {}]
  %s12 = inlined_call_operand.vmem [shape: f32[1,32], index: 12, kind: input, shape index: {}]
  %s13 = inlined_call_operand.hbm [shape: f32[8,2,32], index: 13, kind: output, shape index: {}]
  %s14 = sld [smem:[#allocation0]]
  $region74: #{tpu_custom_call.1} parent=0
    _
  %s16 = ssub.s32 1, %s14
  %s17 = scalar_select 0, %s16, %s14
  $region1: #{tpu_custom_call.1} parent=0
    #allocation3 [shape = 'u8[8192]{0}', space=vmem, size = 0x2000, scoped, tag = 'input window, operand 4, single buffered']
    #allocation4 [shape = 's32[1]{0}', space=sflag, size = 0x4, scoped, tag = 'scoped memory for tpu_custom_call.1']
    #allocation5 [shape = 's32[1]{0}', space=sflag, size = 0x4, scoped, tag = 'scoped memory for tpu_custom_call.1']
    #allocation6 [shape = 'u8[8192]{0}', space=vmem, size = 0x2000, scoped, tag = 'input window, operand 5, single buffered']
    #allocation7 [shape = 's32[1]{0}', space=sflag, size = 0x4, scoped, tag = 'scoped memory for tpu_custom_call.1']
    #allocation8 [shape = 'u8[8192]{0}', space=vmem, size = 0x2000, scoped, tag = 'input window, operand 6, single buffered']
    #allocation9 [shape = 'u8[8192]{0}', space=vmem, size = 0x2000, scoped, tag = 'output window, operand 0, single buffered']
    %18 = vsyncpa [#allocation4], 0
    %19 = vsyncpa [#allocation7], 0
    %20 = vsyncpa [#allocation5], 0
    // Predicated region
    $region2: #{tpu_custom_call.1} parent=1 // pred_check
      _
    $region3: #{tpu_custom_call.1} parent=1 // pred_check_branch
      %22 = sbr.rel (0) target = $region5
    $region4: #{tpu_custom_call.1} parent=1 // pred_region
      _
    $region5: #{tpu_custom_call.1} parent=1 // pred_fallthru
      _
    // Predicated region
    $region6: #{tpu_custom_call.1} parent=1 // pred_check
      _
    $region7: #{tpu_custom_call.1} parent=1 // pred_check_branch
      %24 = sbr.rel (0) target = $region9
    $region8: #{tpu_custom_call.1} parent=1 // pred_region
      _
    $region9: #{tpu_custom_call.1} parent=1 // pred_fallthru
      _
    // Predicated region
    $region10: #{tpu_custom_call.1} parent=1 // pred_check
      _
    $region11: #{tpu_custom_call.1} parent=1 // pred_check_branch
      %26 = sbr.rel (0) target = $region13
    $region12: #{tpu_custom_call.1} parent=1 // pred_region
      _
    $region13: #{tpu_custom_call.1} parent=1 // pred_fallthru
      _
    // Predicated region
    $region14: #{tpu_custom_call.1} parent=1 // pred_check
      _
    $region15: #{tpu_custom_call.1} parent=1 // pred_check_branch
      %28 = sbr.rel (0) target = $region17
    $region16: #{tpu_custom_call.1} parent=1 // pred_region
      _
    $region17: #{tpu_custom_call.1} parent=1 // pred_fallthru
      _
    // Predicated region
    $region18: #{tpu_custom_call.1} parent=1 // pred_check
      _
    $region19: #{tpu_custom_call.1} parent=1 // pred_check_branch
      %30 = sbr.rel (0) target = $region21
    $region20: #{tpu_custom_call.1} parent=1 // pred_region
      %s32 = ssub.s32 256, 256
      %33 = vsyncadd [#allocation4], %s32
      %s34 = sshll.u32 [#allocation3], 4
      %s35 = int_to_ptr.vmem [resolvable:$true] %s34
      %40 = dma.hbm_to_vmem [thread:$0]  %s4, 256, %s35, [#allocation4], 64, 64, 4
    $region21: #{tpu_custom_call.1} parent=1 // pred_fallthru
      _
    // Predicated region
    $region22: #{tpu_custom_call.1} parent=1 // pred_check
      _
    $region23: #{tpu_custom_call.1} parent=1 // pred_check_branch
      %42 = sbr.rel (0) target = $region25
    $region24: #{tpu_custom_call.1} parent=1 // pred_region
      %s44 = ssub.s32 256, 256
      %45 = vsyncadd [#allocation7], %s44
      %s46 = sshll.u32 [#allocation6], 4
      %s47 = int_to_ptr.vmem [resolvable:$true] %s46
      %52 = dma.hbm_to_vmem [thread:$0]  %s5, 256, %s47, [#allocation7], 64, 64, 4
    $region25: #{tpu_custom_call.1} parent=1 // pred_fallthru
      _
    // Predicated region
    $region26: #{tpu_custom_call.1} parent=1 // pred_check
      _
    $region27: #{tpu_custom_call.1} parent=1 // pred_check_branch
      %54 = sbr.rel (0) target = $region29
    $region28: #{tpu_custom_call.1} parent=1 // pred_region
      %s56 = ssub.s32 256, 256
      %57 = vsyncadd [#allocation7], %s56
      %s58 = sshll.u32 [#allocation8], 4
      %s59 = int_to_ptr.vmem [resolvable:$true] %s58
      %64 = dma.hbm_to_vmem [thread:$0]  %s6, 256, %s59, [#allocation7], 64, 64, 4
    $region29: #{tpu_custom_call.1} parent=1 // pred_fallthru
      _
    // Predicated region
    $region30: #{tpu_custom_call.1} parent=1 // pred_check
      _
    $region31: #{tpu_custom_call.1} parent=1 // pred_check_branch
      %66 = sbr.rel (0) target = $region33
    $region32: #{tpu_custom_call.1} parent=1 // pred_region
      _
    $region33: #{tpu_custom_call.1} parent=1 // pred_fallthru
      _
    // Predicated region
    $region34: #{tpu_custom_call.1} parent=1 // pred_check
      _
    $region35: #{tpu_custom_call.1} parent=1 // pred_check_branch
      %68 = sbr.rel (0) target = $region37
    $region36: #{tpu_custom_call.1} parent=1 // pred_region
      _
    $region37: #{tpu_custom_call.1} parent=1 // pred_fallthru
      _
    // Predicated region
    $region38: #{tpu_custom_call.1} parent=1 // pred_check
      _
    $region39: #{tpu_custom_call.1} parent=1 // pred_check_branch
      %70 = sbr.rel (0) target = $region41
    $region40: #{tpu_custom_call.1} parent=1 // pred_region
      _
    $region41: #{tpu_custom_call.1} parent=1 // pred_fallthru
      _
    // Predicated region
    $region42: #{tpu_custom_call.1} parent=1 // pred_check
      _
    $region43: #{tpu_custom_call.1} parent=1 // pred_check_branch
      %72 = sbr.rel (0) target = $region45
    $region44: #{tpu_custom_call.1} parent=1 // pred_region
      _
    $region45: #{tpu_custom_call.1} parent=1 // pred_fallthru
      _
    // Predicated region
    $region46: #{tpu_custom_call.1} parent=1 // pred_check
      _
    $region47: #{tpu_custom_call.1} parent=1 // pred_check_branch
      %74 = sbr.rel (0) target = $region49
    $region48: #{tpu_custom_call.1} parent=1 // pred_region
      _
    $region49: #{tpu_custom_call.1} parent=1 // pred_fallthru
      _
    // Predicated region
    $region50: #{tpu_custom_call.1} parent=1 // pred_check
      _
    $region51: #{tpu_custom_call.1} parent=1 // pred_check_branch
      %76 = sbr.rel (0) target = $region53
    $region52: #{tpu_custom_call.1} parent=1 // pred_region
      _
    $region53: #{tpu_custom_call.1} parent=1 // pred_fallthru
      _
    // Predicated region
    $region54: #{tpu_custom_call.1} parent=1 // pred_check
      _
    $region55: #{tpu_custom_call.1} parent=1 // pred_check_branch
      %78 = sbr.rel (0) target = $region57
    $region56: #{tpu_custom_call.1} parent=1 // pred_region
      %79 = dma.done [#allocation4], 256
    $region57: #{tpu_custom_call.1} parent=1 // pred_fallthru
      _
    // Predicated region
    $region58: #{tpu_custom_call.1} parent=1 // pred_check
      _
    $region59: #{tpu_custom_call.1} parent=1 // pred_check_branch
      %81 = sbr.rel (0) target = $region61
    $region60: #{tpu_custom_call.1} parent=1 // pred_region
      %82 = dma.done [#allocation7], 256
    $region61: #{tpu_custom_call.1} parent=1 // pred_fallthru
      _
    // Predicated region
    $region62: #{tpu_custom_call.1} parent=1 // pred_check
      _
    $region63: #{tpu_custom_call.1} parent=1 // pred_check_branch
      %84 = sbr.rel (0) target = $region65
    $region64: #{tpu_custom_call.1} parent=1 // pred_region
      %85 = dma.done [#allocation7], 256
    $region65: #{tpu_custom_call.1} parent=1 // pred_fallthru
      _
    %v87 = vld [vmem:[%s0] sm:$0x3]
    %v88 = vld [vmem:[%s0 + $0x2] sm:$0x3]
    %v89 = vld [vmem:[%s0 + $0x4] sm:$0x3]
    %v90 = vld [vmem:[%s0 + $0x6] sm:$0x3]
    %v91 = vld [vmem:[%s0 + $0x8] sm:$0x3]
    %v92 = vld [vmem:[%s0 + $0xa] sm:$0x3]
    %v93 = vld [vmem:[%s0 + $0xc] sm:$0x3]
    %v94 = vld [vmem:[%s0 + $0xe] sm:$0x3]
    %v95 = vcombine.low %v87, %v89
    %v97 = vunpack.c.l.s4 1983009808
    %v98 = vunpack.c.0.s8 %v97
    %v99 = vlaneseq
    %v100 = vshrl.u32 %v99, 7
    %v101 = vsub.s32 %v98, %v100
    %v102 = vrot.slane %v95, %v101
    %v103 = vcombine.low %v88, %v90
    %v105 = vunpack.c.l.s4 1983009808
    %v106 = vunpack.c.0.s8 %v105
    %v107 = vlaneseq
    %v108 = vshrl.u32 %v107, 7
    %v109 = vsub.s32 %v106, %v108
    %v110 = vrot.slane %v103, %v109
    %v111 = vcombine.low %v91, %v93
    %v113 = vunpack.c.l.s4 1983009808
    %v114 = vunpack.c.0.s8 %v113
    %v115 = vlaneseq
    %v116 = vshrl.u32 %v115, 7
    %v117 = vsub.s32 %v114, %v116
    %v118 = vrot.slane %v111, %v117
    %v119 = vcombine.low %v92, %v94
    %v121 = vunpack.c.l.s4 1983009808
    %v122 = vunpack.c.0.s8 %v121
    %v123 = vlaneseq
    %v124 = vshrl.u32 %v123, 7
    %v125 = vsub.s32 %v122, %v124
    %v126 = vrot.slane %v119, %v125
    %v127 = vcombine.low %v102, %v110
    %v129 = vunpack.c.l.s4 1934713408
    %v130 = vunpack.c.0.s8 %v129
    %v131 = vlaneseq
    %v132 = vshrl.u32 %v131, 7
    %v133 = vsub.s32 %v130, %v132
    %v134 = vrot.slane %v127, %v133
    %v135 = vcombine.low %v118, %v126
    %v137 = vunpack.c.l.s4 1934713408
    %v138 = vunpack.c.0.s8 %v137
    %v139 = vlaneseq
    %v140 = vshrl.u32 %v139, 7
    %v141 = vsub.s32 %v138, %v140
    %v142 = vrot.slane %v135, %v141
    %v143 = vcombine.low %v134, %v142
    %v144 = vcombine.high %v134, %v142
    %v145 = vld [vmem:[%s1] sm:$0x3]
    %v146 = vld [vmem:[%s1 + $0x2] sm:$0x3]
    %v147 = vld [vmem:[%s1 + $0x4] sm:$0x3]
    %v148 = vld [vmem:[%s1 + $0x6] sm:$0x3]
    %v149 = vld [vmem:[%s1 + $0x8] sm:$0x3]
    %v150 = vld [vmem:[%s1 + $0xa] sm:$0x3]
    %v151 = vld [vmem:[%s1 + $0xc] sm:$0x3]
    %v152 = vld [vmem:[%s1 + $0xe] sm:$0x3]
    %v153 = vld [vmem:[%s1 + $0x10] sm:$0x3]
    %v154 = vld [vmem:[%s1 + $0x12] sm:$0x3]
    %v155 = vld [vmem:[%s1 + $0x14] sm:$0x3]
    %v156 = vld [vmem:[%s1 + $0x16] sm:$0x3]
    %v157 = vld [vmem:[%s1 + $0x18] sm:$0x3]
    %v158 = vld [vmem:[%s1 + $0x1a] sm:$0x3]
    %v159 = vld [vmem:[%s1 + $0x1c] sm:$0x3]
    %v160 = vld [vmem:[%s1 + $0x1e] sm:$0x3]
    %v161 = vcombine.low %v145, %v147
    %v163 = vunpack.c.l.s4 1983009808
    %v164 = vunpack.c.0.s8 %v163
    %v165 = vlaneseq
    %v166 = vshrl.u32 %v165, 7
    %v167 = vsub.s32 %v164, %v166
    %v168 = vrot.slane %v161, %v167
    %v169 = vcombine.low %v146, %v148
    %v171 = vunpack.c.l.s4 1983009808
    %v172 = vunpack.c.0.s8 %v171
    %v173 = vlaneseq
    %v174 = vshrl.u32 %v173, 7
    %v175 = vsub.s32 %v172, %v174
    %v176 = vrot.slane %v169, %v175
    %v177 = vcombine.low %v149, %v151
    %v179 = vunpack.c.l.s4 1983009808
    %v180 = vunpack.c.0.s8 %v179
    %v181 = vlaneseq
    %v182 = vshrl.u32 %v181, 7
    %v183 = vsub.s32 %v180, %v182
    %v184 = vrot.slane %v177, %v183
    %v185 = vcombine.low %v150, %v152
    %v187 = vunpack.c.l.s4 1983009808
    %v188 = vunpack.c.0.s8 %v187
    %v189 = vlaneseq
    %v190 = vshrl.u32 %v189, 7
    %v191 = vsub.s32 %v188, %v190
    %v192 = vrot.slane %v185, %v191
    %v193 = vcombine.low %v168, %v176
    %v195 = vunpack.c.l.s4 1934713408
    %v196 = vunpack.c.0.s8 %v195
    %v197 = vlaneseq
    %v198 = vshrl.u32 %v197, 7
    %v199 = vsub.s32 %v196, %v198
    %v200 = vrot.slane %v193, %v199
    %v201 = vcombine.low %v184, %v192
    %v203 = vunpack.c.l.s4 1934713408
    %v204 = vunpack.c.0.s8 %v203
    %v205 = vlaneseq
    %v206 = vshrl.u32 %v205, 7
    %v207 = vsub.s32 %v204, %v206
    %v208 = vrot.slane %v201, %v207
    %v209 = vcombine.low %v200, %v208
    %v210 = vcombine.high %v200, %v208
    %v211 = vcombine.low %v153, %v155
    %v213 = vunpack.c.l.s4 1983009808
    %v214 = vunpack.c.0.s8 %v213
    %v215 = vlaneseq
    %v216 = vshrl.u32 %v215, 7
    %v217 = vsub.s32 %v214, %v216
    %v218 = vrot.slane %v211, %v217
    %v219 = vcombine.low %v154, %v156
    %v221 = vunpack.c.l.s4 1983009808
    %v222 = vunpack.c.0.s8 %v221
    %v223 = vlaneseq
    %v224 = vshrl.u32 %v223, 7
    %v225 = vsub.s32 %v222, %v224
    %v226 = vrot.slane %v219, %v225
    %v227 = vcombine.low %v157, %v159
    %v229 = vunpack.c.l.s4 1983009808
    %v230 = vunpack.c.0.s8 %v229
    %v231 = vlaneseq
    %v232 = vshrl.u32 %v231, 7
    %v233 = vsub.s32 %v230, %v232
    %v234 = vrot.slane %v227, %v233
    %v235 = vcombine.low %v158, %v160
    %v237 = vunpack.c.l.s4 1983009808
    %v238 = vunpack.c.0.s8 %v237
    %v239 = vlaneseq
    %v240 = vshrl.u32 %v239, 7
    %v241 = vsub.s32 %v238, %v240
    %v242 = vrot.slane %v235, %v241
    %v243 = vcombine.low %v218, %v226
    %v245 = vunpack.c.l.s4 1934713408
    %v246 = vunpack.c.0.s8 %v245
    %v247 = vlaneseq
    %v248 = vshrl.u32 %v247, 7
    %v249 = vsub.s32 %v246, %v248
    %v250 = vrot.slane %v243, %v249
    %v251 = vcombine.low %v234, %v242
    %v253 = vunpack.c.l.s4 1934713408
    %v254 = vunpack.c.0.s8 %v253
    %v255 = vlaneseq
    %v256 = vshrl.u32 %v255, 7
    %v257 = vsub.s32 %v254, %v256
    %v258 = vrot.slane %v251, %v257
    %v259 = vcombine.low %v250, %v258
    %v260 = vcombine.high %v250, %v258
    %v261 = vpack.c.bf16 %v144, %v143
    %v262 = vpack.c.bf16 %v259, %v209
    %v263 = vpack.c.bf16 %v260, %v210
    %v264 = vld [vmem:[%s8] sm:$0x1]
    %v265 = vld [vmem:[%s8 + $0x1] sm:$0x1]
    %v266 = vld [vmem:[%s8 + $0x2] sm:$0x1]
    %v267 = vld [vmem:[%s9] sm:$0x1]
    %v268 = vld [vmem:[%s10] sm:$0x1]
    %v269 = vld [vmem:[%s10 + $0x1] sm:$0x1]
    %v270 = vld [vmem:[%s11] sm:$0x1]
    %v271 = vld [vmem:[%s12] sm:$0x1]
    %v272 = vld [vmem:[%s2] sm:$0xf]
    %v273 = vld [vmem:[%s2 + $0x4] sm:$0xf]
    %v274 = vld [vmem:[%s2 + $0x8] sm:$0xf]
    %v275 = vld [vmem:[%s2 + $0xc] sm:$0xf]
    %v276 = vlaneseq
    %v277 = vshrl.u32 %v276, 7
    %v278 = vsub.s32 0, %v277
    %v279 = vrot.slane %v264, %v278
    %v284 = vunpack.c.l.b16 %v272
    %v285 = vunpack.c.l.b16 %v273
    %v286 = vunpack.c.l.b16 %v274
    %v287 = vunpack.c.l.b16 %v275
    %v288 = vpack.c.b16 %v285, %v284
    %v289 = vpack.c.b16 %v287, %v286
    %vm292 = vcmask 261120
    %v294 = vsel %vm292, %v261, 0
    %296 = vmatprep.subr.bf16.mxu0 0
    %297 = vmatpush1.bf16.msra.mxu0 %v288
    %298 = vmatprep.subr.bf16.mxu0 0
    %299 = vmatpush1.bf16.msra.mxu0 %v289
    %300 = vmatprep.subr.bf16.mxu0 0
    %301 = vmatpush1.bf16.msra.mxu0 0
    %302 = vmatprep.subr.bf16.mxu0 0
    %303 = vmatpush1.bf16.msra.mxu0 0
    %304 = vmatprep.subr.bf16.mxu0 0
    %305 = vmatpush1.bf16.msra.mxu0 0
    %306 = vmatprep.subr.bf16.mxu0 0
    %307 = vmatpush1.bf16.msra.mxu0 0
    %308 = vmatprep.subr.bf16.mxu0 0
    %309 = vmatpush1.bf16.msra.mxu0 0
    %310 = vmatprep.subr.bf16.mxu0 0
    %311 = vmatpush1.bf16.msra.mxu0 0
    %312 = vmatprep.subr.bf16.mxu0 0
    %313 = vmatpush1.bf16.msra.mxu0 0
    %314 = vmatprep.subr.bf16.mxu0 0
    %315 = vmatpush1.bf16.msra.mxu0 0
    %316 = vmatprep.subr.bf16.mxu0 0
    %317 = vmatpush1.bf16.msra.mxu0 0
    %318 = vmatprep.subr.bf16.mxu0 0
    %319 = vmatpush1.bf16.msra.mxu0 0
    %320 = vmatprep.subr.bf16.mxu0 0
    %321 = vmatpush1.bf16.msra.mxu0 0
    %322 = vmatprep.subr.bf16.mxu0 0
    %323 = vmatpush1.bf16.msra.mxu0 0
    %324 = vmatprep.subr.bf16.mxu0 0
    %325 = vmatpush1.bf16.msra.mxu0 0
    %326 = vmatprep.subr.bf16.mxu0 0
    %327 = vmatpush1.bf16.msra.mxu0 0
    %328 = vmatprep.mubr.bf16.mxu0 0
    %329 = vmatmul.mubr.bf16.gmra.mrb[0].mxu0 %v294
    %v330 = vpop.f32.mrb[0].mxu0
    %v331 = vadd.f32 %v279, %v330
    %v332 = vpop.f32.mrb[0].mxu0
    %v333 = vpop.f32.mrb[0].mxu0
    %v334 = vadd.f32 %v279, %v333
    %v335 = vpop.f32.mrb[0].mxu0
    %336 = vdwg.mxu0
    %v337 = vpack.c.bf16 %v334, %v331
    %v339 = vunpack.c.l.b16 %v337
    %v340 = vunpack.c.h.b16 %v337
    %v341 = vpack.c.b16 %v339, %v339
    %v342 = vpack.c.b16 %v340, %v340
    %v343 = vld [vmem:[%s3] sm:$0xf]
    %v344 = vld [vmem:[%s3 + $0x4] sm:$0xf]
    %v345 = vld [vmem:[%s3 + $0x8] sm:$0xf]
    %v346 = vld [vmem:[%s3 + $0xc] sm:$0xf]
    %v347 = vlaneseq
    %v348 = vshrl.u32 %v347, 7
    %v349 = vsub.s32 0, %v348
    %v350 = vrot.slane %v265, %v349
    %v355 = vunpack.c.l.b16 %v343
    %v356 = vunpack.c.l.b16 %v344
    %v357 = vunpack.c.l.b16 %v345
    %v358 = vunpack.c.l.b16 %v346
    %v359 = vpack.c.b16 %v356, %v355
    %v360 = vpack.c.b16 %v358, %v357
    %v364 = vsel %vm292, %v262, 0
    %v367 = vsel %vm292, %v263, 0
    %369 = vmatprep.subr.bf16.mxu0 0
    %370 = vmatpush1.bf16.msra.mxu0 %v359
    %371 = vmatprep.subr.bf16.mxu0 0
    %372 = vmatpush1.bf16.msra.mxu0 %v360
    %373 = vmatprep.subr.bf16.mxu0 0
    %374 = vmatpush1.bf16.msra.mxu0 0
    %375 = vmatprep.subr.bf16.mxu0 0
    %376 = vmatpush1.bf16.msra.mxu0 0
    %377 = vmatprep.subr.bf16.mxu0 0
    %378 = vmatpush1.bf16.msra.mxu0 0
    %379 = vmatprep.subr.bf16.mxu0 0
    %380 = vmatpush1.bf16.msra.mxu0 0
    %381 = vmatprep.subr.bf16.mxu0 0
    %382 = vmatpush1.bf16.msra.mxu0 0
    %383 = vmatprep.subr.bf16.mxu0 0
    %384 = vmatpush1.bf16.msra.mxu0 0
    %385 = vmatprep.subr.bf16.mxu0 0
    %386 = vmatpush1.bf16.msra.mxu0 0
    %387 = vmatprep.subr.bf16.mxu0 0
    %388 = vmatpush1.bf16.msra.mxu0 0
    %389 = vmatprep.subr.bf16.mxu0 0
    %390 = vmatpush1.bf16.msra.mxu0 0
    %391 = vmatprep.subr.bf16.mxu0 0
    %392 = vmatpush1.bf16.msra.mxu0 0
    %393 = vmatprep.subr.bf16.mxu0 0
    %394 = vmatpush1.bf16.msra.mxu0 0
    %395 = vmatprep.subr.bf16.mxu0 0
    %396 = vmatpush1.bf16.msra.mxu0 0
    %397 = vmatprep.subr.bf16.mxu0 0
    %398 = vmatpush1.bf16.msra.mxu0 0
    %399 = vmatprep.subr.bf16.mxu0 0
    %400 = vmatpush1.bf16.msra.mxu0 0
    %401 = vmatprep.mubr.bf16.mxu0 0
    %402 = vmatmul.mubr.bf16.gmra.mrb[0].mxu0 %v364
    %v403 = vpop.f32.mrb[0].mxu0
    %v404 = vadd.f32 %v350, %v403
    %v405 = vpop.f32.mrb[0].mxu0
    %v406 = vpop.f32.mrb[0].mxu0
    %v407 = vadd.f32 %v350, %v406
    %v408 = vpop.f32.mrb[0].mxu0
    %409 = vmatprep.mubr.bf16.mxu0 0
    %410 = vmatmul.mubr.bf16.gmra.mrb[0].mxu0 %v367
    %v411 = vpop.f32.mrb[0].mxu0
    %v412 = vadd.f32 %v350, %v411
    %v413 = vpop.f32.mrb[0].mxu0
    %v414 = vpop.f32.mrb[0].mxu0
    %v415 = vadd.f32 %v350, %v414
    %v416 = vpop.f32.mrb[0].mxu0
    %417 = vdwg.mxu0
    %v418 = vpack.c.bf16 %v407, %v404
    %v419 = vpack.c.bf16 %v415, %v412
    %v420 = vld [vmem:[#allocation3] sm:$0xf]
    %v421 = vld [vmem:[#allocation3 + $0x4] sm:$0xf]
    %v422 = vld [vmem:[#allocation3 + $0x8] sm:$0xf]
    %v423 = vld [vmem:[#allocation3 + $0xc] sm:$0xf]
    %v424 = vlaneseq
    %v425 = vshrl.u32 %v424, 7
    %v426 = vsub.s32 0, %v425
    %v427 = vrot.slane %v266, %v426
    %v432 = vunpack.c.l.b16 %v420
    %v433 = vunpack.c.l.b16 %v421
    %v434 = vunpack.c.l.b16 %v422
    %v435 = vunpack.c.l.b16 %v423
    %v436 = vpack.c.b16 %v433, %v432
    %v437 = vpack.c.b16 %v435, %v434
    %440 = vmatprep.subr.bf16.mxu0 0
    %441 = vmatpush1.bf16.msra.mxu0 %v436
    %442 = vmatprep.subr.bf16.mxu0 0
    %443 = vmatpush1.bf16.msra.mxu0 %v437
    %444 = vmatprep.subr.bf16.mxu0 0
    %445 = vmatpush1.bf16.msra.mxu0 0
    %446 = vmatprep.subr.bf16.mxu0 0
    %447 = vmatpush1.bf16.msra.mxu0 0
    %448 = vmatprep.subr.bf16.mxu0 0
    %449 = vmatpush1.bf16.msra.mxu0 0
    %450 = vmatprep.subr.bf16.mxu0 0
    %451 = vmatpush1.bf16.msra.mxu0 0
    %452 = vmatprep.subr.bf16.mxu0 0
    %453 = vmatpush1.bf16.msra.mxu0 0
    %454 = vmatprep.subr.bf16.mxu0 0
    %455 = vmatpush1.bf16.msra.mxu0 0
    %456 = vmatprep.subr.bf16.mxu0 0
    %457 = vmatpush1.bf16.msra.mxu0 0
    %458 = vmatprep.subr.bf16.mxu0 0
    %459 = vmatpush1.bf16.msra.mxu0 0
    %460 = vmatprep.subr.bf16.mxu0 0
    %461 = vmatpush1.bf16.msra.mxu0 0
    %462 = vmatprep.subr.bf16.mxu0 0
    %463 = vmatpush1.bf16.msra.mxu0 0
    %464 = vmatprep.subr.bf16.mxu0 0
    %465 = vmatpush1.bf16.msra.mxu0 0
    %466 = vmatprep.subr.bf16.mxu0 0
    %467 = vmatpush1.bf16.msra.mxu0 0
    %468 = vmatprep.subr.bf16.mxu0 0
    %469 = vmatpush1.bf16.msra.mxu0 0
    %470 = vmatprep.subr.bf16.mxu0 0
    %471 = vmatpush1.bf16.msra.mxu0 0
    %472 = vmatprep.mubr.bf16.mxu0 0
    %473 = vmatmul.mubr.bf16.gmra.mrb[0].mxu0 %v364
    %v474 = vpop.f32.mrb[0].mxu0
    %v475 = vadd.f32 %v427, %v474
    %v476 = vpop.f32.mrb[0].mxu0
    %v477 = vpop.f32.mrb[0].mxu0
    %v478 = vadd.f32 %v427, %v477
    %v479 = vpop.f32.mrb[0].mxu0
    %480 = vmatprep.mubr.bf16.mxu0 0
    %481 = vmatmul.mubr.bf16.gmra.mrb[0].mxu0 %v367
    %v482 = vpop.f32.mrb[0].mxu0
    %v483 = vadd.f32 %v427, %v482
    %v484 = vpop.f32.mrb[0].mxu0
    %v485 = vpop.f32.mrb[0].mxu0
    %v486 = vadd.f32 %v427, %v485
    %v487 = vpop.f32.mrb[0].mxu0
    %488 = vdwg.mxu0
    %v489 = vpack.c.bf16 %v478, %v475
    %v490 = vpack.c.bf16 %v486, %v483
    %vm491 = vcmask 64512
    %v493 = vsel %vm491, %v341, 0
    %v496 = vsel %vm491, %v418, 0
    %498 = vmatprep.subr.bf16.mxu0 0
    %499 = vmatpush1.bf16.xpose.msra.mxu0 %v496
    %500 = vmatprep.subr.bf16.mxu0 0
    %501 = vmatpush1.bf16.xpose.msra.mxu0 0
    %502 = vmatprep.subr.bf16.mxu0 0
    %503 = vmatpush1.bf16.xpose.msra.mxu0 0
    %504 = vmatprep.subr.bf16.mxu0 0
    %505 = vmatpush1.bf16.xpose.msra.mxu0 0
    %506 = vmatprep.subr.bf16.mxu0 0
    %507 = vmatpush1.bf16.xpose.msra.mxu0 0
    %508 = vmatprep.subr.bf16.mxu0 0
    %509 = vmatpush1.bf16.xpose.msra.mxu0 0
    %510 = vmatprep.subr.bf16.mxu0 0
    %511 = vmatpush1.bf16.xpose.msra.mxu0 0
    %512 = vmatprep.subr.bf16.mxu0 0
    %513 = vmatpush1.bf16.xpose.msra.mxu0 0
    %514 = vmatprep.subr.bf16.mxu0 0
    %515 = vmatpush1.bf16.xpose.msra.mxu0 0
    %516 = vmatprep.subr.bf16.mxu0 0
    %517 = vmatpush1.bf16.xpose.msra.mxu0 0
    %518 = vmatprep.subr.bf16.mxu0 0
    %519 = vmatpush1.bf16.xpose.msra.mxu0 0
    %520 = vmatprep.subr.bf16.mxu0 0
    %521 = vmatpush1.bf16.xpose.msra.mxu0 0
    %522 = vmatprep.subr.bf16.mxu0 0
    %523 = vmatpush1.bf16.xpose.msra.mxu0 0
    %524 = vmatprep.subr.bf16.mxu0 0
    %525 = vmatpush1.bf16.xpose.msra.mxu0 0
    %526 = vmatprep.subr.bf16.mxu0 0
    %527 = vmatpush1.bf16.xpose.msra.mxu0 0
    %528 = vmatprep.subr.bf16.mxu0 0
    %529 = vmatpush1.bf16.xpose.msra.mxu0 0
    %530 = vmatprep.mubr.bf16.mxu0 0
    %531 = vmatmul.mubr.bf16.gmra.mrb[0].mxu0 %v493
    %v532 = vpop.f32.mrb[0].mxu0
    %v533 = vadd.f32 0.0, %v532
    %v534 = vpop.f32.mrb[0].mxu0
    %v535 = vpop.f32.mrb[0].mxu0
    %v536 = vpop.f32.mrb[0].mxu0
    %537 = vdwg.mxu0
    %v539 = vsel %vm491, %v342, 0
    %v542 = vsel %vm491, %v419, 0
    %544 = vmatprep.subr.bf16.mxu0 0
    %545 = vmatpush1.bf16.xpose.msra.mxu0 %v542
    %546 = vmatprep.subr.bf16.mxu0 0
    %547 = vmatpush1.bf16.xpose.msra.mxu0 0
    %548 = vmatprep.subr.bf16.mxu0 0
    %549 = vmatpush1.bf16.xpose.msra.mxu0 0
    %550 = vmatprep.subr.bf16.mxu0 0
    %551 = vmatpush1.bf16.xpose.msra.mxu0 0
    %552 = vmatprep.subr.bf16.mxu0 0
    %553 = vmatpush1.bf16.xpose.msra.mxu0 0
    %554 = vmatprep.subr.bf16.mxu0 0
    %555 = vmatpush1.bf16.xpose.msra.mxu0 0
    %556 = vmatprep.subr.bf16.mxu0 0
    %557 = vmatpush1.bf16.xpose.msra.mxu0 0
    %558 = vmatprep.subr.bf16.mxu0 0
    %559 = vmatpush1.bf16.xpose.msra.mxu0 0
    %560 = vmatprep.subr.bf16.mxu0 0
    %561 = vmatpush1.bf16.xpose.msra.mxu0 0
    %562 = vmatprep.subr.bf16.mxu0 0
    %563 = vmatpush1.bf16.xpose.msra.mxu0 0
    %564 = vmatprep.subr.bf16.mxu0 0
    %565 = vmatpush1.bf16.xpose.msra.mxu0 0
    %566 = vmatprep.subr.bf16.mxu0 0
    %567 = vmatpush1.bf16.xpose.msra.mxu0 0
    %568 = vmatprep.subr.bf16.mxu0 0
    %569 = vmatpush1.bf16.xpose.msra.mxu0 0
    %570 = vmatprep.subr.bf16.mxu0 0
    %571 = vmatpush1.bf16.xpose.msra.mxu0 0
    %572 = vmatprep.subr.bf16.mxu0 0
    %573 = vmatpush1.bf16.xpose.msra.mxu0 0
    %574 = vmatprep.subr.bf16.mxu0 0
    %575 = vmatpush1.bf16.xpose.msra.mxu0 0
    %576 = vmatprep.mubr.bf16.mxu0 0
    %577 = vmatmul.mubr.bf16.gmra.mrb[0].mxu0 %v539
    %v578 = vpop.f32.mrb[0].mxu0
    %v579 = vadd.f32 0.0, %v578
    %v580 = vpop.f32.mrb[0].mxu0
    %v581 = vpop.f32.mrb[0].mxu0
    %v582 = vpop.f32.mrb[0].mxu0
    %583 = vdwg.mxu0
    %vm584 = vcmask 130048
    %v585 = vsel %vm584, %v533, -inf
    %586 = vmax.xlane.f32.xlu0 %v585
    %v587 = vpop.xlane.xlu0 %586
    %v588 = vsel %vm584, %v579, -inf
    %589 = vmax.xlane.f32.xlu0 %v588
    %v590 = vpop.xlane.xlu0 %589
    %v591 = vsub.f32 %v533, %v587
    %v592 = vsub.f32 %v579, %v590
    %v593 = vmul.f32 %v591, 1.442695
    %v594 = vpow.pop %v593
    %v595 = vmul.f32 %v592, 1.442695
    %v596 = vpow.pop %v595
    %v597 = vsel %vm584, %v594, 0.0
    %598 = vadd.xlane.f32.xlu0 %v597
    %v599 = vpop.xlane.xlu0 %598
    %v600 = vsel %vm584, %v596, 0.0
    %601 = vadd.xlane.f32.xlu0 %v600
    %v602 = vpop.xlane.xlu0 %601
    %v603 = vrcp.pop %v599
    %v604 = vmul.f32 %v594, %v603
    %v605 = vrcp.pop %v602
    %v606 = vmul.f32 %v596, %v605
    %v607 = vpack.c.bf16 %v604, %v604
    %v608 = vpack.c.bf16 %v606, %v606
    %v610 = vsel %vm584, %v607, 0
    %612 = vmatprep.subr.bf16.mxu0 0
    %613 = vmatpush1.bf16.msra.mxu0 %v489
    %614 = vmatprep.subr.bf16.mxu0 0
    %615 = vmatpush1.bf16.msra.mxu0 0
    %616 = vmatprep.subr.bf16.mxu0 0
    %617 = vmatpush1.bf16.msra.mxu0 0
    %618 = vmatprep.subr.bf16.mxu0 0
    %619 = vmatpush1.bf16.msra.mxu0 0
    %620 = vmatprep.subr.bf16.mxu0 0
    %621 = vmatpush1.bf16.msra.mxu0 0
    %622 = vmatprep.subr.bf16.mxu0 0
    %623 = vmatpush1.bf16.msra.mxu0 0
    %624 = vmatprep.subr.bf16.mxu0 0
    %625 = vmatpush1.bf16.msra.mxu0 0
    %626 = vmatprep.subr.bf16.mxu0 0
    %627 = vmatpush1.bf16.msra.mxu0 0
    %628 = vmatprep.subr.bf16.mxu0 0
    %629 = vmatpush1.bf16.msra.mxu0 0
    %630 = vmatprep.subr.bf16.mxu0 0
    %631 = vmatpush1.bf16.msra.mxu0 0
    %632 = vmatprep.subr.bf16.mxu0 0
    %633 = vmatpush1.bf16.msra.mxu0 0
    %634 = vmatprep.subr.bf16.mxu0 0
    %635 = vmatpush1.bf16.msra.mxu0 0
    %636 = vmatprep.subr.bf16.mxu0 0
    %637 = vmatpush1.bf16.msra.mxu0 0
    %638 = vmatprep.subr.bf16.mxu0 0
    %639 = vmatpush1.bf16.msra.mxu0 0
    %640 = vmatprep.subr.bf16.mxu0 0
    %641 = vmatpush1.bf16.msra.mxu0 0
    %642 = vmatprep.subr.bf16.mxu0 0
    %643 = vmatpush1.bf16.msra.mxu0 0
    %644 = vmatprep.mubr.bf16.mxu0 0
    %645 = vmatmul.mubr.bf16.gmra.mrb[0].mxu0 %v610
    %v646 = vpop.f32.mrb[0].mxu0
    %v647 = vadd.f32 0.0, %v646
    %v648 = vpop.f32.mrb[0].mxu0
    %v649 = vpop.f32.mrb[0].mxu0
    %v650 = vpop.f32.mrb[0].mxu0
    %651 = vdwg.mxu0
    %v653 = vsel %vm584, %v608, 0
    %655 = vmatprep.subr.bf16.mxu0 0
    %656 = vmatpush1.bf16.msra.mxu0 %v490
    %657 = vmatprep.subr.bf16.mxu0 0
    %658 = vmatpush1.bf16.msra.mxu0 0
    %659 = vmatprep.subr.bf16.mxu0 0
    %660 = vmatpush1.bf16.msra.mxu0 0
    %661 = vmatprep.subr.bf16.mxu0 0
    %662 = vmatpush1.bf16.msra.mxu0 0
    %663 = vmatprep.subr.bf16.mxu0 0
    %664 = vmatpush1.bf16.msra.mxu0 0
    %665 = vmatprep.subr.bf16.mxu0 0
    %666 = vmatpush1.bf16.msra.mxu0 0
    %667 = vmatprep.subr.bf16.mxu0 0
    %668 = vmatpush1.bf16.msra.mxu0 0
    %669 = vmatprep.subr.bf16.mxu0 0
    %670 = vmatpush1.bf16.msra.mxu0 0
    %671 = vmatprep.subr.bf16.mxu0 0
    %672 = vmatpush1.bf16.msra.mxu0 0
    %673 = vmatprep.subr.bf16.mxu0 0
    %674 = vmatpush1.bf16.msra.mxu0 0
    %675 = vmatprep.subr.bf16.mxu0 0
    %676 = vmatpush1.bf16.msra.mxu0 0
    %677 = vmatprep.subr.bf16.mxu0 0
    %678 = vmatpush1.bf16.msra.mxu0 0
    %679 = vmatprep.subr.bf16.mxu0 0
    %680 = vmatpush1.bf16.msra.mxu0 0
    %681 = vmatprep.subr.bf16.mxu0 0
    %682 = vmatpush1.bf16.msra.mxu0 0
    %683 = vmatprep.subr.bf16.mxu0 0
    %684 = vmatpush1.bf16.msra.mxu0 0
    %685 = vmatprep.subr.bf16.mxu0 0
    %686 = vmatpush1.bf16.msra.mxu0 0
    %687 = vmatprep.mubr.bf16.mxu0 0
    %688 = vmatmul.mubr.bf16.gmra.mrb[0].mxu0 %v653
    %v689 = vpop.f32.mrb[0].mxu0
    %v690 = vadd.f32 0.0, %v689
    %v691 = vpop.f32.mrb[0].mxu0
    %v692 = vpop.f32.mrb[0].mxu0
    %v693 = vpop.f32.mrb[0].mxu0
    %694 = vdwg.mxu0
    %695 = vst.msk [vmem:[#allocation2] sm:$0xff] %vm491, %v647
    %696 = vst.msk [vmem:[#allocation2 + $0x8] sm:$0xff] %vm491, %v690
    %697 = vrot.lane.b32.xlu0 %v341, 120
    %v698 = vpop.permute.xlu0 %697
    %700 = vrot.lane.b32.xlu0 %v418, 120
    %v701 = vpop.permute.xlu0 %700
    %v703 = vsel %vm491, %v698, 0
    %v706 = vsel %vm491, %v701, 0
    %708 = vmatprep.subr.bf16.mxu0 0
    %709 = vmatpush1.bf16.xpose.msra.mxu0 %v706
    %710 = vmatprep.subr.bf16.mxu0 0
    %711 = vmatpush1.bf16.xpose.msra.mxu0 0
    %712 = vmatprep.subr.bf16.mxu0 0
    %713 = vmatpush1.bf16.xpose.msra.mxu0 0
    %714 = vmatprep.subr.bf16.mxu0 0
    %715 = vmatpush1.bf16.xpose.msra.mxu0 0
    %716 = vmatprep.subr.bf16.mxu0 0
    %717 = vmatpush1.bf16.xpose.msra.mxu0 0
    %718 = vmatprep.subr.bf16.mxu0 0
    %719 = vmatpush1.bf16.xpose.msra.mxu0 0
    %720 = vmatprep.subr.bf16.mxu0 0
    %721 = vmatpush1.bf16.xpose.msra.mxu0 0
    %722 = vmatprep.subr.bf16.mxu0 0
    %723 = vmatpush1.bf16.xpose.msra.mxu0 0
    %724 = vmatprep.subr.bf16.mxu0 0
    %725 = vmatpush1.bf16.xpose.msra.mxu0 0
    %726 = vmatprep.subr.bf16.mxu0 0
    %727 = vmatpush1.bf16.xpose.msra.mxu0 0
    %728 = vmatprep.subr.bf16.mxu0 0
    %729 = vmatpush1.bf16.xpose.msra.mxu0 0
    %730 = vmatprep.subr.bf16.mxu0 0
    %731 = vmatpush1.bf16.xpose.msra.mxu0 0
    %732 = vmatprep.subr.bf16.mxu0 0
    %733 = vmatpush1.bf16.xpose.msra.mxu0 0
    %734 = vmatprep.subr.bf16.mxu0 0
    %735 = vmatpush1.bf16.xpose.msra.mxu0 0
    %736 = vmatprep.subr.bf16.mxu0 0
    %737 = vmatpush1.bf16.xpose.msra.mxu0 0
    %738 = vmatprep.subr.bf16.mxu0 0
    %739 = vmatpush1.bf16.xpose.msra.mxu0 0
    %740 = vmatprep.mubr.bf16.mxu0 0
    %741 = vmatmul.mubr.bf16.gmra.mrb[0].mxu0 %v703
    %v742 = vpop.f32.mrb[0].mxu0
    %v743 = vadd.f32 0.0, %v742
    %v744 = vpop.f32.mrb[0].mxu0
    %v745 = vpop.f32.mrb[0].mxu0
    %v746 = vpop.f32.mrb[0].mxu0
    %747 = vdwg.mxu0
    %748 = vrot.lane.b32.xlu0 %v342, 120
    %v749 = vpop.permute.xlu0 %748
    %751 = vrot.lane.b32.xlu0 %v419, 120
    %v752 = vpop.permute.xlu0 %751
    %v754 = vsel %vm491, %v749, 0
    %v757 = vsel %vm491, %v752, 0
    %759 = vmatprep.subr.bf16.mxu0 0
    %760 = vmatpush1.bf16.xpose.msra.mxu0 %v757
    %761 = vmatprep.subr.bf16.mxu0 0
    %762 = vmatpush1.bf16.xpose.msra.mxu0 0
    %763 = vmatprep.subr.bf16.mxu0 0
    %764 = vmatpush1.bf16.xpose.msra.mxu0 0
    %765 = vmatprep.subr.bf16.mxu0 0
    %766 = vmatpush1.bf16.xpose.msra.mxu0 0
    %767 = vmatprep.subr.bf16.mxu0 0
    %768 = vmatpush1.bf16.xpose.msra.mxu0 0
    %769 = vmatprep.subr.bf16.mxu0 0
    %770 = vmatpush1.bf16.xpose.msra.mxu0 0
    %771 = vmatprep.subr.bf16.mxu0 0
    %772 = vmatpush1.bf16.xpose.msra.mxu0 0
    %773 = vmatprep.subr.bf16.mxu0 0
    %774 = vmatpush1.bf16.xpose.msra.mxu0 0
    %775 = vmatprep.subr.bf16.mxu0 0
    %776 = vmatpush1.bf16.xpose.msra.mxu0 0
    %777 = vmatprep.subr.bf16.mxu0 0
    %778 = vmatpush1.bf16.xpose.msra.mxu0 0
    %779 = vmatprep.subr.bf16.mxu0 0
    %780 = vmatpush1.bf16.xpose.msra.mxu0 0
    %781 = vmatprep.subr.bf16.mxu0 0
    %782 = vmatpush1.bf16.xpose.msra.mxu0 0
    %783 = vmatprep.subr.bf16.mxu0 0
    %784 = vmatpush1.bf16.xpose.msra.mxu0 0
    %785 = vmatprep.subr.bf16.mxu0 0
    %786 = vmatpush1.bf16.xpose.msra.mxu0 0
    %787 = vmatprep.subr.bf16.mxu0 0
    %788 = vmatpush1.bf16.xpose.msra.mxu0 0
    %789 = vmatprep.subr.bf16.mxu0 0
    %790 = vmatpush1.bf16.xpose.msra.mxu0 0
    %791 = vmatprep.mubr.bf16.mxu0 0
    %792 = vmatmul.mubr.bf16.gmra.mrb[0].mxu0 %v754
    %v793 = vpop.f32.mrb[0].mxu0
    %v794 = vadd.f32 0.0, %v793
    %v795 = vpop.f32.mrb[0].mxu0
    %v796 = vpop.f32.mrb[0].mxu0
    %v797 = vpop.f32.mrb[0].mxu0
    %798 = vdwg.mxu0
    %v799 = vsel %vm584, %v743, -inf
    %800 = vmax.xlane.f32.xlu0 %v799
    %v801 = vpop.xlane.xlu0 %800
    %v802 = vsel %vm584, %v794, -inf
    %803 = vmax.xlane.f32.xlu0 %v802
    %v804 = vpop.xlane.xlu0 %803
    %v805 = vsub.f32 %v743, %v801
    %v806 = vsub.f32 %v794, %v804
    %v807 = vmul.f32 %v805, 1.442695
    %v808 = vpow.pop %v807
    %v809 = vmul.f32 %v806, 1.442695
    %v810 = vpow.pop %v809
    %v811 = vsel %vm584, %v808, 0.0
    %812 = vadd.xlane.f32.xlu0 %v811
    %v813 = vpop.xlane.xlu0 %812
    %v814 = vsel %vm584, %v810, 0.0
    %815 = vadd.xlane.f32.xlu0 %v814
    %v816 = vpop.xlane.xlu0 %815
    %v817 = vrcp.pop %v813
    %v818 = vmul.f32 %v808, %v817
    %v819 = vrcp.pop %v816
    %v820 = vmul.f32 %v810, %v819
    %v821 = vpack.c.bf16 %v818, %v818
    %v822 = vpack.c.bf16 %v820, %v820
    %824 = vrot.lane.b32.xlu0 %v489, 120
    %v825 = vpop.permute.xlu0 %824
    %v828 = vsel %vm584, %v821, 0
    %830 = vmatprep.subr.bf16.mxu0 0
    %831 = vmatpush1.bf16.msra.mxu0 %v825
    %832 = vmatprep.subr.bf16.mxu0 0
    %833 = vmatpush1.bf16.msra.mxu0 0
    %834 = vmatprep.subr.bf16.mxu0 0
    %835 = vmatpush1.bf16.msra.mxu0 0
    %836 = vmatprep.subr.bf16.mxu0 0
    %837 = vmatpush1.bf16.msra.mxu0 0
    %838 = vmatprep.subr.bf16.mxu0 0
    %839 = vmatpush1.bf16.msra.mxu0 0
    %840 = vmatprep.subr.bf16.mxu0 0
    %841 = vmatpush1.bf16.msra.mxu0 0
    %842 = vmatprep.subr.bf16.mxu0 0
    %843 = vmatpush1.bf16.msra.mxu0 0
    %844 = vmatprep.subr.bf16.mxu0 0
    %845 = vmatpush1.bf16.msra.mxu0 0
    %846 = vmatprep.subr.bf16.mxu0 0
    %847 = vmatpush1.bf16.msra.mxu0 0
    %848 = vmatprep.subr.bf16.mxu0 0
    %849 = vmatpush1.bf16.msra.mxu0 0
    %850 = vmatprep.subr.bf16.mxu0 0
    %851 = vmatpush1.bf16.msra.mxu0 0
    %852 = vmatprep.subr.bf16.mxu0 0
    %853 = vmatpush1.bf16.msra.mxu0 0
    %854 = vmatprep.subr.bf16.mxu0 0
    %855 = vmatpush1.bf16.msra.mxu0 0
    %856 = vmatprep.subr.bf16.mxu0 0
    %857 = vmatpush1.bf16.msra.mxu0 0
    %858 = vmatprep.subr.bf16.mxu0 0
    %859 = vmatpush1.bf16.msra.mxu0 0
    %860 = vmatprep.subr.bf16.mxu0 0
    %861 = vmatpush1.bf16.msra.mxu0 0
    %862 = vmatprep.mubr.bf16.mxu0 0
    %863 = vmatmul.mubr.bf16.gmra.mrb[0].mxu0 %v828
    %v864 = vpop.f32.mrb[0].mxu0
    %v865 = vadd.f32 0.0, %v864
    %v866 = vpop.f32.mrb[0].mxu0
    %v867 = vpop.f32.mrb[0].mxu0
    %v868 = vpop.f32.mrb[0].mxu0
    %869 = vdwg.mxu0
    %871 = vrot.lane.b32.xlu0 %v490, 120
    %v872 = vpop.permute.xlu0 %871
    %v875 = vsel %vm584, %v822, 0
    %877 = vmatprep.subr.bf16.mxu0 0
    %878 = vmatpush1.bf16.msra.mxu0 %v872
    %879 = vmatprep.subr.bf16.mxu0 0
    %880 = vmatpush1.bf16.msra.mxu0 0
    %881 = vmatprep.subr.bf16.mxu0 0
    %882 = vmatpush1.bf16.msra.mxu0 0
    %883 = vmatprep.subr.bf16.mxu0 0
    %884 = vmatpush1.bf16.msra.mxu0 0
    %885 = vmatprep.subr.bf16.mxu0 0
    %886 = vmatpush1.bf16.msra.mxu0 0
    %887 = vmatprep.subr.bf16.mxu0 0
    %888 = vmatpush1.bf16.msra.mxu0 0
    %889 = vmatprep.subr.bf16.mxu0 0
    %890 = vmatpush1.bf16.msra.mxu0 0
    %891 = vmatprep.subr.bf16.mxu0 0
    %892 = vmatpush1.bf16.msra.mxu0 0
    %893 = vmatprep.subr.bf16.mxu0 0
    %894 = vmatpush1.bf16.msra.mxu0 0
    %895 = vmatprep.subr.bf16.mxu0 0
    %896 = vmatpush1.bf16.msra.mxu0 0
    %897 = vmatprep.subr.bf16.mxu0 0
    %898 = vmatpush1.bf16.msra.mxu0 0
    %899 = vmatprep.subr.bf16.mxu0 0
    %900 = vmatpush1.bf16.msra.mxu0 0
    %901 = vmatprep.subr.bf16.mxu0 0
    %902 = vmatpush1.bf16.msra.mxu0 0
    %903 = vmatprep.subr.bf16.mxu0 0
    %904 = vmatpush1.bf16.msra.mxu0 0
    %905 = vmatprep.subr.bf16.mxu0 0
    %906 = vmatpush1.bf16.msra.mxu0 0
    %907 = vmatprep.subr.bf16.mxu0 0
    %908 = vmatpush1.bf16.msra.mxu0 0
    %909 = vmatprep.mubr.bf16.mxu0 0
    %910 = vmatmul.mubr.bf16.gmra.mrb[0].mxu0 %v875
    %v911 = vpop.f32.mrb[0].mxu0
    %v912 = vadd.f32 0.0, %v911
    %v913 = vpop.f32.mrb[0].mxu0
    %v914 = vpop.f32.mrb[0].mxu0
    %v915 = vpop.f32.mrb[0].mxu0
    %916 = vdwg.mxu0
    %919 = vrot.lane.b32.xlu0 %v865, 8
    %v920 = vpop.permute.xlu0 %919
    %921 = vrot.lane.b32.xlu0 %v912, 8
    %v922 = vpop.permute.xlu0 %921
    %vm925 = vcmask 130112
    %926 = vst.msk [vmem:[#allocation2] sm:$0xff] %vm925, %v920
    %927 = vst.msk [vmem:[#allocation2 + $0x8] sm:$0xff] %vm925, %v922
    %928 = vrot.lane.b32.xlu0 %v341, 112
    %v929 = vpop.permute.xlu0 %928
    %930 = vrot.lane.b32.xlu0 %v418, 112
    %v931 = vpop.permute.xlu0 %930
    %v933 = vsel %vm491, %v929, 0
    %v936 = vsel %vm491, %v931, 0
    %938 = vmatprep.subr.bf16.mxu0 0
    %939 = vmatpush1.bf16.xpose.msra.mxu0 %v936
    %940 = vmatprep.subr.bf16.mxu0 0
    %941 = vmatpush1.bf16.xpose.msra.mxu0 0
    %942 = vmatprep.subr.bf16.mxu0 0
    %943 = vmatpush1.bf16.xpose.msra.mxu0 0
    %944 = vmatprep.subr.bf16.mxu0 0
    %945 = vmatpush1.bf16.xpose.msra.mxu0 0
    %946 = vmatprep.subr.bf16.mxu0 0
    %947 = vmatpush1.bf16.xpose.msra.mxu0 0
    %948 = vmatprep.subr.bf16.mxu0 0
    %949 = vmatpush1.bf16.xpose.msra.mxu0 0
    %950 = vmatprep.subr.bf16.mxu0 0
    %951 = vmatpush1.bf16.xpose.msra.mxu0 0
    %952 = vmatprep.subr.bf16.mxu0 0
    %953 = vmatpush1.bf16.xpose.msra.mxu0 0
    %954 = vmatprep.subr.bf16.mxu0 0
    %955 = vmatpush1.bf16.xpose.msra.mxu0 0
    %956 = vmatprep.subr.bf16.mxu0 0
    %957 = vmatpush1.bf16.xpose.msra.mxu0 0
    %958 = vmatprep.subr.bf16.mxu0 0
    %959 = vmatpush1.bf16.xpose.msra.mxu0 0
    %960 = vmatprep.subr.bf16.mxu0 0
    %961 = vmatpush1.bf16.xpose.msra.mxu0 0
    %962 = vmatprep.subr.bf16.mxu0 0
    %963 = vmatpush1.bf16.xpose.msra.mxu0 0
    %964 = vmatprep.subr.bf16.mxu0 0
    %965 = vmatpush1.bf16.xpose.msra.mxu0 0
    %966 = vmatprep.subr.bf16.mxu0 0
    %967 = vmatpush1.bf16.xpose.msra.mxu0 0
    %968 = vmatprep.subr.bf16.mxu0 0
    %969 = vmatpush1.bf16.xpose.msra.mxu0 0
    %970 = vmatprep.mubr.bf16.mxu0 0
    %971 = vmatmul.mubr.bf16.gmra.mrb[0].mxu0 %v933
    %v972 = vpop.f32.mrb[0].mxu0
    %v973 = vadd.f32 0.0, %v972
    %v974 = vpop.f32.mrb[0].mxu0
    %v975 = vpop.f32.mrb[0].mxu0
    %v976 = vpop.f32.mrb[0].mxu0
    %977 = vdwg.mxu0
    %978 = vrot.lane.b32.xlu0 %v342, 112
    %v979 = vpop.permute.xlu0 %978
    %980 = vrot.lane.b32.xlu0 %v419, 112
    %v981 = vpop.permute.xlu0 %980
    %v983 = vsel %vm491, %v979, 0
    %v986 = vsel %vm491, %v981, 0
    %988 = vmatprep.subr.bf16.mxu0 0
    %989 = vmatpush1.bf16.xpose.msra.mxu0 %v986
    %990 = vmatprep.subr.bf16.mxu0 0
    %991 = vmatpush1.bf16.xpose.msra.mxu0 0
    %992 = vmatprep.subr.bf16.mxu0 0
    %993 = vmatpush1.bf16.xpose.msra.mxu0 0
    %994 = vmatprep.subr.bf16.mxu0 0
    %995 = vmatpush1.bf16.xpose.msra.mxu0 0
    %996 = vmatprep.subr.bf16.mxu0 0
    %997 = vmatpush1.bf16.xpose.msra.mxu0 0
    %998 = vmatprep.subr.bf16.mxu0 0
    %999 = vmatpush1.bf16.xpose.msra.mxu0 0
    %1000 = vmatprep.subr.bf16.mxu0 0
    %1001 = vmatpush1.bf16.xpose.msra.mxu0 0
    %1002 = vmatprep.subr.bf16.mxu0 0
    %1003 = vmatpush1.bf16.xpose.msra.mxu0 0
    %1004 = vmatprep.subr.bf16.mxu0 0
    %1005 = vmatpush1.bf16.xpose.msra.mxu0 0
    %1006 = vmatprep.subr.bf16.mxu0 0
    %1007 = vmatpush1.bf16.xpose.msra.mxu0 0
    %1008 = vmatprep.subr.bf16.mxu0 0
    %1009 = vmatpush1.bf16.xpose.msra.mxu0 0
    %1010 = vmatprep.subr.bf16.mxu0 0
    %1011 = vmatpush1.bf16.xpose.msra.mxu0 0
    %1012 = vmatprep.subr.bf16.mxu0 0
    %1013 = vmatpush1.bf16.xpose.msra.mxu0 0
    %1014 = vmatprep.subr.bf16.mxu0 0
    %1015 = vmatpush1.bf16.xpose.msra.mxu0 0
    %1016 = vmatprep.subr.bf16.mxu0 0
    %1017 = vmatpush1.bf16.xpose.msra.mxu0 0
    %1018 = vmatprep.subr.bf16.mxu0 0
    %1019 = vmatpush1.bf16.xpose.msra.mxu0 0
    %1020 = vmatprep.mubr.bf16.mxu0 0
    %1021 = vmatmul.mubr.bf16.gmra.mrb[0].mxu0 %v983
    %v1022 = vpop.f32.mrb[0].mxu0
    %v1023 = vadd.f32 0.0, %v1022
    %v1024 = vpop.f32.mrb[0].mxu0
    %v1025 = vpop.f32.mrb[0].mxu0
    %v1026 = vpop.f32.mrb[0].mxu0
    %1027 = vdwg.mxu0
    %v1028 = vsel %vm584, %v973, -inf
    %1029 = vmax.xlane.f32.xlu0 %v1028
    %v1030 = vpop.xlane.xlu0 %1029
    %v1031 = vsel %vm584, %v1023, -inf
    %1032 = vmax.xlane.f32.xlu0 %v1031
    %v1033 = vpop.xlane.xlu0 %1032
    %v1034 = vsub.f32 %v973, %v1030
    %v1035 = vsub.f32 %v1023, %v1033
    %v1036 = vmul.f32 %v1034, 1.442695
    %v1037 = vpow.pop %v1036
    %v1038 = vmul.f32 %v1035, 1.442695
    %v1039 = vpow.pop %v1038
    %v1040 = vsel %vm584, %v1037, 0.0
    %1041 = vadd.xlane.f32.xlu0 %v1040
    %v1042 = vpop.xlane.xlu0 %1041
    %v1043 = vsel %vm584, %v1039, 0.0
    %1044 = vadd.xlane.f32.xlu0 %v1043
    %v1045 = vpop.xlane.xlu0 %1044
    %v1046 = vrcp.pop %v1042
    %v1047 = vmul.f32 %v1037, %v1046
    %v1048 = vrcp.pop %v1045
    %v1049 = vmul.f32 %v1039, %v1048
    %v1050 = vpack.c.bf16 %v1047, %v1047
    %v1051 = vpack.c.bf16 %v1049, %v1049
    %1052 = vrot.lane.b32.xlu0 %v489, 112
    %v1053 = vpop.permute.xlu0 %1052
    %v1056 = vsel %vm584, %v1050, 0
    %1058 = vmatprep.subr.bf16.mxu0 0
    %1059 = vmatpush1.bf16.msra.mxu0 %v1053
    %1060 = vmatprep.subr.bf16.mxu0 0
    %1061 = vmatpush1.bf16.msra.mxu0 0
    %1062 = vmatprep.subr.bf16.mxu0 0
    %1063 = vmatpush1.bf16.msra.mxu0 0
    %1064 = vmatprep.subr.bf16.mxu0 0
    %1065 = vmatpush1.bf16.msra.mxu0 0
    %1066 = vmatprep.subr.bf16.mxu0 0
    %1067 = vmatpush1.bf16.msra.mxu0 0
    %1068 = vmatprep.subr.bf16.mxu0 0
    %1069 = vmatpush1.bf16.msra.mxu0 0
    %1070 = vmatprep.subr.bf16.mxu0 0
    %1071 = vmatpush1.bf16.msra.mxu0 0
    %1072 = vmatprep.subr.bf16.mxu0 0
    %1073 = vmatpush1.bf16.msra.mxu0 0
    %1074 = vmatprep.subr.bf16.mxu0 0
    %1075 = vmatpush1.bf16.msra.mxu0 0
    %1076 = vmatprep.subr.bf16.mxu0 0
    %1077 = vmatpush1.bf16.msra.mxu0 0
    %1078 = vmatprep.subr.bf16.mxu0 0
    %1079 = vmatpush1.bf16.msra.mxu0 0
    %1080 = vmatprep.subr.bf16.mxu0 0
    %1081 = vmatpush1.bf16.msra.mxu0 0
    %1082 = vmatprep.subr.bf16.mxu0 0
    %1083 = vmatpush1.bf16.msra.mxu0 0
    %1084 = vmatprep.subr.bf16.mxu0 0
    %1085 = vmatpush1.bf16.msra.mxu0 0
    %1086 = vmatprep.subr.bf16.mxu0 0
    %1087 = vmatpush1.bf16.msra.mxu0 0
    %1088 = vmatprep.subr.bf16.mxu0 0
    %1089 = vmatpush1.bf16.msra.mxu0 0
    %1090 = vmatprep.mubr.bf16.mxu0 0
    %1091 = vmatmul.mubr.bf16.gmra.mrb[0].mxu0 %v1056
    %v1092 = vpop.f32.mrb[0].mxu0
    %v1093 = vadd.f32 0.0, %v1092
    %v1094 = vpop.f32.mrb[0].mxu0
    %v1095 = vpop.f32.mrb[0].mxu0
    %v1096 = vpop.f32.mrb[0].mxu0
    %1097 = vdwg.mxu0
    %1098 = vrot.lane.b32.xlu0 %v490, 112
    %v1099 = vpop.permute.xlu0 %1098
    %v1102 = vsel %vm584, %v1051, 0
    %1104 = vmatprep.subr.bf16.mxu0 0
    %1105 = vmatpush1.bf16.msra.mxu0 %v1099
    %1106 = vmatprep.subr.bf16.mxu0 0
    %1107 = vmatpush1.bf16.msra.mxu0 0
    %1108 = vmatprep.subr.bf16.mxu0 0
    %1109 = vmatpush1.bf16.msra.mxu0 0
    %1110 = vmatprep.subr.bf16.mxu0 0
    %1111 = vmatpush1.bf16.msra.mxu0 0
    %1112 = vmatprep.subr.bf16.mxu0 0
    %1113 = vmatpush1.bf16.msra.mxu0 0
    %1114 = vmatprep.subr.bf16.mxu0 0
    %1115 = vmatpush1.bf16.msra.mxu0 0
    %1116 = vmatprep.subr.bf16.mxu0 0
    %1117 = vmatpush1.bf16.msra.mxu0 0
    %1118 = vmatprep.subr.bf16.mxu0 0
    %1119 = vmatpush1.bf16.msra.mxu0 0
    %1120 = vmatprep.subr.bf16.mxu0 0
    %1121 = vmatpush1.bf16.msra.mxu0 0
    %1122 = vmatprep.subr.bf16.mxu0 0
    %1123 = vmatpush1.bf16.msra.mxu0 0
    %1124 = vmatprep.subr.bf16.mxu0 0
    %1125 = vmatpush1.bf16.msra.mxu0 0
    %1126 = vmatprep.subr.bf16.mxu0 0
    %1127 = vmatpush1.bf16.msra.mxu0 0
    %1128 = vmatprep.subr.bf16.mxu0 0
    %1129 = vmatpush1.bf16.msra.mxu0 0
    %1130 = vmatprep.subr.bf16.mxu0 0
    %1131 = vmatpush1.bf16.msra.mxu0 0
    %1132 = vmatprep.subr.bf16.mxu0 0
    %1133 = vmatpush1.bf16.msra.mxu0 0
    %1134 = vmatprep.subr.bf16.mxu0 0
    %1135 = vmatpush1.bf16.msra.mxu0 0
    %1136 = vmatprep.mubr.bf16.mxu0 0
    %1137 = vmatmul.mubr.bf16.gmra.mrb[0].mxu0 %v1102
    %v1138 = vpop.f32.mrb[0].mxu0
    %v1139 = vadd.f32 0.0, %v1138
    %v1140 = vpop.f32.mrb[0].mxu0
    %v1141 = vpop.f32.mrb[0].mxu0
    %v1142 = vpop.f32.mrb[0].mxu0
    %1143 = vdwg.mxu0
    %1146 = vrot.lane.b32.xlu0 %v1093, 16
    %v1147 = vpop.permute.xlu0 %1146
    %1148 = vrot.lane.b32.xlu0 %v1139, 16
    %v1149 = vpop.permute.xlu0 %1148
    %vm1152 = vcmask 195712
    %1153 = vst.msk [vmem:[#allocation2] sm:$0xff] %vm1152, %v1147
    %1154 = vst.msk [vmem:[#allocation2 + $0x8] sm:$0xff] %vm1152, %v1149
    %1155 = vrot.lane.b32.xlu0 %v341, 104
    %v1156 = vpop.permute.xlu0 %1155
    %1157 = vrot.lane.b32.xlu0 %v418, 104
    %v1158 = vpop.permute.xlu0 %1157
    %v1160 = vsel %vm491, %v1156, 0
    %v1163 = vsel %vm491, %v1158, 0
    %1165 = vmatprep.subr.bf16.mxu0 0
    %1166 = vmatpush1.bf16.xpose.msra.mxu0 %v1163
    %1167 = vmatprep.subr.bf16.mxu0 0
    %1168 = vmatpush1.bf16.xpose.msra.mxu0 0
    %1169 = vmatprep.subr.bf16.mxu0 0
    %1170 = vmatpush1.bf16.xpose.msra.mxu0 0
    %1171 = vmatprep.subr.bf16.mxu0 0
    %1172 = vmatpush1.bf16.xpose.msra.mxu0 0
    %1173 = vmatprep.subr.bf16.mxu0 0
    %1174 = vmatpush1.bf16.xpose.msra.mxu0 0
    %1175 = vmatprep.subr.bf16.mxu0 0
    %1176 = vmatpush1.bf16.xpose.msra.mxu0 0
    %1177 = vmatprep.subr.bf16.mxu0 0
    %1178 = vmatpush1.bf16.xpose.msra.mxu0 0
    %1179 = vmatprep.subr.bf16.mxu0 0
    %1180 = vmatpush1.bf16.xpose.msra.mxu0 0
    %1181 = vmatprep.subr.bf16.mxu0 0
    %1182 = vmatpush1.bf16.xpose.msra.mxu0 0
    %1183 = vmatprep.subr.bf16.mxu0 0
    %1184 = vmatpush1.bf16.xpose.msra.mxu0 0
    %1185 = vmatprep.subr.bf16.mxu0 0
    %1186 = vmatpush1.bf16.xpose.msra.mxu0 0
    %1187 = vmatprep.subr.bf16.mxu0 0
    %1188 = vmatpush1.bf16.xpose.msra.mxu0 0
    %1189 = vmatprep.subr.bf16.mxu0 0
    %1190 = vmatpush1.bf16.xpose.msra.mxu0 0
    %1191 = vmatprep.subr.bf16.mxu0 0
    %1192 = vmatpush1.bf16.xpose.msra.mxu0 0
    %1193 = vmatprep.subr.bf16.mxu0 0
    %1194 = vmatpush1.bf16.xpose.msra.mxu0 0
    %1195 = vmatprep.subr.bf16.mxu0 0
    %1196 = vmatpush1.bf16.xpose.msra.mxu0 0
    %1197 = vmatprep.mubr.bf16.mxu0 0
    %1198 = vmatmul.mubr.bf16.gmra.mrb[0].mxu0 %v1160
    %v1199 = vpop.f32.mrb[0].mxu0
    %v1200 = vadd.f32 0.0, %v1199
    %v1201 = vpop.f32.mrb[0].mxu0
    %v1202 = vpop.f32.mrb[0].mxu0
    %v1203 = vpop.f32.mrb[0].mxu0
    %1204 = vdwg.mxu0
    %1205 = vrot.lane.b32.xlu0 %v342, 104
    %v1206 = vpop.permute.xlu0 %1205
    %1207 = vrot.lane.b32.xlu0 %v419, 104
    %v1208 = vpop.permute.xlu0 %1207
    %v1210 = vsel %vm491, %v1206, 0
    %v1213 = vsel %vm491, %v1208, 0
    %1215 = vmatprep.subr.bf16.mxu0 0
    %1216 = vmatpush1.bf16.xpose.msra.mxu0 %v1213
    %1217 = vmatprep.subr.bf16.mxu0 0
    %1218 = vmatpush1.bf16.xpose.msra.mxu0 0
    %1219 = vmatprep.subr.bf16.mxu0 0
    %1220 = vmatpush1.bf16.xpose.msra.mxu0 0
    %1221 = vmatprep.subr.bf16.mxu0 0
    %1222 = vmatpush1.bf16.xpose.msra.mxu0 0
    %1223 = vmatprep.subr.bf16.mxu0 0
    %1224 = vmatpush1.bf16.xpose.msra.mxu0 0
    %1225 = vmatprep.subr.bf16.mxu0 0
    %1226 = vmatpush1.bf16.xpose.msra.mxu0 0
    %1227 = vmatprep.subr.bf16.mxu0 0
    %1228 = vmatpush1.bf16.xpose.msra.mxu0 0
    %1229 = vmatprep.subr.bf16.mxu0 0
    %1230 = vmatpush1.bf16.xpose.msra.mxu0 0
    %1231 = vmatprep.subr.bf16.mxu0 0
    %1232 = vmatpush1.bf16.xpose.msra.mxu0 0
    %1233 = vmatprep.subr.bf16.mxu0 0
    %1234 = vmatpush1.bf16.xpose.msra.mxu0 0
    %1235 = vmatprep.subr.bf16.mxu0 0
    %1236 = vmatpush1.bf16.xpose.msra.mxu0 0
    %1237 = vmatprep.subr.bf16.mxu0 0
    %1238 = vmatpush1.bf16.xpose.msra.mxu0 0
    %1239 = vmatprep.subr.bf16.mxu0 0
    %1240 = vmatpush1.bf16.xpose.msra.mxu0 0
    %1241 = vmatprep.subr.bf16.mxu0 0
    %1242 = vmatpush1.bf16.xpose.msra.mxu0 0
    %1243 = vmatprep.subr.bf16.mxu0 0
    %1244 = vmatpush1.bf16.xpose.msra.mxu0 0
    %1245 = vmatprep.subr.bf16.mxu0 0
    %1246 = vmatpush1.bf16.xpose.msra.mxu0 0
    %1247 = vmatprep.mubr.bf16.mxu0 0
    %1248 = vmatmul.mubr.bf16.gmra.mrb[0].mxu0 %v1210
    %v1249 = vpop.f32.mrb[0].mxu0
    %v1250 = vadd.f32 0.0, %v1249
    %v1251 = vpop.f32.mrb[0].mxu0
    %v1252 = vpop.f32.mrb[0].mxu0
    %v1253 = vpop.f32.mrb[0].mxu0
    %1254 = vdwg.mxu0
    %v1255 = vsel %vm584, %v1200, -inf
    %1256 = vmax.xlane.f32.xlu0 %v1255
    %v1257 = vpop.xlane.xlu0 %1256
    %v1258 = vsel %vm584, %v1250, -inf
    %1259 = vmax.xlane.f32.xlu0 %v1258
    %v1260 = vpop.xlane.xlu0 %1259
    %v1261 = vsub.f32 %v1200, %v1257
    %v1262 = vsub.f32 %v1250, %v1260
    %v1263 = vmul.f32 %v1261, 1.442695
    %v1264 = vpow.pop %v1263
    %v1265 = vmul.f32 %v1262, 1.442695
    %v1266 = vpow.pop %v1265
    %v1267 = vsel %vm584, %v1264, 0.0
    %1268 = vadd.xlane.f32.xlu0 %v1267
    %v1269 = vpop.xlane.xlu0 %1268
    %v1270 = vsel %vm584, %v1266, 0.0
    %1271 = vadd.xlane.f32.xlu0 %v1270
    %v1272 = vpop.xlane.xlu0 %1271
    %v1273 = vrcp.pop %v1269
    %v1274 = vmul.f32 %v1264, %v1273
    %v1275 = vrcp.pop %v1272
    %v1276 = vmul.f32 %v1266, %v1275
    %v1277 = vpack.c.bf16 %v1274, %v1274
    %v1278 = vpack.c.bf16 %v1276, %v1276
    %1279 = vrot.lane.b32.xlu0 %v489, 104
    %v1280 = vpop.permute.xlu0 %1279
    %v1283 = vsel %vm584, %v1277, 0
    %1285 = vmatprep.subr.bf16.mxu0 0
    %1286 = vmatpush1.bf16.msra.mxu0 %v1280
    %1287 = vmatprep.subr.bf16.mxu0 0
    %1288 = vmatpush1.bf16.msra.mxu0 0
    %1289 = vmatprep.subr.bf16.mxu0 0
    %1290 = vmatpush1.bf16.msra.mxu0 0
    %1291 = vmatprep.subr.bf16.mxu0 0
    %1292 = vmatpush1.bf16.msra.mxu0 0
    %1293 = vmatprep.subr.bf16.mxu0 0
    %1294 = vmatpush1.bf16.msra.mxu0 0
    %1295 = vmatprep.subr.bf16.mxu0 0
    %1296 = vmatpush1.bf16.msra.mxu0 0
    %1297 = vmatprep.subr.bf16.mxu0 0
    %1298 = vmatpush1.bf16.msra.mxu0 0
    %1299 = vmatprep.subr.bf16.mxu0 0
    %1300 = vmatpush1.bf16.msra.mxu0 0
    %1301 = vmatprep.subr.bf16.mxu0 0
    %1302 = vmatpush1.bf16.msra.mxu0 0
    %1303 = vmatprep.subr.bf16.mxu0 0
    %1304 = vmatpush1.bf16.msra.mxu0 0
    %1305 = vmatprep.subr.bf16.mxu0 0
    %1306 = vmatpush1.bf16.msra.mxu0 0
    %1307 = vmatprep.subr.bf16.mxu0 0
    %1308 = vmatpush1.bf16.msra.mxu0 0
    %1309 = vmatprep.subr.bf16.mxu0 0
    %1310 = vmatpush1.bf16.msra.mxu0 0
    %1311 = vmatprep.subr.bf16.mxu0 0
    %1312 = vmatpush1.bf16.msra.mxu0 0
    %1313 = vmatprep.subr.bf16.mxu0 0
    %1314 = vmatpush1.bf16.msra.mxu0 0
    %1315 = vmatprep.subr.bf16.mxu0 0
    %1316 = vmatpush1.bf16.msra.mxu0 0
    %1317 = vmatprep.mubr.bf16.mxu0 0
    %1318 = vmatmul.mubr.bf16.gmra.mrb[0].mxu0 %v1283
    %v1319 = vpop.f32.mrb[0].mxu0
    %v1320 = vadd.f32 0.0, %v1319
    %v1321 = vpop.f32.mrb[0].mxu0
    %v1322 = vpop.f32.mrb[0].mxu0
    %v1323 = vpop.f32.mrb[0].mxu0
    %1324 = vdwg.mxu0
    %1325 = vrot.lane.b32.xlu0 %v490, 104
    %v1326 = vpop.permute.xlu0 %1325
    %v1329 = vsel %vm584, %v1278, 0
    %1331 = vmatprep.subr.bf16.mxu0 0
    %1332 = vmatpush1.bf16.msra.mxu0 %v1326
    %1333 = vmatprep.subr.bf16.mxu0 0
    %1334 = vmatpush1.bf16.msra.mxu0 0
    %1335 = vmatprep.subr.bf16.mxu0 0
    %1336 = vmatpush1.bf16.msra.mxu0 0
    %1337 = vmatprep.subr.bf16.mxu0 0
    %1338 = vmatpush1.bf16.msra.mxu0 0
    %1339 = vmatprep.subr.bf16.mxu0 0
    %1340 = vmatpush1.bf16.msra.mxu0 0
    %1341 = vmatprep.subr.bf16.mxu0 0
    %1342 = vmatpush1.bf16.msra.mxu0 0
    %1343 = vmatprep.subr.bf16.mxu0 0
    %1344 = vmatpush1.bf16.msra.mxu0 0
    %1345 = vmatprep.subr.bf16.mxu0 0
    %1346 = vmatpush1.bf16.msra.mxu0 0
    %1347 = vmatprep.subr.bf16.mxu0 0
    %1348 = vmatpush1.bf16.msra.mxu0 0
    %1349 = vmatprep.subr.bf16.mxu0 0
    %1350 = vmatpush1.bf16.msra.mxu0 0
    %1351 = vmatprep.subr.bf16.mxu0 0
    %1352 = vmatpush1.bf16.msra.mxu0 0
    %1353 = vmatprep.subr.bf16.mxu0 0
    %1354 = vmatpush1.bf16.msra.mxu0 0
    %1355 = vmatprep.subr.bf16.mxu0 0
    %1356 = vmatpush1.bf16.msra.mxu0 0
    %1357 = vmatprep.subr.bf16.mxu0 0
    %1358 = vmatpush1.bf16.msra.mxu0 0
    %1359 = vmatprep.subr.bf16.mxu0 0
    %1360 = vmatpush1.bf16.msra.mxu0 0
    %1361 = vmatprep.subr.bf16.mxu0 0
    %1362 = vmatpush1.bf16.msra.mxu0 0
    %1363 = vmatprep.mubr.bf16.mxu0 0
    %1364 = vmatmul.mubr.bf16.gmra.mrb[0].mxu0 %v1329
    %v1365 = vpop.f32.mrb[0].mxu0
    %v1366 = vadd.f32 0.0, %v1365
    %v1367 = vpop.f32.mrb[0].mxu0
    %v1368 = vpop.f32.mrb[0].mxu0
    %v1369 = vpop.f32.mrb[0].mxu0
    %1370 = vdwg.mxu0
    %1373 = vrot.lane.b32.xlu0 %v1320, 24
    %v1374 = vpop.permute.xlu0 %1373
    %1375 = vrot.lane.b32.xlu0 %v1366, 24
    %v1376 = vpop.permute.xlu0 %1375
    %vm1379 = vcmask 261312
    %1380 = vst.msk [vmem:[#allocation2] sm:$0xff] %vm1379, %v1374
    %1381 = vst.msk [vmem:[#allocation2 + $0x8] sm:$0xff] %vm1379, %v1376
    %v1382 = vld [vmem:[#allocation2] sm:$0xff]
    %v1383 = vld [vmem:[#allocation2 + $0x8] sm:$0xff]
    %v1384 = vpack.c.bf16 %v1382, %v1382
    %v1385 = vpack.c.bf16 %v1383, %v1383
    %v1386 = vld [vmem:[#allocation6] sm:$0xf]
    %v1387 = vld [vmem:[#allocation6 + $0x4] sm:$0xf]
    %v1388 = vld [vmem:[#allocation6 + $0x8] sm:$0xf]
    %v1389 = vld [vmem:[#allocation6 + $0xc] sm:$0xf]
    %v1392 = vunpack.c.l.b16 %v1384
    %v1393 = vunpack.c.l.b16 %v1385
    %v1394 = vpack.c.b16 %v1393, %v1392
    %v1399 = vunpack.c.l.b16 %v1386
    %v1400 = vunpack.c.l.b16 %v1387
    %v1401 = vunpack.c.l.b16 %v1388
    %v1402 = vunpack.c.l.b16 %v1389
    %v1403 = vpack.c.b16 %v1400, %v1399
    %v1404 = vpack.c.b16 %v1402, %v1401
    %v1408 = vsel %vm292, %v1394, 0
    %1410 = vmatprep.subr.bf16.mxu0 0
    %1411 = vmatpush1.bf16.msra.mxu0 %v1403
    %1412 = vmatprep.subr.bf16.mxu0 0
    %1413 = vmatpush1.bf16.msra.mxu0 %v1404
    %1414 = vmatprep.subr.bf16.mxu0 0
    %1415 = vmatpush1.bf16.msra.mxu0 0
    %1416 = vmatprep.subr.bf16.mxu0 0
    %1417 = vmatpush1.bf16.msra.mxu0 0
    %1418 = vmatprep.subr.bf16.mxu0 0
    %1419 = vmatpush1.bf16.msra.mxu0 0
    %1420 = vmatprep.subr.bf16.mxu0 0
    %1421 = vmatpush1.bf16.msra.mxu0 0
    %1422 = vmatprep.subr.bf16.mxu0 0
    %1423 = vmatpush1.bf16.msra.mxu0 0
    %1424 = vmatprep.subr.bf16.mxu0 0
    %1425 = vmatpush1.bf16.msra.mxu0 0
    %1426 = vmatprep.subr.bf16.mxu0 0
    %1427 = vmatpush1.bf16.msra.mxu0 0
    %1428 = vmatprep.subr.bf16.mxu0 0
    %1429 = vmatpush1.bf16.msra.mxu0 0
    %1430 = vmatprep.subr.bf16.mxu0 0
    %1431 = vmatpush1.bf16.msra.mxu0 0
    %1432 = vmatprep.subr.bf16.mxu0 0
    %1433 = vmatpush1.bf16.msra.mxu0 0
    %1434 = vmatprep.subr.bf16.mxu0 0
    %1435 = vmatpush1.bf16.msra.mxu0 0
    %1436 = vmatprep.subr.bf16.mxu0 0
    %1437 = vmatpush1.bf16.msra.mxu0 0
    %1438 = vmatprep.subr.bf16.mxu0 0
    %1439 = vmatpush1.bf16.msra.mxu0 0
    %1440 = vmatprep.subr.bf16.mxu0 0
    %1441 = vmatpush1.bf16.msra.mxu0 0
    %1442 = vmatprep.mubr.bf16.mxu0 0
    %1443 = vmatmul.mubr.bf16.gmra.mrb[0].mxu0 %v1408
    %v1444 = vpop.f32.mrb[0].mxu0
    %v1445 = vadd.f32 0.0, %v1444
    %v1446 = vpop.f32.mrb[0].mxu0
    %v1447 = vpop.f32.mrb[0].mxu0
    %v1448 = vadd.f32 0.0, %v1447
    %v1449 = vpop.f32.mrb[0].mxu0
    %1450 = vdwg.mxu0
    %v1451 = vadd.f32 %v143, %v1445
    %v1452 = vadd.f32 %v144, %v1448
    %v1454 = vlaneseq
    %v1455 = vshrl.u32 %v1454, 7
    %v1456 = vsub.s32 0, %v1455
    %v1457 = vrot.slane %v267, %v1456
    %v1459 = vadd.f32 %v1451, %v1457
    %v1460 = vadd.f32 %v1452, %v1457
    %v1461 = vsel %vm292, %v1459, 0.0
    %1462 = vadd.xlane.f32.xlu0 %v1461
    %v1463 = vpop.xlane.xlu0 %1462
    %v1464 = vsel %vm292, %v1460, 0.0
    %1465 = vadd.xlane.f32.xlu0 %v1464
    %v1466 = vpop.xlane.xlu0 %1465
    %v1467 = vrcp.pop 32.0
    %v1468 = vmul.f32 %v1463, %v1467
    %v1469 = vmul.f32 %v1466, %v1467
    %v1470 = vsub.f32 %v1459, %v1468
    %v1471 = vsub.f32 %v1460, %v1469
    %v1472 = vmul.f32 %v1470, %v1470
    %v1473 = vmul.f32 %v1471, %v1471
    %v1474 = vsel %vm292, %v1472, 0.0
    %1475 = vadd.xlane.f32.xlu0 %v1474
    %v1476 = vpop.xlane.xlu0 %1475
    %v1477 = vsel %vm292, %v1473, 0.0
    %1478 = vadd.xlane.f32.xlu0 %v1477
    %v1479 = vpop.xlane.xlu0 %1478
    %v1480 = vmul.f32 %v1476, %v1467
    %v1481 = vmul.f32 %v1479, %v1467
    %v1482 = vadd.f32 %v1480, 1e-05
    %v1483 = vadd.f32 %v1481, 1e-05
    %v1484 = vrsqrt.pop %v1482
    %v1485 = vrsqrt.pop %v1483
    %v1486 = vmul.f32 %v1470, %v1484
    %v1487 = vmul.f32 %v1471, %v1485
    %v1488 = vlaneseq
    %v1489 = vshrl.u32 %v1488, 7
    %v1490 = vsub.s32 0, %v1489
    %v1491 = vrot.slane %v268, %v1490
    %v1492 = vmul.f32 %v1486, %v1491
    %v1493 = vmul.f32 %v1487, %v1491
    %v1494 = vlaneseq
    %v1495 = vshrl.u32 %v1494, 7
    %v1496 = vsub.s32 0, %v1495
    %v1497 = vrot.slane %v269, %v1496
    %v1498 = vadd.f32 %v1492, %v1497
    %v1499 = vadd.f32 %v1493, %v1497
    %v1500 = vpack.c.bf16 %v1499, %v1498
    %v1501 = vld [vmem:[#allocation8] sm:$0xf]
    %v1502 = vld [vmem:[#allocation8 + $0x4] sm:$0xf]
    %v1503 = vld [vmem:[#allocation8 + $0x8] sm:$0xf]
    %v1504 = vld [vmem:[#allocation8 + $0xc] sm:$0xf]
    %v1506 = vlaneseq
    %v1507 = vshrl.u32 %v1506, 7
    %v1508 = vsub.s32 0, %v1507
    %v1509 = vrot.slane %v270, %v1508
    %v1515 = vunpack.c.l.b16 %v1501
    %v1516 = vunpack.c.l.b16 %v1502
    %v1517 = vunpack.c.l.b16 %v1503
    %v1518 = vunpack.c.l.b16 %v1504
    %v1519 = vpack.c.b16 %v1516, %v1515
    %v1520 = vpack.c.b16 %v1518, %v1517
    %v1524 = vsel %vm292, %v1500, 0
    %1526 = vmatprep.subr.bf16.mxu0 0
    %1527 = vmatpush1.bf16.msra.mxu0 %v1519
    %1528 = vmatprep.subr.bf16.mxu0 0
    %1529 = vmatpush1.bf16.msra.mxu0 %v1520
    %1530 = vmatprep.subr.bf16.mxu0 0
    %1531 = vmatpush1.bf16.msra.mxu0 0
    %1532 = vmatprep.subr.bf16.mxu0 0
    %1533 = vmatpush1.bf16.msra.mxu0 0
    %1534 = vmatprep.subr.bf16.mxu0 0
    %1535 = vmatpush1.bf16.msra.mxu0 0
    %1536 = vmatprep.subr.bf16.mxu0 0
    %1537 = vmatpush1.bf16.msra.mxu0 0
    %1538 = vmatprep.subr.bf16.mxu0 0
    %1539 = vmatpush1.bf16.msra.mxu0 0
    %1540 = vmatprep.subr.bf16.mxu0 0
    %1541 = vmatpush1.bf16.msra.mxu0 0
    %1542 = vmatprep.subr.bf16.mxu0 0
    %1543 = vmatpush1.bf16.msra.mxu0 0
    %1544 = vmatprep.subr.bf16.mxu0 0
    %1545 = vmatpush1.bf16.msra.mxu0 0
    %1546 = vmatprep.subr.bf16.mxu0 0
    %1547 = vmatpush1.bf16.msra.mxu0 0
    %1548 = vmatprep.subr.bf16.mxu0 0
    %1549 = vmatpush1.bf16.msra.mxu0 0
    %1550 = vmatprep.subr.bf16.mxu0 0
    %1551 = vmatpush1.bf16.msra.mxu0 0
    %1552 = vmatprep.subr.bf16.mxu0 0
    %1553 = vmatpush1.bf16.msra.mxu0 0
    %1554 = vmatprep.subr.bf16.mxu0 0
    %1555 = vmatpush1.bf16.msra.mxu0 0
    %1556 = vmatprep.subr.bf16.mxu0 0
    %1557 = vmatpush1.bf16.msra.mxu0 0
    %1558 = vmatprep.mubr.bf16.mxu0 0
    %1559 = vmatmul.mubr.bf16.gmra.mrb[0].mxu0 %v1524
    %v1560 = vpop.f32.mrb[0].mxu0
    %v1561 = vadd.f32 %v1509, %v1560
    %v1562 = vpop.f32.mrb[0].mxu0
    %v1563 = vpop.f32.mrb[0].mxu0
    %v1564 = vadd.f32 %v1509, %v1563
    %v1565 = vpop.f32.mrb[0].mxu0
    %1566 = vdwg.mxu0
    %v1567 = vmul.f32 %v1561, 1.702
    %v1568 = vmul.f32 %v1564, 1.702
    %v1569 = vxor.u32 %v1567, 2147483648
    %v1570 = vxor.u32 %v1568, 2147483648
    %v1571 = vmul.f32 %v1569, 1.442695
    %v1572 = vpow.pop %v1571
    %v1573 = vmul.f32 %v1570, 1.442695
    %v1574 = vpow.pop %v1573
    %v1575 = vadd.f32 %v1572, 1.0
    %v1576 = vadd.f32 %v1574, 1.0
    %v1577 = vrcp.pop %v1575
    %v1578 = vmul.f32 1.0, %v1577
    %v1579 = vrcp.pop %v1576
    %v1580 = vmul.f32 1.0, %v1579
    %v1581 = vmul.f32 %v1561, %v1578
    %v1582 = vmul.f32 %v1564, %v1580
    %v1583 = vpack.c.bf16 %v1582, %v1581
    %v1584 = vld [vmem:[%s7] sm:$0xf]
    %v1585 = vld [vmem:[%s7 + $0x4] sm:$0xf]
    %v1586 = vld [vmem:[%s7 + $0x8] sm:$0xf]
    %v1587 = vld [vmem:[%s7 + $0xc] sm:$0xf]
    %v1588 = vld [vmem:[%s7 + $0x10] sm:$0xf]
    %v1589 = vld [vmem:[%s7 + $0x14] sm:$0xf]
    %v1590 = vld [vmem:[%s7 + $0x18] sm:$0xf]
    %v1591 = vld [vmem:[%s7 + $0x1c] sm:$0xf]
    %v1592 = vld [vmem:[%s7 + $0x20] sm:$0xf]
    %v1593 = vld [vmem:[%s7 + $0x24] sm:$0xf]
    %v1594 = vld [vmem:[%s7 + $0x28] sm:$0xf]
    %v1595 = vld [vmem:[%s7 + $0x2c] sm:$0xf]
    %v1596 = vld [vmem:[%s7 + $0x30] sm:$0xf]
    %v1597 = vld [vmem:[%s7 + $0x34] sm:$0xf]
    %v1598 = vld [vmem:[%s7 + $0x38] sm:$0xf]
    %v1599 = vld [vmem:[%s7 + $0x3c] sm:$0xf]
    %v1601 = vlaneseq
    %v1602 = vshrl.u32 %v1601, 7
    %v1603 = vsub.s32 0, %v1602
    %v1604 = vrot.slane %v271, %v1603
    %v1622 = vunpack.c.l.b16 %v1584
    %v1623 = vunpack.c.l.b16 %v1585
    %v1624 = vunpack.c.l.b16 %v1586
    %v1625 = vunpack.c.l.b16 %v1587
    %v1626 = vunpack.c.l.b16 %v1588
    %v1627 = vunpack.c.l.b16 %v1589
    %v1628 = vunpack.c.l.b16 %v1590
    %v1629 = vunpack.c.l.b16 %v1591
    %v1630 = vunpack.c.l.b16 %v1592
    %v1631 = vunpack.c.l.b16 %v1593
    %v1632 = vunpack.c.l.b16 %v1594
    %v1633 = vunpack.c.l.b16 %v1595
    %v1634 = vunpack.c.l.b16 %v1596
    %v1635 = vunpack.c.l.b16 %v1597
    %v1636 = vunpack.c.l.b16 %v1598
    %v1637 = vunpack.c.l.b16 %v1599
    %v1638 = vpack.c.b16 %v1623, %v1622
    %v1639 = vpack.c.b16 %v1625, %v1624
    %v1640 = vpack.c.b16 %v1627, %v1626
    %v1641 = vpack.c.b16 %v1629, %v1628
    %v1642 = vpack.c.b16 %v1631, %v1630
    %v1643 = vpack.c.b16 %v1633, %v1632
    %v1644 = vpack.c.b16 %v1635, %v1634
    %v1645 = vpack.c.b16 %v1637, %v1636
    %1654 = vmatprep.subr.bf16.mxu0 0
    %1655 = vmatpush1.bf16.msra.mxu0 %v1638
    %1656 = vmatprep.subr.bf16.mxu0 0
    %1657 = vmatpush1.bf16.msra.mxu0 %v1639
    %1658 = vmatprep.subr.bf16.mxu0 0
    %1659 = vmatpush1.bf16.msra.mxu0 %v1640
    %1660 = vmatprep.subr.bf16.mxu0 0
    %1661 = vmatpush1.bf16.msra.mxu0 %v1641
    %1662 = vmatprep.subr.bf16.mxu0 0
    %1663 = vmatpush1.bf16.msra.mxu0 %v1642
    %1664 = vmatprep.subr.bf16.mxu0 0
    %1665 = vmatpush1.bf16.msra.mxu0 %v1643
    %1666 = vmatprep.subr.bf16.mxu0 0
    %1667 = vmatpush1.bf16.msra.mxu0 %v1644
    %1668 = vmatprep.subr.bf16.mxu0 0
    %1669 = vmatpush1.bf16.msra.mxu0 %v1645
    %1670 = vmatprep.subr.bf16.mxu0 0
    %1671 = vmatpush1.bf16.msra.mxu0 0
    %1672 = vmatprep.subr.bf16.mxu0 0
    %1673 = vmatpush1.bf16.msra.mxu0 0
    %1674 = vmatprep.subr.bf16.mxu0 0
    %1675 = vmatpush1.bf16.msra.mxu0 0
    %1676 = vmatprep.subr.bf16.mxu0 0
    %1677 = vmatpush1.bf16.msra.mxu0 0
    %1678 = vmatprep.subr.bf16.mxu0 0
    %1679 = vmatpush1.bf16.msra.mxu0 0
    %1680 = vmatprep.subr.bf16.mxu0 0
    %1681 = vmatpush1.bf16.msra.mxu0 0
    %1682 = vmatprep.subr.bf16.mxu0 0
    %1683 = vmatpush1.bf16.msra.mxu0 0
    %1684 = vmatprep.subr.bf16.mxu0 0
    %1685 = vmatpush1.bf16.msra.mxu0 0
    %1686 = vmatprep.mubr.bf16.mxu0 0
    %1687 = vmatmul.mubr.bf16.gmra.mrb[0].mxu0 %v1583
    %v1688 = vpop.f32.mrb[0].mxu0
    %v1689 = vadd.f32 %v1604, %v1688
    %v1690 = vpop.f32.mrb[0].mxu0
    %v1691 = vpop.f32.mrb[0].mxu0
    %v1692 = vadd.f32 %v1604, %v1691
    %v1693 = vpop.f32.mrb[0].mxu0
    %1694 = vdwg.mxu0
    %v1695 = vadd.f32 %v1459, %v1689
    %v1696 = vadd.f32 %v1460, %v1692
    %v1697 = vcombine.high %v1695, 0.0
    %v1699 = vunpack.c.l.s4 1983009808
    %v1700 = vunpack.c.0.s8 %v1699
    %v1701 = vlaneseq
    %v1702 = vshrl.u32 %v1701, 7
    %v1703 = vsub.s32 %v1700, %v1702
    %v1704 = vrot.slane %v1695, %v1703
    %v1706 = vunpack.c.l.s4 1983009808
    %v1707 = vunpack.c.0.s8 %v1706
    %v1708 = vlaneseq
    %v1709 = vshrl.u32 %v1708, 7
    %v1710 = vsub.s32 %v1707, %v1709
    %v1711 = vrot.slane %v1697, %v1710
    %v1712 = vcombine.high %v1696, 0.0
    %v1714 = vunpack.c.l.s4 1983009808
    %v1715 = vunpack.c.0.s8 %v1714
    %v1716 = vlaneseq
    %v1717 = vshrl.u32 %v1716, 7
    %v1718 = vsub.s32 %v1715, %v1717
    %v1719 = vrot.slane %v1696, %v1718
    %v1721 = vunpack.c.l.s4 1983009808
    %v1722 = vunpack.c.0.s8 %v1721
    %v1723 = vlaneseq
    %v1724 = vshrl.u32 %v1723, 7
    %v1725 = vsub.s32 %v1722, %v1724
    %v1726 = vrot.slane %v1712, %v1725
    %v1727 = vcombine.low %v1704, %v1719
    %v1728 = vcombine.high %v1704, %v1719
    %v1730 = vunpack.c.l.s4 1934713408
    %v1731 = vunpack.c.0.s8 %v1730
    %v1732 = vlaneseq
    %v1733 = vshrl.u32 %v1732, 7
    %v1734 = vsub.s32 %v1731, %v1733
    %v1735 = vrot.slane %v1727, %v1734
    %v1737 = vunpack.c.l.s4 1934713408
    %v1738 = vunpack.c.0.s8 %v1737
    %v1739 = vlaneseq
    %v1740 = vshrl.u32 %v1739, 7
    %v1741 = vsub.s32 %v1738, %v1740
    %v1742 = vrot.slane %v1728, %v1741
    %v1743 = vcombine.low %v1711, %v1726
    %v1744 = vcombine.high %v1711, %v1726
    %v1746 = vunpack.c.l.s4 1934713408
    %v1747 = vunpack.c.0.s8 %v1746
    %v1748 = vlaneseq
    %v1749 = vshrl.u32 %v1748, 7
    %v1750 = vsub.s32 %v1747, %v1749
    %v1751 = vrot.slane %v1743, %v1750
    %v1753 = vunpack.c.l.s4 1934713408
    %v1754 = vunpack.c.0.s8 %v1753
    %v1755 = vlaneseq
    %v1756 = vshrl.u32 %v1755, 7
    %v1757 = vsub.s32 %v1754, %v1756
    %v1758 = vrot.slane %v1744, %v1757
    %v1759 = vcombine.high %v1735, 0.0
    %v1760 = vcombine.high %v1742, 0.0
    %v1761 = vcombine.high %v1751, 0.0
    %v1762 = vcombine.high %v1758, 0.0
    %vm1763 = vcmask 254976
    %1764 = vst.msk [vmem:[#allocation9] sm:$0x3] %vm1763, %v1735
    %1765 = vst.msk [vmem:[#allocation9 + $0x2] sm:$0x3] %vm1763, %v1759
    %1766 = vst.msk [vmem:[#allocation9 + $0x4] sm:$0x3] %vm1763, %v1742
    %1767 = vst.msk [vmem:[#allocation9 + $0x6] sm:$0x3] %vm1763, %v1760
    %1768 = vst.msk [vmem:[#allocation9 + $0x8] sm:$0x3] %vm1763, %v1751
    %1769 = vst.msk [vmem:[#allocation9 + $0xa] sm:$0x3] %vm1763, %v1761
    %1770 = vst.msk [vmem:[#allocation9 + $0xc] sm:$0x3] %vm1763, %v1758
    %1771 = vst.msk [vmem:[#allocation9 + $0xe] sm:$0x3] %vm1763, %v1762
    // Predicated region
    $region66: #{tpu_custom_call.1} parent=1 // pred_check
      _
    $region67: #{tpu_custom_call.1} parent=1 // pred_check_branch
      %1773 = sbr.rel (0) target = $region69
    $region68: #{tpu_custom_call.1} parent=1 // pred_region
      %s1775 = ssub.s32 256, 256
      %1776 = vsyncadd [#allocation5], %s1775
      %s1777 = sshll.u32 [#allocation9], 4
      %s1778 = int_to_ptr.vmem [resolvable:$true] %s1777
      %1783 = dma.vmem_to_hbm [thread:$0]  %s1778, 256, %s13, [#allocation5], 32, 32, 2
    $region69: #{tpu_custom_call.1} parent=1 // pred_fallthru
      _
    // Predicated region
    $region70: #{tpu_custom_call.1} parent=1 // pred_check
      _
    $region71: #{tpu_custom_call.1} parent=1 // pred_check_branch
      %1785 = sbr.rel (0) target = $region73
    $region72: #{tpu_custom_call.1} parent=1 // pred_region
      %1786 = dma.done [#allocation5], 256
    $region73: #{tpu_custom_call.1} parent=1 // pred_fallthru
      _
    %1787 = vsyncpa [#allocation4], 1
    %1788 = vsyncpa [#allocation7], 1
    %1789 = vsyncpa [#allocation5], 1

// kernel: tpu_custom_call.1
$region0: #{tpu_custom_call.1}
  #allocation0 [shape = 'u32[]', space=smem, size = 0x4, offset = 0x4, fixed_abs, tag = 'smem constant byte address 0x4 - core index']
  #allocation1 [shape = 'u32[144,128]{1,0:T(1,128)}', space=vmem, size = 0x12000, scoped, tag = 'internal scratch']
  #allocation2 [shape = 'f32[2,8,32]{2,1,0:T(8,128)}', space=vmem, size = 0x2000, scoped, tag = 'scratch operand']
  %s0 = inlined_call_operand.vmem [shape: f32[2,8,32], index: 0, kind: input, shape index: {}]
  %s1 = inlined_call_operand.vmem [shape: f32[2,16,32], index: 1, kind: input, shape index: {}]
  %s2 = inlined_call_operand.vmem [shape: bf16[32,32], index: 2, kind: input, shape index: {}]
  %s3 = inlined_call_operand.vmem [shape: bf16[32,32], index: 3, kind: input, shape index: {}]
  %s4 = inlined_call_operand.hbm [shape: bf16[32,32], index: 4, kind: input, shape index: {}]
  %s5 = inlined_call_operand.hbm [shape: bf16[32,32], index: 5, kind: input, shape index: {}]
  %s6 = inlined_call_operand.hbm [shape: bf16[32,128], index: 6, kind: input, shape index: {}]
  %s7 = inlined_call_operand.vmem [shape: bf16[128,32], index: 7, kind: input, shape index: {}]
  %s8 = inlined_call_operand.vmem [shape: f32[3,32], index: 8, kind: input, shape index: {}]
  %s9 = inlined_call_operand.vmem [shape: f32[1,32], index: 9, kind: input, shape index: {}]
  %s10 = inlined_call_operand.vmem [shape: f32[2,32], index: 10, kind: input, shape index: {}]
  %s11 = inlined_call_operand.vmem [shape: f32[1,128], index: 11, kind: input, shape index: {}]
  %s12 = inlined_call_operand.vmem [shape: f32[1,32], index: 12, kind: input, shape index: {}]
  %s13 = inlined_call_operand.hbm [shape: f32[2,8,32], index: 13, kind: output, shape index: {}]
  %s14 = sld [smem:[#allocation0]]
  $region74: #{tpu_custom_call.1} parent=0
    _
  %s16 = ssub.s32 1, %s14
  %s17 = scalar_select 0, %s16, %s14
  $region1: #{tpu_custom_call.1} parent=0
    #allocation3 [shape = 'u8[8192]{0}', space=vmem, size = 0x2000, scoped, tag = 'input window, operand 4, single buffered']
    #allocation4 [shape = 's32[1]{0}', space=sflag, size = 0x4, scoped, tag = 'scoped memory for tpu_custom_call.1']
    #allocation5 [shape = 's32[1]{0}', space=sflag, size = 0x4, scoped, tag = 'scoped memory for tpu_custom_call.1']
    #allocation6 [shape = 'u8[8192]{0}', space=vmem, size = 0x2000, scoped, tag = 'input window, operand 5, single buffered']
    #allocation7 [shape = 's32[1]{0}', space=sflag, size = 0x4, scoped, tag = 'scoped memory for tpu_custom_call.1']
    #allocation8 [shape = 'u8[8192]{0}', space=vmem, size = 0x2000, scoped, tag = 'input window, operand 6, single buffered']
    #allocation9 [shape = 'u8[8192]{0}', space=vmem, size = 0x2000, scoped, tag = 'output window, operand 0, single buffered']
    %18 = vsyncpa [#allocation4], 0
    %19 = vsyncpa [#allocation7], 0
    %20 = vsyncpa [#allocation5], 0
    // Predicated region
    $region2: #{tpu_custom_call.1} parent=1 // pred_check
      _
    $region3: #{tpu_custom_call.1} parent=1 // pred_check_branch
      %22 = sbr.rel (0) target = $region5
    $region4: #{tpu_custom_call.1} parent=1 // pred_region
      _
    $region5: #{tpu_custom_call.1} parent=1 // pred_fallthru
      _
    // Predicated region
    $region6: #{tpu_custom_call.1} parent=1 // pred_check
      _
    $region7: #{tpu_custom_call.1} parent=1 // pred_check_branch
      %24 = sbr.rel (0) target = $region9
    $region8: #{tpu_custom_call.1} parent=1 // pred_region
      _
    $region9: #{tpu_custom_call.1} parent=1 // pred_fallthru
      _
    // Predicated region
    $region10: #{tpu_custom_call.1} parent=1 // pred_check
      _
    $region11: #{tpu_custom_call.1} parent=1 // pred_check_branch
      %26 = sbr.rel (0) target = $region13
    $region12: #{tpu_custom_call.1} parent=1 // pred_region
      _
    $region13: #{tpu_custom_call.1} parent=1 // pred_fallthru
      _
    // Predicated region
    $region14: #{tpu_custom_call.1} parent=1 // pred_check
      _
    $region15: #{tpu_custom_call.1} parent=1 // pred_check_branch
      %28 = sbr.rel (0) target = $region17
    $region16: #{tpu_custom_call.1} parent=1 // pred_region
      _
    $region17: #{tpu_custom_call.1} parent=1 // pred_fallthru
      _
    // Predicated region
    $region18: #{tpu_custom_call.1} parent=1 // pred_check
      _
    $region19: #{tpu_custom_call.1} parent=1 // pred_check_branch
      %30 = sbr.rel (0) target = $region21
    $region20: #{tpu_custom_call.1} parent=1 // pred_region
      %s32 = ssub.s32 256, 256
      %33 = vsyncadd [#allocation4], %s32
      %s34 = sshll.u32 [#allocation3], 4
      %s35 = int_to_ptr.vmem [resolvable:$true] %s34
      %40 = dma.hbm_to_vmem [thread:$0]  %s4, 256, %s35, [#allocation4], 64, 64, 4
    $region21: #{tpu_custom_call.1} parent=1 // pred_fallthru
      _
    // Predicated region
    $region22: #{tpu_custom_call.1} parent=1 // pred_check
      _
    $region23: #{tpu_custom_call.1} parent=1 // pred_check_branch
      %42 = sbr.rel (0) target = $region25
    $region24: #{tpu_custom_call.1} parent=1 // pred_region
      %s44 = ssub.s32 256, 256
      %45 = vsyncadd [#allocation7], %s44
      %s46 = sshll.u32 [#allocation6], 4
      %s47 = int_to_ptr.vmem [resolvable:$true] %s46
      %52 = dma.hbm_to_vmem [thread:$0]  %s5, 256, %s47, [#allocation7], 64, 64, 4
    $region25: #{tpu_custom_call.1} parent=1 // pred_fallthru
      _
    // Predicated region
    $region26: #{tpu_custom_call.1} parent=1 // pred_check
      _
    $region27: #{tpu_custom_call.1} parent=1 // pred_check_branch
      %54 = sbr.rel (0) target = $region29
    $region28: #{tpu_custom_call.1} parent=1 // pred_region
      %s56 = ssub.s32 256, 256
      %57 = vsyncadd [#allocation7], %s56
      %s58 = sshll.u32 [#allocation8], 4
      %s59 = int_to_ptr.vmem [resolvable:$true] %s58
      %64 = dma.hbm_to_vmem [thread:$0]  %s6, 256, %s59, [#allocation7], 64, 64, 4
    $region29: #{tpu_custom_call.1} parent=1 // pred_fallthru
      _
    // Predicated region
    $region30: #{tpu_custom_call.1} parent=1 // pred_check
      _
    $region31: #{tpu_custom_call.1} parent=1 // pred_check_branch
      %66 = sbr.rel (0) target = $region33
    $region32: #{tpu_custom_call.1} parent=1 // pred_region
      _
    $region33: #{tpu_custom_call.1} parent=1 // pred_fallthru
      _
    // Predicated region
    $region34: #{tpu_custom_call.1} parent=1 // pred_check
      _
    $region35: #{tpu_custom_call.1} parent=1 // pred_check_branch
      %68 = sbr.rel (0) target = $region37
    $region36: #{tpu_custom_call.1} parent=1 // pred_region
      _
    $region37: #{tpu_custom_call.1} parent=1 // pred_fallthru
      _
    // Predicated region
    $region38: #{tpu_custom_call.1} parent=1 // pred_check
      _
    $region39: #{tpu_custom_call.1} parent=1 // pred_check_branch
      %70 = sbr.rel (0) target = $region41
    $region40: #{tpu_custom_call.1} parent=1 // pred_region
      _
    $region41: #{tpu_custom_call.1} parent=1 // pred_fallthru
      _
    // Predicated region
    $region42: #{tpu_custom_call.1} parent=1 // pred_check
      _
    $region43: #{tpu_custom_call.1} parent=1 // pred_check_branch
      %72 = sbr.rel (0) target = $region45
    $region44: #{tpu_custom_call.1} parent=1 // pred_region
      _
    $region45: #{tpu_custom_call.1} parent=1 // pred_fallthru
      _
    // Predicated region
    $region46: #{tpu_custom_call.1} parent=1 // pred_check
      _
    $region47: #{tpu_custom_call.1} parent=1 // pred_check_branch
      %74 = sbr.rel (0) target = $region49
    $region48: #{tpu_custom_call.1} parent=1 // pred_region
      _
    $region49: #{tpu_custom_call.1} parent=1 // pred_fallthru
      _
    // Predicated region
    $region50: #{tpu_custom_call.1} parent=1 // pred_check
      _
    $region51: #{tpu_custom_call.1} parent=1 // pred_check_branch
      %76 = sbr.rel (0) target = $region53
    $region52: #{tpu_custom_call.1} parent=1 // pred_region
      _
    $region53: #{tpu_custom_call.1} parent=1 // pred_fallthru
      _
    // Predicated region
    $region54: #{tpu_custom_call.1} parent=1 // pred_check
      _
    $region55: #{tpu_custom_call.1} parent=1 // pred_check_branch
      %78 = sbr.rel (0) target = $region57
    $region56: #{tpu_custom_call.1} parent=1 // pred_region
      %79 = dma.done [#allocation4], 256
    $region57: #{tpu_custom_call.1} parent=1 // pred_fallthru
      _
    // Predicated region
    $region58: #{tpu_custom_call.1} parent=1 // pred_check
      _
    $region59: #{tpu_custom_call.1} parent=1 // pred_check_branch
      %81 = sbr.rel (0) target = $region61
    $region60: #{tpu_custom_call.1} parent=1 // pred_region
      %82 = dma.done [#allocation7], 256
    $region61: #{tpu_custom_call.1} parent=1 // pred_fallthru
      _
    // Predicated region
    $region62: #{tpu_custom_call.1} parent=1 // pred_check
      _
    $region63: #{tpu_custom_call.1} parent=1 // pred_check_branch
      %84 = sbr.rel (0) target = $region65
    $region64: #{tpu_custom_call.1} parent=1 // pred_region
      %85 = dma.done [#allocation7], 256
    $region65: #{tpu_custom_call.1} parent=1 // pred_fallthru
      _
    %v87 = vld [vmem:[%s0] sm:$0xff]
    %v88 = vld [vmem:[%s0 + $0x8] sm:$0xff]
    %v89 = vld [vmem:[%s1] sm:$0xff]
    %v90 = vld [vmem:[%s1 + $0x8] sm:$0xff]
    %v91 = vld [vmem:[%s1 + $0x10] sm:$0xff]
    %v92 = vld [vmem:[%s1 + $0x18] sm:$0xff]
    %v93 = vpack.c.bf16 %v88, %v87
    %v94 = vpack.c.bf16 %v90, %v89
    %v95 = vpack.c.bf16 %v92, %v91
    %v96 = vld [vmem:[%s8] sm:$0x1]
    %v97 = vld [vmem:[%s8 + $0x1] sm:$0x1]
    %v98 = vld [vmem:[%s8 + $0x2] sm:$0x1]
    %v99 = vld [vmem:[%s9] sm:$0x1]
    %v100 = vld [vmem:[%s10] sm:$0x1]
    %v101 = vld [vmem:[%s10 + $0x1] sm:$0x1]
    %v102 = vld [vmem:[%s11] sm:$0x1]
    %v103 = vld [vmem:[%s12] sm:$0x1]
    %v104 = vld [vmem:[%s2] sm:$0xf]
    %v105 = vld [vmem:[%s2 + $0x4] sm:$0xf]
    %v106 = vld [vmem:[%s2 + $0x8] sm:$0xf]
    %v107 = vld [vmem:[%s2 + $0xc] sm:$0xf]
    %v108 = vlaneseq
    %v109 = vshrl.u32 %v108, 7
    %v110 = vsub.s32 0, %v109
    %v111 = vrot.slane %v96, %v110
    %v116 = vunpack.c.l.b16 %v104
    %v117 = vunpack.c.l.b16 %v105
    %v118 = vunpack.c.l.b16 %v106
    %v119 = vunpack.c.l.b16 %v107
    %v120 = vpack.c.b16 %v117, %v116
    %v121 = vpack.c.b16 %v119, %v118
    %vm124 = vcmask 261120
    %v126 = vsel %vm124, %v93, 0
    %128 = vmatprep.subr.bf16.mxu0 0
    %129 = vmatpush1.bf16.msra.mxu0 %v120
    %130 = vmatprep.subr.bf16.mxu0 0
    %131 = vmatpush1.bf16.msra.mxu0 %v121
    %132 = vmatprep.subr.bf16.mxu0 0
    %133 = vmatpush1.bf16.msra.mxu0 0
    %134 = vmatprep.subr.bf16.mxu0 0
    %135 = vmatpush1.bf16.msra.mxu0 0
    %136 = vmatprep.subr.bf16.mxu0 0
    %137 = vmatpush1.bf16.msra.mxu0 0
    %138 = vmatprep.subr.bf16.mxu0 0
    %139 = vmatpush1.bf16.msra.mxu0 0
    %140 = vmatprep.subr.bf16.mxu0 0
    %141 = vmatpush1.bf16.msra.mxu0 0
    %142 = vmatprep.subr.bf16.mxu0 0
    %143 = vmatpush1.bf16.msra.mxu0 0
    %144 = vmatprep.subr.bf16.mxu0 0
    %145 = vmatpush1.bf16.msra.mxu0 0
    %146 = vmatprep.subr.bf16.mxu0 0
    %147 = vmatpush1.bf16.msra.mxu0 0
    %148 = vmatprep.subr.bf16.mxu0 0
    %149 = vmatpush1.bf16.msra.mxu0 0
    %150 = vmatprep.subr.bf16.mxu0 0
    %151 = vmatpush1.bf16.msra.mxu0 0
    %152 = vmatprep.subr.bf16.mxu0 0
    %153 = vmatpush1.bf16.msra.mxu0 0
    %154 = vmatprep.subr.bf16.mxu0 0
    %155 = vmatpush1.bf16.msra.mxu0 0
    %156 = vmatprep.subr.bf16.mxu0 0
    %157 = vmatpush1.bf16.msra.mxu0 0
    %158 = vmatprep.subr.bf16.mxu0 0
    %159 = vmatpush1.bf16.msra.mxu0 0
    %160 = vmatprep.mubr.bf16.mxu0 0
    %161 = vmatmul.mubr.bf16.gmra.mrb[0].mxu0 %v126
    %v162 = vpop.f32.mrb[0].mxu0
    %v163 = vadd.f32 %v111, %v162
    %v164 = vpop.f32.mrb[0].mxu0
    %v165 = vpop.f32.mrb[0].mxu0
    %v166 = vadd.f32 %v111, %v165
    %v167 = vpop.f32.mrb[0].mxu0
    %168 = vdwg.mxu0
    %v169 = vpack.c.bf16 %v166, %v163
    %v171 = vunpack.c.l.b16 %v169
    %v172 = vunpack.c.h.b16 %v169
    %v173 = vpack.c.b16 %v171, %v171
    %v174 = vpack.c.b16 %v172, %v172
    %v175 = vld [vmem:[%s3] sm:$0xf]
    %v176 = vld [vmem:[%s3 + $0x4] sm:$0xf]
    %v177 = vld [vmem:[%s3 + $0x8] sm:$0xf]
    %v178 = vld [vmem:[%s3 + $0xc] sm:$0xf]
    %v179 = vlaneseq
    %v180 = vshrl.u32 %v179, 7
    %v181 = vsub.s32 0, %v180
    %v182 = vrot.slane %v97, %v181
    %v187 = vunpack.c.l.b16 %v175
    %v188 = vunpack.c.l.b16 %v176
    %v189 = vunpack.c.l.b16 %v177
    %v190 = vunpack.c.l.b16 %v178
    %v191 = vpack.c.b16 %v188, %v187
    %v192 = vpack.c.b16 %v190, %v189
    %v196 = vsel %vm124, %v94, 0
    %v199 = vsel %vm124, %v95, 0
    %201 = vmatprep.subr.bf16.mxu0 0
    %202 = vmatpush1.bf16.msra.mxu0 %v191
    %203 = vmatprep.subr.bf16.mxu0 0
    %204 = vmatpush1.bf16.msra.mxu0 %v192
    %205 = vmatprep.subr.bf16.mxu0 0
    %206 = vmatpush1.bf16.msra.mxu0 0
    %207 = vmatprep.subr.bf16.mxu0 0
    %208 = vmatpush1.bf16.msra.mxu0 0
    %209 = vmatprep.subr.bf16.mxu0 0
    %210 = vmatpush1.bf16.msra.mxu0 0
    %211 = vmatprep.subr.bf16.mxu0 0
    %212 = vmatpush1.bf16.msra.mxu0 0
    %213 = vmatprep.subr.bf16.mxu0 0
    %214 = vmatpush1.bf16.msra.mxu0 0
    %215 = vmatprep.subr.bf16.mxu0 0
    %216 = vmatpush1.bf16.msra.mxu0 0
    %217 = vmatprep.subr.bf16.mxu0 0
    %218 = vmatpush1.bf16.msra.mxu0 0
    %219 = vmatprep.subr.bf16.mxu0 0
    %220 = vmatpush1.bf16.msra.mxu0 0
    %221 = vmatprep.subr.bf16.mxu0 0
    %222 = vmatpush1.bf16.msra.mxu0 0
    %223 = vmatprep.subr.bf16.mxu0 0
    %224 = vmatpush1.bf16.msra.mxu0 0
    %225 = vmatprep.subr.bf16.mxu0 0
    %226 = vmatpush1.bf16.msra.mxu0 0
    %227 = vmatprep.subr.bf16.mxu0 0
    %228 = vmatpush1.bf16.msra.mxu0 0
    %229 = vmatprep.subr.bf16.mxu0 0
    %230 = vmatpush1.bf16.msra.mxu0 0
    %231 = vmatprep.subr.bf16.mxu0 0
    %232 = vmatpush1.bf16.msra.mxu0 0
    %233 = vmatprep.mubr.bf16.mxu0 0
    %234 = vmatmul.mubr.bf16.gmra.mrb[0].mxu0 %v196
    %v235 = vpop.f32.mrb[0].mxu0
    %v236 = vadd.f32 %v182, %v235
    %v237 = vpop.f32.mrb[0].mxu0
    %v238 = vpop.f32.mrb[0].mxu0
    %v239 = vadd.f32 %v182, %v238
    %v240 = vpop.f32.mrb[0].mxu0
    %241 = vmatprep.mubr.bf16.mxu0 0
    %242 = vmatmul.mubr.bf16.gmra.mrb[0].mxu0 %v199
    %v243 = vpop.f32.mrb[0].mxu0
    %v244 = vadd.f32 %v182, %v243
    %v245 = vpop.f32.mrb[0].mxu0
    %v246 = vpop.f32.mrb[0].mxu0
    %v247 = vadd.f32 %v182, %v246
    %v248 = vpop.f32.mrb[0].mxu0
    %249 = vdwg.mxu0
    %v250 = vpack.c.bf16 %v239, %v236
    %v251 = vpack.c.bf16 %v247, %v244
    %v252 = vld [vmem:[#allocation3] sm:$0xf]
    %v253 = vld [vmem:[#allocation3 + $0x4] sm:$0xf]
    %v254 = vld [vmem:[#allocation3 + $0x8] sm:$0xf]
    %v255 = vld [vmem:[#allocation3 + $0xc] sm:$0xf]
    %v256 = vlaneseq
    %v257 = vshrl.u32 %v256, 7
    %v258 = vsub.s32 0, %v257
    %v259 = vrot.slane %v98, %v258
    %v264 = vunpack.c.l.b16 %v252
    %v265 = vunpack.c.l.b16 %v253
    %v266 = vunpack.c.l.b16 %v254
    %v267 = vunpack.c.l.b16 %v255
    %v268 = vpack.c.b16 %v265, %v264
    %v269 = vpack.c.b16 %v267, %v266
    %272 = vmatprep.subr.bf16.mxu0 0
    %273 = vmatpush1.bf16.msra.mxu0 %v268
    %274 = vmatprep.subr.bf16.mxu0 0
    %275 = vmatpush1.bf16.msra.mxu0 %v269
    %276 = vmatprep.subr.bf16.mxu0 0
    %277 = vmatpush1.bf16.msra.mxu0 0
    %278 = vmatprep.subr.bf16.mxu0 0
    %279 = vmatpush1.bf16.msra.mxu0 0
    %280 = vmatprep.subr.bf16.mxu0 0
    %281 = vmatpush1.bf16.msra.mxu0 0
    %282 = vmatprep.subr.bf16.mxu0 0
    %283 = vmatpush1.bf16.msra.mxu0 0
    %284 = vmatprep.subr.bf16.mxu0 0
    %285 = vmatpush1.bf16.msra.mxu0 0
    %286 = vmatprep.subr.bf16.mxu0 0
    %287 = vmatpush1.bf16.msra.mxu0 0
    %288 = vmatprep.subr.bf16.mxu0 0
    %289 = vmatpush1.bf16.msra.mxu0 0
    %290 = vmatprep.subr.bf16.mxu0 0
    %291 = vmatpush1.bf16.msra.mxu0 0
    %292 = vmatprep.subr.bf16.mxu0 0
    %293 = vmatpush1.bf16.msra.mxu0 0
    %294 = vmatprep.subr.bf16.mxu0 0
    %295 = vmatpush1.bf16.msra.mxu0 0
    %296 = vmatprep.subr.bf16.mxu0 0
    %297 = vmatpush1.bf16.msra.mxu0 0
    %298 = vmatprep.subr.bf16.mxu0 0
    %299 = vmatpush1.bf16.msra.mxu0 0
    %300 = vmatprep.subr.bf16.mxu0 0
    %301 = vmatpush1.bf16.msra.mxu0 0
    %302 = vmatprep.subr.bf16.mxu0 0
    %303 = vmatpush1.bf16.msra.mxu0 0
    %304 = vmatprep.mubr.bf16.mxu0 0
    %305 = vmatmul.mubr.bf16.gmra.mrb[0].mxu0 %v196
    %v306 = vpop.f32.mrb[0].mxu0
    %v307 = vadd.f32 %v259, %v306
    %v308 = vpop.f32.mrb[0].mxu0
    %v309 = vpop.f32.mrb[0].mxu0
    %v310 = vadd.f32 %v259, %v309
    %v311 = vpop.f32.mrb[0].mxu0
    %312 = vmatprep.mubr.bf16.mxu0 0
    %313 = vmatmul.mubr.bf16.gmra.mrb[0].mxu0 %v199
    %v314 = vpop.f32.mrb[0].mxu0
    %v315 = vadd.f32 %v259, %v314
    %v316 = vpop.f32.mrb[0].mxu0
    %v317 = vpop.f32.mrb[0].mxu0
    %v318 = vadd.f32 %v259, %v317
    %v319 = vpop.f32.mrb[0].mxu0
    %320 = vdwg.mxu0
    %v321 = vpack.c.bf16 %v310, %v307
    %v322 = vpack.c.bf16 %v318, %v315
    %vm323 = vcmask 64512
    %v325 = vsel %vm323, %v173, 0
    %v328 = vsel %vm323, %v250, 0
    %330 = vmatprep.subr.bf16.mxu0 0
    %331 = vmatpush1.bf16.xpose.msra.mxu0 %v328
    %332 = vmatprep.subr.bf16.mxu0 0
    %333 = vmatpush1.bf16.xpose.msra.mxu0 0
    %334 = vmatprep.subr.bf16.mxu0 0
    %335 = vmatpush1.bf16.xpose.msra.mxu0 0
    %336 = vmatprep.subr.bf16.mxu0 0
    %337 = vmatpush1.bf16.xpose.msra.mxu0 0
    %338 = vmatprep.subr.bf16.mxu0 0
    %339 = vmatpush1.bf16.xpose.msra.mxu0 0
    %340 = vmatprep.subr.bf16.mxu0 0
    %341 = vmatpush1.bf16.xpose.msra.mxu0 0
    %342 = vmatprep.subr.bf16.mxu0 0
    %343 = vmatpush1.bf16.xpose.msra.mxu0 0
    %344 = vmatprep.subr.bf16.mxu0 0
    %345 = vmatpush1.bf16.xpose.msra.mxu0 0
    %346 = vmatprep.subr.bf16.mxu0 0
    %347 = vmatpush1.bf16.xpose.msra.mxu0 0
    %348 = vmatprep.subr.bf16.mxu0 0
    %349 = vmatpush1.bf16.xpose.msra.mxu0 0
    %350 = vmatprep.subr.bf16.mxu0 0
    %351 = vmatpush1.bf16.xpose.msra.mxu0 0
    %352 = vmatprep.subr.bf16.mxu0 0
    %353 = vmatpush1.bf16.xpose.msra.mxu0 0
    %354 = vmatprep.subr.bf16.mxu0 0
    %355 = vmatpush1.bf16.xpose.msra.mxu0 0
    %356 = vmatprep.subr.bf16.mxu0 0
    %357 = vmatpush1.bf16.xpose.msra.mxu0 0
    %358 = vmatprep.subr.bf16.mxu0 0
    %359 = vmatpush1.bf16.xpose.msra.mxu0 0
    %360 = vmatprep.subr.bf16.mxu0 0
    %361 = vmatpush1.bf16.xpose.msra.mxu0 0
    %362 = vmatprep.mubr.bf16.mxu0 0
    %363 = vmatmul.mubr.bf16.gmra.mrb[0].mxu0 %v325
    %v364 = vpop.f32.mrb[0].mxu0
    %v365 = vadd.f32 0.0, %v364
    %v366 = vpop.f32.mrb[0].mxu0
    %v367 = vpop.f32.mrb[0].mxu0
    %v368 = vpop.f32.mrb[0].mxu0
    %369 = vdwg.mxu0
    %v371 = vsel %vm323, %v174, 0
    %v374 = vsel %vm323, %v251, 0
    %376 = vmatprep.subr.bf16.mxu0 0
    %377 = vmatpush1.bf16.xpose.msra.mxu0 %v374
    %378 = vmatprep.subr.bf16.mxu0 0
    %379 = vmatpush1.bf16.xpose.msra.mxu0 0
    %380 = vmatprep.subr.bf16.mxu0 0
    %381 = vmatpush1.bf16.xpose.msra.mxu0 0
    %382 = vmatprep.subr.bf16.mxu0 0
    %383 = vmatpush1.bf16.xpose.msra.mxu0 0
    %384 = vmatprep.subr.bf16.mxu0 0
    %385 = vmatpush1.bf16.xpose.msra.mxu0 0
    %386 = vmatprep.subr.bf16.mxu0 0
    %387 = vmatpush1.bf16.xpose.msra.mxu0 0
    %388 = vmatprep.subr.bf16.mxu0 0
    %389 = vmatpush1.bf16.xpose.msra.mxu0 0
    %390 = vmatprep.subr.bf16.mxu0 0
    %391 = vmatpush1.bf16.xpose.msra.mxu0 0
    %392 = vmatprep.subr.bf16.mxu0 0
    %393 = vmatpush1.bf16.xpose.msra.mxu0 0
    %394 = vmatprep.subr.bf16.mxu0 0
    %395 = vmatpush1.bf16.xpose.msra.mxu0 0
    %396 = vmatprep.subr.bf16.mxu0 0
    %397 = vmatpush1.bf16.xpose.msra.mxu0 0
    %398 = vmatprep.subr.bf16.mxu0 0
    %399 = vmatpush1.bf16.xpose.msra.mxu0 0
    %400 = vmatprep.subr.bf16.mxu0 0
    %401 = vmatpush1.bf16.xpose.msra.mxu0 0
    %402 = vmatprep.subr.bf16.mxu0 0
    %403 = vmatpush1.bf16.xpose.msra.mxu0 0
    %404 = vmatprep.subr.bf16.mxu0 0
    %405 = vmatpush1.bf16.xpose.msra.mxu0 0
    %406 = vmatprep.subr.bf16.mxu0 0
    %407 = vmatpush1.bf16.xpose.msra.mxu0 0
    %408 = vmatprep.mubr.bf16.mxu0 0
    %409 = vmatmul.mubr.bf16.gmra.mrb[0].mxu0 %v371
    %v410 = vpop.f32.mrb[0].mxu0
    %v411 = vadd.f32 0.0, %v410
    %v412 = vpop.f32.mrb[0].mxu0
    %v413 = vpop.f32.mrb[0].mxu0
    %v414 = vpop.f32.mrb[0].mxu0
    %415 = vdwg.mxu0
    %vm416 = vcmask 130048
    %v417 = vsel %vm416, %v365, -inf
    %418 = vmax.xlane.f32.xlu0 %v417
    %v419 = vpop.xlane.xlu0 %418
    %v420 = vsel %vm416, %v411, -inf
    %421 = vmax.xlane.f32.xlu0 %v420
    %v422 = vpop.xlane.xlu0 %421
    %v423 = vsub.f32 %v365, %v419
    %v424 = vsub.f32 %v411, %v422
    %v425 = vmul.f32 %v423, 1.442695
    %v426 = vpow.pop %v425
    %v427 = vmul.f32 %v424, 1.442695
    %v428 = vpow.pop %v427
    %v429 = vsel %vm416, %v426, 0.0
    %430 = vadd.xlane.f32.xlu0 %v429
    %v431 = vpop.xlane.xlu0 %430
    %v432 = vsel %vm416, %v428, 0.0
    %433 = vadd.xlane.f32.xlu0 %v432
    %v434 = vpop.xlane.xlu0 %433
    %v435 = vrcp.pop %v431
    %v436 = vmul.f32 %v426, %v435
    %v437 = vrcp.pop %v434
    %v438 = vmul.f32 %v428, %v437
    %v439 = vpack.c.bf16 %v436, %v436
    %v440 = vpack.c.bf16 %v438, %v438
    %v442 = vsel %vm416, %v439, 0
    %444 = vmatprep.subr.bf16.mxu0 0
    %445 = vmatpush1.bf16.msra.mxu0 %v321
    %446 = vmatprep.subr.bf16.mxu0 0
    %447 = vmatpush1.bf16.msra.mxu0 0
    %448 = vmatprep.subr.bf16.mxu0 0
    %449 = vmatpush1.bf16.msra.mxu0 0
    %450 = vmatprep.subr.bf16.mxu0 0
    %451 = vmatpush1.bf16.msra.mxu0 0
    %452 = vmatprep.subr.bf16.mxu0 0
    %453 = vmatpush1.bf16.msra.mxu0 0
    %454 = vmatprep.subr.bf16.mxu0 0
    %455 = vmatpush1.bf16.msra.mxu0 0
    %456 = vmatprep.subr.bf16.mxu0 0
    %457 = vmatpush1.bf16.msra.mxu0 0
    %458 = vmatprep.subr.bf16.mxu0 0
    %459 = vmatpush1.bf16.msra.mxu0 0
    %460 = vmatprep.subr.bf16.mxu0 0
    %461 = vmatpush1.bf16.msra.mxu0 0
    %462 = vmatprep.subr.bf16.mxu0 0
    %463 = vmatpush1.bf16.msra.mxu0 0
    %464 = vmatprep.subr.bf16.mxu0 0
    %465 = vmatpush1.bf16.msra.mxu0 0
    %466 = vmatprep.subr.bf16.mxu0 0
    %467 = vmatpush1.bf16.msra.mxu0 0
    %468 = vmatprep.subr.bf16.mxu0 0
    %469 = vmatpush1.bf16.msra.mxu0 0
    %470 = vmatprep.subr.bf16.mxu0 0
    %471 = vmatpush1.bf16.msra.mxu0 0
    %472 = vmatprep.subr.bf16.mxu0 0
    %473 = vmatpush1.bf16.msra.mxu0 0
    %474 = vmatprep.subr.bf16.mxu0 0
    %475 = vmatpush1.bf16.msra.mxu0 0
    %476 = vmatprep.mubr.bf16.mxu0 0
    %477 = vmatmul.mubr.bf16.gmra.mrb[0].mxu0 %v442
    %v478 = vpop.f32.mrb[0].mxu0
    %v479 = vadd.f32 0.0, %v478
    %v480 = vpop.f32.mrb[0].mxu0
    %v481 = vpop.f32.mrb[0].mxu0
    %v482 = vpop.f32.mrb[0].mxu0
    %483 = vdwg.mxu0
    %v485 = vsel %vm416, %v440, 0
    %487 = vmatprep.subr.bf16.mxu0 0
    %488 = vmatpush1.bf16.msra.mxu0 %v322
    %489 = vmatprep.subr.bf16.mxu0 0
    %490 = vmatpush1.bf16.msra.mxu0 0
    %491 = vmatprep.subr.bf16.mxu0 0
    %492 = vmatpush1.bf16.msra.mxu0 0
    %493 = vmatprep.subr.bf16.mxu0 0
    %494 = vmatpush1.bf16.msra.mxu0 0
    %495 = vmatprep.subr.bf16.mxu0 0
    %496 = vmatpush1.bf16.msra.mxu0 0
    %497 = vmatprep.subr.bf16.mxu0 0
    %498 = vmatpush1.bf16.msra.mxu0 0
    %499 = vmatprep.subr.bf16.mxu0 0
    %500 = vmatpush1.bf16.msra.mxu0 0
    %501 = vmatprep.subr.bf16.mxu0 0
    %502 = vmatpush1.bf16.msra.mxu0 0
    %503 = vmatprep.subr.bf16.mxu0 0
    %504 = vmatpush1.bf16.msra.mxu0 0
    %505 = vmatprep.subr.bf16.mxu0 0
    %506 = vmatpush1.bf16.msra.mxu0 0
    %507 = vmatprep.subr.bf16.mxu0 0
    %508 = vmatpush1.bf16.msra.mxu0 0
    %509 = vmatprep.subr.bf16.mxu0 0
    %510 = vmatpush1.bf16.msra.mxu0 0
    %511 = vmatprep.subr.bf16.mxu0 0
    %512 = vmatpush1.bf16.msra.mxu0 0
    %513 = vmatprep.subr.bf16.mxu0 0
    %514 = vmatpush1.bf16.msra.mxu0 0
    %515 = vmatprep.subr.bf16.mxu0 0
    %516 = vmatpush1.bf16.msra.mxu0 0
    %517 = vmatprep.subr.bf16.mxu0 0
    %518 = vmatpush1.bf16.msra.mxu0 0
    %519 = vmatprep.mubr.bf16.mxu0 0
    %520 = vmatmul.mubr.bf16.gmra.mrb[0].mxu0 %v485
    %v521 = vpop.f32.mrb[0].mxu0
    %v522 = vadd.f32 0.0, %v521
    %v523 = vpop.f32.mrb[0].mxu0
    %v524 = vpop.f32.mrb[0].mxu0
    %v525 = vpop.f32.mrb[0].mxu0
    %526 = vdwg.mxu0
    %527 = vst.msk [vmem:[#allocation2] sm:$0xff] %vm323, %v479
    %528 = vst.msk [vmem:[#allocation2 + $0x8] sm:$0xff] %vm323, %v522
    %529 = vrot.lane.b32.xlu0 %v173, 120
    %v530 = vpop.permute.xlu0 %529
    %532 = vrot.lane.b32.xlu0 %v250, 120
    %v533 = vpop.permute.xlu0 %532
    %v535 = vsel %vm323, %v530, 0
    %v538 = vsel %vm323, %v533, 0
    %540 = vmatprep.subr.bf16.mxu0 0
    %541 = vmatpush1.bf16.xpose.msra.mxu0 %v538
    %542 = vmatprep.subr.bf16.mxu0 0
    %543 = vmatpush1.bf16.xpose.msra.mxu0 0
    %544 = vmatprep.subr.bf16.mxu0 0
    %545 = vmatpush1.bf16.xpose.msra.mxu0 0
    %546 = vmatprep.subr.bf16.mxu0 0
    %547 = vmatpush1.bf16.xpose.msra.mxu0 0
    %548 = vmatprep.subr.bf16.mxu0 0
    %549 = vmatpush1.bf16.xpose.msra.mxu0 0
    %550 = vmatprep.subr.bf16.mxu0 0
    %551 = vmatpush1.bf16.xpose.msra.mxu0 0
    %552 = vmatprep.subr.bf16.mxu0 0
    %553 = vmatpush1.bf16.xpose.msra.mxu0 0
    %554 = vmatprep.subr.bf16.mxu0 0
    %555 = vmatpush1.bf16.xpose.msra.mxu0 0
    %556 = vmatprep.subr.bf16.mxu0 0
    %557 = vmatpush1.bf16.xpose.msra.mxu0 0
    %558 = vmatprep.subr.bf16.mxu0 0
    %559 = vmatpush1.bf16.xpose.msra.mxu0 0
    %560 = vmatprep.subr.bf16.mxu0 0
    %561 = vmatpush1.bf16.xpose.msra.mxu0 0
    %562 = vmatprep.subr.bf16.mxu0 0
    %563 = vmatpush1.bf16.xpose.msra.mxu0 0
    %564 = vmatprep.subr.bf16.mxu0 0
    %565 = vmatpush1.bf16.xpose.msra.mxu0 0
    %566 = vmatprep.subr.bf16.mxu0 0
    %567 = vmatpush1.bf16.xpose.msra.mxu0 0
    %568 = vmatprep.subr.bf16.mxu0 0
    %569 = vmatpush1.bf16.xpose.msra.mxu0 0
    %570 = vmatprep.subr.bf16.mxu0 0
    %571 = vmatpush1.bf16.xpose.msra.mxu0 0
    %572 = vmatprep.mubr.bf16.mxu0 0
    %573 = vmatmul.mubr.bf16.gmra.mrb[0].mxu0 %v535
    %v574 = vpop.f32.mrb[0].mxu0
    %v575 = vadd.f32 0.0, %v574
    %v576 = vpop.f32.mrb[0].mxu0
    %v577 = vpop.f32.mrb[0].mxu0
    %v578 = vpop.f32.mrb[0].mxu0
    %579 = vdwg.mxu0
    %580 = vrot.lane.b32.xlu0 %v174, 120
    %v581 = vpop.permute.xlu0 %580
    %583 = vrot.lane.b32.xlu0 %v251, 120
    %v584 = vpop.permute.xlu0 %583
    %v586 = vsel %vm323, %v581, 0
    %v589 = vsel %vm323, %v584, 0
    %591 = vmatprep.subr.bf16.mxu0 0
    %592 = vmatpush1.bf16.xpose.msra.mxu0 %v589
    %593 = vmatprep.subr.bf16.mxu0 0
    %594 = vmatpush1.bf16.xpose.msra.mxu0 0
    %595 = vmatprep.subr.bf16.mxu0 0
    %596 = vmatpush1.bf16.xpose.msra.mxu0 0
    %597 = vmatprep.subr.bf16.mxu0 0
    %598 = vmatpush1.bf16.xpose.msra.mxu0 0
    %599 = vmatprep.subr.bf16.mxu0 0
    %600 = vmatpush1.bf16.xpose.msra.mxu0 0
    %601 = vmatprep.subr.bf16.mxu0 0
    %602 = vmatpush1.bf16.xpose.msra.mxu0 0
    %603 = vmatprep.subr.bf16.mxu0 0
    %604 = vmatpush1.bf16.xpose.msra.mxu0 0
    %605 = vmatprep.subr.bf16.mxu0 0
    %606 = vmatpush1.bf16.xpose.msra.mxu0 0
    %607 = vmatprep.subr.bf16.mxu0 0
    %608 = vmatpush1.bf16.xpose.msra.mxu0 0
    %609 = vmatprep.subr.bf16.mxu0 0
    %610 = vmatpush1.bf16.xpose.msra.mxu0 0
    %611 = vmatprep.subr.bf16.mxu0 0
    %612 = vmatpush1.bf16.xpose.msra.mxu0 0
    %613 = vmatprep.subr.bf16.mxu0 0
    %614 = vmatpush1.bf16.xpose.msra.mxu0 0
    %615 = vmatprep.subr.bf16.mxu0 0
    %616 = vmatpush1.bf16.xpose.msra.mxu0 0
    %617 = vmatprep.subr.bf16.mxu0 0
    %618 = vmatpush1.bf16.xpose.msra.mxu0 0
    %619 = vmatprep.subr.bf16.mxu0 0
    %620 = vmatpush1.bf16.xpose.msra.mxu0 0
    %621 = vmatprep.subr.bf16.mxu0 0
    %622 = vmatpush1.bf16.xpose.msra.mxu0 0
    %623 = vmatprep.mubr.bf16.mxu0 0
    %624 = vmatmul.mubr.bf16.gmra.mrb[0].mxu0 %v586
    %v625 = vpop.f32.mrb[0].mxu0
    %v626 = vadd.f32 0.0, %v625
    %v627 = vpop.f32.mrb[0].mxu0
    %v628 = vpop.f32.mrb[0].mxu0
    %v629 = vpop.f32.mrb[0].mxu0
    %630 = vdwg.mxu0
    %v631 = vsel %vm416, %v575, -inf
    %632 = vmax.xlane.f32.xlu0 %v631
    %v633 = vpop.xlane.xlu0 %632
    %v634 = vsel %vm416, %v626, -inf
    %635 = vmax.xlane.f32.xlu0 %v634
    %v636 = vpop.xlane.xlu0 %635
    %v637 = vsub.f32 %v575, %v633
    %v638 = vsub.f32 %v626, %v636
    %v639 = vmul.f32 %v637, 1.442695
    %v640 = vpow.pop %v639
    %v641 = vmul.f32 %v638, 1.442695
    %v642 = vpow.pop %v641
    %v643 = vsel %vm416, %v640, 0.0
    %644 = vadd.xlane.f32.xlu0 %v643
    %v645 = vpop.xlane.xlu0 %644
    %v646 = vsel %vm416, %v642, 0.0
    %647 = vadd.xlane.f32.xlu0 %v646
    %v648 = vpop.xlane.xlu0 %647
    %v649 = vrcp.pop %v645
    %v650 = vmul.f32 %v640, %v649
    %v651 = vrcp.pop %v648
    %v652 = vmul.f32 %v642, %v651
    %v653 = vpack.c.bf16 %v650, %v650
    %v654 = vpack.c.bf16 %v652, %v652
    %656 = vrot.lane.b32.xlu0 %v321, 120
    %v657 = vpop.permute.xlu0 %656
    %v660 = vsel %vm416, %v653, 0
    %662 = vmatprep.subr.bf16.mxu0 0
    %663 = vmatpush1.bf16.msra.mxu0 %v657
    %664 = vmatprep.subr.bf16.mxu0 0
    %665 = vmatpush1.bf16.msra.mxu0 0
    %666 = vmatprep.subr.bf16.mxu0 0
    %667 = vmatpush1.bf16.msra.mxu0 0
    %668 = vmatprep.subr.bf16.mxu0 0
    %669 = vmatpush1.bf16.msra.mxu0 0
    %670 = vmatprep.subr.bf16.mxu0 0
    %671 = vmatpush1.bf16.msra.mxu0 0
    %672 = vmatprep.subr.bf16.mxu0 0
    %673 = vmatpush1.bf16.msra.mxu0 0
    %674 = vmatprep.subr.bf16.mxu0 0
    %675 = vmatpush1.bf16.msra.mxu0 0
    %676 = vmatprep.subr.bf16.mxu0 0
    %677 = vmatpush1.bf16.msra.mxu0 0
    %678 = vmatprep.subr.bf16.mxu0 0
    %679 = vmatpush1.bf16.msra.mxu0 0
    %680 = vmatprep.subr.bf16.mxu0 0
    %681 = vmatpush1.bf16.msra.mxu0 0
    %682 = vmatprep.subr.bf16.mxu0 0
    %683 = vmatpush1.bf16.msra.mxu0 0
    %684 = vmatprep.subr.bf16.mxu0 0
    %685 = vmatpush1.bf16.msra.mxu0 0
    %686 = vmatprep.subr.bf16.mxu0 0
    %687 = vmatpush1.bf16.msra.mxu0 0
    %688 = vmatprep.subr.bf16.mxu0 0
    %689 = vmatpush1.bf16.msra.mxu0 0
    %690 = vmatprep.subr.bf16.mxu0 0
    %691 = vmatpush1.bf16.msra.mxu0 0
    %692 = vmatprep.subr.bf16.mxu0 0
    %693 = vmatpush1.bf16.msra.mxu0 0
    %694 = vmatprep.mubr.bf16.mxu0 0
    %695 = vmatmul.mubr.bf16.gmra.mrb[0].mxu0 %v660
    %v696 = vpop.f32.mrb[0].mxu0
    %v697 = vadd.f32 0.0, %v696
    %v698 = vpop.f32.mrb[0].mxu0
    %v699 = vpop.f32.mrb[0].mxu0
    %v700 = vpop.f32.mrb[0].mxu0
    %701 = vdwg.mxu0
    %703 = vrot.lane.b32.xlu0 %v322, 120
    %v704 = vpop.permute.xlu0 %703
    %v707 = vsel %vm416, %v654, 0
    %709 = vmatprep.subr.bf16.mxu0 0
    %710 = vmatpush1.bf16.msra.mxu0 %v704
    %711 = vmatprep.subr.bf16.mxu0 0
    %712 = vmatpush1.bf16.msra.mxu0 0
    %713 = vmatprep.subr.bf16.mxu0 0
    %714 = vmatpush1.bf16.msra.mxu0 0
    %715 = vmatprep.subr.bf16.mxu0 0
    %716 = vmatpush1.bf16.msra.mxu0 0
    %717 = vmatprep.subr.bf16.mxu0 0
    %718 = vmatpush1.bf16.msra.mxu0 0
    %719 = vmatprep.subr.bf16.mxu0 0
    %720 = vmatpush1.bf16.msra.mxu0 0
    %721 = vmatprep.subr.bf16.mxu0 0
    %722 = vmatpush1.bf16.msra.mxu0 0
    %723 = vmatprep.subr.bf16.mxu0 0
    %724 = vmatpush1.bf16.msra.mxu0 0
    %725 = vmatprep.subr.bf16.mxu0 0
    %726 = vmatpush1.bf16.msra.mxu0 0
    %727 = vmatprep.subr.bf16.mxu0 0
    %728 = vmatpush1.bf16.msra.mxu0 0
    %729 = vmatprep.subr.bf16.mxu0 0
    %730 = vmatpush1.bf16.msra.mxu0 0
    %731 = vmatprep.subr.bf16.mxu0 0
    %732 = vmatpush1.bf16.msra.mxu0 0
    %733 = vmatprep.subr.bf16.mxu0 0
    %734 = vmatpush1.bf16.msra.mxu0 0
    %735 = vmatprep.subr.bf16.mxu0 0
    %736 = vmatpush1.bf16.msra.mxu0 0
    %737 = vmatprep.subr.bf16.mxu0 0
    %738 = vmatpush1.bf16.msra.mxu0 0
    %739 = vmatprep.subr.bf16.mxu0 0
    %740 = vmatpush1.bf16.msra.mxu0 0
    %741 = vmatprep.mubr.bf16.mxu0 0
    %742 = vmatmul.mubr.bf16.gmra.mrb[0].mxu0 %v707
    %v743 = vpop.f32.mrb[0].mxu0
    %v744 = vadd.f32 0.0, %v743
    %v745 = vpop.f32.mrb[0].mxu0
    %v746 = vpop.f32.mrb[0].mxu0
    %v747 = vpop.f32.mrb[0].mxu0
    %748 = vdwg.mxu0
    %751 = vrot.lane.b32.xlu0 %v697, 8
    %v752 = vpop.permute.xlu0 %751
    %753 = vrot.lane.b32.xlu0 %v744, 8
    %v754 = vpop.permute.xlu0 %753
    %vm757 = vcmask 130112
    %758 = vst.msk [vmem:[#allocation2] sm:$0xff] %vm757, %v752
    %759 = vst.msk [vmem:[#allocation2 + $0x8] sm:$0xff] %vm757, %v754
    %760 = vrot.lane.b32.xlu0 %v173, 112
    %v761 = vpop.permute.xlu0 %760
    %762 = vrot.lane.b32.xlu0 %v250, 112
    %v763 = vpop.permute.xlu0 %762
    %v765 = vsel %vm323, %v761, 0
    %v768 = vsel %vm323, %v763, 0
    %770 = vmatprep.subr.bf16.mxu0 0
    %771 = vmatpush1.bf16.xpose.msra.mxu0 %v768
    %772 = vmatprep.subr.bf16.mxu0 0
    %773 = vmatpush1.bf16.xpose.msra.mxu0 0
    %774 = vmatprep.subr.bf16.mxu0 0
    %775 = vmatpush1.bf16.xpose.msra.mxu0 0
    %776 = vmatprep.subr.bf16.mxu0 0
    %777 = vmatpush1.bf16.xpose.msra.mxu0 0
    %778 = vmatprep.subr.bf16.mxu0 0
    %779 = vmatpush1.bf16.xpose.msra.mxu0 0
    %780 = vmatprep.subr.bf16.mxu0 0
    %781 = vmatpush1.bf16.xpose.msra.mxu0 0
    %782 = vmatprep.subr.bf16.mxu0 0
    %783 = vmatpush1.bf16.xpose.msra.mxu0 0
    %784 = vmatprep.subr.bf16.mxu0 0
    %785 = vmatpush1.bf16.xpose.msra.mxu0 0
    %786 = vmatprep.subr.bf16.mxu0 0
    %787 = vmatpush1.bf16.xpose.msra.mxu0 0
    %788 = vmatprep.subr.bf16.mxu0 0
    %789 = vmatpush1.bf16.xpose.msra.mxu0 0
    %790 = vmatprep.subr.bf16.mxu0 0
    %791 = vmatpush1.bf16.xpose.msra.mxu0 0
    %792 = vmatprep.subr.bf16.mxu0 0
    %793 = vmatpush1.bf16.xpose.msra.mxu0 0
    %794 = vmatprep.subr.bf16.mxu0 0
    %795 = vmatpush1.bf16.xpose.msra.mxu0 0
    %796 = vmatprep.subr.bf16.mxu0 0
    %797 = vmatpush1.bf16.xpose.msra.mxu0 0
    %798 = vmatprep.subr.bf16.mxu0 0
    %799 = vmatpush1.bf16.xpose.msra.mxu0 0
    %800 = vmatprep.subr.bf16.mxu0 0
    %801 = vmatpush1.bf16.xpose.msra.mxu0 0
    %802 = vmatprep.mubr.bf16.mxu0 0
    %803 = vmatmul.mubr.bf16.gmra.mrb[0].mxu0 %v765
    %v804 = vpop.f32.mrb[0].mxu0
    %v805 = vadd.f32 0.0, %v804
    %v806 = vpop.f32.mrb[0].mxu0
    %v807 = vpop.f32.mrb[0].mxu0
    %v808 = vpop.f32.mrb[0].mxu0
    %809 = vdwg.mxu0
    %810 = vrot.lane.b32.xlu0 %v174, 112
    %v811 = vpop.permute.xlu0 %810
    %812 = vrot.lane.b32.xlu0 %v251, 112
    %v813 = vpop.permute.xlu0 %812
    %v815 = vsel %vm323, %v811, 0
    %v818 = vsel %vm323, %v813, 0
    %820 = vmatprep.subr.bf16.mxu0 0
    %821 = vmatpush1.bf16.xpose.msra.mxu0 %v818
    %822 = vmatprep.subr.bf16.mxu0 0
    %823 = vmatpush1.bf16.xpose.msra.mxu0 0
    %824 = vmatprep.subr.bf16.mxu0 0
    %825 = vmatpush1.bf16.xpose.msra.mxu0 0
    %826 = vmatprep.subr.bf16.mxu0 0
    %827 = vmatpush1.bf16.xpose.msra.mxu0 0
    %828 = vmatprep.subr.bf16.mxu0 0
    %829 = vmatpush1.bf16.xpose.msra.mxu0 0
    %830 = vmatprep.subr.bf16.mxu0 0
    %831 = vmatpush1.bf16.xpose.msra.mxu0 0
    %832 = vmatprep.subr.bf16.mxu0 0
    %833 = vmatpush1.bf16.xpose.msra.mxu0 0
    %834 = vmatprep.subr.bf16.mxu0 0
    %835 = vmatpush1.bf16.xpose.msra.mxu0 0
    %836 = vmatprep.subr.bf16.mxu0 0
    %837 = vmatpush1.bf16.xpose.msra.mxu0 0
    %838 = vmatprep.subr.bf16.mxu0 0
    %839 = vmatpush1.bf16.xpose.msra.mxu0 0
    %840 = vmatprep.subr.bf16.mxu0 0
    %841 = vmatpush1.bf16.xpose.msra.mxu0 0
    %842 = vmatprep.subr.bf16.mxu0 0
    %843 = vmatpush1.bf16.xpose.msra.mxu0 0
    %844 = vmatprep.subr.bf16.mxu0 0
    %845 = vmatpush1.bf16.xpose.msra.mxu0 0
    %846 = vmatprep.subr.bf16.mxu0 0
    %847 = vmatpush1.bf16.xpose.msra.mxu0 0
    %848 = vmatprep.subr.bf16.mxu0 0
    %849 = vmatpush1.bf16.xpose.msra.mxu0 0
    %850 = vmatprep.subr.bf16.mxu0 0
    %851 = vmatpush1.bf16.xpose.msra.mxu0 0
    %852 = vmatprep.mubr.bf16.mxu0 0
    %853 = vmatmul.mubr.bf16.gmra.mrb[0].mxu0 %v815
    %v854 = vpop.f32.mrb[0].mxu0
    %v855 = vadd.f32 0.0, %v854
    %v856 = vpop.f32.mrb[0].mxu0
    %v857 = vpop.f32.mrb[0].mxu0
    %v858 = vpop.f32.mrb[0].mxu0
    %859 = vdwg.mxu0
    %v860 = vsel %vm416, %v805, -inf
    %861 = vmax.xlane.f32.xlu0 %v860
    %v862 = vpop.xlane.xlu0 %861
    %v863 = vsel %vm416, %v855, -inf
    %864 = vmax.xlane.f32.xlu0 %v863
    %v865 = vpop.xlane.xlu0 %864
    %v866 = vsub.f32 %v805, %v862
    %v867 = vsub.f32 %v855, %v865
    %v868 = vmul.f32 %v866, 1.442695
    %v869 = vpow.pop %v868
    %v870 = vmul.f32 %v867, 1.442695
    %v871 = vpow.pop %v870
    %v872 = vsel %vm416, %v869, 0.0
    %873 = vadd.xlane.f32.xlu0 %v872
    %v874 = vpop.xlane.xlu0 %873
    %v875 = vsel %vm416, %v871, 0.0
    %876 = vadd.xlane.f32.xlu0 %v875
    %v877 = vpop.xlane.xlu0 %876
    %v878 = vrcp.pop %v874
    %v879 = vmul.f32 %v869, %v878
    %v880 = vrcp.pop %v877
    %v881 = vmul.f32 %v871, %v880
    %v882 = vpack.c.bf16 %v879, %v879
    %v883 = vpack.c.bf16 %v881, %v881
    %884 = vrot.lane.b32.xlu0 %v321, 112
    %v885 = vpop.permute.xlu0 %884
    %v888 = vsel %vm416, %v882, 0
    %890 = vmatprep.subr.bf16.mxu0 0
    %891 = vmatpush1.bf16.msra.mxu0 %v885
    %892 = vmatprep.subr.bf16.mxu0 0
    %893 = vmatpush1.bf16.msra.mxu0 0
    %894 = vmatprep.subr.bf16.mxu0 0
    %895 = vmatpush1.bf16.msra.mxu0 0
    %896 = vmatprep.subr.bf16.mxu0 0
    %897 = vmatpush1.bf16.msra.mxu0 0
    %898 = vmatprep.subr.bf16.mxu0 0
    %899 = vmatpush1.bf16.msra.mxu0 0
    %900 = vmatprep.subr.bf16.mxu0 0
    %901 = vmatpush1.bf16.msra.mxu0 0
    %902 = vmatprep.subr.bf16.mxu0 0
    %903 = vmatpush1.bf16.msra.mxu0 0
    %904 = vmatprep.subr.bf16.mxu0 0
    %905 = vmatpush1.bf16.msra.mxu0 0
    %906 = vmatprep.subr.bf16.mxu0 0
    %907 = vmatpush1.bf16.msra.mxu0 0
    %908 = vmatprep.subr.bf16.mxu0 0
    %909 = vmatpush1.bf16.msra.mxu0 0
    %910 = vmatprep.subr.bf16.mxu0 0
    %911 = vmatpush1.bf16.msra.mxu0 0
    %912 = vmatprep.subr.bf16.mxu0 0
    %913 = vmatpush1.bf16.msra.mxu0 0
    %914 = vmatprep.subr.bf16.mxu0 0
    %915 = vmatpush1.bf16.msra.mxu0 0
    %916 = vmatprep.subr.bf16.mxu0 0
    %917 = vmatpush1.bf16.msra.mxu0 0
    %918 = vmatprep.subr.bf16.mxu0 0
    %919 = vmatpush1.bf16.msra.mxu0 0
    %920 = vmatprep.subr.bf16.mxu0 0
    %921 = vmatpush1.bf16.msra.mxu0 0
    %922 = vmatprep.mubr.bf16.mxu0 0
    %923 = vmatmul.mubr.bf16.gmra.mrb[0].mxu0 %v888
    %v924 = vpop.f32.mrb[0].mxu0
    %v925 = vadd.f32 0.0, %v924
    %v926 = vpop.f32.mrb[0].mxu0
    %v927 = vpop.f32.mrb[0].mxu0
    %v928 = vpop.f32.mrb[0].mxu0
    %929 = vdwg.mxu0
    %930 = vrot.lane.b32.xlu0 %v322, 112
    %v931 = vpop.permute.xlu0 %930
    %v934 = vsel %vm416, %v883, 0
    %936 = vmatprep.subr.bf16.mxu0 0
    %937 = vmatpush1.bf16.msra.mxu0 %v931
    %938 = vmatprep.subr.bf16.mxu0 0
    %939 = vmatpush1.bf16.msra.mxu0 0
    %940 = vmatprep.subr.bf16.mxu0 0
    %941 = vmatpush1.bf16.msra.mxu0 0
    %942 = vmatprep.subr.bf16.mxu0 0
    %943 = vmatpush1.bf16.msra.mxu0 0
    %944 = vmatprep.subr.bf16.mxu0 0
    %945 = vmatpush1.bf16.msra.mxu0 0
    %946 = vmatprep.subr.bf16.mxu0 0
    %947 = vmatpush1.bf16.msra.mxu0 0
    %948 = vmatprep.subr.bf16.mxu0 0
    %949 = vmatpush1.bf16.msra.mxu0 0
    %950 = vmatprep.subr.bf16.mxu0 0
    %951 = vmatpush1.bf16.msra.mxu0 0
    %952 = vmatprep.subr.bf16.mxu0 0
    %953 = vmatpush1.bf16.msra.mxu0 0
    %954 = vmatprep.subr.bf16.mxu0 0
    %955 = vmatpush1.bf16.msra.mxu0 0
    %956 = vmatprep.subr.bf16.mxu0 0
    %957 = vmatpush1.bf16.msra.mxu0 0
    %958 = vmatprep.subr.bf16.mxu0 0
    %959 = vmatpush1.bf16.msra.mxu0 0
    %960 = vmatprep.subr.bf16.mxu0 0
    %961 = vmatpush1.bf16.msra.mxu0 0
    %962 = vmatprep.subr.bf16.mxu0 0
    %963 = vmatpush1.bf16.msra.mxu0 0
    %964 = vmatprep.subr.bf16.mxu0 0
    %965 = vmatpush1.bf16.msra.mxu0 0
    %966 = vmatprep.subr.bf16.mxu0 0
    %967 = vmatpush1.bf16.msra.mxu0 0
    %968 = vmatprep.mubr.bf16.mxu0 0
    %969 = vmatmul.mubr.bf16.gmra.mrb[0].mxu0 %v934
    %v970 = vpop.f32.mrb[0].mxu0
    %v971 = vadd.f32 0.0, %v970
    %v972 = vpop.f32.mrb[0].mxu0
    %v973 = vpop.f32.mrb[0].mxu0
    %v974 = vpop.f32.mrb[0].mxu0
    %975 = vdwg.mxu0
    %978 = vrot.lane.b32.xlu0 %v925, 16
    %v979 = vpop.permute.xlu0 %978
    %980 = vrot.lane.b32.xlu0 %v971, 16
    %v981 = vpop.permute.xlu0 %980
    %vm984 = vcmask 195712
    %985 = vst.msk [vmem:[#allocation2] sm:$0xff] %vm984, %v979
    %986 = vst.msk [vmem:[#allocation2 + $0x8] sm:$0xff] %vm984, %v981
    %987 = vrot.lane.b32.xlu0 %v173, 104
    %v988 = vpop.permute.xlu0 %987
    %989 = vrot.lane.b32.xlu0 %v250, 104
    %v990 = vpop.permute.xlu0 %989
    %v992 = vsel %vm323, %v988, 0
    %v995 = vsel %vm323, %v990, 0
    %997 = vmatprep.subr.bf16.mxu0 0
    %998 = vmatpush1.bf16.xpose.msra.mxu0 %v995
    %999 = vmatprep.subr.bf16.mxu0 0
    %1000 = vmatpush1.bf16.xpose.msra.mxu0 0
    %1001 = vmatprep.subr.bf16.mxu0 0
    %1002 = vmatpush1.bf16.xpose.msra.mxu0 0
    %1003 = vmatprep.subr.bf16.mxu0 0
    %1004 = vmatpush1.bf16.xpose.msra.mxu0 0
    %1005 = vmatprep.subr.bf16.mxu0 0
    %1006 = vmatpush1.bf16.xpose.msra.mxu0 0
    %1007 = vmatprep.subr.bf16.mxu0 0
    %1008 = vmatpush1.bf16.xpose.msra.mxu0 0
    %1009 = vmatprep.subr.bf16.mxu0 0
    %1010 = vmatpush1.bf16.xpose.msra.mxu0 0
    %1011 = vmatprep.subr.bf16.mxu0 0
    %1012 = vmatpush1.bf16.xpose.msra.mxu0 0
    %1013 = vmatprep.subr.bf16.mxu0 0
    %1014 = vmatpush1.bf16.xpose.msra.mxu0 0
    %1015 = vmatprep.subr.bf16.mxu0 0
    %1016 = vmatpush1.bf16.xpose.msra.mxu0 0
    %1017 = vmatprep.subr.bf16.mxu0 0
    %1018 = vmatpush1.bf16.xpose.msra.mxu0 0
    %1019 = vmatprep.subr.bf16.mxu0 0
    %1020 = vmatpush1.bf16.xpose.msra.mxu0 0
    %1021 = vmatprep.subr.bf16.mxu0 0
    %1022 = vmatpush1.bf16.xpose.msra.mxu0 0
    %1023 = vmatprep.subr.bf16.mxu0 0
    %1024 = vmatpush1.bf16.xpose.msra.mxu0 0
    %1025 = vmatprep.subr.bf16.mxu0 0
    %1026 = vmatpush1.bf16.xpose.msra.mxu0 0
    %1027 = vmatprep.subr.bf16.mxu0 0
    %1028 = vmatpush1.bf16.xpose.msra.mxu0 0
    %1029 = vmatprep.mubr.bf16.mxu0 0
    %1030 = vmatmul.mubr.bf16.gmra.mrb[0].mxu0 %v992
    %v1031 = vpop.f32.mrb[0].mxu0
    %v1032 = vadd.f32 0.0, %v1031
    %v1033 = vpop.f32.mrb[0].mxu0
    %v1034 = vpop.f32.mrb[0].mxu0
    %v1035 = vpop.f32.mrb[0].mxu0
    %1036 = vdwg.mxu0
    %1037 = vrot.lane.b32.xlu0 %v174, 104
    %v1038 = vpop.permute.xlu0 %1037
    %1039 = vrot.lane.b32.xlu0 %v251, 104
    %v1040 = vpop.permute.xlu0 %1039
    %v1042 = vsel %vm323, %v1038, 0
    %v1045 = vsel %vm323, %v1040, 0
    %1047 = vmatprep.subr.bf16.mxu0 0
    %1048 = vmatpush1.bf16.xpose.msra.mxu0 %v1045
    %1049 = vmatprep.subr.bf16.mxu0 0
    %1050 = vmatpush1.bf16.xpose.msra.mxu0 0
    %1051 = vmatprep.subr.bf16.mxu0 0
    %1052 = vmatpush1.bf16.xpose.msra.mxu0 0
    %1053 = vmatprep.subr.bf16.mxu0 0
    %1054 = vmatpush1.bf16.xpose.msra.mxu0 0
    %1055 = vmatprep.subr.bf16.mxu0 0
    %1056 = vmatpush1.bf16.xpose.msra.mxu0 0
    %1057 = vmatprep.subr.bf16.mxu0 0
    %1058 = vmatpush1.bf16.xpose.msra.mxu0 0
    %1059 = vmatprep.subr.bf16.mxu0 0
    %1060 = vmatpush1.bf16.xpose.msra.mxu0 0
    %1061 = vmatprep.subr.bf16.mxu0 0
    %1062 = vmatpush1.bf16.xpose.msra.mxu0 0
    %1063 = vmatprep.subr.bf16.mxu0 0
    %1064 = vmatpush1.bf16.xpose.msra.mxu0 0
    %1065 = vmatprep.subr.bf16.mxu0 0
    %1066 = vmatpush1.bf16.xpose.msra.mxu0 0
    %1067 = vmatprep.subr.bf16.mxu0 0
    %1068 = vmatpush1.bf16.xpose.msra.mxu0 0
    %1069 = vmatprep.subr.bf16.mxu0 0
    %1070 = vmatpush1.bf16.xpose.msra.mxu0 0
    %1071 = vmatprep.subr.bf16.mxu0 0
    %1072 = vmatpush1.bf16.xpose.msra.mxu0 0
    %1073 = vmatprep.subr.bf16.mxu0 0
    %1074 = vmatpush1.bf16.xpose.msra.mxu0 0
    %1075 = vmatprep.subr.bf16.mxu0 0
    %1076 = vmatpush1.bf16.xpose.msra.mxu0 0
    %1077 = vmatprep.subr.bf16.mxu0 0
    %1078 = vmatpush1.bf16.xpose.msra.mxu0 0
    %1079 = vmatprep.mubr.bf16.mxu0 0
    %1080 = vmatmul.mubr.bf16.gmra.mrb[0].mxu0 %v1042
    %v1081 = vpop.f32.mrb[0].mxu0
    %v1082 = vadd.f32 0.0, %v1081
    %v1083 = vpop.f32.mrb[0].mxu0
    %v1084 = vpop.f32.mrb[0].mxu0
    %v1085 = vpop.f32.mrb[0].mxu0
    %1086 = vdwg.mxu0
    %v1087 = vsel %vm416, %v1032, -inf
    %1088 = vmax.xlane.f32.xlu0 %v1087
    %v1089 = vpop.xlane.xlu0 %1088
    %v1090 = vsel %vm416, %v1082, -inf
    %1091 = vmax.xlane.f32.xlu0 %v1090
    %v1092 = vpop.xlane.xlu0 %1091
    %v1093 = vsub.f32 %v1032, %v1089
    %v1094 = vsub.f32 %v1082, %v1092
    %v1095 = vmul.f32 %v1093, 1.442695
    %v1096 = vpow.pop %v1095
    %v1097 = vmul.f32 %v1094, 1.442695
    %v1098 = vpow.pop %v1097
    %v1099 = vsel %vm416, %v1096, 0.0
    %1100 = vadd.xlane.f32.xlu0 %v1099
    %v1101 = vpop.xlane.xlu0 %1100
    %v1102 = vsel %vm416, %v1098, 0.0
    %1103 = vadd.xlane.f32.xlu0 %v1102
    %v1104 = vpop.xlane.xlu0 %1103
    %v1105 = vrcp.pop %v1101
    %v1106 = vmul.f32 %v1096, %v1105
    %v1107 = vrcp.pop %v1104
    %v1108 = vmul.f32 %v1098, %v1107
    %v1109 = vpack.c.bf16 %v1106, %v1106
    %v1110 = vpack.c.bf16 %v1108, %v1108
    %1111 = vrot.lane.b32.xlu0 %v321, 104
    %v1112 = vpop.permute.xlu0 %1111
    %v1115 = vsel %vm416, %v1109, 0
    %1117 = vmatprep.subr.bf16.mxu0 0
    %1118 = vmatpush1.bf16.msra.mxu0 %v1112
    %1119 = vmatprep.subr.bf16.mxu0 0
    %1120 = vmatpush1.bf16.msra.mxu0 0
    %1121 = vmatprep.subr.bf16.mxu0 0
    %1122 = vmatpush1.bf16.msra.mxu0 0
    %1123 = vmatprep.subr.bf16.mxu0 0
    %1124 = vmatpush1.bf16.msra.mxu0 0
    %1125 = vmatprep.subr.bf16.mxu0 0
    %1126 = vmatpush1.bf16.msra.mxu0 0
    %1127 = vmatprep.subr.bf16.mxu0 0
    %1128 = vmatpush1.bf16.msra.mxu0 0
    %1129 = vmatprep.subr.bf16.mxu0 0
    %1130 = vmatpush1.bf16.msra.mxu0 0
    %1131 = vmatprep.subr.bf16.mxu0 0
    %1132 = vmatpush1.bf16.msra.mxu0 0
    %1133 = vmatprep.subr.bf16.mxu0 0
    %1134 = vmatpush1.bf16.msra.mxu0 0
    %1135 = vmatprep.subr.bf16.mxu0 0
    %1136 = vmatpush1.bf16.msra.mxu0 0
    %1137 = vmatprep.subr.bf16.mxu0 0
    %1138 = vmatpush1.bf16.msra.mxu0 0
    %1139 = vmatprep.subr.bf16.mxu0 0
    %1140 = vmatpush1.bf16.msra.mxu0 0
    %1141 = vmatprep.subr.bf16.mxu0 0
    %1142 = vmatpush1.bf16.msra.mxu0 0
    %1143 = vmatprep.subr.bf16.mxu0 0
    %1144 = vmatpush1.bf16.msra.mxu0 0
    %1145 = vmatprep.subr.bf16.mxu0 0
    %1146 = vmatpush1.bf16.msra.mxu0 0
    %1147 = vmatprep.subr.bf16.mxu0 0
    %1148 = vmatpush1.bf16.msra.mxu0 0
    %1149 = vmatprep.mubr.bf16.mxu0 0
    %1150 = vmatmul.mubr.bf16.gmra.mrb[0].mxu0 %v1115
    %v1151 = vpop.f32.mrb[0].mxu0
    %v1152 = vadd.f32 0.0, %v1151
    %v1153 = vpop.f32.mrb[0].mxu0
    %v1154 = vpop.f32.mrb[0].mxu0
    %v1155 = vpop.f32.mrb[0].mxu0
    %1156 = vdwg.mxu0
    %1157 = vrot.lane.b32.xlu0 %v322, 104
    %v1158 = vpop.permute.xlu0 %1157
    %v1161 = vsel %vm416, %v1110, 0
    %1163 = vmatprep.subr.bf16.mxu0 0
    %1164 = vmatpush1.bf16.msra.mxu0 %v1158
    %1165 = vmatprep.subr.bf16.mxu0 0
    %1166 = vmatpush1.bf16.msra.mxu0 0
    %1167 = vmatprep.subr.bf16.mxu0 0
    %1168 = vmatpush1.bf16.msra.mxu0 0
    %1169 = vmatprep.subr.bf16.mxu0 0
    %1170 = vmatpush1.bf16.msra.mxu0 0
    %1171 = vmatprep.subr.bf16.mxu0 0
    %1172 = vmatpush1.bf16.msra.mxu0 0
    %1173 = vmatprep.subr.bf16.mxu0 0
    %1174 = vmatpush1.bf16.msra.mxu0 0
    %1175 = vmatprep.subr.bf16.mxu0 0
    %1176 = vmatpush1.bf16.msra.mxu0 0
    %1177 = vmatprep.subr.bf16.mxu0 0
    %1178 = vmatpush1.bf16.msra.mxu0 0
    %1179 = vmatprep.subr.bf16.mxu0 0
    %1180 = vmatpush1.bf16.msra.mxu0 0
    %1181 = vmatprep.subr.bf16.mxu0 0
    %1182 = vmatpush1.bf16.msra.mxu0 0
    %1183 = vmatprep.subr.bf16.mxu0 0
    %1184 = vmatpush1.bf16.msra.mxu0 0
    %1185 = vmatprep.subr.bf16.mxu0 0
    %1186 = vmatpush1.bf16.msra.mxu0 0
    %1187 = vmatprep.subr.bf16.mxu0 0
    %1188 = vmatpush1.bf16.msra.mxu0 0
    %1189 = vmatprep.subr.bf16.mxu0 0
    %1190 = vmatpush1.bf16.msra.mxu0 0
    %1191 = vmatprep.subr.bf16.mxu0 0
    %1192 = vmatpush1.bf16.msra.mxu0 0
    %1193 = vmatprep.subr.bf16.mxu0 0
    %1194 = vmatpush1.bf16.msra.mxu0 0
    %1195 = vmatprep.mubr.bf16.mxu0 0
    %1196 = vmatmul.mubr.bf16.gmra.mrb[0].mxu0 %v1161
    %v1197 = vpop.f32.mrb[0].mxu0
    %v1198 = vadd.f32 0.0, %v1197
    %v1199 = vpop.f32.mrb[0].mxu0
    %v1200 = vpop.f32.mrb[0].mxu0
    %v1201 = vpop.f32.mrb[0].mxu0
    %1202 = vdwg.mxu0
    %1205 = vrot.lane.b32.xlu0 %v1152, 24
    %v1206 = vpop.permute.xlu0 %1205
    %1207 = vrot.lane.b32.xlu0 %v1198, 24
    %v1208 = vpop.permute.xlu0 %1207
    %vm1211 = vcmask 261312
    %1212 = vst.msk [vmem:[#allocation2] sm:$0xff] %vm1211, %v1206
    %1213 = vst.msk [vmem:[#allocation2 + $0x8] sm:$0xff] %vm1211, %v1208
    %v1214 = vld [vmem:[#allocation2] sm:$0xff]
    %v1215 = vld [vmem:[#allocation2 + $0x8] sm:$0xff]
    %v1216 = vpack.c.bf16 %v1214, %v1214
    %v1217 = vpack.c.bf16 %v1215, %v1215
    %v1218 = vld [vmem:[#allocation6] sm:$0xf]
    %v1219 = vld [vmem:[#allocation6 + $0x4] sm:$0xf]
    %v1220 = vld [vmem:[#allocation6 + $0x8] sm:$0xf]
    %v1221 = vld [vmem:[#allocation6 + $0xc] sm:$0xf]
    %v1224 = vunpack.c.l.b16 %v1216
    %v1225 = vunpack.c.l.b16 %v1217
    %v1226 = vpack.c.b16 %v1225, %v1224
    %v1231 = vunpack.c.l.b16 %v1218
    %v1232 = vunpack.c.l.b16 %v1219
    %v1233 = vunpack.c.l.b16 %v1220
    %v1234 = vunpack.c.l.b16 %v1221
    %v1235 = vpack.c.b16 %v1232, %v1231
    %v1236 = vpack.c.b16 %v1234, %v1233
    %v1240 = vsel %vm124, %v1226, 0
    %1242 = vmatprep.subr.bf16.mxu0 0
    %1243 = vmatpush1.bf16.msra.mxu0 %v1235
    %1244 = vmatprep.subr.bf16.mxu0 0
    %1245 = vmatpush1.bf16.msra.mxu0 %v1236
    %1246 = vmatprep.subr.bf16.mxu0 0
    %1247 = vmatpush1.bf16.msra.mxu0 0
    %1248 = vmatprep.subr.bf16.mxu0 0
    %1249 = vmatpush1.bf16.msra.mxu0 0
    %1250 = vmatprep.subr.bf16.mxu0 0
    %1251 = vmatpush1.bf16.msra.mxu0 0
    %1252 = vmatprep.subr.bf16.mxu0 0
    %1253 = vmatpush1.bf16.msra.mxu0 0
    %1254 = vmatprep.subr.bf16.mxu0 0
    %1255 = vmatpush1.bf16.msra.mxu0 0
    %1256 = vmatprep.subr.bf16.mxu0 0
    %1257 = vmatpush1.bf16.msra.mxu0 0
    %1258 = vmatprep.subr.bf16.mxu0 0
    %1259 = vmatpush1.bf16.msra.mxu0 0
    %1260 = vmatprep.subr.bf16.mxu0 0
    %1261 = vmatpush1.bf16.msra.mxu0 0
    %1262 = vmatprep.subr.bf16.mxu0 0
    %1263 = vmatpush1.bf16.msra.mxu0 0
    %1264 = vmatprep.subr.bf16.mxu0 0
    %1265 = vmatpush1.bf16.msra.mxu0 0
    %1266 = vmatprep.subr.bf16.mxu0 0
    %1267 = vmatpush1.bf16.msra.mxu0 0
    %1268 = vmatprep.subr.bf16.mxu0 0
    %1269 = vmatpush1.bf16.msra.mxu0 0
    %1270 = vmatprep.subr.bf16.mxu0 0
    %1271 = vmatpush1.bf16.msra.mxu0 0
    %1272 = vmatprep.subr.bf16.mxu0 0
    %1273 = vmatpush1.bf16.msra.mxu0 0
    %1274 = vmatprep.mubr.bf16.mxu0 0
    %1275 = vmatmul.mubr.bf16.gmra.mrb[0].mxu0 %v1240
    %v1276 = vpop.f32.mrb[0].mxu0
    %v1277 = vadd.f32 0.0, %v1276
    %v1278 = vpop.f32.mrb[0].mxu0
    %v1279 = vpop.f32.mrb[0].mxu0
    %v1280 = vadd.f32 0.0, %v1279
    %v1281 = vpop.f32.mrb[0].mxu0
    %1282 = vdwg.mxu0
    %v1283 = vadd.f32 %v87, %v1277
    %v1284 = vadd.f32 %v88, %v1280
    %v1286 = vlaneseq
    %v1287 = vshrl.u32 %v1286, 7
    %v1288 = vsub.s32 0, %v1287
    %v1289 = vrot.slane %v99, %v1288
    %v1291 = vadd.f32 %v1283, %v1289
    %v1292 = vadd.f32 %v1284, %v1289
    %v1293 = vsel %vm124, %v1291, 0.0
    %1294 = vadd.xlane.f32.xlu0 %v1293
    %v1295 = vpop.xlane.xlu0 %1294
    %v1296 = vsel %vm124, %v1292, 0.0
    %1297 = vadd.xlane.f32.xlu0 %v1296
    %v1298 = vpop.xlane.xlu0 %1297
    %v1299 = vrcp.pop 32.0
    %v1300 = vmul.f32 %v1295, %v1299
    %v1301 = vmul.f32 %v1298, %v1299
    %v1302 = vsub.f32 %v1291, %v1300
    %v1303 = vsub.f32 %v1292, %v1301
    %v1304 = vmul.f32 %v1302, %v1302
    %v1305 = vmul.f32 %v1303, %v1303
    %v1306 = vsel %vm124, %v1304, 0.0
    %1307 = vadd.xlane.f32.xlu0 %v1306
    %v1308 = vpop.xlane.xlu0 %1307
    %v1309 = vsel %vm124, %v1305, 0.0
    %1310 = vadd.xlane.f32.xlu0 %v1309
    %v1311 = vpop.xlane.xlu0 %1310
    %v1312 = vmul.f32 %v1308, %v1299
    %v1313 = vmul.f32 %v1311, %v1299
    %v1314 = vadd.f32 %v1312, 1e-05
    %v1315 = vadd.f32 %v1313, 1e-05
    %v1316 = vrsqrt.pop %v1314
    %v1317 = vrsqrt.pop %v1315
    %v1318 = vmul.f32 %v1302, %v1316
    %v1319 = vmul.f32 %v1303, %v1317
    %v1320 = vlaneseq
    %v1321 = vshrl.u32 %v1320, 7
    %v1322 = vsub.s32 0, %v1321
    %v1323 = vrot.slane %v100, %v1322
    %v1324 = vmul.f32 %v1318, %v1323
    %v1325 = vmul.f32 %v1319, %v1323
    %v1326 = vlaneseq
    %v1327 = vshrl.u32 %v1326, 7
    %v1328 = vsub.s32 0, %v1327
    %v1329 = vrot.slane %v101, %v1328
    %v1330 = vadd.f32 %v1324, %v1329
    %v1331 = vadd.f32 %v1325, %v1329
    %v1332 = vpack.c.bf16 %v1331, %v1330
    %v1333 = vld [vmem:[#allocation8] sm:$0xf]
    %v1334 = vld [vmem:[#allocation8 + $0x4] sm:$0xf]
    %v1335 = vld [vmem:[#allocation8 + $0x8] sm:$0xf]
    %v1336 = vld [vmem:[#allocation8 + $0xc] sm:$0xf]
    %v1338 = vlaneseq
    %v1339 = vshrl.u32 %v1338, 7
    %v1340 = vsub.s32 0, %v1339
    %v1341 = vrot.slane %v102, %v1340
    %v1347 = vunpack.c.l.b16 %v1333
    %v1348 = vunpack.c.l.b16 %v1334
    %v1349 = vunpack.c.l.b16 %v1335
    %v1350 = vunpack.c.l.b16 %v1336
    %v1351 = vpack.c.b16 %v1348, %v1347
    %v1352 = vpack.c.b16 %v1350, %v1349
    %v1356 = vsel %vm124, %v1332, 0
    %1358 = vmatprep.subr.bf16.mxu0 0
    %1359 = vmatpush1.bf16.msra.mxu0 %v1351
    %1360 = vmatprep.subr.bf16.mxu0 0
    %1361 = vmatpush1.bf16.msra.mxu0 %v1352
    %1362 = vmatprep.subr.bf16.mxu0 0
    %1363 = vmatpush1.bf16.msra.mxu0 0
    %1364 = vmatprep.subr.bf16.mxu0 0
    %1365 = vmatpush1.bf16.msra.mxu0 0
    %1366 = vmatprep.subr.bf16.mxu0 0
    %1367 = vmatpush1.bf16.msra.mxu0 0
    %1368 = vmatprep.subr.bf16.mxu0 0
    %1369 = vmatpush1.bf16.msra.mxu0 0
    %1370 = vmatprep.subr.bf16.mxu0 0
    %1371 = vmatpush1.bf16.msra.mxu0 0
    %1372 = vmatprep.subr.bf16.mxu0 0
    %1373 = vmatpush1.bf16.msra.mxu0 0
    %1374 = vmatprep.subr.bf16.mxu0 0
    %1375 = vmatpush1.bf16.msra.mxu0 0
    %1376 = vmatprep.subr.bf16.mxu0 0
    %1377 = vmatpush1.bf16.msra.mxu0 0
    %1378 = vmatprep.subr.bf16.mxu0 0
    %1379 = vmatpush1.bf16.msra.mxu0 0
    %1380 = vmatprep.subr.bf16.mxu0 0
    %1381 = vmatpush1.bf16.msra.mxu0 0
    %1382 = vmatprep.subr.bf16.mxu0 0
    %1383 = vmatpush1.bf16.msra.mxu0 0
    %1384 = vmatprep.subr.bf16.mxu0 0
    %1385 = vmatpush1.bf16.msra.mxu0 0
    %1386 = vmatprep.subr.bf16.mxu0 0
    %1387 = vmatpush1.bf16.msra.mxu0 0
    %1388 = vmatprep.subr.bf16.mxu0 0
    %1389 = vmatpush1.bf16.msra.mxu0 0
    %1390 = vmatprep.mubr.bf16.mxu0 0
    %1391 = vmatmul.mubr.bf16.gmra.mrb[0].mxu0 %v1356
    %v1392 = vpop.f32.mrb[0].mxu0
    %v1393 = vadd.f32 %v1341, %v1392
    %v1394 = vpop.f32.mrb[0].mxu0
    %v1395 = vpop.f32.mrb[0].mxu0
    %v1396 = vadd.f32 %v1341, %v1395
    %v1397 = vpop.f32.mrb[0].mxu0
    %1398 = vdwg.mxu0
    %v1399 = vmul.f32 %v1393, 1.702
    %v1400 = vmul.f32 %v1396, 1.702
    %v1401 = vxor.u32 %v1399, 2147483648
    %v1402 = vxor.u32 %v1400, 2147483648
    %v1403 = vmul.f32 %v1401, 1.442695
    %v1404 = vpow.pop %v1403
    %v1405 = vmul.f32 %v1402, 1.442695
    %v1406 = vpow.pop %v1405
    %v1407 = vadd.f32 %v1404, 1.0
    %v1408 = vadd.f32 %v1406, 1.0
    %v1409 = vrcp.pop %v1407
    %v1410 = vmul.f32 1.0, %v1409
    %v1411 = vrcp.pop %v1408
    %v1412 = vmul.f32 1.0, %v1411
    %v1413 = vmul.f32 %v1393, %v1410
    %v1414 = vmul.f32 %v1396, %v1412
    %v1415 = vpack.c.bf16 %v1414, %v1413
    %v1416 = vld [vmem:[%s7] sm:$0xf]
    %v1417 = vld [vmem:[%s7 + $0x4] sm:$0xf]
    %v1418 = vld [vmem:[%s7 + $0x8] sm:$0xf]
    %v1419 = vld [vmem:[%s7 + $0xc] sm:$0xf]
    %v1420 = vld [vmem:[%s7 + $0x10] sm:$0xf]
    %v1421 = vld [vmem:[%s7 + $0x14] sm:$0xf]
    %v1422 = vld [vmem:[%s7 + $0x18] sm:$0xf]
    %v1423 = vld [vmem:[%s7 + $0x1c] sm:$0xf]
    %v1424 = vld [vmem:[%s7 + $0x20] sm:$0xf]
    %v1425 = vld [vmem:[%s7 + $0x24] sm:$0xf]
    %v1426 = vld [vmem:[%s7 + $0x28] sm:$0xf]
    %v1427 = vld [vmem:[%s7 + $0x2c] sm:$0xf]
    %v1428 = vld [vmem:[%s7 + $0x30] sm:$0xf]
    %v1429 = vld [vmem:[%s7 + $0x34] sm:$0xf]
    %v1430 = vld [vmem:[%s7 + $0x38] sm:$0xf]
    %v1431 = vld [vmem:[%s7 + $0x3c] sm:$0xf]
    %v1433 = vlaneseq
    %v1434 = vshrl.u32 %v1433, 7
    %v1435 = vsub.s32 0, %v1434
    %v1436 = vrot.slane %v103, %v1435
    %v1454 = vunpack.c.l.b16 %v1416
    %v1455 = vunpack.c.l.b16 %v1417
    %v1456 = vunpack.c.l.b16 %v1418
    %v1457 = vunpack.c.l.b16 %v1419
    %v1458 = vunpack.c.l.b16 %v1420
    %v1459 = vunpack.c.l.b16 %v1421
    %v1460 = vunpack.c.l.b16 %v1422
    %v1461 = vunpack.c.l.b16 %v1423
    %v1462 = vunpack.c.l.b16 %v1424
    %v1463 = vunpack.c.l.b16 %v1425
    %v1464 = vunpack.c.l.b16 %v1426
    %v1465 = vunpack.c.l.b16 %v1427
    %v1466 = vunpack.c.l.b16 %v1428
    %v1467 = vunpack.c.l.b16 %v1429
    %v1468 = vunpack.c.l.b16 %v1430
    %v1469 = vunpack.c.l.b16 %v1431
    %v1470 = vpack.c.b16 %v1455, %v1454
    %v1471 = vpack.c.b16 %v1457, %v1456
    %v1472 = vpack.c.b16 %v1459, %v1458
    %v1473 = vpack.c.b16 %v1461, %v1460
    %v1474 = vpack.c.b16 %v1463, %v1462
    %v1475 = vpack.c.b16 %v1465, %v1464
    %v1476 = vpack.c.b16 %v1467, %v1466
    %v1477 = vpack.c.b16 %v1469, %v1468
    %1486 = vmatprep.subr.bf16.mxu0 0
    %1487 = vmatpush1.bf16.msra.mxu0 %v1470
    %1488 = vmatprep.subr.bf16.mxu0 0
    %1489 = vmatpush1.bf16.msra.mxu0 %v1471
    %1490 = vmatprep.subr.bf16.mxu0 0
    %1491 = vmatpush1.bf16.msra.mxu0 %v1472
    %1492 = vmatprep.subr.bf16.mxu0 0
    %1493 = vmatpush1.bf16.msra.mxu0 %v1473
    %1494 = vmatprep.subr.bf16.mxu0 0
    %1495 = vmatpush1.bf16.msra.mxu0 %v1474
    %1496 = vmatprep.subr.bf16.mxu0 0
    %1497 = vmatpush1.bf16.msra.mxu0 %v1475
    %1498 = vmatprep.subr.bf16.mxu0 0
    %1499 = vmatpush1.bf16.msra.mxu0 %v1476
    %1500 = vmatprep.subr.bf16.mxu0 0
    %1501 = vmatpush1.bf16.msra.mxu0 %v1477
    %1502 = vmatprep.subr.bf16.mxu0 0
    %1503 = vmatpush1.bf16.msra.mxu0 0
    %1504 = vmatprep.subr.bf16.mxu0 0
    %1505 = vmatpush1.bf16.msra.mxu0 0
    %1506 = vmatprep.subr.bf16.mxu0 0
    %1507 = vmatpush1.bf16.msra.mxu0 0
    %1508 = vmatprep.subr.bf16.mxu0 0
    %1509 = vmatpush1.bf16.msra.mxu0 0
    %1510 = vmatprep.subr.bf16.mxu0 0
    %1511 = vmatpush1.bf16.msra.mxu0 0
    %1512 = vmatprep.subr.bf16.mxu0 0
    %1513 = vmatpush1.bf16.msra.mxu0 0
    %1514 = vmatprep.subr.bf16.mxu0 0
    %1515 = vmatpush1.bf16.msra.mxu0 0
    %1516 = vmatprep.subr.bf16.mxu0 0
    %1517 = vmatpush1.bf16.msra.mxu0 0
    %1518 = vmatprep.mubr.bf16.mxu0 0
    %1519 = vmatmul.mubr.bf16.gmra.mrb[0].mxu0 %v1415
    %v1520 = vpop.f32.mrb[0].mxu0
    %v1521 = vadd.f32 %v1436, %v1520
    %v1522 = vpop.f32.mrb[0].mxu0
    %v1523 = vpop.f32.mrb[0].mxu0
    %v1524 = vadd.f32 %v1436, %v1523
    %v1525 = vpop.f32.mrb[0].mxu0
    %1526 = vdwg.mxu0
    %v1527 = vadd.f32 %v1291, %v1521
    %v1528 = vadd.f32 %v1292, %v1524
    %1529 = vst.msk [vmem:[#allocation9] sm:$0xff] %vm124, %v1527
    %1530 = vst.msk [vmem:[#allocation9 + $0x8] sm:$0xff] %vm124, %v1528
    // Predicated region
    $region66: #{tpu_custom_call.1} parent=1 // pred_check
      _
    $region67: #{tpu_custom_call.1} parent=1 // pred_check_branch
      %1532 = sbr.rel (0) target = $region69
    $region68: #{tpu_custom_call.1} parent=1 // pred_region
      %s1534 = ssub.s32 256, 256
      %1535 = vsyncadd [#allocation5], %s1534
      %s1536 = sshll.u32 [#allocation9], 4
      %s1537 = int_to_ptr.vmem [resolvable:$true] %s1536
      %1542 = dma.vmem_to_hbm [thread:$0]  %s1537, 256, %s13, [#allocation5], 128, 128, 8
    $region69: #{tpu_custom_call.1} parent=1 // pred_fallthru
      _
    // Predicated region
    $region70: #{tpu_custom_call.1} parent=1 // pred_check
      _
    $region71: #{tpu_custom_call.1} parent=1 // pred_check_branch
      %1544 = sbr.rel (0) target = $region73
    $region72: #{tpu_custom_call.1} parent=1 // pred_region
      %1545 = dma.done [#allocation5], 256
    $region73: #{tpu_custom_call.1} parent=1 // pred_fallthru
      _
    %1546 = vsyncpa [#allocation4], 1
    %1547 = vsyncpa [#allocation7], 1
    %1548 = vsyncpa [#allocation5], 1

// kernel: tpu_custom_call.1
$region0: #{tpu_custom_call.1}
  #allocation0 [shape = 'u32[]', space=smem, size = 0x4, offset = 0x4, fixed_abs, tag = 'smem constant byte address 0x4 - core index']
  #allocation1 [shape = 'u32[144,128]{1,0:T(1,128)}', space=vmem, size = 0x12000, scoped, tag = 'internal scratch']
  #allocation2 [shape = 'f32[2,8,32]{2,1,0:T(8,128)}', space=vmem, size = 0x2000, scoped, tag = 'scratch operand']
  %s0 = inlined_call_operand.vmem [shape: f32[2,8,32], index: 0, kind: input, shape index: {}]
  %s1 = inlined_call_operand.vmem [shape: f32[2,16,32], index: 1, kind: input, shape index: {}]
  %s2 = inlined_call_operand.vmem [shape: bf16[32,32], index: 2, kind: input, shape index: {}]
  %s3 = inlined_call_operand.vmem [shape: bf16[32,32], index: 3, kind: input, shape index: {}]
  %s4 = inlined_call_operand.hbm [shape: bf16[32,32], index: 4, kind: input, shape index: {}]
  %s5 = inlined_call_operand.hbm [shape: bf16[32,32], index: 5, kind: input, shape index: {}]
  %s6 = inlined_call_operand.hbm [shape: bf16[32,128], index: 6, kind: input, shape index: {}]
  %s7 = inlined_call_operand.vmem [shape: bf16[128,32], index: 7, kind: input, shape index: {}]
  %s8 = inlined_call_operand.vmem [shape: f32[3,32], index: 8, kind: input, shape index: {}]
  %s9 = inlined_call_operand.vmem [shape: f32[1,32], index: 9, kind: input, shape index: {}]
  %s10 = inlined_call_operand.vmem [shape: f32[2,32], index: 10, kind: input, shape index: {}]
  %s11 = inlined_call_operand.vmem [shape: f32[1,128], index: 11, kind: input, shape index: {}]
  %s12 = inlined_call_operand.vmem [shape: f32[1,32], index: 12, kind: input, shape index: {}]
  %s13 = inlined_call_operand.hbm [shape: f32[2,8,32], index: 13, kind: output, shape index: {}]
  %s14 = sld [smem:[#allocation0]]
  $region74: #{tpu_custom_call.1} parent=0
    _
  %s16 = ssub.s32 1, %s14
  %s17 = scalar_select 0, %s16, %s14
  $region1: #{tpu_custom_call.1} parent=0
    #allocation3 [shape = 'u8[8192]{0}', space=vmem, size = 0x2000, scoped, tag = 'input window, operand 4, single buffered']
    #allocation4 [shape = 's32[1]{0}', space=sflag, size = 0x4, scoped, tag = 'scoped memory for tpu_custom_call.1']
    #allocation5 [shape = 's32[1]{0}', space=sflag, size = 0x4, scoped, tag = 'scoped memory for tpu_custom_call.1']
    #allocation6 [shape = 'u8[8192]{0}', space=vmem, size = 0x2000, scoped, tag = 'input window, operand 5, single buffered']
    #allocation7 [shape = 's32[1]{0}', space=sflag, size = 0x4, scoped, tag = 'scoped memory for tpu_custom_call.1']
    #allocation8 [shape = 'u8[8192]{0}', space=vmem, size = 0x2000, scoped, tag = 'input window, operand 6, single buffered']
    #allocation9 [shape = 'u8[8192]{0}', space=vmem, size = 0x2000, scoped, tag = 'output window, operand 0, single buffered']
    %18 = vsyncpa [#allocation4], 0
    %19 = vsyncpa [#allocation7], 0
    %20 = vsyncpa [#allocation5], 0
    // Predicated region
    $region2: #{tpu_custom_call.1} parent=1 // pred_check
      _
    $region3: #{tpu_custom_call.1} parent=1 // pred_check_branch
      %22 = sbr.rel (0) target = $region5
    $region4: #{tpu_custom_call.1} parent=1 // pred_region
      _
    $region5: #{tpu_custom_call.1} parent=1 // pred_fallthru
      _
    // Predicated region
    $region6: #{tpu_custom_call.1} parent=1 // pred_check
      _
    $region7: #{tpu_custom_call.1} parent=1 // pred_check_branch
      %24 = sbr.rel (0) target = $region9
    $region8: #{tpu_custom_call.1} parent=1 // pred_region
      _
    $region9: #{tpu_custom_call.1} parent=1 // pred_fallthru
      _
    // Predicated region
    $region10: #{tpu_custom_call.1} parent=1 // pred_check
      _
    $region11: #{tpu_custom_call.1} parent=1 // pred_check_branch
      %26 = sbr.rel (0) target = $region13
    $region12: #{tpu_custom_call.1} parent=1 // pred_region
      _
    $region13: #{tpu_custom_call.1} parent=1 // pred_fallthru
      _
    // Predicated region
    $region14: #{tpu_custom_call.1} parent=1 // pred_check
      _
    $region15: #{tpu_custom_call.1} parent=1 // pred_check_branch
      %28 = sbr.rel (0) target = $region17
    $region16: #{tpu_custom_call.1} parent=1 // pred_region
      _
    $region17: #{tpu_custom_call.1} parent=1 // pred_fallthru
      _
    // Predicated region
    $region18: #{tpu_custom_call.1} parent=1 // pred_check
      _
    $region19: #{tpu_custom_call.1} parent=1 // pred_check_branch
      %30 = sbr.rel (0) target = $region21
    $region20: #{tpu_custom_call.1} parent=1 // pred_region
      %s32 = ssub.s32 256, 256
      %33 = vsyncadd [#allocation4], %s32
      %s34 = sshll.u32 [#allocation3], 4
      %s35 = int_to_ptr.vmem [resolvable:$true] %s34
      %40 = dma.hbm_to_vmem [thread:$0]  %s4, 256, %s35, [#allocation4], 64, 64, 4
    $region21: #{tpu_custom_call.1} parent=1 // pred_fallthru
      _
    // Predicated region
    $region22: #{tpu_custom_call.1} parent=1 // pred_check
      _
    $region23: #{tpu_custom_call.1} parent=1 // pred_check_branch
      %42 = sbr.rel (0) target = $region25
    $region24: #{tpu_custom_call.1} parent=1 // pred_region
      %s44 = ssub.s32 256, 256
      %45 = vsyncadd [#allocation7], %s44
      %s46 = sshll.u32 [#allocation6], 4
      %s47 = int_to_ptr.vmem [resolvable:$true] %s46
      %52 = dma.hbm_to_vmem [thread:$0]  %s5, 256, %s47, [#allocation7], 64, 64, 4
    $region25: #{tpu_custom_call.1} parent=1 // pred_fallthru
      _
    // Predicated region
    $region26: #{tpu_custom_call.1} parent=1 // pred_check
      _
    $region27: #{tpu_custom_call.1} parent=1 // pred_check_branch
      %54 = sbr.rel (0) target = $region29
    $region28: #{tpu_custom_call.1} parent=1 // pred_region
      %s56 = ssub.s32 256, 256
      %57 = vsyncadd [#allocation7], %s56
      %s58 = sshll.u32 [#allocation8], 4
      %s59 = int_to_ptr.vmem [resolvable:$true] %s58
      %64 = dma.hbm_to_vmem [thread:$0]  %s6, 256, %s59, [#allocation7], 64, 64, 4
    $region29: #{tpu_custom_call.1} parent=1 // pred_fallthru
      _
    // Predicated region
    $region30: #{tpu_custom_call.1} parent=1 // pred_check
      _
    $region31: #{tpu_custom_call.1} parent=1 // pred_check_branch
      %66 = sbr.rel (0) target = $region33
    $region32: #{tpu_custom_call.1} parent=1 // pred_region
      _
    $region33: #{tpu_custom_call.1} parent=1 // pred_fallthru
      _
    // Predicated region
    $region34: #{tpu_custom_call.1} parent=1 // pred_check
      _
    $region35: #{tpu_custom_call.1} parent=1 // pred_check_branch
      %68 = sbr.rel (0) target = $region37
    $region36: #{tpu_custom_call.1} parent=1 // pred_region
      _
    $region37: #{tpu_custom_call.1} parent=1 // pred_fallthru
      _
    // Predicated region
    $region38: #{tpu_custom_call.1} parent=1 // pred_check
      _
    $region39: #{tpu_custom_call.1} parent=1 // pred_check_branch
      %70 = sbr.rel (0) target = $region41
    $region40: #{tpu_custom_call.1} parent=1 // pred_region
      _
    $region41: #{tpu_custom_call.1} parent=1 // pred_fallthru
      _
    // Predicated region
    $region42: #{tpu_custom_call.1} parent=1 // pred_check
      _
    $region43: #{tpu_custom_call.1} parent=1 // pred_check_branch
      %72 = sbr.rel (0) target = $region45
    $region44: #{tpu_custom_call.1} parent=1 // pred_region
      _
    $region45: #{tpu_custom_call.1} parent=1 // pred_fallthru
      _
    // Predicated region
    $region46: #{tpu_custom_call.1} parent=1 // pred_check
      _
    $region47: #{tpu_custom_call.1} parent=1 // pred_check_branch
      %74 = sbr.rel (0) target = $region49
    $region48: #{tpu_custom_call.1} parent=1 // pred_region
      _
    $region49: #{tpu_custom_call.1} parent=1 // pred_fallthru
      _
    // Predicated region
    $region50: #{tpu_custom_call.1} parent=1 // pred_check
      _
    $region51: #{tpu_custom_call.1} parent=1 // pred_check_branch
      %76 = sbr.rel (0) target = $region53
    $region52: #{tpu_custom_call.1} parent=1 // pred_region
      _
    $region53: #{tpu_custom_call.1} parent=1 // pred_fallthru
      _
    // Predicated region
    $region54: #{tpu_custom_call.1} parent=1 // pred_check
      _
    $region55: #{tpu_custom_call.1} parent=1 // pred_check_branch
      %78 = sbr.rel (0) target = $region57
    $region56: #{tpu_custom_call.1} parent=1 // pred_region
      %79 = dma.done [#allocation4], 256
    $region57: #{tpu_custom_call.1} parent=1 // pred_fallthru
      _
    // Predicated region
    $region58: #{tpu_custom_call.1} parent=1 // pred_check
      _
    $region59: #{tpu_custom_call.1} parent=1 // pred_check_branch
      %81 = sbr.rel (0) target = $region61
    $region60: #{tpu_custom_call.1} parent=1 // pred_region
      %82 = dma.done [#allocation7], 256
    $region61: #{tpu_custom_call.1} parent=1 // pred_fallthru
      _
    // Predicated region
    $region62: #{tpu_custom_call.1} parent=1 // pred_check
      _
    $region63: #{tpu_custom_call.1} parent=1 // pred_check_branch
      %84 = sbr.rel (0) target = $region65
    $region64: #{tpu_custom_call.1} parent=1 // pred_region
      %85 = dma.done [#allocation7], 256
    $region65: #{tpu_custom_call.1} parent=1 // pred_fallthru
      _
    %v87 = vld [vmem:[%s0] sm:$0xff]
    %v88 = vld [vmem:[%s0 + $0x8] sm:$0xff]
    %v89 = vld [vmem:[%s1] sm:$0xff]
    %v90 = vld [vmem:[%s1 + $0x8] sm:$0xff]
    %v91 = vld [vmem:[%s1 + $0x10] sm:$0xff]
    %v92 = vld [vmem:[%s1 + $0x18] sm:$0xff]
    %v93 = vpack.c.bf16 %v88, %v87
    %v94 = vpack.c.bf16 %v90, %v89
    %v95 = vpack.c.bf16 %v92, %v91
    %v96 = vld [vmem:[%s8] sm:$0x1]
    %v97 = vld [vmem:[%s8 + $0x1] sm:$0x1]
    %v98 = vld [vmem:[%s8 + $0x2] sm:$0x1]
    %v99 = vld [vmem:[%s9] sm:$0x1]
    %v100 = vld [vmem:[%s10] sm:$0x1]
    %v101 = vld [vmem:[%s10 + $0x1] sm:$0x1]
    %v102 = vld [vmem:[%s11] sm:$0x1]
    %v103 = vld [vmem:[%s12] sm:$0x1]
    %v104 = vld [vmem:[%s2] sm:$0xf]
    %v105 = vld [vmem:[%s2 + $0x4] sm:$0xf]
    %v106 = vld [vmem:[%s2 + $0x8] sm:$0xf]
    %v107 = vld [vmem:[%s2 + $0xc] sm:$0xf]
    %v108 = vlaneseq
    %v109 = vshrl.u32 %v108, 7
    %v110 = vsub.s32 0, %v109
    %v111 = vrot.slane %v96, %v110
    %v116 = vunpack.c.l.b16 %v104
    %v117 = vunpack.c.l.b16 %v105
    %v118 = vunpack.c.l.b16 %v106
    %v119 = vunpack.c.l.b16 %v107
    %v120 = vpack.c.b16 %v117, %v116
    %v121 = vpack.c.b16 %v119, %v118
    %vm124 = vcmask 261120
    %v126 = vsel %vm124, %v93, 0
    %128 = vmatprep.subr.bf16.mxu0 0
    %129 = vmatpush1.bf16.msra.mxu0 %v120
    %130 = vmatprep.subr.bf16.mxu0 0
    %131 = vmatpush1.bf16.msra.mxu0 %v121
    %132 = vmatprep.subr.bf16.mxu0 0
    %133 = vmatpush1.bf16.msra.mxu0 0
    %134 = vmatprep.subr.bf16.mxu0 0
    %135 = vmatpush1.bf16.msra.mxu0 0
    %136 = vmatprep.subr.bf16.mxu0 0
    %137 = vmatpush1.bf16.msra.mxu0 0
    %138 = vmatprep.subr.bf16.mxu0 0
    %139 = vmatpush1.bf16.msra.mxu0 0
    %140 = vmatprep.subr.bf16.mxu0 0
    %141 = vmatpush1.bf16.msra.mxu0 0
    %142 = vmatprep.subr.bf16.mxu0 0
    %143 = vmatpush1.bf16.msra.mxu0 0
    %144 = vmatprep.subr.bf16.mxu0 0
    %145 = vmatpush1.bf16.msra.mxu0 0
    %146 = vmatprep.subr.bf16.mxu0 0
    %147 = vmatpush1.bf16.msra.mxu0 0
    %148 = vmatprep.subr.bf16.mxu0 0
    %149 = vmatpush1.bf16.msra.mxu0 0
    %150 = vmatprep.subr.bf16.mxu0 0
    %151 = vmatpush1.bf16.msra.mxu0 0
    %152 = vmatprep.subr.bf16.mxu0 0
    %153 = vmatpush1.bf16.msra.mxu0 0
    %154 = vmatprep.subr.bf16.mxu0 0
    %155 = vmatpush1.bf16.msra.mxu0 0
    %156 = vmatprep.subr.bf16.mxu0 0
    %157 = vmatpush1.bf16.msra.mxu0 0
    %158 = vmatprep.subr.bf16.mxu0 0
    %159 = vmatpush1.bf16.msra.mxu0 0
    %160 = vmatprep.mubr.bf16.mxu0 0
    %161 = vmatmul.mubr.bf16.gmra.mrb[0].mxu0 %v126
    %v162 = vpop.f32.mrb[0].mxu0
    %v163 = vadd.f32 %v111, %v162
    %v164 = vpop.f32.mrb[0].mxu0
    %v165 = vpop.f32.mrb[0].mxu0
    %v166 = vadd.f32 %v111, %v165
    %v167 = vpop.f32.mrb[0].mxu0
    %168 = vdwg.mxu0
    %v169 = vpack.c.bf16 %v166, %v163
    %v171 = vunpack.c.l.b16 %v169
    %v172 = vunpack.c.h.b16 %v169
    %v173 = vpack.c.b16 %v171, %v171
    %v174 = vpack.c.b16 %v172, %v172
    %v175 = vld [vmem:[%s3] sm:$0xf]
    %v176 = vld [vmem:[%s3 + $0x4] sm:$0xf]
    %v177 = vld [vmem:[%s3 + $0x8] sm:$0xf]
    %v178 = vld [vmem:[%s3 + $0xc] sm:$0xf]
    %v179 = vlaneseq
    %v180 = vshrl.u32 %v179, 7
    %v181 = vsub.s32 0, %v180
    %v182 = vrot.slane %v97, %v181
    %v187 = vunpack.c.l.b16 %v175
    %v188 = vunpack.c.l.b16 %v176
    %v189 = vunpack.c.l.b16 %v177
    %v190 = vunpack.c.l.b16 %v178
    %v191 = vpack.c.b16 %v188, %v187
    %v192 = vpack.c.b16 %v190, %v189
    %v196 = vsel %vm124, %v94, 0
    %v199 = vsel %vm124, %v95, 0
    %201 = vmatprep.subr.bf16.mxu0 0
    %202 = vmatpush1.bf16.msra.mxu0 %v191
    %203 = vmatprep.subr.bf16.mxu0 0
    %204 = vmatpush1.bf16.msra.mxu0 %v192
    %205 = vmatprep.subr.bf16.mxu0 0
    %206 = vmatpush1.bf16.msra.mxu0 0
    %207 = vmatprep.subr.bf16.mxu0 0
    %208 = vmatpush1.bf16.msra.mxu0 0
    %209 = vmatprep.subr.bf16.mxu0 0
    %210 = vmatpush1.bf16.msra.mxu0 0
    %211 = vmatprep.subr.bf16.mxu0 0
    %212 = vmatpush1.bf16.msra.mxu0 0
    %213 = vmatprep.subr.bf16.mxu0 0
    %214 = vmatpush1.bf16.msra.mxu0 0
    %215 = vmatprep.subr.bf16.mxu0 0
    %216 = vmatpush1.bf16.msra.mxu0 0
    %217 = vmatprep.subr.bf16.mxu0 0
    %218 = vmatpush1.bf16.msra.mxu0 0
    %219 = vmatprep.subr.bf16.mxu0 0
    %220 = vmatpush1.bf16.msra.mxu0 0
    %221 = vmatprep.subr.bf16.mxu0 0
    %222 = vmatpush1.bf16.msra.mxu0 0
    %223 = vmatprep.subr.bf16.mxu0 0
    %224 = vmatpush1.bf16.msra.mxu0 0
    %225 = vmatprep.subr.bf16.mxu0 0
    %226 = vmatpush1.bf16.msra.mxu0 0
    %227 = vmatprep.subr.bf16.mxu0 0
    %228 = vmatpush1.bf16.msra.mxu0 0
    %229 = vmatprep.subr.bf16.mxu0 0
    %230 = vmatpush1.bf16.msra.mxu0 0
    %231 = vmatprep.subr.bf16.mxu0 0
    %232 = vmatpush1.bf16.msra.mxu0 0
    %233 = vmatprep.mubr.bf16.mxu0 0
    %234 = vmatmul.mubr.bf16.gmra.mrb[0].mxu0 %v196
    %v235 = vpop.f32.mrb[0].mxu0
    %v236 = vadd.f32 %v182, %v235
    %v237 = vpop.f32.mrb[0].mxu0
    %v238 = vpop.f32.mrb[0].mxu0
    %v239 = vadd.f32 %v182, %v238
    %v240 = vpop.f32.mrb[0].mxu0
    %241 = vmatprep.mubr.bf16.mxu0 0
    %242 = vmatmul.mubr.bf16.gmra.mrb[0].mxu0 %v199
    %v243 = vpop.f32.mrb[0].mxu0
    %v244 = vadd.f32 %v182, %v243
    %v245 = vpop.f32.mrb[0].mxu0
    %v246 = vpop.f32.mrb[0].mxu0
    %v247 = vadd.f32 %v182, %v246
    %v248 = vpop.f32.mrb[0].mxu0
    %249 = vdwg.mxu0
    %v250 = vpack.c.bf16 %v239, %v236
    %v251 = vpack.c.bf16 %v247, %v244
    %v252 = vld [vmem:[#allocation3] sm:$0xf]
    %v253 = vld [vmem:[#allocation3 + $0x4] sm:$0xf]
    %v254 = vld [vmem:[#allocation3 + $0x8] sm:$0xf]
    %v255 = vld [vmem:[#allocation3 + $0xc] sm:$0xf]
    %v256 = vlaneseq
    %v257 = vshrl.u32 %v256, 7
    %v258 = vsub.s32 0, %v257
    %v259 = vrot.slane %v98, %v258
    %v264 = vunpack.c.l.b16 %v252
    %v265 = vunpack.c.l.b16 %v253
    %v266 = vunpack.c.l.b16 %v254
    %v267 = vunpack.c.l.b16 %v255
    %v268 = vpack.c.b16 %v265, %v264
    %v269 = vpack.c.b16 %v267, %v266
    %272 = vmatprep.subr.bf16.mxu0 0
    %273 = vmatpush1.bf16.msra.mxu0 %v268
    %274 = vmatprep.subr.bf16.mxu0 0
    %275 = vmatpush1.bf16.msra.mxu0 %v269
    %276 = vmatprep.subr.bf16.mxu0 0
    %277 = vmatpush1.bf16.msra.mxu0 0
    %278 = vmatprep.subr.bf16.mxu0 0
    %279 = vmatpush1.bf16.msra.mxu0 0
    %280 = vmatprep.subr.bf16.mxu0 0
    %281 = vmatpush1.bf16.msra.mxu0 0
    %282 = vmatprep.subr.bf16.mxu0 0
    %283 = vmatpush1.bf16.msra.mxu0 0
    %284 = vmatprep.subr.bf16.mxu0 0
    %285 = vmatpush1.bf16.msra.mxu0 0
    %286 = vmatprep.subr.bf16.mxu0 0
    %287 = vmatpush1.bf16.msra.mxu0 0
    %288 = vmatprep.subr.bf16.mxu0 0
    %289 = vmatpush1.bf16.msra.mxu0 0
    %290 = vmatprep.subr.bf16.mxu0 0
    %291 = vmatpush1.bf16.msra.mxu0 0
    %292 = vmatprep.subr.bf16.mxu0 0
    %293 = vmatpush1.bf16.msra.mxu0 0
    %294 = vmatprep.subr.bf16.mxu0 0
    %295 = vmatpush1.bf16.msra.mxu0 0
    %296 = vmatprep.subr.bf16.mxu0 0
    %297 = vmatpush1.bf16.msra.mxu0 0
    %298 = vmatprep.subr.bf16.mxu0 0
    %299 = vmatpush1.bf16.msra.mxu0 0
    %300 = vmatprep.subr.bf16.mxu0 0
    %301 = vmatpush1.bf16.msra.mxu0 0
    %302 = vmatprep.subr.bf16.mxu0 0
    %303 = vmatpush1.bf16.msra.mxu0 0
    %304 = vmatprep.mubr.bf16.mxu0 0
    %305 = vmatmul.mubr.bf16.gmra.mrb[0].mxu0 %v196
    %v306 = vpop.f32.mrb[0].mxu0
    %v307 = vadd.f32 %v259, %v306
    %v308 = vpop.f32.mrb[0].mxu0
    %v309 = vpop.f32.mrb[0].mxu0
    %v310 = vadd.f32 %v259, %v309
    %v311 = vpop.f32.mrb[0].mxu0
    %312 = vmatprep.mubr.bf16.mxu0 0
    %313 = vmatmul.mubr.bf16.gmra.mrb[0].mxu0 %v199
    %v314 = vpop.f32.mrb[0].mxu0
    %v315 = vadd.f32 %v259, %v314
    %v316 = vpop.f32.mrb[0].mxu0
    %v317 = vpop.f32.mrb[0].mxu0
    %v318 = vadd.f32 %v259, %v317
    %v319 = vpop.f32.mrb[0].mxu0
    %320 = vdwg.mxu0
    %v321 = vpack.c.bf16 %v310, %v307
    %v322 = vpack.c.bf16 %v318, %v315
    %vm323 = vcmask 64512
    %v325 = vsel %vm323, %v173, 0
    %v328 = vsel %vm323, %v250, 0
    %330 = vmatprep.subr.bf16.mxu0 0
    %331 = vmatpush1.bf16.xpose.msra.mxu0 %v328
    %332 = vmatprep.subr.bf16.mxu0 0
    %333 = vmatpush1.bf16.xpose.msra.mxu0 0
    %334 = vmatprep.subr.bf16.mxu0 0
    %335 = vmatpush1.bf16.xpose.msra.mxu0 0
    %336 = vmatprep.subr.bf16.mxu0 0
    %337 = vmatpush1.bf16.xpose.msra.mxu0 0
    %338 = vmatprep.subr.bf16.mxu0 0
    %339 = vmatpush1.bf16.xpose.msra.mxu0 0
    %340 = vmatprep.subr.bf16.mxu0 0
    %341 = vmatpush1.bf16.xpose.msra.mxu0 0
    %342 = vmatprep.subr.bf16.mxu0 0
    %343 = vmatpush1.bf16.xpose.msra.mxu0 0
    %344 = vmatprep.subr.bf16.mxu0 0
    %345 = vmatpush1.bf16.xpose.msra.mxu0 0
    %346 = vmatprep.subr.bf16.mxu0 0
    %347 = vmatpush1.bf16.xpose.msra.mxu0 0
    %348 = vmatprep.subr.bf16.mxu0 0
    %349 = vmatpush1.bf16.xpose.msra.mxu0 0
    %350 = vmatprep.subr.bf16.mxu0 0
    %351 = vmatpush1.bf16.xpose.msra.mxu0 0
    %352 = vmatprep.subr.bf16.mxu0 0
    %353 = vmatpush1.bf16.xpose.msra.mxu0 0
    %354 = vmatprep.subr.bf16.mxu0 0
    %355 = vmatpush1.bf16.xpose.msra.mxu0 0
    %356 = vmatprep.subr.bf16.mxu0 0
    %357 = vmatpush1.bf16.xpose.msra.mxu0 0
    %358 = vmatprep.subr.bf16.mxu0 0
    %359 = vmatpush1.bf16.xpose.msra.mxu0 0
    %360 = vmatprep.subr.bf16.mxu0 0
    %361 = vmatpush1.bf16.xpose.msra.mxu0 0
    %362 = vmatprep.mubr.bf16.mxu0 0
    %363 = vmatmul.mubr.bf16.gmra.mrb[0].mxu0 %v325
    %v364 = vpop.f32.mrb[0].mxu0
    %v365 = vadd.f32 0.0, %v364
    %v366 = vpop.f32.mrb[0].mxu0
    %v367 = vpop.f32.mrb[0].mxu0
    %v368 = vpop.f32.mrb[0].mxu0
    %369 = vdwg.mxu0
    %v371 = vsel %vm323, %v174, 0
    %v374 = vsel %vm323, %v251, 0
    %376 = vmatprep.subr.bf16.mxu0 0
    %377 = vmatpush1.bf16.xpose.msra.mxu0 %v374
    %378 = vmatprep.subr.bf16.mxu0 0
    %379 = vmatpush1.bf16.xpose.msra.mxu0 0
    %380 = vmatprep.subr.bf16.mxu0 0
    %381 = vmatpush1.bf16.xpose.msra.mxu0 0
    %382 = vmatprep.subr.bf16.mxu0 0
    %383 = vmatpush1.bf16.xpose.msra.mxu0 0
    %384 = vmatprep.subr.bf16.mxu0 0
    %385 = vmatpush1.bf16.xpose.msra.mxu0 0
    %386 = vmatprep.subr.bf16.mxu0 0
    %387 = vmatpush1.bf16.xpose.msra.mxu0 0
    %388 = vmatprep.subr.bf16.mxu0 0
    %389 = vmatpush1.bf16.xpose.msra.mxu0 0
    %390 = vmatprep.subr.bf16.mxu0 0
    %391 = vmatpush1.bf16.xpose.msra.mxu0 0
    %392 = vmatprep.subr.bf16.mxu0 0
    %393 = vmatpush1.bf16.xpose.msra.mxu0 0
    %394 = vmatprep.subr.bf16.mxu0 0
    %395 = vmatpush1.bf16.xpose.msra.mxu0 0
    %396 = vmatprep.subr.bf16.mxu0 0
    %397 = vmatpush1.bf16.xpose.msra.mxu0 0
    %398 = vmatprep.subr.bf16.mxu0 0
    %399 = vmatpush1.bf16.xpose.msra.mxu0 0
    %400 = vmatprep.subr.bf16.mxu0 0
    %401 = vmatpush1.bf16.xpose.msra.mxu0 0
    %402 = vmatprep.subr.bf16.mxu0 0
    %403 = vmatpush1.bf16.xpose.msra.mxu0 0
    %404 = vmatprep.subr.bf16.mxu0 0
    %405 = vmatpush1.bf16.xpose.msra.mxu0 0
    %406 = vmatprep.subr.bf16.mxu0 0
    %407 = vmatpush1.bf16.xpose.msra.mxu0 0
    %408 = vmatprep.mubr.bf16.mxu0 0
    %409 = vmatmul.mubr.bf16.gmra.mrb[0].mxu0 %v371
    %v410 = vpop.f32.mrb[0].mxu0
    %v411 = vadd.f32 0.0, %v410
    %v412 = vpop.f32.mrb[0].mxu0
    %v413 = vpop.f32.mrb[0].mxu0
    %v414 = vpop.f32.mrb[0].mxu0
    %415 = vdwg.mxu0
    %vm416 = vcmask 130048
    %v417 = vsel %vm416, %v365, -inf
    %418 = vmax.xlane.f32.xlu0 %v417
    %v419 = vpop.xlane.xlu0 %418
    %v420 = vsel %vm416, %v411, -inf
    %421 = vmax.xlane.f32.xlu0 %v420
    %v422 = vpop.xlane.xlu0 %421
    %v423 = vsub.f32 %v365, %v419
    %v424 = vsub.f32 %v411, %v422
    %v425 = vmul.f32 %v423, 1.442695
    %v426 = vpow.pop %v425
    %v427 = vmul.f32 %v424, 1.442695
    %v428 = vpow.pop %v427
    %v429 = vsel %vm416, %v426, 0.0
    %430 = vadd.xlane.f32.xlu0 %v429
    %v431 = vpop.xlane.xlu0 %430
    %v432 = vsel %vm416, %v428, 0.0
    %433 = vadd.xlane.f32.xlu0 %v432
    %v434 = vpop.xlane.xlu0 %433
    %v435 = vrcp.pop %v431
    %v436 = vmul.f32 %v426, %v435
    %v437 = vrcp.pop %v434
    %v438 = vmul.f32 %v428, %v437
    %v439 = vpack.c.bf16 %v436, %v436
    %v440 = vpack.c.bf16 %v438, %v438
    %v442 = vsel %vm416, %v439, 0
    %444 = vmatprep.subr.bf16.mxu0 0
    %445 = vmatpush1.bf16.msra.mxu0 %v321
    %446 = vmatprep.subr.bf16.mxu0 0
    %447 = vmatpush1.bf16.msra.mxu0 0
    %448 = vmatprep.subr.bf16.mxu0 0
    %449 = vmatpush1.bf16.msra.mxu0 0
    %450 = vmatprep.subr.bf16.mxu0 0
    %451 = vmatpush1.bf16.msra.mxu0 0
    %452 = vmatprep.subr.bf16.mxu0 0
    %453 = vmatpush1.bf16.msra.mxu0 0
    %454 = vmatprep.subr.bf16.mxu0 0
    %455 = vmatpush1.bf16.msra.mxu0 0
    %456 = vmatprep.subr.bf16.mxu0 0
    %457 = vmatpush1.bf16.msra.mxu0 0
    %458 = vmatprep.subr.bf16.mxu0 0
    %459 = vmatpush1.bf16.msra.mxu0 0
    %460 = vmatprep.subr.bf16.mxu0 0
    %461 = vmatpush1.bf16.msra.mxu0 0
    %462 = vmatprep.subr.bf16.mxu0 0
    %463 = vmatpush1.bf16.msra.mxu0 0
    %464 = vmatprep.subr.bf16.mxu0 0
    %465 = vmatpush1.bf16.msra.mxu0 0
    %466 = vmatprep.subr.bf16.mxu0 0
    %467 = vmatpush1.bf16.msra.mxu0 0
    %468 = vmatprep.subr.bf16.mxu0 0
    %469 = vmatpush1.bf16.msra.mxu0 0
    %470 = vmatprep.subr.bf16.mxu0 0
    %471 = vmatpush1.bf16.msra.mxu0 0
    %472 = vmatprep.subr.bf16.mxu0 0
    %473 = vmatpush1.bf16.msra.mxu0 0
    %474 = vmatprep.subr.bf16.mxu0 0
    %475 = vmatpush1.bf16.msra.mxu0 0
    %476 = vmatprep.mubr.bf16.mxu0 0
    %477 = vmatmul.mubr.bf16.gmra.mrb[0].mxu0 %v442
    %v478 = vpop.f32.mrb[0].mxu0
    %v479 = vadd.f32 0.0, %v478
    %v480 = vpop.f32.mrb[0].mxu0
    %v481 = vpop.f32.mrb[0].mxu0
    %v482 = vpop.f32.mrb[0].mxu0
    %483 = vdwg.mxu0
    %v485 = vsel %vm416, %v440, 0
    %487 = vmatprep.subr.bf16.mxu0 0
    %488 = vmatpush1.bf16.msra.mxu0 %v322
    %489 = vmatprep.subr.bf16.mxu0 0
    %490 = vmatpush1.bf16.msra.mxu0 0
    %491 = vmatprep.subr.bf16.mxu0 0
    %492 = vmatpush1.bf16.msra.mxu0 0
    %493 = vmatprep.subr.bf16.mxu0 0
    %494 = vmatpush1.bf16.msra.mxu0 0
    %495 = vmatprep.subr.bf16.mxu0 0
    %496 = vmatpush1.bf16.msra.mxu0 0
    %497 = vmatprep.subr.bf16.mxu0 0
    %498 = vmatpush1.bf16.msra.mxu0 0
    %499 = vmatprep.subr.bf16.mxu0 0
    %500 = vmatpush1.bf16.msra.mxu0 0
    %501 = vmatprep.subr.bf16.mxu0 0
    %502 = vmatpush1.bf16.msra.mxu0 0
    %503 = vmatprep.subr.bf16.mxu0 0
    %504 = vmatpush1.bf16.msra.mxu0 0
    %505 = vmatprep.subr.bf16.mxu0 0
    %506 = vmatpush1.bf16.msra.mxu0 0
    %507 = vmatprep.subr.bf16.mxu0 0
    %508 = vmatpush1.bf16.msra.mxu0 0
    %509 = vmatprep.subr.bf16.mxu0 0
    %510 = vmatpush1.bf16.msra.mxu0 0
    %511 = vmatprep.subr.bf16.mxu0 0
    %512 = vmatpush1.bf16.msra.mxu0 0
    %513 = vmatprep.subr.bf16.mxu0 0
    %514 = vmatpush1.bf16.msra.mxu0 0
    %515 = vmatprep.subr.bf16.mxu0 0
    %516 = vmatpush1.bf16.msra.mxu0 0
    %517 = vmatprep.subr.bf16.mxu0 0
    %518 = vmatpush1.bf16.msra.mxu0 0
    %519 = vmatprep.mubr.bf16.mxu0 0
    %520 = vmatmul.mubr.bf16.gmra.mrb[0].mxu0 %v485
    %v521 = vpop.f32.mrb[0].mxu0
    %v522 = vadd.f32 0.0, %v521
    %v523 = vpop.f32.mrb[0].mxu0
    %v524 = vpop.f32.mrb[0].mxu0
    %v525 = vpop.f32.mrb[0].mxu0
    %526 = vdwg.mxu0
    %527 = vst.msk [vmem:[#allocation2] sm:$0xff] %vm323, %v479
    %528 = vst.msk [vmem:[#allocation2 + $0x8] sm:$0xff] %vm323, %v522
    %529 = vrot.lane.b32.xlu0 %v173, 120
    %v530 = vpop.permute.xlu0 %529
    %532 = vrot.lane.b32.xlu0 %v250, 120
    %v533 = vpop.permute.xlu0 %532
    %v535 = vsel %vm323, %v530, 0
    %v538 = vsel %vm323, %v533, 0
    %540 = vmatprep.subr.bf16.mxu0 0
    %541 = vmatpush1.bf16.xpose.msra.mxu0 %v538
    %542 = vmatprep.subr.bf16.mxu0 0
    %543 = vmatpush1.bf16.xpose.msra.mxu0 0
    %544 = vmatprep.subr.bf16.mxu0 0
    %545 = vmatpush1.bf16.xpose.msra.mxu0 0
    %546 = vmatprep.subr.bf16.mxu0 0
    %547 = vmatpush1.bf16.xpose.msra.mxu0 0
    %548 = vmatprep.subr.bf16.mxu0 0
    %549 = vmatpush1.bf16.xpose.msra.mxu0 0
    %550 = vmatprep.subr.bf16.mxu0 0
    %551 = vmatpush1.bf16.xpose.msra.mxu0 0
    %552 = vmatprep.subr.bf16.mxu0 0
    %553 = vmatpush1.bf16.xpose.msra.mxu0 0
    %554 = vmatprep.subr.bf16.mxu0 0
    %555 = vmatpush1.bf16.xpose.msra.mxu0 0
    %556 = vmatprep.subr.bf16.mxu0 0
    %557 = vmatpush1.bf16.xpose.msra.mxu0 0
    %558 = vmatprep.subr.bf16.mxu0 0
    %559 = vmatpush1.bf16.xpose.msra.mxu0 0
    %560 = vmatprep.subr.bf16.mxu0 0
    %561 = vmatpush1.bf16.xpose.msra.mxu0 0
    %562 = vmatprep.subr.bf16.mxu0 0
    %563 = vmatpush1.bf16.xpose.msra.mxu0 0
    %564 = vmatprep.subr.bf16.mxu0 0
    %565 = vmatpush1.bf16.xpose.msra.mxu0 0
    %566 = vmatprep.subr.bf16.mxu0 0
    %567 = vmatpush1.bf16.xpose.msra.mxu0 0
    %568 = vmatprep.subr.bf16.mxu0 0
    %569 = vmatpush1.bf16.xpose.msra.mxu0 0
    %570 = vmatprep.subr.bf16.mxu0 0
    %571 = vmatpush1.bf16.xpose.msra.mxu0 0
    %572 = vmatprep.mubr.bf16.mxu0 0
    %573 = vmatmul.mubr.bf16.gmra.mrb[0].mxu0 %v535
    %v574 = vpop.f32.mrb[0].mxu0
    %v575 = vadd.f32 0.0, %v574
    %v576 = vpop.f32.mrb[0].mxu0
    %v577 = vpop.f32.mrb[0].mxu0
    %v578 = vpop.f32.mrb[0].mxu0
    %579 = vdwg.mxu0
    %580 = vrot.lane.b32.xlu0 %v174, 120
    %v581 = vpop.permute.xlu0 %580
    %583 = vrot.lane.b32.xlu0 %v251, 120
    %v584 = vpop.permute.xlu0 %583
    %v586 = vsel %vm323, %v581, 0
    %v589 = vsel %vm323, %v584, 0
    %591 = vmatprep.subr.bf16.mxu0 0
    %592 = vmatpush1.bf16.xpose.msra.mxu0 %v589
    %593 = vmatprep.subr.bf16.mxu0 0
    %594 = vmatpush1.bf16.xpose.msra.mxu0 0
    %595 = vmatprep.subr.bf16.mxu0 0
    %596 = vmatpush1.bf16.xpose.msra.mxu0 0
    %597 = vmatprep.subr.bf16.mxu0 0
    %598 = vmatpush1.bf16.xpose.msra.mxu0 0
    %599 = vmatprep.subr.bf16.mxu0 0
    %600 = vmatpush1.bf16.xpose.msra.mxu0 0
    %601 = vmatprep.subr.bf16.mxu0 0
    %602 = vmatpush1.bf16.xpose.msra.mxu0 0
    %603 = vmatprep.subr.bf16.mxu0 0
    %604 = vmatpush1.bf16.xpose.msra.mxu0 0
    %605 = vmatprep.subr.bf16.mxu0 0
    %606 = vmatpush1.bf16.xpose.msra.mxu0 0
    %607 = vmatprep.subr.bf16.mxu0 0
    %608 = vmatpush1.bf16.xpose.msra.mxu0 0
    %609 = vmatprep.subr.bf16.mxu0 0
    %610 = vmatpush1.bf16.xpose.msra.mxu0 0
    %611 = vmatprep.subr.bf16.mxu0 0
    %612 = vmatpush1.bf16.xpose.msra.mxu0 0
    %613 = vmatprep.subr.bf16.mxu0 0
    %614 = vmatpush1.bf16.xpose.msra.mxu0 0
    %615 = vmatprep.subr.bf16.mxu0 0
    %616 = vmatpush1.bf16.xpose.msra.mxu0 0
    %617 = vmatprep.subr.bf16.mxu0 0
    %618 = vmatpush1.bf16.xpose.msra.mxu0 0
    %619 = vmatprep.subr.bf16.mxu0 0
    %620 = vmatpush1.bf16.xpose.msra.mxu0 0
    %621 = vmatprep.subr.bf16.mxu0 0
    %622 = vmatpush1.bf16.xpose.msra.mxu0 0
    %623 = vmatprep.mubr.bf16.mxu0 0
    %624 = vmatmul.mubr.bf16.gmra.mrb[0].mxu0 %v586
    %v625 = vpop.f32.mrb[0].mxu0
    %v626 = vadd.f32 0.0, %v625
    %v627 = vpop.f32.mrb[0].mxu0
    %v628 = vpop.f32.mrb[0].mxu0
    %v629 = vpop.f32.mrb[0].mxu0
    %630 = vdwg.mxu0
    %v631 = vsel %vm416, %v575, -inf
    %632 = vmax.xlane.f32.xlu0 %v631
    %v633 = vpop.xlane.xlu0 %632
    %v634 = vsel %vm416, %v626, -inf
    %635 = vmax.xlane.f32.xlu0 %v634
    %v636 = vpop.xlane.xlu0 %635
    %v637 = vsub.f32 %v575, %v633
    %v638 = vsub.f32 %v626, %v636
    %v639 = vmul.f32 %v637, 1.442695
    %v640 = vpow.pop %v639
    %v641 = vmul.f32 %v638, 1.442695
    %v642 = vpow.pop %v641
    %v643 = vsel %vm416, %v640, 0.0
    %644 = vadd.xlane.f32.xlu0 %v643
    %v645 = vpop.xlane.xlu0 %644
    %v646 = vsel %vm416, %v642, 0.0
    %647 = vadd.xlane.f32.xlu0 %v646
    %v648 = vpop.xlane.xlu0 %647
    %v649 = vrcp.pop %v645
    %v650 = vmul.f32 %v640, %v649
    %v651 = vrcp.pop %v648
    %v652 = vmul.f32 %v642, %v651
    %v653 = vpack.c.bf16 %v650, %v650
    %v654 = vpack.c.bf16 %v652, %v652
    %656 = vrot.lane.b32.xlu0 %v321, 120
    %v657 = vpop.permute.xlu0 %656
    %v660 = vsel %vm416, %v653, 0
    %662 = vmatprep.subr.bf16.mxu0 0
    %663 = vmatpush1.bf16.msra.mxu0 %v657
    %664 = vmatprep.subr.bf16.mxu0 0
    %665 = vmatpush1.bf16.msra.mxu0 0
    %666 = vmatprep.subr.bf16.mxu0 0
    %667 = vmatpush1.bf16.msra.mxu0 0
    %668 = vmatprep.subr.bf16.mxu0 0
    %669 = vmatpush1.bf16.msra.mxu0 0
    %670 = vmatprep.subr.bf16.mxu0 0
    %671 = vmatpush1.bf16.msra.mxu0 0
    %672 = vmatprep.subr.bf16.mxu0 0
    %673 = vmatpush1.bf16.msra.mxu0 0
    %674 = vmatprep.subr.bf16.mxu0 0
    %675 = vmatpush1.bf16.msra.mxu0 0
    %676 = vmatprep.subr.bf16.mxu0 0
    %677 = vmatpush1.bf16.msra.mxu0 0
    %678 = vmatprep.subr.bf16.mxu0 0
    %679 = vmatpush1.bf16.msra.mxu0 0
    %680 = vmatprep.subr.bf16.mxu0 0
    %681 = vmatpush1.bf16.msra.mxu0 0
    %682 = vmatprep.subr.bf16.mxu0 0
    %683 = vmatpush1.bf16.msra.mxu0 0
    %684 = vmatprep.subr.bf16.mxu0 0
    %685 = vmatpush1.bf16.msra.mxu0 0
    %686 = vmatprep.subr.bf16.mxu0 0
    %687 = vmatpush1.bf16.msra.mxu0 0
    %688 = vmatprep.subr.bf16.mxu0 0
    %689 = vmatpush1.bf16.msra.mxu0 0
    %690 = vmatprep.subr.bf16.mxu0 0
    %691 = vmatpush1.bf16.msra.mxu0 0
    %692 = vmatprep.subr.bf16.mxu0 0
    %693 = vmatpush1.bf16.msra.mxu0 0
    %694 = vmatprep.mubr.bf16.mxu0 0
    %695 = vmatmul.mubr.bf16.gmra.mrb[0].mxu0 %v660
    %v696 = vpop.f32.mrb[0].mxu0
    %v697 = vadd.f32 0.0, %v696
    %v698 = vpop.f32.mrb[0].mxu0
    %v699 = vpop.f32.mrb[0].mxu0
    %v700 = vpop.f32.mrb[0].mxu0
    %701 = vdwg.mxu0
    %703 = vrot.lane.b32.xlu0 %v322, 120
    %v704 = vpop.permute.xlu0 %703
    %v707 = vsel %vm416, %v654, 0
    %709 = vmatprep.subr.bf16.mxu0 0
    %710 = vmatpush1.bf16.msra.mxu0 %v704
    %711 = vmatprep.subr.bf16.mxu0 0
    %712 = vmatpush1.bf16.msra.mxu0 0
    %713 = vmatprep.subr.bf16.mxu0 0
    %714 = vmatpush1.bf16.msra.mxu0 0
    %715 = vmatprep.subr.bf16.mxu0 0
    %716 = vmatpush1.bf16.msra.mxu0 0
    %717 = vmatprep.subr.bf16.mxu0 0
    %718 = vmatpush1.bf16.msra.mxu0 0
    %719 = vmatprep.subr.bf16.mxu0 0
    %720 = vmatpush1.bf16.msra.mxu0 0
    %721 = vmatprep.subr.bf16.mxu0 0
    %722 = vmatpush1.bf16.msra.mxu0 0
    %723 = vmatprep.subr.bf16.mxu0 0
    %724 = vmatpush1.bf16.msra.mxu0 0
    %725 = vmatprep.subr.bf16.mxu0 0
    %726 = vmatpush1.bf16.msra.mxu0 0
    %727 = vmatprep.subr.bf16.mxu0 0
    %728 = vmatpush1.bf16.msra.mxu0 0
    %729 = vmatprep.subr.bf16.mxu0 0
    %730 = vmatpush1.bf16.msra.mxu0 0
    %731 = vmatprep.subr.bf16.mxu0 0
    %732 = vmatpush1.bf16.msra.mxu0 0
    %733 = vmatprep.subr.bf16.mxu0 0
    %734 = vmatpush1.bf16.msra.mxu0 0
    %735 = vmatprep.subr.bf16.mxu0 0
    %736 = vmatpush1.bf16.msra.mxu0 0
    %737 = vmatprep.subr.bf16.mxu0 0
    %738 = vmatpush1.bf16.msra.mxu0 0
    %739 = vmatprep.subr.bf16.mxu0 0
    %740 = vmatpush1.bf16.msra.mxu0 0
    %741 = vmatprep.mubr.bf16.mxu0 0
    %742 = vmatmul.mubr.bf16.gmra.mrb[0].mxu0 %v707
    %v743 = vpop.f32.mrb[0].mxu0
    %v744 = vadd.f32 0.0, %v743
    %v745 = vpop.f32.mrb[0].mxu0
    %v746 = vpop.f32.mrb[0].mxu0
    %v747 = vpop.f32.mrb[0].mxu0
    %748 = vdwg.mxu0
    %751 = vrot.lane.b32.xlu0 %v697, 8
    %v752 = vpop.permute.xlu0 %751
    %753 = vrot.lane.b32.xlu0 %v744, 8
    %v754 = vpop.permute.xlu0 %753
    %vm757 = vcmask 130112
    %758 = vst.msk [vmem:[#allocation2] sm:$0xff] %vm757, %v752
    %759 = vst.msk [vmem:[#allocation2 + $0x8] sm:$0xff] %vm757, %v754
    %760 = vrot.lane.b32.xlu0 %v173, 112
    %v761 = vpop.permute.xlu0 %760
    %762 = vrot.lane.b32.xlu0 %v250, 112
    %v763 = vpop.permute.xlu0 %762
    %v765 = vsel %vm323, %v761, 0
    %v768 = vsel %vm323, %v763, 0
    %770 = vmatprep.subr.bf16.mxu0 0
    %771 = vmatpush1.bf16.xpose.msra.mxu0 %v768
    %772 = vmatprep.subr.bf16.mxu0 0
    %773 = vmatpush1.bf16.xpose.msra.mxu0 0
    %774 = vmatprep.subr.bf16.mxu0 0
    %775 = vmatpush1.bf16.xpose.msra.mxu0 0
    %776 = vmatprep.subr.bf16.mxu0 0
    %777 = vmatpush1.bf16.xpose.msra.mxu0 0
    %778 = vmatprep.subr.bf16.mxu0 0
    %779 = vmatpush1.bf16.xpose.msra.mxu0 0
    %780 = vmatprep.subr.bf16.mxu0 0
    %781 = vmatpush1.bf16.xpose.msra.mxu0 0
    %782 = vmatprep.subr.bf16.mxu0 0
    %783 = vmatpush1.bf16.xpose.msra.mxu0 0
    %784 = vmatprep.subr.bf16.mxu0 0
    %785 = vmatpush1.bf16.xpose.msra.mxu0 0
    %786 = vmatprep.subr.bf16.mxu0 0
    %787 = vmatpush1.bf16.xpose.msra.mxu0 0
    %788 = vmatprep.subr.bf16.mxu0 0
    %789 = vmatpush1.bf16.xpose.msra.mxu0 0
    %790 = vmatprep.subr.bf16.mxu0 0
    %791 = vmatpush1.bf16.xpose.msra.mxu0 0
    %792 = vmatprep.subr.bf16.mxu0 0
    %793 = vmatpush1.bf16.xpose.msra.mxu0 0
    %794 = vmatprep.subr.bf16.mxu0 0
    %795 = vmatpush1.bf16.xpose.msra.mxu0 0
    %796 = vmatprep.subr.bf16.mxu0 0
    %797 = vmatpush1.bf16.xpose.msra.mxu0 0
    %798 = vmatprep.subr.bf16.mxu0 0
    %799 = vmatpush1.bf16.xpose.msra.mxu0 0
    %800 = vmatprep.subr.bf16.mxu0 0
    %801 = vmatpush1.bf16.xpose.msra.mxu0 0
    %802 = vmatprep.mubr.bf16.mxu0 0
    %803 = vmatmul.mubr.bf16.gmra.mrb[0].mxu0 %v765
    %v804 = vpop.f32.mrb[0].mxu0
    %v805 = vadd.f32 0.0, %v804
    %v806 = vpop.f32.mrb[0].mxu0
    %v807 = vpop.f32.mrb[0].mxu0
    %v808 = vpop.f32.mrb[0].mxu0
    %809 = vdwg.mxu0
    %810 = vrot.lane.b32.xlu0 %v174, 112
    %v811 = vpop.permute.xlu0 %810
    %812 = vrot.lane.b32.xlu0 %v251, 112
    %v813 = vpop.permute.xlu0 %812
    %v815 = vsel %vm323, %v811, 0
    %v818 = vsel %vm323, %v813, 0
    %820 = vmatprep.subr.bf16.mxu0 0
    %821 = vmatpush1.bf16.xpose.msra.mxu0 %v818
    %822 = vmatprep.subr.bf16.mxu0 0
    %823 = vmatpush1.bf16.xpose.msra.mxu0 0
    %824 = vmatprep.subr.bf16.mxu0 0
    %825 = vmatpush1.bf16.xpose.msra.mxu0 0
    %826 = vmatprep.subr.bf16.mxu0 0
    %827 = vmatpush1.bf16.xpose.msra.mxu0 0
    %828 = vmatprep.subr.bf16.mxu0 0
    %829 = vmatpush1.bf16.xpose.msra.mxu0 0
    %830 = vmatprep.subr.bf16.mxu0 0
    %831 = vmatpush1.bf16.xpose.msra.mxu0 0
    %832 = vmatprep.subr.bf16.mxu0 0
    %833 = vmatpush1.bf16.xpose.msra.mxu0 0
    %834 = vmatprep.subr.bf16.mxu0 0
    %835 = vmatpush1.bf16.xpose.msra.mxu0 0
    %836 = vmatprep.subr.bf16.mxu0 0
    %837 = vmatpush1.bf16.xpose.msra.mxu0 0
    %838 = vmatprep.subr.bf16.mxu0 0
    %839 = vmatpush1.bf16.xpose.msra.mxu0 0
    %840 = vmatprep.subr.bf16.mxu0 0
    %841 = vmatpush1.bf16.xpose.msra.mxu0 0
    %842 = vmatprep.subr.bf16.mxu0 0
    %843 = vmatpush1.bf16.xpose.msra.mxu0 0
    %844 = vmatprep.subr.bf16.mxu0 0
    %845 = vmatpush1.bf16.xpose.msra.mxu0 0
    %846 = vmatprep.subr.bf16.mxu0 0
    %847 = vmatpush1.bf16.xpose.msra.mxu0 0
    %848 = vmatprep.subr.bf16.mxu0 0
    %849 = vmatpush1.bf16.xpose.msra.mxu0 0
    %850 = vmatprep.subr.bf16.mxu0 0
    %851 = vmatpush1.bf16.xpose.msra.mxu0 0
    %852 = vmatprep.mubr.bf16.mxu0 0
    %853 = vmatmul.mubr.bf16.gmra.mrb[0].mxu0 %v815
    %v854 = vpop.f32.mrb[0].mxu0
    %v855 = vadd.f32 0.0, %v854
    %v856 = vpop.f32.mrb[0].mxu0
    %v857 = vpop.f32.mrb[0].mxu0
    %v858 = vpop.f32.mrb[0].mxu0
    %859 = vdwg.mxu0
    %v860 = vsel %vm416, %v805, -inf
    %861 = vmax.xlane.f32.xlu0 %v860
    %v862 = vpop.xlane.xlu0 %861
    %v863 = vsel %vm416, %v855, -inf
    %864 = vmax.xlane.f32.xlu0 %v863
    %v865 = vpop.xlane.xlu0 %864
    %v866 = vsub.f32 %v805, %v862
    %v867 = vsub.f32 %v855, %v865
    %v868 = vmul.f32 %v866, 1.442695
    %v869 = vpow.pop %v868
    %v870 = vmul.f32 %v867, 1.442695
    %v871 = vpow.pop %v870
    %v872 = vsel %vm416, %v869, 0.0
    %873 = vadd.xlane.f32.xlu0 %v872
    %v874 = vpop.xlane.xlu0 %873
    %v875 = vsel %vm416, %v871, 0.0
    %876 = vadd.xlane.f32.xlu0 %v875
    %v877 = vpop.xlane.xlu0 %876
    %v878 = vrcp.pop %v874
    %v879 = vmul.f32 %v869, %v878
    %v880 = vrcp.pop %v877
    %v881 = vmul.f32 %v871, %v880
    %v882 = vpack.c.bf16 %v879, %v879
    %v883 = vpack.c.bf16 %v881, %v881
    %884 = vrot.lane.b32.xlu0 %v321, 112
    %v885 = vpop.permute.xlu0 %884
    %v888 = vsel %vm416, %v882, 0
    %890 = vmatprep.subr.bf16.mxu0 0
    %891 = vmatpush1.bf16.msra.mxu0 %v885
    %892 = vmatprep.subr.bf16.mxu0 0
    %893 = vmatpush1.bf16.msra.mxu0 0
    %894 = vmatprep.subr.bf16.mxu0 0
    %895 = vmatpush1.bf16.msra.mxu0 0
    %896 = vmatprep.subr.bf16.mxu0 0
    %897 = vmatpush1.bf16.msra.mxu0 0
    %898 = vmatprep.subr.bf16.mxu0 0
    %899 = vmatpush1.bf16.msra.mxu0 0
    %900 = vmatprep.subr.bf16.mxu0 0
    %901 = vmatpush1.bf16.msra.mxu0 0
    %902 = vmatprep.subr.bf16.mxu0 0
    %903 = vmatpush1.bf16.msra.mxu0 0
    %904 = vmatprep.subr.bf16.mxu0 0
    %905 = vmatpush1.bf16.msra.mxu0 0
    %906 = vmatprep.subr.bf16.mxu0 0
    %907 = vmatpush1.bf16.msra.mxu0 0
    %908 = vmatprep.subr.bf16.mxu0 0
    %909 = vmatpush1.bf16.msra.mxu0 0
    %910 = vmatprep.subr.bf16.mxu0 0
    %911 = vmatpush1.bf16.msra.mxu0 0
    %912 = vmatprep.subr.bf16.mxu0 0
    %913 = vmatpush1.bf16.msra.mxu0 0
    %914 = vmatprep.subr.bf16.mxu0 0
    %915 = vmatpush1.bf16.msra.mxu0 0
    %916 = vmatprep.subr.bf16.mxu0 0
    %917 = vmatpush1.bf16.msra.mxu0 0
    %918 = vmatprep.subr.bf16.mxu0 0
    %919 = vmatpush1.bf16.msra.mxu0 0
    %920 = vmatprep.subr.bf16.mxu0 0
    %921 = vmatpush1.bf16.msra.mxu0 0
    %922 = vmatprep.mubr.bf16.mxu0 0
    %923 = vmatmul.mubr.bf16.gmra.mrb[0].mxu0 %v888
    %v924 = vpop.f32.mrb[0].mxu0
    %v925 = vadd.f32 0.0, %v924
    %v926 = vpop.f32.mrb[0].mxu0
    %v927 = vpop.f32.mrb[0].mxu0
    %v928 = vpop.f32.mrb[0].mxu0
    %929 = vdwg.mxu0
    %930 = vrot.lane.b32.xlu0 %v322, 112
    %v931 = vpop.permute.xlu0 %930
    %v934 = vsel %vm416, %v883, 0
    %936 = vmatprep.subr.bf16.mxu0 0
    %937 = vmatpush1.bf16.msra.mxu0 %v931
    %938 = vmatprep.subr.bf16.mxu0 0
    %939 = vmatpush1.bf16.msra.mxu0 0
    %940 = vmatprep.subr.bf16.mxu0 0
    %941 = vmatpush1.bf16.msra.mxu0 0
    %942 = vmatprep.subr.bf16.mxu0 0
    %943 = vmatpush1.bf16.msra.mxu0 0
    %944 = vmatprep.subr.bf16.mxu0 0
    %945 = vmatpush1.bf16.msra.mxu0 0
    %946 = vmatprep.subr.bf16.mxu0 0
    %947 = vmatpush1.bf16.msra.mxu0 0
    %948 = vmatprep.subr.bf16.mxu0 0
    %949 = vmatpush1.bf16.msra.mxu0 0
    %950 = vmatprep.subr.bf16.mxu0 0
    %951 = vmatpush1.bf16.msra.mxu0 0
    %952 = vmatprep.subr.bf16.mxu0 0
    %953 = vmatpush1.bf16.msra.mxu0 0
    %954 = vmatprep.subr.bf16.mxu0 0
    %955 = vmatpush1.bf16.msra.mxu0 0
    %956 = vmatprep.subr.bf16.mxu0 0
    %957 = vmatpush1.bf16.msra.mxu0 0
    %958 = vmatprep.subr.bf16.mxu0 0
    %959 = vmatpush1.bf16.msra.mxu0 0
    %960 = vmatprep.subr.bf16.mxu0 0
    %961 = vmatpush1.bf16.msra.mxu0 0
    %962 = vmatprep.subr.bf16.mxu0 0
    %963 = vmatpush1.bf16.msra.mxu0 0
    %964 = vmatprep.subr.bf16.mxu0 0
    %965 = vmatpush1.bf16.msra.mxu0 0
    %966 = vmatprep.subr.bf16.mxu0 0
    %967 = vmatpush1.bf16.msra.mxu0 0
    %968 = vmatprep.mubr.bf16.mxu0 0
    %969 = vmatmul.mubr.bf16.gmra.mrb[0].mxu0 %v934
    %v970 = vpop.f32.mrb[0].mxu0
    %v971 = vadd.f32 0.0, %v970
    %v972 = vpop.f32.mrb[0].mxu0
    %v973 = vpop.f32.mrb[0].mxu0
    %v974 = vpop.f32.mrb[0].mxu0
    %975 = vdwg.mxu0
    %978 = vrot.lane.b32.xlu0 %v925, 16
    %v979 = vpop.permute.xlu0 %978
    %980 = vrot.lane.b32.xlu0 %v971, 16
    %v981 = vpop.permute.xlu0 %980
    %vm984 = vcmask 195712
    %985 = vst.msk [vmem:[#allocation2] sm:$0xff] %vm984, %v979
    %986 = vst.msk [vmem:[#allocation2 + $0x8] sm:$0xff] %vm984, %v981
    %987 = vrot.lane.b32.xlu0 %v173, 104
    %v988 = vpop.permute.xlu0 %987
    %989 = vrot.lane.b32.xlu0 %v250, 104
    %v990 = vpop.permute.xlu0 %989
    %v992 = vsel %vm323, %v988, 0
    %v995 = vsel %vm323, %v990, 0
    %997 = vmatprep.subr.bf16.mxu0 0
    %998 = vmatpush1.bf16.xpose.msra.mxu0 %v995
    %999 = vmatprep.subr.bf16.mxu0 0
    %1000 = vmatpush1.bf16.xpose.msra.mxu0 0
    %1001 = vmatprep.subr.bf16.mxu0 0
    %1002 = vmatpush1.bf16.xpose.msra.mxu0 0
    %1003 = vmatprep.subr.bf16.mxu0 0
    %1004 = vmatpush1.bf16.xpose.msra.mxu0 0
    %1005 = vmatprep.subr.bf16.mxu0 0
    %1006 = vmatpush1.bf16.xpose.msra.mxu0 0
    %1007 = vmatprep.subr.bf16.mxu0 0
    %1008 = vmatpush1.bf16.xpose.msra.mxu0 0
    %1009 = vmatprep.subr.bf16.mxu0 0
    %1010 = vmatpush1.bf16.xpose.msra.mxu0 0
    %1011 = vmatprep.subr.bf16.mxu0 0
    %1012 = vmatpush1.bf16.xpose.msra.mxu0 0
    %1013 = vmatprep.subr.bf16.mxu0 0
    %1014 = vmatpush1.bf16.xpose.msra.mxu0 0
    %1015 = vmatprep.subr.bf16.mxu0 0
    %1016 = vmatpush1.bf16.xpose.msra.mxu0 0
    %1017 = vmatprep.subr.bf16.mxu0 0
    %1018 = vmatpush1.bf16.xpose.msra.mxu0 0
    %1019 = vmatprep.subr.bf16.mxu0 0
    %1020 = vmatpush1.bf16.xpose.msra.mxu0 0
    %1021 = vmatprep.subr.bf16.mxu0 0
    %1022 = vmatpush1.bf16.xpose.msra.mxu0 0
    %1023 = vmatprep.subr.bf16.mxu0 0
    %1024 = vmatpush1.bf16.xpose.msra.mxu0 0
    %1025 = vmatprep.subr.bf16.mxu0 0
    %1026 = vmatpush1.bf16.xpose.msra.mxu0 0
    %1027 = vmatprep.subr.bf16.mxu0 0
    %1028 = vmatpush1.bf16.xpose.msra.mxu0 0
    %1029 = vmatprep.mubr.bf16.mxu0 0
    %1030 = vmatmul.mubr.bf16.gmra.mrb[0].mxu0 %v992
    %v1031 = vpop.f32.mrb[0].mxu0
    %v1032 = vadd.f32 0.0, %v1031
    %v1033 = vpop.f32.mrb[0].mxu0
    %v1034 = vpop.f32.mrb[0].mxu0
    %v1035 = vpop.f32.mrb[0].mxu0
    %1036 = vdwg.mxu0
    %1037 = vrot.lane.b32.xlu0 %v174, 104
    %v1038 = vpop.permute.xlu0 %1037
    %1039 = vrot.lane.b32.xlu0 %v251, 104
    %v1040 = vpop.permute.xlu0 %1039
    %v1042 = vsel %vm323, %v1038, 0
    %v1045 = vsel %vm323, %v1040, 0
    %1047 = vmatprep.subr.bf16.mxu0 0
    %1048 = vmatpush1.bf16.xpose.msra.mxu0 %v1045
    %1049 = vmatprep.subr.bf16.mxu0 0
    %1050 = vmatpush1.bf16.xpose.msra.mxu0 0
    %1051 = vmatprep.subr.bf16.mxu0 0
    %1052 = vmatpush1.bf16.xpose.msra.mxu0 0
    %1053 = vmatprep.subr.bf16.mxu0 0
    %1054 = vmatpush1.bf16.xpose.msra.mxu0 0
    %1055 = vmatprep.subr.bf16.mxu0 0
    %1056 = vmatpush1.bf16.xpose.msra.mxu0 0
    %1057 = vmatprep.subr.bf16.mxu0 0
    %1058 = vmatpush1.bf16.xpose.msra.mxu0 0
    %1059 = vmatprep.subr.bf16.mxu0 0
    %1060 = vmatpush1.bf16.xpose.msra.mxu0 0
    %1061 = vmatprep.subr.bf16.mxu0 0
    %1062 = vmatpush1.bf16.xpose.msra.mxu0 0
    %1063 = vmatprep.subr.bf16.mxu0 0
    %1064 = vmatpush1.bf16.xpose.msra.mxu0 0
    %1065 = vmatprep.subr.bf16.mxu0 0
    %1066 = vmatpush1.bf16.xpose.msra.mxu0 0
    %1067 = vmatprep.subr.bf16.mxu0 0
    %1068 = vmatpush1.bf16.xpose.msra.mxu0 0
    %1069 = vmatprep.subr.bf16.mxu0 0
    %1070 = vmatpush1.bf16.xpose.msra.mxu0 0
    %1071 = vmatprep.subr.bf16.mxu0 0
    %1072 = vmatpush1.bf16.xpose.msra.mxu0 0
    %1073 = vmatprep.subr.bf16.mxu0 0
    %1074 = vmatpush1.bf16.xpose.msra.mxu0 0
    %1075 = vmatprep.subr.bf16.mxu0 0
    %1076 = vmatpush1.bf16.xpose.msra.mxu0 0
    %1077 = vmatprep.subr.bf16.mxu0 0
    %1078 = vmatpush1.bf16.xpose.msra.mxu0 0
    %1079 = vmatprep.mubr.bf16.mxu0 0
    %1080 = vmatmul.mubr.bf16.gmra.mrb[0].mxu0 %v1042
    %v1081 = vpop.f32.mrb[0].mxu0
    %v1082 = vadd.f32 0.0, %v1081
    %v1083 = vpop.f32.mrb[0].mxu0
    %v1084 = vpop.f32.mrb[0].mxu0
    %v1085 = vpop.f32.mrb[0].mxu0
    %1086 = vdwg.mxu0
    %v1087 = vsel %vm416, %v1032, -inf
    %1088 = vmax.xlane.f32.xlu0 %v1087
    %v1089 = vpop.xlane.xlu0 %1088
    %v1090 = vsel %vm416, %v1082, -inf
    %1091 = vmax.xlane.f32.xlu0 %v1090
    %v1092 = vpop.xlane.xlu0 %1091
    %v1093 = vsub.f32 %v1032, %v1089
    %v1094 = vsub.f32 %v1082, %v1092
    %v1095 = vmul.f32 %v1093, 1.442695
    %v1096 = vpow.pop %v1095
    %v1097 = vmul.f32 %v1094, 1.442695
    %v1098 = vpow.pop %v1097
    %v1099 = vsel %vm416, %v1096, 0.0
    %1100 = vadd.xlane.f32.xlu0 %v1099
    %v1101 = vpop.xlane.xlu0 %1100
    %v1102 = vsel %vm416, %v1098, 0.0
    %1103 = vadd.xlane.f32.xlu0 %v1102
    %v1104 = vpop.xlane.xlu0 %1103
    %v1105 = vrcp.pop %v1101
    %v1106 = vmul.f32 %v1096, %v1105
    %v1107 = vrcp.pop %v1104
    %v1108 = vmul.f32 %v1098, %v1107
    %v1109 = vpack.c.bf16 %v1106, %v1106
    %v1110 = vpack.c.bf16 %v1108, %v1108
    %1111 = vrot.lane.b32.xlu0 %v321, 104
    %v1112 = vpop.permute.xlu0 %1111
    %v1115 = vsel %vm416, %v1109, 0
    %1117 = vmatprep.subr.bf16.mxu0 0
    %1118 = vmatpush1.bf16.msra.mxu0 %v1112
    %1119 = vmatprep.subr.bf16.mxu0 0
    %1120 = vmatpush1.bf16.msra.mxu0 0
    %1121 = vmatprep.subr.bf16.mxu0 0
    %1122 = vmatpush1.bf16.msra.mxu0 0
    %1123 = vmatprep.subr.bf16.mxu0 0
    %1124 = vmatpush1.bf16.msra.mxu0 0
    %1125 = vmatprep.subr.bf16.mxu0 0
    %1126 = vmatpush1.bf16.msra.mxu0 0
    %1127 = vmatprep.subr.bf16.mxu0 0
    %1128 = vmatpush1.bf16.msra.mxu0 0
    %1129 = vmatprep.subr.bf16.mxu0 0
    %1130 = vmatpush1.bf16.msra.mxu0 0
    %1131 = vmatprep.subr.bf16.mxu0 0
    %1132 = vmatpush1.bf16.msra.mxu0 0
    %1133 = vmatprep.subr.bf16.mxu0 0
    %1134 = vmatpush1.bf16.msra.mxu0 0
    %1135 = vmatprep.subr.bf16.mxu0 0
    %1136 = vmatpush1.bf16.msra.mxu0 0
    %1137 = vmatprep.subr.bf16.mxu0 0
    %1138 = vmatpush1.bf16.msra.mxu0 0
    %1139 = vmatprep.subr.bf16.mxu0 0
    %1140 = vmatpush1.bf16.msra.mxu0 0
    %1141 = vmatprep.subr.bf16.mxu0 0
    %1142 = vmatpush1.bf16.msra.mxu0 0
    %1143 = vmatprep.subr.bf16.mxu0 0
    %1144 = vmatpush1.bf16.msra.mxu0 0
    %1145 = vmatprep.subr.bf16.mxu0 0
    %1146 = vmatpush1.bf16.msra.mxu0 0
    %1147 = vmatprep.subr.bf16.mxu0 0
    %1148 = vmatpush1.bf16.msra.mxu0 0
    %1149 = vmatprep.mubr.bf16.mxu0 0
    %1150 = vmatmul.mubr.bf16.gmra.mrb[0].mxu0 %v1115
    %v1151 = vpop.f32.mrb[0].mxu0
    %v1152 = vadd.f32 0.0, %v1151
    %v1153 = vpop.f32.mrb[0].mxu0
    %v1154 = vpop.f32.mrb[0].mxu0
    %v1155 = vpop.f32.mrb[0].mxu0
    %1156 = vdwg.mxu0
    %1157 = vrot.lane.b32.xlu0 %v322, 104
    %v1158 = vpop.permute.xlu0 %1157
    %v1161 = vsel %vm416, %v1110, 0
    %1163 = vmatprep.subr.bf16.mxu0 0
    %1164 = vmatpush1.bf16.msra.mxu0 %v1158
    %1165 = vmatprep.subr.bf16.mxu0 0
    %1166 = vmatpush1.bf16.msra.mxu0 0
    %1167 = vmatprep.subr.bf16.mxu0 0
    %1168 = vmatpush1.bf16.msra.mxu0 0
    %1169 = vmatprep.subr.bf16.mxu0 0
    %1170 = vmatpush1.bf16.msra.mxu0 0
    %1171 = vmatprep.subr.bf16.mxu0 0
    %1172 = vmatpush1.bf16.msra.mxu0 0
    %1173 = vmatprep.subr.bf16.mxu0 0
    %1174 = vmatpush1.bf16.msra.mxu0 0
    %1175 = vmatprep.subr.bf16.mxu0 0
    %1176 = vmatpush1.bf16.msra.mxu0 0
    %1177 = vmatprep.subr.bf16.mxu0 0
    %1178 = vmatpush1.bf16.msra.mxu0 0
    %1179 = vmatprep.subr.bf16.mxu0 0
    %1180 = vmatpush1.bf16.msra.mxu0 0
    %1181 = vmatprep.subr.bf16.mxu0 0
    %1182 = vmatpush1.bf16.msra.mxu0 0
    %1183 = vmatprep.subr.bf16.mxu0 0
    %1184 = vmatpush1.bf16.msra.mxu0 0
    %1185 = vmatprep.subr.bf16.mxu0 0
    %1186 = vmatpush1.bf16.msra.mxu0 0
    %1187 = vmatprep.subr.bf16.mxu0 0
    %1188 = vmatpush1.bf16.msra.mxu0 0
    %1189 = vmatprep.subr.bf16.mxu0 0
    %1190 = vmatpush1.bf16.msra.mxu0 0
    %1191 = vmatprep.subr.bf16.mxu0 0
    %1192 = vmatpush1.bf16.msra.mxu0 0
    %1193 = vmatprep.subr.bf16.mxu0 0
    %1194 = vmatpush1.bf16.msra.mxu0 0
    %1195 = vmatprep.mubr.bf16.mxu0 0
    %1196 = vmatmul.mubr.bf16.gmra.mrb[0].mxu0 %v1161
    %v1197 = vpop.f32.mrb[0].mxu0
    %v1198 = vadd.f32 0.0, %v1197
    %v1199 = vpop.f32.mrb[0].mxu0
    %v1200 = vpop.f32.mrb[0].mxu0
    %v1201 = vpop.f32.mrb[0].mxu0
    %1202 = vdwg.mxu0
    %1205 = vrot.lane.b32.xlu0 %v1152, 24
    %v1206 = vpop.permute.xlu0 %1205
    %1207 = vrot.lane.b32.xlu0 %v1198, 24
    %v1208 = vpop.permute.xlu0 %1207
    %vm1211 = vcmask 261312
    %1212 = vst.msk [vmem:[#allocation2] sm:$0xff] %vm1211, %v1206
    %1213 = vst.msk [vmem:[#allocation2 + $0x8] sm:$0xff] %vm1211, %v1208
    %v1214 = vld [vmem:[#allocation2] sm:$0xff]
    %v1215 = vld [vmem:[#allocation2 + $0x8] sm:$0xff]
    %v1216 = vpack.c.bf16 %v1214, %v1214
    %v1217 = vpack.c.bf16 %v1215, %v1215
    %v1218 = vld [vmem:[#allocation6] sm:$0xf]
    %v1219 = vld [vmem:[#allocation6 + $0x4] sm:$0xf]
    %v1220 = vld [vmem:[#allocation6 + $0x8] sm:$0xf]
    %v1221 = vld [vmem:[#allocation6 + $0xc] sm:$0xf]
    %v1224 = vunpack.c.l.b16 %v1216
    %v1225 = vunpack.c.l.b16 %v1217
    %v1226 = vpack.c.b16 %v1225, %v1224
    %v1231 = vunpack.c.l.b16 %v1218
    %v1232 = vunpack.c.l.b16 %v1219
    %v1233 = vunpack.c.l.b16 %v1220
    %v1234 = vunpack.c.l.b16 %v1221
    %v1235 = vpack.c.b16 %v1232, %v1231
    %v1236 = vpack.c.b16 %v1234, %v1233
    %v1240 = vsel %vm124, %v1226, 0
    %1242 = vmatprep.subr.bf16.mxu0 0
    %1243 = vmatpush1.bf16.msra.mxu0 %v1235
    %1244 = vmatprep.subr.bf16.mxu0 0
    %1245 = vmatpush1.bf16.msra.mxu0 %v1236
    %1246 = vmatprep.subr.bf16.mxu0 0
    %1247 = vmatpush1.bf16.msra.mxu0 0
    %1248 = vmatprep.subr.bf16.mxu0 0
    %1249 = vmatpush1.bf16.msra.mxu0 0
    %1250 = vmatprep.subr.bf16.mxu0 0
    %1251 = vmatpush1.bf16.msra.mxu0 0
    %1252 = vmatprep.subr.bf16.mxu0 0
    %1253 = vmatpush1.bf16.msra.mxu0 0
    %1254 = vmatprep.subr.bf16.mxu0 0
    %1255 = vmatpush1.bf16.msra.mxu0 0
    %1256 = vmatprep.subr.bf16.mxu0 0
    %1257 = vmatpush1.bf16.msra.mxu0 0
    %1258 = vmatprep.subr.bf16.mxu0 0
    %1259 = vmatpush1.bf16.msra.mxu0 0
    %1260 = vmatprep.subr.bf16.mxu0 0
    %1261 = vmatpush1.bf16.msra.mxu0 0
    %1262 = vmatprep.subr.bf16.mxu0 0
    %1263 = vmatpush1.bf16.msra.mxu0 0
    %1264 = vmatprep.subr.bf16.mxu0 0
    %1265 = vmatpush1.bf16.msra.mxu0 0
    %1266 = vmatprep.subr.bf16.mxu0 0
    %1267 = vmatpush1.bf16.msra.mxu0 0
    %1268 = vmatprep.subr.bf16.mxu0 0
    %1269 = vmatpush1.bf16.msra.mxu0 0
    %1270 = vmatprep.subr.bf16.mxu0 0
    %1271 = vmatpush1.bf16.msra.mxu0 0
    %1272 = vmatprep.subr.bf16.mxu0 0
    %1273 = vmatpush1.bf16.msra.mxu0 0
    %1274 = vmatprep.mubr.bf16.mxu0 0
    %1275 = vmatmul.mubr.bf16.gmra.mrb[0].mxu0 %v1240
    %v1276 = vpop.f32.mrb[0].mxu0
    %v1277 = vadd.f32 0.0, %v1276
    %v1278 = vpop.f32.mrb[0].mxu0
    %v1279 = vpop.f32.mrb[0].mxu0
    %v1280 = vadd.f32 0.0, %v1279
    %v1281 = vpop.f32.mrb[0].mxu0
    %1282 = vdwg.mxu0
    %v1283 = vadd.f32 %v87, %v1277
    %v1284 = vadd.f32 %v88, %v1280
    %v1286 = vlaneseq
    %v1287 = vshrl.u32 %v1286, 7
    %v1288 = vsub.s32 0, %v1287
    %v1289 = vrot.slane %v99, %v1288
    %v1291 = vadd.f32 %v1283, %v1289
    %v1292 = vadd.f32 %v1284, %v1289
    %v1293 = vsel %vm124, %v1291, 0.0
    %1294 = vadd.xlane.f32.xlu0 %v1293
    %v1295 = vpop.xlane.xlu0 %1294
    %v1296 = vsel %vm124, %v1292, 0.0
    %1297 = vadd.xlane.f32.xlu0 %v1296
    %v1298 = vpop.xlane.xlu0 %1297
    %v1299 = vrcp.pop 32.0
    %v1300 = vmul.f32 %v1295, %v1299
    %v1301 = vmul.f32 %v1298, %v1299
    %v1302 = vsub.f32 %v1291, %v1300
    %v1303 = vsub.f32 %v1292, %v1301
    %v1304 = vmul.f32 %v1302, %v1302
    %v1305 = vmul.f32 %v1303, %v1303
    %v1306 = vsel %vm124, %v1304, 0.0
    %1307 = vadd.xlane.f32.xlu0 %v1306
    %v1308 = vpop.xlane.xlu0 %1307
    %v1309 = vsel %vm124, %v1305, 0.0
    %1310 = vadd.xlane.f32.xlu0 %v1309
    %v1311 = vpop.xlane.xlu0 %1310
    %v1312 = vmul.f32 %v1308, %v1299
    %v1313 = vmul.f32 %v1311, %v1299
    %v1314 = vadd.f32 %v1312, 1e-05
    %v1315 = vadd.f32 %v1313, 1e-05
    %v1316 = vrsqrt.pop %v1314
    %v1317 = vrsqrt.pop %v1315
    %v1318 = vmul.f32 %v1302, %v1316
    %v1319 = vmul.f32 %v1303, %v1317
    %v1320 = vlaneseq
    %v1321 = vshrl.u32 %v1320, 7
    %v1322 = vsub.s32 0, %v1321
    %v1323 = vrot.slane %v100, %v1322
    %v1324 = vmul.f32 %v1318, %v1323
    %v1325 = vmul.f32 %v1319, %v1323
    %v1326 = vlaneseq
    %v1327 = vshrl.u32 %v1326, 7
    %v1328 = vsub.s32 0, %v1327
    %v1329 = vrot.slane %v101, %v1328
    %v1330 = vadd.f32 %v1324, %v1329
    %v1331 = vadd.f32 %v1325, %v1329
    %v1332 = vpack.c.bf16 %v1331, %v1330
    %v1333 = vld [vmem:[#allocation8] sm:$0xf]
    %v1334 = vld [vmem:[#allocation8 + $0x4] sm:$0xf]
    %v1335 = vld [vmem:[#allocation8 + $0x8] sm:$0xf]
    %v1336 = vld [vmem:[#allocation8 + $0xc] sm:$0xf]
    %v1338 = vlaneseq
    %v1339 = vshrl.u32 %v1338, 7
    %v1340 = vsub.s32 0, %v1339
    %v1341 = vrot.slane %v102, %v1340
    %v1347 = vunpack.c.l.b16 %v1333
    %v1348 = vunpack.c.l.b16 %v1334
    %v1349 = vunpack.c.l.b16 %v1335
    %v1350 = vunpack.c.l.b16 %v1336
    %v1351 = vpack.c.b16 %v1348, %v1347
    %v1352 = vpack.c.b16 %v1350, %v1349
    %v1356 = vsel %vm124, %v1332, 0
    %1358 = vmatprep.subr.bf16.mxu0 0
    %1359 = vmatpush1.bf16.msra.mxu0 %v1351
    %1360 = vmatprep.subr.bf16.mxu0 0
    %1361 = vmatpush1.bf16.msra.mxu0 %v1352
    %1362 = vmatprep.subr.bf16.mxu0 0
    %1363 = vmatpush1.bf16.msra.mxu0 0
    %1364 = vmatprep.subr.bf16.mxu0 0
    %1365 = vmatpush1.bf16.msra.mxu0 0
    %1366 = vmatprep.subr.bf16.mxu0 0
    %1367 = vmatpush1.bf16.msra.mxu0 0
    %1368 = vmatprep.subr.bf16.mxu0 0
    %1369 = vmatpush1.bf16.msra.mxu0 0
    %1370 = vmatprep.subr.bf16.mxu0 0
    %1371 = vmatpush1.bf16.msra.mxu0 0
    %1372 = vmatprep.subr.bf16.mxu0 0
    %1373 = vmatpush1.bf16.msra.mxu0 0
    %1374 = vmatprep.subr.bf16.mxu0 0
    %1375 = vmatpush1.bf16.msra.mxu0 0
    %1376 = vmatprep.subr.bf16.mxu0 0
    %1377 = vmatpush1.bf16.msra.mxu0 0
    %1378 = vmatprep.subr.bf16.mxu0 0
    %1379 = vmatpush1.bf16.msra.mxu0 0
    %1380 = vmatprep.subr.bf16.mxu0 0
    %1381 = vmatpush1.bf16.msra.mxu0 0
    %1382 = vmatprep.subr.bf16.mxu0 0
    %1383 = vmatpush1.bf16.msra.mxu0 0
    %1384 = vmatprep.subr.bf16.mxu0 0
    %1385 = vmatpush1.bf16.msra.mxu0 0
    %1386 = vmatprep.subr.bf16.mxu0 0
    %1387 = vmatpush1.bf16.msra.mxu0 0
    %1388 = vmatprep.subr.bf16.mxu0 0
    %1389 = vmatpush1.bf16.msra.mxu0 0
    %1390 = vmatprep.mubr.bf16.mxu0 0
    %1391 = vmatmul.mubr.bf16.gmra.mrb[0].mxu0 %v1356
    %v1392 = vpop.f32.mrb[0].mxu0
    %v1393 = vadd.f32 %v1341, %v1392
    %v1394 = vpop.f32.mrb[0].mxu0
    %v1395 = vpop.f32.mrb[0].mxu0
    %v1396 = vadd.f32 %v1341, %v1395
    %v1397 = vpop.f32.mrb[0].mxu0
    %1398 = vdwg.mxu0
    %v1399 = vmul.f32 %v1393, 1.702
    %v1400 = vmul.f32 %v1396, 1.702
    %v1401 = vxor.u32 %v1399, 2147483648
    %v1402 = vxor.u32 %v1400, 2147483648
    %v1403 = vmul.f32 %v1401, 1.442695
    %v1404 = vpow.pop %v1403
    %v1405 = vmul.f32 %v1402, 1.442695
    %v1406 = vpow.pop %v1405
    %v1407 = vadd.f32 %v1404, 1.0
    %v1408 = vadd.f32 %v1406, 1.0
    %v1409 = vrcp.pop %v1407
    %v1410 = vmul.f32 1.0, %v1409
    %v1411 = vrcp.pop %v1408
    %v1412 = vmul.f32 1.0, %v1411
    %v1413 = vmul.f32 %v1393, %v1410
    %v1414 = vmul.f32 %v1396, %v1412
    %v1415 = vpack.c.bf16 %v1414, %v1413
    %v1416 = vld [vmem:[%s7] sm:$0xf]
    %v1417 = vld [vmem:[%s7 + $0x4] sm:$0xf]
    %v1418 = vld [vmem:[%s7 + $0x8] sm:$0xf]
    %v1419 = vld [vmem:[%s7 + $0xc] sm:$0xf]
    %v1420 = vld [vmem:[%s7 + $0x10] sm:$0xf]
    %v1421 = vld [vmem:[%s7 + $0x14] sm:$0xf]
    %v1422 = vld [vmem:[%s7 + $0x18] sm:$0xf]
    %v1423 = vld [vmem:[%s7 + $0x1c] sm:$0xf]
    %v1424 = vld [vmem:[%s7 + $0x20] sm:$0xf]
    %v1425 = vld [vmem:[%s7 + $0x24] sm:$0xf]
    %v1426 = vld [vmem:[%s7 + $0x28] sm:$0xf]
    %v1427 = vld [vmem:[%s7 + $0x2c] sm:$0xf]
    %v1428 = vld [vmem:[%s7 + $0x30] sm:$0xf]
    %v1429 = vld [vmem:[%s7 + $0x34] sm:$0xf]
    %v1430 = vld [vmem:[%s7 + $0x38] sm:$0xf]
    %v1431 = vld [vmem:[%s7 + $0x3c] sm:$0xf]
    %v1433 = vlaneseq
    %v1434 = vshrl.u32 %v1433, 7
    %v1435 = vsub.s32 0, %v1434
    %v1436 = vrot.slane %v103, %v1435
    %v1454 = vunpack.c.l.b16 %v1416
    %v1455 = vunpack.c.l.b16 %v1417
    %v1456 = vunpack.c.l.b16 %v1418
    %v1457 = vunpack.c.l.b16 %v1419
    %v1458 = vunpack.c.l.b16 %v1420
    %v1459 = vunpack.c.l.b16 %v1421
    %v1460 = vunpack.c.l.b16 %v1422
    %v1461 = vunpack.c.l.b16 %v1423
    %v1462 = vunpack.c.l.b16 %v1424
    %v1463 = vunpack.c.l.b16 %v1425
    %v1464 = vunpack.c.l.b16 %v1426
    %v1465 = vunpack.c.l.b16 %v1427
    %v1466 = vunpack.c.l.b16 %v1428
    %v1467 = vunpack.c.l.b16 %v1429
    %v1468 = vunpack.c.l.b16 %v1430
    %v1469 = vunpack.c.l.b16 %v1431
    %v1470 = vpack.c.b16 %v1455, %v1454
    %v1471 = vpack.c.b16 %v1457, %v1456
    %v1472 = vpack.c.b16 %v1459, %v1458
    %v1473 = vpack.c.b16 %v1461, %v1460
    %v1474 = vpack.c.b16 %v1463, %v1462
    %v1475 = vpack.c.b16 %v1465, %v1464
    %v1476 = vpack.c.b16 %v1467, %v1466
    %v1477 = vpack.c.b16 %v1469, %v1468
    %1486 = vmatprep.subr.bf16.mxu0 0
    %1487 = vmatpush1.bf16.msra.mxu0 %v1470
    %1488 = vmatprep.subr.bf16.mxu0 0
    %1489 = vmatpush1.bf16.msra.mxu0 %v1471
    %1490 = vmatprep.subr.bf16.mxu0 0
    %1491 = vmatpush1.bf16.msra.mxu0 %v1472
    %1492 = vmatprep.subr.bf16.mxu0 0
    %1493 = vmatpush1.bf16.msra.mxu0 %v1473
    %1494 = vmatprep.subr.bf16.mxu0 0
    %1495 = vmatpush1.bf16.msra.mxu0 %v1474
    %1496 = vmatprep.subr.bf16.mxu0 0
    %1497 = vmatpush1.bf16.msra.mxu0 %v1475
    %1498 = vmatprep.subr.bf16.mxu0 0
    %1499 = vmatpush1.bf16.msra.mxu0 %v1476
    %1500 = vmatprep.subr.bf16.mxu0 0
    %1501 = vmatpush1.bf16.msra.mxu0 %v1477
    %1502 = vmatprep.subr.bf16.mxu0 0
    %1503 = vmatpush1.bf16.msra.mxu0 0
    %1504 = vmatprep.subr.bf16.mxu0 0
    %1505 = vmatpush1.bf16.msra.mxu0 0
    %1506 = vmatprep.subr.bf16.mxu0 0
    %1507 = vmatpush1.bf16.msra.mxu0 0
    %1508 = vmatprep.subr.bf16.mxu0 0
    %1509 = vmatpush1.bf16.msra.mxu0 0
    %1510 = vmatprep.subr.bf16.mxu0 0
    %1511 = vmatpush1.bf16.msra.mxu0 0
    %1512 = vmatprep.subr.bf16.mxu0 0
    %1513 = vmatpush1.bf16.msra.mxu0 0
    %1514 = vmatprep.subr.bf16.mxu0 0
    %1515 = vmatpush1.bf16.msra.mxu0 0
    %1516 = vmatprep.subr.bf16.mxu0 0
    %1517 = vmatpush1.bf16.msra.mxu0 0
    %1518 = vmatprep.mubr.bf16.mxu0 0
    %1519 = vmatmul.mubr.bf16.gmra.mrb[0].mxu0 %v1415
    %v1520 = vpop.f32.mrb[0].mxu0
    %v1521 = vadd.f32 %v1436, %v1520
    %v1522 = vpop.f32.mrb[0].mxu0
    %v1523 = vpop.f32.mrb[0].mxu0
    %v1524 = vadd.f32 %v1436, %v1523
    %v1525 = vpop.f32.mrb[0].mxu0
    %1526 = vdwg.mxu0
    %v1527 = vadd.f32 %v1291, %v1521
    %v1528 = vadd.f32 %v1292, %v1524
    %1529 = vst.msk [vmem:[#allocation9] sm:$0xff] %vm124, %v1527
    %1530 = vst.msk [vmem:[#allocation9 + $0x8] sm:$0xff] %vm124, %v1528
    // Predicated region
    $region66: #{tpu_custom_call.1} parent=1 // pred_check
      _
    $region67: #{tpu_custom_call.1} parent=1 // pred_check_branch
      %1532 = sbr.rel (0) target = $region69
    $region68: #{tpu_custom_call.1} parent=1 // pred_region
      %s1534 = ssub.s32 256, 256
      %1535 = vsyncadd [#allocation5], %s1534
      %s1536 = sshll.u32 [#allocation9], 4
      %s1537 = int_to_ptr.vmem [resolvable:$true] %s1536
      %1542 = dma.vmem_to_hbm [thread:$0]  %s1537, 256, %s13, [#allocation5], 128, 128, 8
    $region69: #{tpu_custom_call.1} parent=1 // pred_fallthru
      _
    // Predicated region
    $region70: #{tpu_custom_call.1} parent=1 // pred_check
      _
    $region71: #{tpu_custom_call.1} parent=1 // pred_check_branch
      %1544 = sbr.rel (0) target = $region73
    $region72: #{tpu_custom_call.1} parent=1 // pred_region
      %1545 = dma.done [#allocation5], 256
    $region73: #{tpu_custom_call.1} parent=1 // pred_fallthru
      _
    %1546 = vsyncpa [#allocation4], 1
    %1547 = vsyncpa [#allocation7], 1
    %1548 = vsyncpa [#allocation5], 1

</llo_original>
